<compile_context>
chip_gen: v7x
topology: tpu7x:2x2x1
jax: 0.10.0
libtpu: 0.0.40
codegen_flags: <defaults>
</compile_context>

<pallas_src>
import jax
import jax.numpy as jnp
from jax.experimental import pallas as pl
from jax.experimental.pallas import tpu as pltpu

# ------------------------- model configuration -------------------------
B, T = 4, 8      # batch, sequence length
P = 16           # input_pos (per-step feature dim)
H = 32           # hidden_dim
L = 16           # latent_dim
DTYPE = jnp.float32

# ---- weight-slab row offsets (each block zero-padded to 128 lanes) ----
R_EX1 = 0        # W_EX1                       (P,  H)  = (16, 32)
R_EX2EN1 = 16    # W_EX2 @ W_EN1[:L]           (H,  H)  = (32, 32)
R_H1 = 48        # [W_EN1[L:] | W_PR1 | W_DE1[L:]]  (H, 3H) = (32, 96)
R_WHH = 80       # W_hh (LSTM)                 (H, 4H)  = (32, 128)
R_ENPR2 = 112    # blockdiag(W_EN2, W_PR2)     (2H, 4L) = (64, 64)
R_EZ1 = 176      # W_EZ1                       (L,  H)  = (16, 32)
R_EZ2DE1 = 192   # W_EZ2 @ W_DE1[:L]           (H,  H)  = (32, 32)
R_DE2 = 224      # W_DE2                       (H,  P)  = (32, 16)
R_DE2EX1 = 256   # W_DE2 @ W_EX1               (H,  H)  = (32, 32)
R_EX2LSTM = 288  # W_EX2 @ W_ih[:L]            (H, 4H)  = (32, 128)
R_EZ2LSTM = 320  # W_EZ2 @ W_ih[L:2L]          (H, 4H)  = (32, 128)
W_ROWS = 352

# ---- bias-slab rows (each zero-padded to 128 lanes) ----
B_EX1 = 0        # ex_b1                                (H,)
B_EXEN = 1       # ex_b2 @ W_EN1[:L] + en_b1            (H,)
B_PR1 = 2        # pr_b1                                (H,)
B_ENPR2 = 3      # [en_b2 | pr_b2]                      (4L,)
B_EZ1 = 4        # ez_b1                                (H,)
B_DE1F = 5       # ez_b2 @ W_DE1[:L] + de_b1            (H,)
B_DE2 = 6        # de_b2                                (P,)
B_EXHF = 7       # de_b2 @ W_EX1 + ex_b1                (H,)
B_GATES = 8      # lstm_b + ex_b2@W_ih[:L] + ez_b2@W_ih[L:2L]   (4H,)
B_ROWS = 9

OUT_COLS = T * P + 2 * (T * 2 * L)    # 128 + 256 + 256 = 640


# ------------------------------ kernel ---------------------------------
def vrnn_kernel(x_ref, eps_ref, w_ref, b_ref, out_ref, encx_ref):
    def dotf(a, b):
        return jnp.dot(a, b, preferred_element_type=jnp.float32)

    def W(r0, rows, cols):
        # static slice load of one weight block from the packed slab
        return w_ref[r0:r0 + rows, 0:cols]

    def Bv(row, cols):
        return b_ref[row:row + 1, 0:cols]          # (1, cols)

    # hoist biases once (tiny)
    b_ex1 = Bv(B_EX1, H)
    b_pr1 = Bv(B_PR1, H)
    b_enpr2 = Bv(B_ENPR2, 4 * L)
    b_ez1 = Bv(B_EZ1, H)
    b_de1f = Bv(B_DE1F, H)
    b_de2 = Bv(B_DE2, P)
    b_exhf = Bv(B_EXHF, H)
    b_gates = Bv(B_GATES, 4 * H)

    # --- pre-loop: embed_x(x_t) -> encoder-1 contribution for ALL timesteps ---
    # x_ref is (T*B, P), t-major rows: row t*B + b.
    x_all = x_ref[...]                                              # (T*B, P)
    ex_hid = jnp.maximum(dotf(x_all, W(R_EX1, P, H)) + b_ex1, 0.0)  # (T*B, H)
    encx_ref[...] = dotf(ex_hid, W(R_EX2EN1, H, H)) + Bv(B_EXEN, H)  # (T*B, H)

    # --- hoist critical-path weights into vregs once (~18 vregs) ---
    w_h1 = W(R_H1, H, 3 * H)               # (32, 96)
    w_hh = W(R_WHH, H, 4 * H)              # (32, 128)
    w_ez1 = W(R_EZ1, L, H)                 # (16, 32)
    w_de2ex1 = W(R_DE2EX1, H, H)           # (32, 32)
    w_ex2lstm = W(R_EX2LSTM, H, 4 * H)     # (32, 128)

    h = jnp.zeros((B, H), jnp.float32)
    c = jnp.zeros((B, H), jnp.float32)

    recon_cols, zpost_cols, zprior_cols = [], [], []

    for t in range(T):                              # fully unrolled (T=8)
        eps = eps_ref[:, t * L:(t + 1) * L]         # (B, L)
        enc_x = encx_ref[t * B:(t + 1) * B, :]      # (B, H) precomputed contrib

        # h-conditioned contributions, issued once at the top of the step
        hc = dotf(h, w_h1)                          # (B, 96): [enc | prior | dec]
        hc_lstm = dotf(h, w_hh)                     # (B, 128)

        # ---------------- _inference / _prior (fused 2nd layers) ----------------
        enc_hid = jnp.maximum(enc_x + hc[:, 0:H], 0.0)
        pr_hid = jnp.maximum(hc[:, H:2 * H] + b_pr1, 0.0)
        ep_in = jnp.concatenate([enc_hid, pr_hid], axis=-1)            # (B, 2H)
        ep = dotf(ep_in, W(R_ENPR2, 2 * H, 4 * L)) + b_enpr2           # (B, 4L)
        enc_out = ep[:, 0:2 * L]                                       # [z_mu|z_lv]
        prior_out = ep[:, 2 * L:4 * L]

        z_mu = enc_out[:, 0:L]
        z_log_var = enc_out[:, L:2 * L]
        z_std = jnp.minimum(jnp.exp(0.5 * z_log_var), 100.0)
        z = z_mu + z_std * eps

        # ---------------- _decode (embedder_z 2nd layer folded forward) --------
        ez_hid = jnp.maximum(dotf(z, w_ez1) + b_ez1, 0.0)              # (B, H)
        dec_hid = jnp.maximum(dotf(ez_hid, W(R_EZ2DE1, H, H))
                              + hc[:, 2 * H:3 * H] + b_de1f, 0.0)      # (B, H)
        x_hat = dotf(dec_hid, W(R_DE2, H, P)) + b_de2                  # (B, P) output only

        # embed_x(x_hat) hidden (decoder-2 folded in), then fused LSTM gates
        exh_hid = jnp.maximum(dotf(dec_hid, w_de2ex1) + b_exhf, 0.0)   # (B, H)
        gates = (dotf(exh_hid, w_ex2lstm)
                 + dotf(ez_hid, W(R_EZ2LSTM, H, 4 * H))
                 + hc_lstm + b_gates)                                  # (B, 4H)

        sg = jax.nn.sigmoid(gates)     # whole vreg on EUP
        th = jnp.tanh(gates)
        i_g = sg[:, 0 * H:1 * H]
        f_g = sg[:, 1 * H:2 * H]
        g_g = th[:, 2 * H:3 * H]
        o_g = sg[:, 3 * H:4 * H]
        c = f_g * c + i_g * g_g
        h = o_g * jnp.tanh(c)

        recon_cols.append(x_hat)
        zpost_cols.append(enc_out)
        zprior_cols.append(prior_out)

    # single lane-dense writeback: [recon | z_post | z_prior] = (4, 640)
    out_ref[...] = jnp.concatenate(recon_cols + zpost_cols + zprior_cols, axis=-1)


# ------------------------------ wrapper ---------------------------------
@jax.jit
def vrnn_forward(x_btp, eps_btl, w_slab, b_slab):
    """x_btp: [B,T,P], eps_btl: [B,T,L]. Returns (reconstr_seq [B,T,P],
    z_params [B,T,2,L], z_params_prior [B,T,2,L])."""
    x_tb = jnp.transpose(x_btp, (1, 0, 2)).reshape(T * B, P)   # t-major rows
    eps_slab = eps_btl.reshape(B, T * L)

    out_slab = pl.pallas_call(
        vrnn_kernel,
        out_shape=jax.ShapeDtypeStruct((B, OUT_COLS), DTYPE),
        scratch_shapes=[pltpu.VMEM((T * B, H), jnp.float32)],
    )(x_tb, eps_slab, w_slab, b_slab)

    reconstr_seq = out_slab[:, :T * P].reshape(B, T, P)
    z_params = out_slab[:, T * P:T * P + T * 2 * L].reshape(B, T, 2, L)
    z_params_prior = out_slab[:, T * P + T * 2 * L:].reshape(B, T, 2, L)
    return reconstr_seq, z_params, z_params_prior


# --------------------- deterministic parameter init ---------------------
def _xavier(key, shape):
    fan_in, fan_out = shape
    std = (2.0 / (fan_in + fan_out)) ** 0.5
    return (std * jax.random.normal(key, shape)).astype(DTYPE)


def _mlp_params(key, d_in, d_hid, d_out):
    k1, k2 = jax.random.split(key)
    return (_xavier(k1, (d_in, d_hid)), jnp.full((d_hid,), 0.1, DTYPE),
            _xavier(k2, (d_hid, d_out)), jnp.full((d_out,), 0.1, DTYPE))


def make_raw_params(key):
    keys = jax.random.split(key, 8)
    raw = {
        "ex": _mlp_params(keys[0], P, H, L),           # embedder_x
        "en": _mlp_params(keys[1], L + H, H, 2 * L),   # encoder (input = [embed_x | h])
        "pr": _mlp_params(keys[2], H, H, 2 * L),       # prior
        "ez": _mlp_params(keys[3], L, H, L),           # embedder_z
        "de": _mlp_params(keys[4], L + H, H, P),       # decoder (input = [embed_z | h])
    }
    k = 1.0 / (H ** 0.5)
    raw["wih"] = jax.random.uniform(keys[5], (2 * L, 4 * H), DTYPE, -k, k)  # [embed_x(x_hat) | embed_z]
    raw["whh"] = jax.random.uniform(keys[6], (H, 4 * H), DTYPE, -k, k)
    # NOTE: modeled as bias_ih + bias_hh summed; sum the two when loading real
    # PyTorch LSTMCell checkpoints.
    raw["lstm_b"] = jax.random.uniform(keys[7], (4 * H,), DTYPE, -2 * k, 2 * k)
    return raw


def pack_params(raw):
    """Packs (and offline-folds) raw params into one (352,128) weight slab and
    one (9,128) bias slab."""
    hi = jax.lax.Precision.HIGHEST

    def mm(a, b):
        return jnp.dot(a, b, precision=hi)

    ex_w1, ex_b1, ex_w2, ex_b2 = raw["ex"]
    en_w1, en_b1, en_w2, en_b2 = raw["en"]
    pr_w1, pr_b1, pr_w2, pr_b2 = raw["pr"]
    ez_w1, ez_b1, ez_w2, ez_b2 = raw["ez"]
    de_w1, de_b1, de_w2, de_b2 = raw["de"]
    wih, whh, lstm_b = raw["wih"], raw["whh"], raw["lstm_b"]

    en_w1_ex, en_w1_h = en_w1[:L], en_w1[L:]
    de_w1_ez, de_w1_h = de_w1[:L], de_w1[L:]
    wih_ex, wih_ez = wih[:L], wih[L:]

    # offline folds (no nonlinearity intervenes)
    w_ex2en1 = mm(ex_w2, en_w1_ex)                               # (32, 32)
    w_h1 = jnp.concatenate([en_w1_h, pr_w1, de_w1_h], axis=1)    # (32, 96)
    w_enpr2 = jnp.zeros((2 * H, 4 * L), DTYPE)
    w_enpr2 = w_enpr2.at[:H, :2 * L].set(en_w2).at[H:, 2 * L:].set(pr_w2)  # (64, 64)
    w_ez2de1 = mm(ez_w2, de_w1_ez)                               # (32, 32)
    w_de2ex1 = mm(de_w2, ex_w1)                                  # (32, 32)
    w_ex2lstm = mm(ex_w2, wih_ex)                                # (32, 128)
    w_ez2lstm = mm(ez_w2, wih_ez)                                # (32, 128)

    def pad_cols(w):
        return jnp.pad(w, ((0, 0), (0, 128 - w.shape[1])))

    w_slab = jnp.concatenate([
        pad_cols(ex_w1),        # R_EX1     = 0
        pad_cols(w_ex2en1),     # R_EX2EN1  = 16
        pad_cols(w_h1),         # R_H1      = 48
        whh,                    # R_WHH     = 80
        pad_cols(w_enpr2),      # R_ENPR2   = 112
        pad_cols(ez_w1),        # R_EZ1     = 176
        pad_cols(w_ez2de1),     # R_EZ2DE1  = 192
        pad_cols(de_w2),        # R_DE2     = 224
        pad_cols(w_de2ex1),     # R_DE2EX1  = 256
        w_ex2lstm,              # R_EX2LSTM = 288
        w_ez2lstm,              # R_EZ2LSTM = 320
    ], axis=0)
    assert w_slab.shape == (W_ROWS, 128)

    b_exen = mm(ex_b2, en_w1_ex) + en_b1
    b_enpr2 = jnp.concatenate([en_b2, pr_b2])
    b_de1f = mm(ez_b2, de_w1_ez) + de_b1
    b_exhf = mm(de_b2, ex_w1) + ex_b1
    b_gates = lstm_b + mm(ex_b2, wih_ex) + mm(ez_b2, wih_ez)

    def pad_bias(b):
        return jnp.pad(b, (0, 128 - b.shape[0]))[None, :]

    b_slab = jnp.concatenate([
        pad_bias(ex_b1),    # B_EX1
        pad_bias(b_exen),   # B_EXEN
        pad_bias(pr_b1),    # B_PR1
        pad_bias(b_enpr2),  # B_ENPR2
        pad_bias(ez_b1),    # B_EZ1
        pad_bias(b_de1f),   # B_DE1F
        pad_bias(de_b2),    # B_DE2
        pad_bias(b_exhf),   # B_EXHF
        pad_bias(b_gates),  # B_GATES
    ], axis=0)
    assert b_slab.shape == (B_ROWS, 128)
    return w_slab, b_slab


# ----------------------- pure-JAX reference model -----------------------
def vrnn_reference(x_btp, eps_btl, raw):
    ex_w1, ex_b1, ex_w2, ex_b2 = raw["ex"]
    en_w1, en_b1, en_w2, en_b2 = raw["en"]
    pr_w1, pr_b1, pr_w2, pr_b2 = raw["pr"]
    ez_w1, ez_b1, ez_w2, ez_b2 = raw["ez"]
    de_w1, de_b1, de_w2, de_b2 = raw["de"]
    wih, whh, lstm_b = raw["wih"], raw["whh"], raw["lstm_b"]

    def mlp(x, w1, b1, w2, b2):
        return jnp.maximum(x @ w1 + b1, 0.0) @ w2 + b2

    h = jnp.zeros((B, H), DTYPE)
    c = jnp.zeros((B, H), DTYPE)
    recon, zpost, zprior = [], [], []
    for t in range(T):
        x_t = x_btp[:, t, :]
        eps = eps_btl[:, t, :]
        ex = mlp(x_t, ex_w1, ex_b1, ex_w2, ex_b2)
        enc_out = mlp(jnp.concatenate([ex, h], -1), en_w1, en_b1, en_w2, en_b2)
        z_mu, z_lv = enc_out[:, :L], enc_out[:, L:]
        z = z_mu + jnp.minimum(jnp.exp(0.5 * z_lv), 100.0) * eps
        prior_out = mlp(h, pr_w1, pr_b1, pr_w2, pr_b2)
        ez = mlp(z, ez_w1, ez_b1, ez_w2, ez_b2)
        x_hat = mlp(jnp.concatenate([ez, h], -1), de_w1, de_b1, de_w2, de_b2)
        ex_hat = mlp(x_hat, ex_w1, ex_b1, ex_w2, ex_b2)
        gates = jnp.concatenate([ex_hat, ez], -1) @ wih + h @ whh + lstm_b
        i_g = jax.nn.sigmoid(gates[:, 0 * H:1 * H])
        f_g = jax.nn.sigmoid(gates[:, 1 * H:2 * H])
        g_g = jnp.tanh(gates[:, 2 * H:3 * H])
        o_g = jax.nn.sigmoid(gates[:, 3 * H:4 * H])
        c = f_g * c + i_g * g_g
        h = o_g * jnp.tanh(c)
        recon.append(x_hat)
        zpost.append(enc_out)
        zprior.append(prior_out)
    recon = jnp.stack(recon, axis=1)                                     # [B, T, P]
    zpost = jnp.stack(zpost, axis=1).reshape(B, T, 2, L)
    zprior = jnp.stack(zprior, axis=1).reshape(B, T, 2, L)
    return recon, zpost, zprior


# -------------------------------- main ----------------------------------
if __name__ == "__main__":
    key = jax.random.PRNGKey(0)
    kx, keps, kp = jax.random.split(key, 3)

    x = jax.random.normal(kx, (B, T, P), DTYPE)       # PyTorch layout [B, T, P]
    eps = jax.random.normal(keps, (B, T, L), DTYPE)   # inference noise per step
    raw_params = make_raw_params(kp)
    w_slab, b_slab = pack_params(raw_params)

    recon, z_params, z_params_prior = jax.block_until_ready(
        vrnn_forward(x, eps, w_slab, b_slab))

    recon_ref, zp_ref, zpp_ref = vrnn_reference(x, eps, raw_params)
    assert recon.shape == (B, T, P)
    assert z_params.shape == (B, T, 2, L)
    assert z_params_prior.shape == (B, T, 2, L)
    assert jnp.allclose(recon, recon_ref, atol=5e-4, rtol=5e-4)
    assert jnp.allclose(z_params, zp_ref, atol=5e-4, rtol=5e-4)
    assert jnp.allclose(z_params_prior, zpp_ref, atol=5e-4, rtol=5e-4)

    print("KERNEL_OK")
</pallas_src>

<mosaic_0001>
module attributes {stable_mosaic.version = 11 : i64} {
  func.func @vrnn_kernel(%arg0: memref<32x16xf32, #tpu.memory_space<vmem>>, %arg1: memref<4x128xf32, #tpu.memory_space<vmem>>, %arg2: memref<352x128xf32, #tpu.memory_space<vmem>>, %arg3: memref<9x128xf32, #tpu.memory_space<vmem>>, %arg4: memref<4x640xf32, #tpu.memory_space<vmem>>, %arg5: memref<32x32xf32, #tpu.memory_space<vmem>>) attributes {dimension_semantics = [], scalar_prefetch = 0 : i64, scratch_operands = 1 : i64, tpu.core_type = #tpu.core_type<tc>} {
    %c0 = arith.constant 0 : index
    %c0_0 = arith.constant 0 : index
    %0 = vector.load %arg3[%c0, %c0_0] : memref<9x128xf32, #tpu.memory_space<vmem>>, vector<1x32xf32>
    %c2 = arith.constant 2 : index
    %c0_1 = arith.constant 0 : index
    %1 = vector.load %arg3[%c2, %c0_1] : memref<9x128xf32, #tpu.memory_space<vmem>>, vector<1x32xf32>
    %c3 = arith.constant 3 : index
    %c0_2 = arith.constant 0 : index
    %2 = vector.load %arg3[%c3, %c0_2] : memref<9x128xf32, #tpu.memory_space<vmem>>, vector<1x64xf32>
    %c4 = arith.constant 4 : index
    %c0_3 = arith.constant 0 : index
    %3 = vector.load %arg3[%c4, %c0_3] : memref<9x128xf32, #tpu.memory_space<vmem>>, vector<1x32xf32>
    %c5 = arith.constant 5 : index
    %c0_4 = arith.constant 0 : index
    %4 = vector.load %arg3[%c5, %c0_4] : memref<9x128xf32, #tpu.memory_space<vmem>>, vector<1x32xf32>
    %c6 = arith.constant 6 : index
    %c0_5 = arith.constant 0 : index
    %5 = vector.load %arg3[%c6, %c0_5] : memref<9x128xf32, #tpu.memory_space<vmem>>, vector<1x16xf32>
    %c7 = arith.constant 7 : index
    %c0_6 = arith.constant 0 : index
    %6 = vector.load %arg3[%c7, %c0_6] : memref<9x128xf32, #tpu.memory_space<vmem>>, vector<1x32xf32>
    %c8 = arith.constant 8 : index
    %c0_7 = arith.constant 0 : index
    %7 = vector.load %arg3[%c8, %c0_7] : memref<9x128xf32, #tpu.memory_space<vmem>>, vector<1x128xf32>
    %c0_8 = arith.constant 0 : index
    %c0_9 = arith.constant 0 : index
    %8 = vector.load %arg0[%c0_8, %c0_9] : memref<32x16xf32, #tpu.memory_space<vmem>>, vector<32x16xf32>
    %c0_10 = arith.constant 0 : index
    %c0_11 = arith.constant 0 : index
    %9 = vector.load %arg2[%c0_10, %c0_11] : memref<352x128xf32, #tpu.memory_space<vmem>>, vector<16x32xf32>
    %cst = arith.constant dense<0.000000e+00> : vector<32x32xf32>
    %10 = tpu.matmul %8, %9, %cst {dimension_numbers = #tpu.dot_dimension_numbers<[1], [0], [0], [1], [0, 0, 1, 1], [], []>} : vector<32x16xf32>, vector<16x32xf32>, vector<32x32xf32> -> vector<32x32xf32>
    %11 = vector.broadcast %0 : vector<1x32xf32> to vector<32x32xf32>
    %12 = arith.addf %10, %11 : vector<32x32xf32>
    %cst_12 = arith.constant 0.000000e+00 : f32
    %13 = vector.broadcast %cst_12 : f32 to vector<32x32xf32>
    %14 = arith.maximumf %12, %13 : vector<32x32xf32>
    %c16 = arith.constant 16 : index
    %c0_13 = arith.constant 0 : index
    %15 = vector.load %arg2[%c16, %c0_13] : memref<352x128xf32, #tpu.memory_space<vmem>>, vector<32x32xf32>
    %cst_14 = arith.constant dense<0.000000e+00> : vector<32x32xf32>
    %16 = tpu.matmul %14, %15, %cst_14 {dimension_numbers = #tpu.dot_dimension_numbers<[1], [0], [0], [1], [0, 0, 1, 1], [], []>} : vector<32x32xf32>, vector<32x32xf32>, vector<32x32xf32> -> vector<32x32xf32>
    %c1 = arith.constant 1 : index
    %c0_15 = arith.constant 0 : index
    %17 = vector.load %arg3[%c1, %c0_15] : memref<9x128xf32, #tpu.memory_space<vmem>>, vector<1x32xf32>
    %18 = vector.broadcast %17 : vector<1x32xf32> to vector<32x32xf32>
    %19 = arith.addf %16, %18 : vector<32x32xf32>
    %c0_16 = arith.constant 0 : index
    %c0_17 = arith.constant 0 : index
    %20 = vector.load %arg5[%c0_16, %c0_17] : memref<32x32xf32, #tpu.memory_space<vmem>>, vector<32x32xf32>
    tpu.vector_store %arg5[%c0_16, %c0_17], %19 {strides = array<i32>} : memref<32x32xf32, #tpu.memory_space<vmem>>, vector<32x32xf32>,
    %c48 = arith.constant 48 : index
    %c0_18 = arith.constant 0 : index
    %21 = vector.load %arg2[%c48, %c0_18] : memref<352x128xf32, #tpu.memory_space<vmem>>, vector<32x96xf32>
    %c80 = arith.constant 80 : index
    %c0_19 = arith.constant 0 : index
    %22 = vector.load %arg2[%c80, %c0_19] : memref<352x128xf32, #tpu.memory_space<vmem>>, vector<32x128xf32>
    %c176 = arith.constant 176 : index
    %c0_20 = arith.constant 0 : index
    %23 = vector.load %arg2[%c176, %c0_20] : memref<352x128xf32, #tpu.memory_space<vmem>>, vector<16x32xf32>
    %c256 = arith.constant 256 : index
    %c0_21 = arith.constant 0 : index
    %24 = vector.load %arg2[%c256, %c0_21] : memref<352x128xf32, #tpu.memory_space<vmem>>, vector<32x32xf32>
    %c288 = arith.constant 288 : index
    %c0_22 = arith.constant 0 : index
    %25 = vector.load %arg2[%c288, %c0_22] : memref<352x128xf32, #tpu.memory_space<vmem>>, vector<32x128xf32>
    %cst_23 = arith.constant 0.000000e+00 : f32
    %26 = vector.broadcast %cst_23 : f32 to vector<4x32xf32>
    %cst_24 = arith.constant 0.000000e+00 : f32
    %27 = vector.broadcast %cst_24 : f32 to vector<4x32xf32>
    %c0_25 = arith.constant 0 : index
    %c0_26 = arith.constant 0 : index
    %28 = vector.load %arg1[%c0_25, %c0_26] : memref<4x128xf32, #tpu.memory_space<vmem>>, vector<4x16xf32>
    %c0_27 = arith.constant 0 : index
    %c0_28 = arith.constant 0 : index
    %29 = vector.load %arg5[%c0_27, %c0_28] : memref<32x32xf32, #tpu.memory_space<vmem>>, vector<4x32xf32>
    %cst_29 = arith.constant dense<0.000000e+00> : vector<4x96xf32>
    %30 = tpu.matmul %26, %21, %cst_29 {dimension_numbers = #tpu.dot_dimension_numbers<[1], [0], [0], [1], [0, 0, 1, 1], [], []>} : vector<4x32xf32>, vector<32x96xf32>, vector<4x96xf32> -> vector<4x96xf32>
    %cst_30 = arith.constant dense<0.000000e+00> : vector<4x128xf32>
    %31 = tpu.matmul %26, %22, %cst_30 {dimension_numbers = #tpu.dot_dimension_numbers<[1], [0], [0], [1], [0, 0, 1, 1], [], []>} : vector<4x32xf32>, vector<32x128xf32>, vector<4x128xf32> -> vector<4x128xf32>
    %32 = vector.extract_strided_slice %30 {offsets = [0, 0], sizes = [4, 32], strides = [1, 1]} : vector<4x96xf32> to vector<4x32xf32>
    %33 = arith.addf %29, %32 : vector<4x32xf32>
    %cst_31 = arith.constant 0.000000e+00 : f32
    %34 = vector.broadcast %cst_31 : f32 to vector<4x32xf32>
    %35 = arith.maximumf %33, %34 : vector<4x32xf32>
    %36 = vector.extract_strided_slice %30 {offsets = [0, 32], sizes = [4, 32], strides = [1, 1]} : vector<4x96xf32> to vector<4x32xf32>
    %37 = vector.broadcast %1 : vector<1x32xf32> to vector<4x32xf32>
    %38 = arith.addf %36, %37 : vector<4x32xf32>
    %cst_32 = arith.constant 0.000000e+00 : f32
    %39 = vector.broadcast %cst_32 : f32 to vector<4x32xf32>
    %40 = arith.maximumf %38, %39 : vector<4x32xf32>
    %41 = tpu.concatenate %35, %40 in 1 : vector<4x32xf32>, vector<4x32xf32> -> vector<4x64xf32>
    %c112 = arith.constant 112 : index
    %c0_33 = arith.constant 0 : index
    %42 = vector.load %arg2[%c112, %c0_33] : memref<352x128xf32, #tpu.memory_space<vmem>>, vector<64x64xf32>
    %cst_34 = arith.constant dense<0.000000e+00> : vector<4x64xf32>
    %43 = tpu.matmul %41, %42, %cst_34 {dimension_numbers = #tpu.dot_dimension_numbers<[1], [0], [0], [1], [0, 0, 1, 1], [], []>} : vector<4x64xf32>, vector<64x64xf32>, vector<4x64xf32> -> vector<4x64xf32>
    %44 = vector.broadcast %2 : vector<1x64xf32> to vector<4x64xf32>
    %45 = arith.addf %43, %44 : vector<4x64xf32>
    %46 = vector.extract_strided_slice %45 {offsets = [0, 0], sizes = [4, 32], strides = [1, 1]} : vector<4x64xf32> to vector<4x32xf32>
    %47 = vector.extract_strided_slice %45 {offsets = [0, 32], sizes = [4, 32], strides = [1, 1]} : vector<4x64xf32> to vector<4x32xf32>
    %48 = vector.extract_strided_slice %46 {offsets = [0, 0], sizes = [4, 16], strides = [1, 1]} : vector<4x32xf32> to vector<4x16xf32>
    %49 = vector.extract_strided_slice %46 {offsets = [0, 16], sizes = [4, 16], strides = [1, 1]} : vector<4x32xf32> to vector<4x16xf32>
    %cst_35 = arith.constant 5.000000e-01 : f32
    %50 = vector.broadcast %cst_35 : f32 to vector<4x16xf32>
    %51 = arith.mulf %50, %49 : vector<4x16xf32>
    %52 = math.exp %51 : vector<4x16xf32>
    %cst_36 = arith.constant 1.000000e+02 : f32
    %53 = vector.broadcast %cst_36 : f32 to vector<4x16xf32>
    %54 = arith.minimumf %52, %53 : vector<4x16xf32>
    %55 = arith.mulf %54, %28 : vector<4x16xf32>
    %56 = arith.addf %48, %55 : vector<4x16xf32>
    %cst_37 = arith.constant dense<0.000000e+00> : vector<4x32xf32>
    %57 = tpu.matmul %56, %23, %cst_37 {dimension_numbers = #tpu.dot_dimension_numbers<[1], [0], [0], [1], [0, 0, 1, 1], [], []>} : vector<4x16xf32>, vector<16x32xf32>, vector<4x32xf32> -> vector<4x32xf32>
    %58 = vector.broadcast %3 : vector<1x32xf32> to vector<4x32xf32>
    %59 = arith.addf %57, %58 : vector<4x32xf32>
    %cst_38 = arith.constant 0.000000e+00 : f32
    %60 = vector.broadcast %cst_38 : f32 to vector<4x32xf32>
    %61 = arith.maximumf %59, %60 : vector<4x32xf32>
    %c192 = arith.constant 192 : index
    %c0_39 = arith.constant 0 : index
    %62 = vector.load %arg2[%c192, %c0_39] : memref<352x128xf32, #tpu.memory_space<vmem>>, vector<32x32xf32>
    %cst_40 = arith.constant dense<0.000000e+00> : vector<4x32xf32>
    %63 = tpu.matmul %61, %62, %cst_40 {dimension_numbers = #tpu.dot_dimension_numbers<[1], [0], [0], [1], [0, 0, 1, 1], [], []>} : vector<4x32xf32>, vector<32x32xf32>, vector<4x32xf32> -> vector<4x32xf32>
    %64 = vector.extract_strided_slice %30 {offsets = [0, 64], sizes = [4, 32], strides = [1, 1]} : vector<4x96xf32> to vector<4x32xf32>
    %65 = arith.addf %63, %64 : vector<4x32xf32>
    %66 = vector.broadcast %4 : vector<1x32xf32> to vector<4x32xf32>
    %67 = arith.addf %65, %66 : vector<4x32xf32>
    %cst_41 = arith.constant 0.000000e+00 : f32
    %68 = vector.broadcast %cst_41 : f32 to vector<4x32xf32>
    %69 = arith.maximumf %67, %68 : vector<4x32xf32>
    %c224 = arith.constant 224 : index
    %c0_42 = arith.constant 0 : index
    %70 = vector.load %arg2[%c224, %c0_42] : memref<352x128xf32, #tpu.memory_space<vmem>>, vector<32x16xf32>
    %cst_43 = arith.constant dense<0.000000e+00> : vector<4x16xf32>
    %71 = tpu.matmul %69, %70, %cst_43 {dimension_numbers = #tpu.dot_dimension_numbers<[1], [0], [0], [1], [0, 0, 1, 1], [], []>} : vector<4x32xf32>, vector<32x16xf32>, vector<4x16xf32> -> vector<4x16xf32>
    %72 = vector.broadcast %5 : vector<1x16xf32> to vector<4x16xf32>
    %73 = arith.addf %71, %72 : vector<4x16xf32>
    %cst_44 = arith.constant dense<0.000000e+00> : vector<4x32xf32>
    %74 = tpu.matmul %69, %24, %cst_44 {dimension_numbers = #tpu.dot_dimension_numbers<[1], [0], [0], [1], [0, 0, 1, 1], [], []>} : vector<4x32xf32>, vector<32x32xf32>, vector<4x32xf32> -> vector<4x32xf32>
    %75 = vector.broadcast %6 : vector<1x32xf32> to vector<4x32xf32>
    %76 = arith.addf %74, %75 : vector<4x32xf32>
    %cst_45 = arith.constant 0.000000e+00 : f32
    %77 = vector.broadcast %cst_45 : f32 to vector<4x32xf32>
    %78 = arith.maximumf %76, %77 : vector<4x32xf32>
    %cst_46 = arith.constant dense<0.000000e+00> : vector<4x128xf32>
    %79 = tpu.matmul %78, %25, %cst_46 {dimension_numbers = #tpu.dot_dimension_numbers<[1], [0], [0], [1], [0, 0, 1, 1], [], []>} : vector<4x32xf32>, vector<32x128xf32>, vector<4x128xf32> -> vector<4x128xf32>
    %c320 = arith.constant 320 : index
    %c0_47 = arith.constant 0 : index
    %80 = vector.load %arg2[%c320, %c0_47] : memref<352x128xf32, #tpu.memory_space<vmem>>, vector<32x128xf32>
    %cst_48 = arith.constant dense<0.000000e+00> : vector<4x128xf32>
    %81 = tpu.matmul %61, %80, %cst_48 {dimension_numbers = #tpu.dot_dimension_numbers<[1], [0], [0], [1], [0, 0, 1, 1], [], []>} : vector<4x32xf32>, vector<32x128xf32>, vector<4x128xf32> -> vector<4x128xf32>
    %82 = arith.addf %79, %81 : vector<4x128xf32>
    %83 = arith.addf %82, %31 : vector<4x128xf32>
    %84 = vector.broadcast %7 : vector<1x128xf32> to vector<4x128xf32>
    %85 = arith.addf %83, %84 : vector<4x128xf32>
    %86 = arith.negf %85 : vector<4x128xf32>
    %87 = math.exp %86 : vector<4x128xf32>
    %cst_49 = arith.constant 1.000000e+00 : f32
    %88 = vector.broadcast %cst_49 : f32 to vector<4x128xf32>
    %89 = arith.addf %88, %87 : vector<4x128xf32>
    %90 = arith.divf %88, %89 : vector<4x128xf32>
    %91 = math.tanh %85 : vector<4x128xf32>
    %92 = vector.extract_strided_slice %90 {offsets = [0, 0], sizes = [4, 32], strides = [1, 1]} : vector<4x128xf32> to vector<4x32xf32>
    %93 = vector.extract_strided_slice %90 {offsets = [0, 32], sizes = [4, 32], strides = [1, 1]} : vector<4x128xf32> to vector<4x32xf32>
    %94 = vector.extract_strided_slice %91 {offsets = [0, 64], sizes = [4, 32], strides = [1, 1]} : vector<4x128xf32> to vector<4x32xf32>
    %95 = vector.extract_strided_slice %90 {offsets = [0, 96], sizes = [4, 32], strides = [1, 1]} : vector<4x128xf32> to vector<4x32xf32>
    %96 = arith.mulf %93, %27 : vector<4x32xf32>
    %97 = arith.mulf %92, %94 : vector<4x32xf32>
    %98 = arith.addf %96, %97 : vector<4x32xf32>
    %99 = math.tanh %98 : vector<4x32xf32>
    %100 = arith.mulf %95, %99 : vector<4x32xf32>
    %c0_50 = arith.constant 0 : index
    %c16_51 = arith.constant 16 : index
    %101 = vector.load %arg1[%c0_50, %c16_51] : memref<4x128xf32, #tpu.memory_space<vmem>>, vector<4x16xf32>
    %c4_52 = arith.constant 4 : index
    %c0_53 = arith.constant 0 : index
    %102 = vector.load %arg5[%c4_52, %c0_53] : memref<32x32xf32, #tpu.memory_space<vmem>>, vector<4x32xf32>
    %cst_54 = arith.constant dense<0.000000e+00> : vector<4x96xf32>
    %103 = tpu.matmul %100, %21, %cst_54 {dimension_numbers = #tpu.dot_dimension_numbers<[1], [0], [0], [1], [0, 0, 1, 1], [], []>} : vector<4x32xf32>, vector<32x96xf32>, vector<4x96xf32> -> vector<4x96xf32>
    %cst_55 = arith.constant dense<0.000000e+00> : vector<4x128xf32>
    %104 = tpu.matmul %100, %22, %cst_55 {dimension_numbers = #tpu.dot_dimension_numbers<[1], [0], [0], [1], [0, 0, 1, 1], [], []>} : vector<4x32xf32>, vector<32x128xf32>, vector<4x128xf32> -> vector<4x128xf32>
    %105 = vector.extract_strided_slice %103 {offsets = [0, 0], sizes = [4, 32], strides = [1, 1]} : vector<4x96xf32> to vector<4x32xf32>
    %106 = arith.addf %102, %105 : vector<4x32xf32>
    %cst_56 = arith.constant 0.000000e+00 : f32
    %107 = vector.broadcast %cst_56 : f32 to vector<4x32xf32>
    %108 = arith.maximumf %106, %107 : vector<4x32xf32>
    %109 = vector.extract_strided_slice %103 {offsets = [0, 32], sizes = [4, 32], strides = [1, 1]} : vector<4x96xf32> to vector<4x32xf32>
    %110 = vector.broadcast %1 : vector<1x32xf32> to vector<4x32xf32>
    %111 = arith.addf %109, %110 : vector<4x32xf32>
    %cst_57 = arith.constant 0.000000e+00 : f32
    %112 = vector.broadcast %cst_57 : f32 to vector<4x32xf32>
    %113 = arith.maximumf %111, %112 : vector<4x32xf32>
    %114 = tpu.concatenate %108, %113 in 1 : vector<4x32xf32>, vector<4x32xf32> -> vector<4x64xf32>
    %c112_58 = arith.constant 112 : index
    %c0_59 = arith.constant 0 : index
    %115 = vector.load %arg2[%c112_58, %c0_59] : memref<352x128xf32, #tpu.memory_space<vmem>>, vector<64x64xf32>
    %cst_60 = arith.constant dense<0.000000e+00> : vector<4x64xf32>
    %116 = tpu.matmul %114, %115, %cst_60 {dimension_numbers = #tpu.dot_dimension_numbers<[1], [0], [0], [1], [0, 0, 1, 1], [], []>} : vector<4x64xf32>, vector<64x64xf32>, vector<4x64xf32> -> vector<4x64xf32>
    %117 = vector.broadcast %2 : vector<1x64xf32> to vector<4x64xf32>
    %118 = arith.addf %116, %117 : vector<4x64xf32>
    %119 = vector.extract_strided_slice %118 {offsets = [0, 0], sizes = [4, 32], strides = [1, 1]} : vector<4x64xf32> to vector<4x32xf32>
    %120 = vector.extract_strided_slice %118 {offsets = [0, 32], sizes = [4, 32], strides = [1, 1]} : vector<4x64xf32> to vector<4x32xf32>
    %121 = vector.extract_strided_slice %119 {offsets = [0, 0], sizes = [4, 16], strides = [1, 1]} : vector<4x32xf32> to vector<4x16xf32>
    %122 = vector.extract_strided_slice %119 {offsets = [0, 16], sizes = [4, 16], strides = [1, 1]} : vector<4x32xf32> to vector<4x16xf32>
    %cst_61 = arith.constant 5.000000e-01 : f32
    %123 = vector.broadcast %cst_61 : f32 to vector<4x16xf32>
    %124 = arith.mulf %123, %122 : vector<4x16xf32>
    %125 = math.exp %124 : vector<4x16xf32>
    %cst_62 = arith.constant 1.000000e+02 : f32
    %126 = vector.broadcast %cst_62 : f32 to vector<4x16xf32>
    %127 = arith.minimumf %125, %126 : vector<4x16xf32>
    %128 = arith.mulf %127, %101 : vector<4x16xf32>
    %129 = arith.addf %121, %128 : vector<4x16xf32>
    %cst_63 = arith.constant dense<0.000000e+00> : vector<4x32xf32>
    %130 = tpu.matmul %129, %23, %cst_63 {dimension_numbers = #tpu.dot_dimension_numbers<[1], [0], [0], [1], [0, 0, 1, 1], [], []>} : vector<4x16xf32>, vector<16x32xf32>, vector<4x32xf32> -> vector<4x32xf32>
    %131 = vector.broadcast %3 : vector<1x32xf32> to vector<4x32xf32>
    %132 = arith.addf %130, %131 : vector<4x32xf32>
    %cst_64 = arith.constant 0.000000e+00 : f32
    %133 = vector.broadcast %cst_64 : f32 to vector<4x32xf32>
    %134 = arith.maximumf %132, %133 : vector<4x32xf32>
    %c192_65 = arith.constant 192 : index
    %c0_66 = arith.constant 0 : index
    %135 = vector.load %arg2[%c192_65, %c0_66] : memref<352x128xf32, #tpu.memory_space<vmem>>, vector<32x32xf32>
    %cst_67 = arith.constant dense<0.000000e+00> : vector<4x32xf32>
    %136 = tpu.matmul %134, %135, %cst_67 {dimension_numbers = #tpu.dot_dimension_numbers<[1], [0], [0], [1], [0, 0, 1, 1], [], []>} : vector<4x32xf32>, vector<32x32xf32>, vector<4x32xf32> -> vector<4x32xf32>
    %137 = vector.extract_strided_slice %103 {offsets = [0, 64], sizes = [4, 32], strides = [1, 1]} : vector<4x96xf32> to vector<4x32xf32>
    %138 = arith.addf %136, %137 : vector<4x32xf32>
    %139 = vector.broadcast %4 : vector<1x32xf32> to vector<4x32xf32>
    %140 = arith.addf %138, %139 : vector<4x32xf32>
    %cst_68 = arith.constant 0.000000e+00 : f32
    %141 = vector.broadcast %cst_68 : f32 to vector<4x32xf32>
    %142 = arith.maximumf %140, %141 : vector<4x32xf32>
    %c224_69 = arith.constant 224 : index
    %c0_70 = arith.constant 0 : index
    %143 = vector.load %arg2[%c224_69, %c0_70] : memref<352x128xf32, #tpu.memory_space<vmem>>, vector<32x16xf32>
    %cst_71 = arith.constant dense<0.000000e+00> : vector<4x16xf32>
    %144 = tpu.matmul %142, %143, %cst_71 {dimension_numbers = #tpu.dot_dimension_numbers<[1], [0], [0], [1], [0, 0, 1, 1], [], []>} : vector<4x32xf32>, vector<32x16xf32>, vector<4x16xf32> -> vector<4x16xf32>
    %145 = vector.broadcast %5 : vector<1x16xf32> to vector<4x16xf32>
    %146 = arith.addf %144, %145 : vector<4x16xf32>
    %cst_72 = arith.constant dense<0.000000e+00> : vector<4x32xf32>
    %147 = tpu.matmul %142, %24, %cst_72 {dimension_numbers = #tpu.dot_dimension_numbers<[1], [0], [0], [1], [0, 0, 1, 1], [], []>} : vector<4x32xf32>, vector<32x32xf32>, vector<4x32xf32> -> vector<4x32xf32>
    %148 = vector.broadcast %6 : vector<1x32xf32> to vector<4x32xf32>
    %149 = arith.addf %147, %148 : vector<4x32xf32>
    %cst_73 = arith.constant 0.000000e+00 : f32
    %150 = vector.broadcast %cst_73 : f32 to vector<4x32xf32>
    %151 = arith.maximumf %149, %150 : vector<4x32xf32>
    %cst_74 = arith.constant dense<0.000000e+00> : vector<4x128xf32>
    %152 = tpu.matmul %151, %25, %cst_74 {dimension_numbers = #tpu.dot_dimension_numbers<[1], [0], [0], [1], [0, 0, 1, 1], [], []>} : vector<4x32xf32>, vector<32x128xf32>, vector<4x128xf32> -> vector<4x128xf32>
    %c320_75 = arith.constant 320 : index
    %c0_76 = arith.constant 0 : index
    %153 = vector.load %arg2[%c320_75, %c0_76] : memref<352x128xf32, #tpu.memory_space<vmem>>, vector<32x128xf32>
    %cst_77 = arith.constant dense<0.000000e+00> : vector<4x128xf32>
    %154 = tpu.matmul %134, %153, %cst_77 {dimension_numbers = #tpu.dot_dimension_numbers<[1], [0], [0], [1], [0, 0, 1, 1], [], []>} : vector<4x32xf32>, vector<32x128xf32>, vector<4x128xf32> -> vector<4x128xf32>
    %155 = arith.addf %152, %154 : vector<4x128xf32>
    %156 = arith.addf %155, %104 : vector<4x128xf32>
    %157 = vector.broadcast %7 : vector<1x128xf32> to vector<4x128xf32>
    %158 = arith.addf %156, %157 : vector<4x128xf32>
    %159 = arith.negf %158 : vector<4x128xf32>
    %160 = math.exp %159 : vector<4x128xf32>
    %cst_78 = arith.constant 1.000000e+00 : f32
    %161 = vector.broadcast %cst_78 : f32 to vector<4x128xf32>
    %162 = arith.addf %161, %160 : vector<4x128xf32>
    %163 = arith.divf %161, %162 : vector<4x128xf32>
    %164 = math.tanh %158 : vector<4x128xf32>
    %165 = vector.extract_strided_slice %163 {offsets = [0, 0], sizes = [4, 32], strides = [1, 1]} : vector<4x128xf32> to vector<4x32xf32>
    %166 = vector.extract_strided_slice %163 {offsets = [0, 32], sizes = [4, 32], strides = [1, 1]} : vector<4x128xf32> to vector<4x32xf32>
    %167 = vector.extract_strided_slice %164 {offsets = [0, 64], sizes = [4, 32], strides = [1, 1]} : vector<4x128xf32> to vector<4x32xf32>
    %168 = vector.extract_strided_slice %163 {offsets = [0, 96], sizes = [4, 32], strides = [1, 1]} : vector<4x128xf32> to vector<4x32xf32>
    %169 = arith.mulf %166, %98 : vector<4x32xf32>
    %170 = arith.mulf %165, %167 : vector<4x32xf32>
    %171 = arith.addf %169, %170 : vector<4x32xf32>
    %172 = math.tanh %171 : vector<4x32xf32>
    %173 = arith.mulf %168, %172 : vector<4x32xf32>
    %c0_79 = arith.constant 0 : index
    %c32 = arith.constant 32 : index
    %174 = vector.load %arg1[%c0_79, %c32] : memref<4x128xf32, #tpu.memory_space<vmem>>, vector<4x16xf32>
    %c8_80 = arith.constant 8 : index
    %c0_81 = arith.constant 0 : index
    %175 = vector.load %arg5[%c8_80, %c0_81] : memref<32x32xf32, #tpu.memory_space<vmem>>, vector<4x32xf32>
    %cst_82 = arith.constant dense<0.000000e+00> : vector<4x96xf32>
    %176 = tpu.matmul %173, %21, %cst_82 {dimension_numbers = #tpu.dot_dimension_numbers<[1], [0], [0], [1], [0, 0, 1, 1], [], []>} : vector<4x32xf32>, vector<32x96xf32>, vector<4x96xf32> -> vector<4x96xf32>
    %cst_83 = arith.constant dense<0.000000e+00> : vector<4x128xf32>
    %177 = tpu.matmul %173, %22, %cst_83 {dimension_numbers = #tpu.dot_dimension_numbers<[1], [0], [0], [1], [0, 0, 1, 1], [], []>} : vector<4x32xf32>, vector<32x128xf32>, vector<4x128xf32> -> vector<4x128xf32>
    %178 = vector.extract_strided_slice %176 {offsets = [0, 0], sizes = [4, 32], strides = [1, 1]} : vector<4x96xf32> to vector<4x32xf32>
    %179 = arith.addf %175, %178 : vector<4x32xf32>
    %cst_84 = arith.constant 0.000000e+00 : f32
    %180 = vector.broadcast %cst_84 : f32 to vector<4x32xf32>
    %181 = arith.maximumf %179, %180 : vector<4x32xf32>
    %182 = vector.extract_strided_slice %176 {offsets = [0, 32], sizes = [4, 32], strides = [1, 1]} : vector<4x96xf32> to vector<4x32xf32>
    %183 = vector.broadcast %1 : vector<1x32xf32> to vector<4x32xf32>
    %184 = arith.addf %182, %183 : vector<4x32xf32>
    %cst_85 = arith.constant 0.000000e+00 : f32
    %185 = vector.broadcast %cst_85 : f32 to vector<4x32xf32>
    %186 = arith.maximumf %184, %185 : vector<4x32xf32>
    %187 = tpu.concatenate %181, %186 in 1 : vector<4x32xf32>, vector<4x32xf32> -> vector<4x64xf32>
    %c112_86 = arith.constant 112 : index
    %c0_87 = arith.constant 0 : index
    %188 = vector.load %arg2[%c112_86, %c0_87] : memref<352x128xf32, #tpu.memory_space<vmem>>, vector<64x64xf32>
    %cst_88 = arith.constant dense<0.000000e+00> : vector<4x64xf32>
    %189 = tpu.matmul %187, %188, %cst_88 {dimension_numbers = #tpu.dot_dimension_numbers<[1], [0], [0], [1], [0, 0, 1, 1], [], []>} : vector<4x64xf32>, vector<64x64xf32>, vector<4x64xf32> -> vector<4x64xf32>
    %190 = vector.broadcast %2 : vector<1x64xf32> to vector<4x64xf32>
    %191 = arith.addf %189, %190 : vector<4x64xf32>
    %192 = vector.extract_strided_slice %191 {offsets = [0, 0], sizes = [4, 32], strides = [1, 1]} : vector<4x64xf32> to vector<4x32xf32>
    %193 = vector.extract_strided_slice %191 {offsets = [0, 32], sizes = [4, 32], strides = [1, 1]} : vector<4x64xf32> to vector<4x32xf32>
    %194 = vector.extract_strided_slice %192 {offsets = [0, 0], sizes = [4, 16], strides = [1, 1]} : vector<4x32xf32> to vector<4x16xf32>
    %195 = vector.extract_strided_slice %192 {offsets = [0, 16], sizes = [4, 16], strides = [1, 1]} : vector<4x32xf32> to vector<4x16xf32>
    %cst_89 = arith.constant 5.000000e-01 : f32
    %196 = vector.broadcast %cst_89 : f32 to vector<4x16xf32>
    %197 = arith.mulf %196, %195 : vector<4x16xf32>
    %198 = math.exp %197 : vector<4x16xf32>
    %cst_90 = arith.constant 1.000000e+02 : f32
    %199 = vector.broadcast %cst_90 : f32 to vector<4x16xf32>
    %200 = arith.minimumf %198, %199 : vector<4x16xf32>
    %201 = arith.mulf %200, %174 : vector<4x16xf32>
    %202 = arith.addf %194, %201 : vector<4x16xf32>
    %cst_91 = arith.constant dense<0.000000e+00> : vector<4x32xf32>
    %203 = tpu.matmul %202, %23, %cst_91 {dimension_numbers = #tpu.dot_dimension_numbers<[1], [0], [0], [1], [0, 0, 1, 1], [], []>} : vector<4x16xf32>, vector<16x32xf32>, vector<4x32xf32> -> vector<4x32xf32>
    %204 = vector.broadcast %3 : vector<1x32xf32> to vector<4x32xf32>
    %205 = arith.addf %203, %204 : vector<4x32xf32>
    %cst_92 = arith.constant 0.000000e+00 : f32
    %206 = vector.broadcast %cst_92 : f32 to vector<4x32xf32>
    %207 = arith.maximumf %205, %206 : vector<4x32xf32>
    %c192_93 = arith.constant 192 : index
    %c0_94 = arith.constant 0 : index
    %208 = vector.load %arg2[%c192_93, %c0_94] : memref<352x128xf32, #tpu.memory_space<vmem>>, vector<32x32xf32>
    %cst_95 = arith.constant dense<0.000000e+00> : vector<4x32xf32>
    %209 = tpu.matmul %207, %208, %cst_95 {dimension_numbers = #tpu.dot_dimension_numbers<[1], [0], [0], [1], [0, 0, 1, 1], [], []>} : vector<4x32xf32>, vector<32x32xf32>, vector<4x32xf32> -> vector<4x32xf32>
    %210 = vector.extract_strided_slice %176 {offsets = [0, 64], sizes = [4, 32], strides = [1, 1]} : vector<4x96xf32> to vector<4x32xf32>
    %211 = arith.addf %209, %210 : vector<4x32xf32>
    %212 = vector.broadcast %4 : vector<1x32xf32> to vector<4x32xf32>
    %213 = arith.addf %211, %212 : vector<4x32xf32>
    %cst_96 = arith.constant 0.000000e+00 : f32
    %214 = vector.broadcast %cst_96 : f32 to vector<4x32xf32>
    %215 = arith.maximumf %213, %214 : vector<4x32xf32>
    %c224_97 = arith.constant 224 : index
    %c0_98 = arith.constant 0 : index
    %216 = vector.load %arg2[%c224_97, %c0_98] : memref<352x128xf32, #tpu.memory_space<vmem>>, vector<32x16xf32>
    %cst_99 = arith.constant dense<0.000000e+00> : vector<4x16xf32>
    %217 = tpu.matmul %215, %216, %cst_99 {dimension_numbers = #tpu.dot_dimension_numbers<[1], [0], [0], [1], [0, 0, 1, 1], [], []>} : vector<4x32xf32>, vector<32x16xf32>, vector<4x16xf32> -> vector<4x16xf32>
    %218 = vector.broadcast %5 : vector<1x16xf32> to vector<4x16xf32>
    %219 = arith.addf %217, %218 : vector<4x16xf32>
    %cst_100 = arith.constant dense<0.000000e+00> : vector<4x32xf32>
    %220 = tpu.matmul %215, %24, %cst_100 {dimension_numbers = #tpu.dot_dimension_numbers<[1], [0], [0], [1], [0, 0, 1, 1], [], []>} : vector<4x32xf32>, vector<32x32xf32>, vector<4x32xf32> -> vector<4x32xf32>
    %221 = vector.broadcast %6 : vector<1x32xf32> to vector<4x32xf32>
    %222 = arith.addf %220, %221 : vector<4x32xf32>
    %cst_101 = arith.constant 0.000000e+00 : f32
    %223 = vector.broadcast %cst_101 : f32 to vector<4x32xf32>
    %224 = arith.maximumf %222, %223 : vector<4x32xf32>
    %cst_102 = arith.constant dense<0.000000e+00> : vector<4x128xf32>
    %225 = tpu.matmul %224, %25, %cst_102 {dimension_numbers = #tpu.dot_dimension_numbers<[1], [0], [0], [1], [0, 0, 1, 1], [], []>} : vector<4x32xf32>, vector<32x128xf32>, vector<4x128xf32> -> vector<4x128xf32>
    %c320_103 = arith.constant 320 : index
    %c0_104 = arith.constant 0 : index
    %226 = vector.load %arg2[%c320_103, %c0_104] : memref<352x128xf32, #tpu.memory_space<vmem>>, vector<32x128xf32>
    %cst_105 = arith.constant dense<0.000000e+00> : vector<4x128xf32>
    %227 = tpu.matmul %207, %226, %cst_105 {dimension_numbers = #tpu.dot_dimension_numbers<[1], [0], [0], [1], [0, 0, 1, 1], [], []>} : vector<4x32xf32>, vector<32x128xf32>, vector<4x128xf32> -> vector<4x128xf32>
    %228 = arith.addf %225, %227 : vector<4x128xf32>
    %229 = arith.addf %228, %177 : vector<4x128xf32>
    %230 = vector.broadcast %7 : vector<1x128xf32> to vector<4x128xf32>
    %231 = arith.addf %229, %230 : vector<4x128xf32>
    %232 = arith.negf %231 : vector<4x128xf32>
    %233 = math.exp %232 : vector<4x128xf32>
    %cst_106 = arith.constant 1.000000e+00 : f32
    %234 = vector.broadcast %cst_106 : f32 to vector<4x128xf32>
    %235 = arith.addf %234, %233 : vector<4x128xf32>
    %236 = arith.divf %234, %235 : vector<4x128xf32>
    %237 = math.tanh %231 : vector<4x128xf32>
    %238 = vector.extract_strided_slice %236 {offsets = [0, 0], sizes = [4, 32], strides = [1, 1]} : vector<4x128xf32> to vector<4x32xf32>
    %239 = vector.extract_strided_slice %236 {offsets = [0, 32], sizes = [4, 32], strides = [1, 1]} : vector<4x128xf32> to vector<4x32xf32>
    %240 = vector.extract_strided_slice %237 {offsets = [0, 64], sizes = [4, 32], strides = [1, 1]} : vector<4x128xf32> to vector<4x32xf32>
    %241 = vector.extract_strided_slice %236 {offsets = [0, 96], sizes = [4, 32], strides = [1, 1]} : vector<4x128xf32> to vector<4x32xf32>
    %242 = arith.mulf %239, %171 : vector<4x32xf32>
    %243 = arith.mulf %238, %240 : vector<4x32xf32>
    %244 = arith.addf %242, %243 : vector<4x32xf32>
    %245 = math.tanh %244 : vector<4x32xf32>
    %246 = arith.mulf %241, %245 : vector<4x32xf32>
    %c0_107 = arith.constant 0 : index
    %c48_108 = arith.constant 48 : index
    %247 = vector.load %arg1[%c0_107, %c48_108] : memref<4x128xf32, #tpu.memory_space<vmem>>, vector<4x16xf32>
    %c12 = arith.constant 12 : index
    %c0_109 = arith.constant 0 : index
    %248 = vector.load %arg5[%c12, %c0_109] : memref<32x32xf32, #tpu.memory_space<vmem>>, vector<4x32xf32>
    %cst_110 = arith.constant dense<0.000000e+00> : vector<4x96xf32>
    %249 = tpu.matmul %246, %21, %cst_110 {dimension_numbers = #tpu.dot_dimension_numbers<[1], [0], [0], [1], [0, 0, 1, 1], [], []>} : vector<4x32xf32>, vector<32x96xf32>, vector<4x96xf32> -> vector<4x96xf32>
    %cst_111 = arith.constant dense<0.000000e+00> : vector<4x128xf32>
    %250 = tpu.matmul %246, %22, %cst_111 {dimension_numbers = #tpu.dot_dimension_numbers<[1], [0], [0], [1], [0, 0, 1, 1], [], []>} : vector<4x32xf32>, vector<32x128xf32>, vector<4x128xf32> -> vector<4x128xf32>
    %251 = vector.extract_strided_slice %249 {offsets = [0, 0], sizes = [4, 32], strides = [1, 1]} : vector<4x96xf32> to vector<4x32xf32>
    %252 = arith.addf %248, %251 : vector<4x32xf32>
    %cst_112 = arith.constant 0.000000e+00 : f32
    %253 = vector.broadcast %cst_112 : f32 to vector<4x32xf32>
    %254 = arith.maximumf %252, %253 : vector<4x32xf32>
    %255 = vector.extract_strided_slice %249 {offsets = [0, 32], sizes = [4, 32], strides = [1, 1]} : vector<4x96xf32> to vector<4x32xf32>
    %256 = vector.broadcast %1 : vector<1x32xf32> to vector<4x32xf32>
    %257 = arith.addf %255, %256 : vector<4x32xf32>
    %cst_113 = arith.constant 0.000000e+00 : f32
    %258 = vector.broadcast %cst_113 : f32 to vector<4x32xf32>
    %259 = arith.maximumf %257, %258 : vector<4x32xf32>
    %260 = tpu.concatenate %254, %259 in 1 : vector<4x32xf32>, vector<4x32xf32> -> vector<4x64xf32>
    %c112_114 = arith.constant 112 : index
    %c0_115 = arith.constant 0 : index
    %261 = vector.load %arg2[%c112_114, %c0_115] : memref<352x128xf32, #tpu.memory_space<vmem>>, vector<64x64xf32>
    %cst_116 = arith.constant dense<0.000000e+00> : vector<4x64xf32>
    %262 = tpu.matmul %260, %261, %cst_116 {dimension_numbers = #tpu.dot_dimension_numbers<[1], [0], [0], [1], [0, 0, 1, 1], [], []>} : vector<4x64xf32>, vector<64x64xf32>, vector<4x64xf32> -> vector<4x64xf32>
    %263 = vector.broadcast %2 : vector<1x64xf32> to vector<4x64xf32>
    %264 = arith.addf %262, %263 : vector<4x64xf32>
    %265 = vector.extract_strided_slice %264 {offsets = [0, 0], sizes = [4, 32], strides = [1, 1]} : vector<4x64xf32> to vector<4x32xf32>
    %266 = vector.extract_strided_slice %264 {offsets = [0, 32], sizes = [4, 32], strides = [1, 1]} : vector<4x64xf32> to vector<4x32xf32>
    %267 = vector.extract_strided_slice %265 {offsets = [0, 0], sizes = [4, 16], strides = [1, 1]} : vector<4x32xf32> to vector<4x16xf32>
    %268 = vector.extract_strided_slice %265 {offsets = [0, 16], sizes = [4, 16], strides = [1, 1]} : vector<4x32xf32> to vector<4x16xf32>
    %cst_117 = arith.constant 5.000000e-01 : f32
    %269 = vector.broadcast %cst_117 : f32 to vector<4x16xf32>
    %270 = arith.mulf %269, %268 : vector<4x16xf32>
    %271 = math.exp %270 : vector<4x16xf32>
    %cst_118 = arith.constant 1.000000e+02 : f32
    %272 = vector.broadcast %cst_118 : f32 to vector<4x16xf32>
    %273 = arith.minimumf %271, %272 : vector<4x16xf32>
    %274 = arith.mulf %273, %247 : vector<4x16xf32>
    %275 = arith.addf %267, %274 : vector<4x16xf32>
    %cst_119 = arith.constant dense<0.000000e+00> : vector<4x32xf32>
    %276 = tpu.matmul %275, %23, %cst_119 {dimension_numbers = #tpu.dot_dimension_numbers<[1], [0], [0], [1], [0, 0, 1, 1], [], []>} : vector<4x16xf32>, vector<16x32xf32>, vector<4x32xf32> -> vector<4x32xf32>
    %277 = vector.broadcast %3 : vector<1x32xf32> to vector<4x32xf32>
    %278 = arith.addf %276, %277 : vector<4x32xf32>
    %cst_120 = arith.constant 0.000000e+00 : f32
    %279 = vector.broadcast %cst_120 : f32 to vector<4x32xf32>
    %280 = arith.maximumf %278, %279 : vector<4x32xf32>
    %c192_121 = arith.constant 192 : index
    %c0_122 = arith.constant 0 : index
    %281 = vector.load %arg2[%c192_121, %c0_122] : memref<352x128xf32, #tpu.memory_space<vmem>>, vector<32x32xf32>
    %cst_123 = arith.constant dense<0.000000e+00> : vector<4x32xf32>
    %282 = tpu.matmul %280, %281, %cst_123 {dimension_numbers = #tpu.dot_dimension_numbers<[1], [0], [0], [1], [0, 0, 1, 1], [], []>} : vector<4x32xf32>, vector<32x32xf32>, vector<4x32xf32> -> vector<4x32xf32>
    %283 = vector.extract_strided_slice %249 {offsets = [0, 64], sizes = [4, 32], strides = [1, 1]} : vector<4x96xf32> to vector<4x32xf32>
    %284 = arith.addf %282, %283 : vector<4x32xf32>
    %285 = vector.broadcast %4 : vector<1x32xf32> to vector<4x32xf32>
    %286 = arith.addf %284, %285 : vector<4x32xf32>
    %cst_124 = arith.constant 0.000000e+00 : f32
    %287 = vector.broadcast %cst_124 : f32 to vector<4x32xf32>
    %288 = arith.maximumf %286, %287 : vector<4x32xf32>
    %c224_125 = arith.constant 224 : index
    %c0_126 = arith.constant 0 : index
    %289 = vector.load %arg2[%c224_125, %c0_126] : memref<352x128xf32, #tpu.memory_space<vmem>>, vector<32x16xf32>
    %cst_127 = arith.constant dense<0.000000e+00> : vector<4x16xf32>
    %290 = tpu.matmul %288, %289, %cst_127 {dimension_numbers = #tpu.dot_dimension_numbers<[1], [0], [0], [1], [0, 0, 1, 1], [], []>} : vector<4x32xf32>, vector<32x16xf32>, vector<4x16xf32> -> vector<4x16xf32>
    %291 = vector.broadcast %5 : vector<1x16xf32> to vector<4x16xf32>
    %292 = arith.addf %290, %291 : vector<4x16xf32>
    %cst_128 = arith.constant dense<0.000000e+00> : vector<4x32xf32>
    %293 = tpu.matmul %288, %24, %cst_128 {dimension_numbers = #tpu.dot_dimension_numbers<[1], [0], [0], [1], [0, 0, 1, 1], [], []>} : vector<4x32xf32>, vector<32x32xf32>, vector<4x32xf32> -> vector<4x32xf32>
    %294 = vector.broadcast %6 : vector<1x32xf32> to vector<4x32xf32>
    %295 = arith.addf %293, %294 : vector<4x32xf32>
    %cst_129 = arith.constant 0.000000e+00 : f32
    %296 = vector.broadcast %cst_129 : f32 to vector<4x32xf32>
    %297 = arith.maximumf %295, %296 : vector<4x32xf32>
    %cst_130 = arith.constant dense<0.000000e+00> : vector<4x128xf32>
    %298 = tpu.matmul %297, %25, %cst_130 {dimension_numbers = #tpu.dot_dimension_numbers<[1], [0], [0], [1], [0, 0, 1, 1], [], []>} : vector<4x32xf32>, vector<32x128xf32>, vector<4x128xf32> -> vector<4x128xf32>
    %c320_131 = arith.constant 320 : index
    %c0_132 = arith.constant 0 : index
    %299 = vector.load %arg2[%c320_131, %c0_132] : memref<352x128xf32, #tpu.memory_space<vmem>>, vector<32x128xf32>
    %cst_133 = arith.constant dense<0.000000e+00> : vector<4x128xf32>
    %300 = tpu.matmul %280, %299, %cst_133 {dimension_numbers = #tpu.dot_dimension_numbers<[1], [0], [0], [1], [0, 0, 1, 1], [], []>} : vector<4x32xf32>, vector<32x128xf32>, vector<4x128xf32> -> vector<4x128xf32>
    %301 = arith.addf %298, %300 : vector<4x128xf32>
    %302 = arith.addf %301, %250 : vector<4x128xf32>
    %303 = vector.broadcast %7 : vector<1x128xf32> to vector<4x128xf32>
    %304 = arith.addf %302, %303 : vector<4x128xf32>
    %305 = arith.negf %304 : vector<4x128xf32>
    %306 = math.exp %305 : vector<4x128xf32>
    %cst_134 = arith.constant 1.000000e+00 : f32
    %307 = vector.broadcast %cst_134 : f32 to vector<4x128xf32>
    %308 = arith.addf %307, %306 : vector<4x128xf32>
    %309 = arith.divf %307, %308 : vector<4x128xf32>
    %310 = math.tanh %304 : vector<4x128xf32>
    %311 = vector.extract_strided_slice %309 {offsets = [0, 0], sizes = [4, 32], strides = [1, 1]} : vector<4x128xf32> to vector<4x32xf32>
    %312 = vector.extract_strided_slice %309 {offsets = [0, 32], sizes = [4, 32], strides = [1, 1]} : vector<4x128xf32> to vector<4x32xf32>
    %313 = vector.extract_strided_slice %310 {offsets = [0, 64], sizes = [4, 32], strides = [1, 1]} : vector<4x128xf32> to vector<4x32xf32>
    %314 = vector.extract_strided_slice %309 {offsets = [0, 96], sizes = [4, 32], strides = [1, 1]} : vector<4x128xf32> to vector<4x32xf32>
    %315 = arith.mulf %312, %244 : vector<4x32xf32>
    %316 = arith.mulf %311, %313 : vector<4x32xf32>
    %317 = arith.addf %315, %316 : vector<4x32xf32>
    %318 = math.tanh %317 : vector<4x32xf32>
    %319 = arith.mulf %314, %318 : vector<4x32xf32>
    %c0_135 = arith.constant 0 : index
    %c64 = arith.constant 64 : index
    %320 = vector.load %arg1[%c0_135, %c64] : memref<4x128xf32, #tpu.memory_space<vmem>>, vector<4x16xf32>
    %c16_136 = arith.constant 16 : index
    %c0_137 = arith.constant 0 : index
    %321 = vector.load %arg5[%c16_136, %c0_137] : memref<32x32xf32, #tpu.memory_space<vmem>>, vector<4x32xf32>
    %cst_138 = arith.constant dense<0.000000e+00> : vector<4x96xf32>
    %322 = tpu.matmul %319, %21, %cst_138 {dimension_numbers = #tpu.dot_dimension_numbers<[1], [0], [0], [1], [0, 0, 1, 1], [], []>} : vector<4x32xf32>, vector<32x96xf32>, vector<4x96xf32> -> vector<4x96xf32>
    %cst_139 = arith.constant dense<0.000000e+00> : vector<4x128xf32>
    %323 = tpu.matmul %319, %22, %cst_139 {dimension_numbers = #tpu.dot_dimension_numbers<[1], [0], [0], [1], [0, 0, 1, 1], [], []>} : vector<4x32xf32>, vector<32x128xf32>, vector<4x128xf32> -> vector<4x128xf32>
    %324 = vector.extract_strided_slice %322 {offsets = [0, 0], sizes = [4, 32], strides = [1, 1]} : vector<4x96xf32> to vector<4x32xf32>
    %325 = arith.addf %321, %324 : vector<4x32xf32>
    %cst_140 = arith.constant 0.000000e+00 : f32
    %326 = vector.broadcast %cst_140 : f32 to vector<4x32xf32>
    %327 = arith.maximumf %325, %326 : vector<4x32xf32>
    %328 = vector.extract_strided_slice %322 {offsets = [0, 32], sizes = [4, 32], strides = [1, 1]} : vector<4x96xf32> to vector<4x32xf32>
    %329 = vector.broadcast %1 : vector<1x32xf32> to vector<4x32xf32>
    %330 = arith.addf %328, %329 : vector<4x32xf32>
    %cst_141 = arith.constant 0.000000e+00 : f32
    %331 = vector.broadcast %cst_141 : f32 to vector<4x32xf32>
    %332 = arith.maximumf %330, %331 : vector<4x32xf32>
    %333 = tpu.concatenate %327, %332 in 1 : vector<4x32xf32>, vector<4x32xf32> -> vector<4x64xf32>
    %c112_142 = arith.constant 112 : index
    %c0_143 = arith.constant 0 : index
    %334 = vector.load %arg2[%c112_142, %c0_143] : memref<352x128xf32, #tpu.memory_space<vmem>>, vector<64x64xf32>
    %cst_144 = arith.constant dense<0.000000e+00> : vector<4x64xf32>
    %335 = tpu.matmul %333, %334, %cst_144 {dimension_numbers = #tpu.dot_dimension_numbers<[1], [0], [0], [1], [0, 0, 1, 1], [], []>} : vector<4x64xf32>, vector<64x64xf32>, vector<4x64xf32> -> vector<4x64xf32>
    %336 = vector.broadcast %2 : vector<1x64xf32> to vector<4x64xf32>
    %337 = arith.addf %335, %336 : vector<4x64xf32>
    %338 = vector.extract_strided_slice %337 {offsets = [0, 0], sizes = [4, 32], strides = [1, 1]} : vector<4x64xf32> to vector<4x32xf32>
    %339 = vector.extract_strided_slice %337 {offsets = [0, 32], sizes = [4, 32], strides = [1, 1]} : vector<4x64xf32> to vector<4x32xf32>
    %340 = vector.extract_strided_slice %338 {offsets = [0, 0], sizes = [4, 16], strides = [1, 1]} : vector<4x32xf32> to vector<4x16xf32>
    %341 = vector.extract_strided_slice %338 {offsets = [0, 16], sizes = [4, 16], strides = [1, 1]} : vector<4x32xf32> to vector<4x16xf32>
    %cst_145 = arith.constant 5.000000e-01 : f32
    %342 = vector.broadcast %cst_145 : f32 to vector<4x16xf32>
    %343 = arith.mulf %342, %341 : vector<4x16xf32>
    %344 = math.exp %343 : vector<4x16xf32>
    %cst_146 = arith.constant 1.000000e+02 : f32
    %345 = vector.broadcast %cst_146 : f32 to vector<4x16xf32>
    %346 = arith.minimumf %344, %345 : vector<4x16xf32>
    %347 = arith.mulf %346, %320 : vector<4x16xf32>
    %348 = arith.addf %340, %347 : vector<4x16xf32>
    %cst_147 = arith.constant dense<0.000000e+00> : vector<4x32xf32>
    %349 = tpu.matmul %348, %23, %cst_147 {dimension_numbers = #tpu.dot_dimension_numbers<[1], [0], [0], [1], [0, 0, 1, 1], [], []>} : vector<4x16xf32>, vector<16x32xf32>, vector<4x32xf32> -> vector<4x32xf32>
    %350 = vector.broadcast %3 : vector<1x32xf32> to vector<4x32xf32>
    %351 = arith.addf %349, %350 : vector<4x32xf32>
    %cst_148 = arith.constant 0.000000e+00 : f32
    %352 = vector.broadcast %cst_148 : f32 to vector<4x32xf32>
    %353 = arith.maximumf %351, %352 : vector<4x32xf32>
    %c192_149 = arith.constant 192 : index
    %c0_150 = arith.constant 0 : index
    %354 = vector.load %arg2[%c192_149, %c0_150] : memref<352x128xf32, #tpu.memory_space<vmem>>, vector<32x32xf32>
    %cst_151 = arith.constant dense<0.000000e+00> : vector<4x32xf32>
    %355 = tpu.matmul %353, %354, %cst_151 {dimension_numbers = #tpu.dot_dimension_numbers<[1], [0], [0], [1], [0, 0, 1, 1], [], []>} : vector<4x32xf32>, vector<32x32xf32>, vector<4x32xf32> -> vector<4x32xf32>
    %356 = vector.extract_strided_slice %322 {offsets = [0, 64], sizes = [4, 32], strides = [1, 1]} : vector<4x96xf32> to vector<4x32xf32>
    %357 = arith.addf %355, %356 : vector<4x32xf32>
    %358 = vector.broadcast %4 : vector<1x32xf32> to vector<4x32xf32>
    %359 = arith.addf %357, %358 : vector<4x32xf32>
    %cst_152 = arith.constant 0.000000e+00 : f32
    %360 = vector.broadcast %cst_152 : f32 to vector<4x32xf32>
    %361 = arith.maximumf %359, %360 : vector<4x32xf32>
    %c224_153 = arith.constant 224 : index
    %c0_154 = arith.constant 0 : index
    %362 = vector.load %arg2[%c224_153, %c0_154] : memref<352x128xf32, #tpu.memory_space<vmem>>, vector<32x16xf32>
    %cst_155 = arith.constant dense<0.000000e+00> : vector<4x16xf32>
    %363 = tpu.matmul %361, %362, %cst_155 {dimension_numbers = #tpu.dot_dimension_numbers<[1], [0], [0], [1], [0, 0, 1, 1], [], []>} : vector<4x32xf32>, vector<32x16xf32>, vector<4x16xf32> -> vector<4x16xf32>
    %364 = vector.broadcast %5 : vector<1x16xf32> to vector<4x16xf32>
    %365 = arith.addf %363, %364 : vector<4x16xf32>
    %cst_156 = arith.constant dense<0.000000e+00> : vector<4x32xf32>
    %366 = tpu.matmul %361, %24, %cst_156 {dimension_numbers = #tpu.dot_dimension_numbers<[1], [0], [0], [1], [0, 0, 1, 1], [], []>} : vector<4x32xf32>, vector<32x32xf32>, vector<4x32xf32> -> vector<4x32xf32>
    %367 = vector.broadcast %6 : vector<1x32xf32> to vector<4x32xf32>
    %368 = arith.addf %366, %367 : vector<4x32xf32>
    %cst_157 = arith.constant 0.000000e+00 : f32
    %369 = vector.broadcast %cst_157 : f32 to vector<4x32xf32>
    %370 = arith.maximumf %368, %369 : vector<4x32xf32>
    %cst_158 = arith.constant dense<0.000000e+00> : vector<4x128xf32>
    %371 = tpu.matmul %370, %25, %cst_158 {dimension_numbers = #tpu.dot_dimension_numbers<[1], [0], [0], [1], [0, 0, 1, 1], [], []>} : vector<4x32xf32>, vector<32x128xf32>, vector<4x128xf32> -> vector<4x128xf32>
    %c320_159 = arith.constant 320 : index
    %c0_160 = arith.constant 0 : index
    %372 = vector.load %arg2[%c320_159, %c0_160] : memref<352x128xf32, #tpu.memory_space<vmem>>, vector<32x128xf32>
    %cst_161 = arith.constant dense<0.000000e+00> : vector<4x128xf32>
    %373 = tpu.matmul %353, %372, %cst_161 {dimension_numbers = #tpu.dot_dimension_numbers<[1], [0], [0], [1], [0, 0, 1, 1], [], []>} : vector<4x32xf32>, vector<32x128xf32>, vector<4x128xf32> -> vector<4x128xf32>
    %374 = arith.addf %371, %373 : vector<4x128xf32>
    %375 = arith.addf %374, %323 : vector<4x128xf32>
    %376 = vector.broadcast %7 : vector<1x128xf32> to vector<4x128xf32>
    %377 = arith.addf %375, %376 : vector<4x128xf32>
    %378 = arith.negf %377 : vector<4x128xf32>
    %379 = math.exp %378 : vector<4x128xf32>
    %cst_162 = arith.constant 1.000000e+00 : f32
    %380 = vector.broadcast %cst_162 : f32 to vector<4x128xf32>
    %381 = arith.addf %380, %379 : vector<4x128xf32>
    %382 = arith.divf %380, %381 : vector<4x128xf32>
    %383 = math.tanh %377 : vector<4x128xf32>
    %384 = vector.extract_strided_slice %382 {offsets = [0, 0], sizes = [4, 32], strides = [1, 1]} : vector<4x128xf32> to vector<4x32xf32>
    %385 = vector.extract_strided_slice %382 {offsets = [0, 32], sizes = [4, 32], strides = [1, 1]} : vector<4x128xf32> to vector<4x32xf32>
    %386 = vector.extract_strided_slice %383 {offsets = [0, 64], sizes = [4, 32], strides = [1, 1]} : vector<4x128xf32> to vector<4x32xf32>
    %387 = vector.extract_strided_slice %382 {offsets = [0, 96], sizes = [4, 32], strides = [1, 1]} : vector<4x128xf32> to vector<4x32xf32>
    %388 = arith.mulf %385, %317 : vector<4x32xf32>
    %389 = arith.mulf %384, %386 : vector<4x32xf32>
    %390 = arith.addf %388, %389 : vector<4x32xf32>
    %391 = math.tanh %390 : vector<4x32xf32>
    %392 = arith.mulf %387, %391 : vector<4x32xf32>
    %c0_163 = arith.constant 0 : index
    %c80_164 = arith.constant 80 : index
    %393 = vector.load %arg1[%c0_163, %c80_164] : memref<4x128xf32, #tpu.memory_space<vmem>>, vector<4x16xf32>
    %c20 = arith.constant 20 : index
    %c0_165 = arith.constant 0 : index
    %394 = vector.load %arg5[%c20, %c0_165] : memref<32x32xf32, #tpu.memory_space<vmem>>, vector<4x32xf32>
    %cst_166 = arith.constant dense<0.000000e+00> : vector<4x96xf32>
    %395 = tpu.matmul %392, %21, %cst_166 {dimension_numbers = #tpu.dot_dimension_numbers<[1], [0], [0], [1], [0, 0, 1, 1], [], []>} : vector<4x32xf32>, vector<32x96xf32>, vector<4x96xf32> -> vector<4x96xf32>
    %cst_167 = arith.constant dense<0.000000e+00> : vector<4x128xf32>
    %396 = tpu.matmul %392, %22, %cst_167 {dimension_numbers = #tpu.dot_dimension_numbers<[1], [0], [0], [1], [0, 0, 1, 1], [], []>} : vector<4x32xf32>, vector<32x128xf32>, vector<4x128xf32> -> vector<4x128xf32>
    %397 = vector.extract_strided_slice %395 {offsets = [0, 0], sizes = [4, 32], strides = [1, 1]} : vector<4x96xf32> to vector<4x32xf32>
    %398 = arith.addf %394, %397 : vector<4x32xf32>
    %cst_168 = arith.constant 0.000000e+00 : f32
    %399 = vector.broadcast %cst_168 : f32 to vector<4x32xf32>
    %400 = arith.maximumf %398, %399 : vector<4x32xf32>
    %401 = vector.extract_strided_slice %395 {offsets = [0, 32], sizes = [4, 32], strides = [1, 1]} : vector<4x96xf32> to vector<4x32xf32>
    %402 = vector.broadcast %1 : vector<1x32xf32> to vector<4x32xf32>
    %403 = arith.addf %401, %402 : vector<4x32xf32>
    %cst_169 = arith.constant 0.000000e+00 : f32
    %404 = vector.broadcast %cst_169 : f32 to vector<4x32xf32>
    %405 = arith.maximumf %403, %404 : vector<4x32xf32>
    %406 = tpu.concatenate %400, %405 in 1 : vector<4x32xf32>, vector<4x32xf32> -> vector<4x64xf32>
    %c112_170 = arith.constant 112 : index
    %c0_171 = arith.constant 0 : index
    %407 = vector.load %arg2[%c112_170, %c0_171] : memref<352x128xf32, #tpu.memory_space<vmem>>, vector<64x64xf32>
    %cst_172 = arith.constant dense<0.000000e+00> : vector<4x64xf32>
    %408 = tpu.matmul %406, %407, %cst_172 {dimension_numbers = #tpu.dot_dimension_numbers<[1], [0], [0], [1], [0, 0, 1, 1], [], []>} : vector<4x64xf32>, vector<64x64xf32>, vector<4x64xf32> -> vector<4x64xf32>
    %409 = vector.broadcast %2 : vector<1x64xf32> to vector<4x64xf32>
    %410 = arith.addf %408, %409 : vector<4x64xf32>
    %411 = vector.extract_strided_slice %410 {offsets = [0, 0], sizes = [4, 32], strides = [1, 1]} : vector<4x64xf32> to vector<4x32xf32>
    %412 = vector.extract_strided_slice %410 {offsets = [0, 32], sizes = [4, 32], strides = [1, 1]} : vector<4x64xf32> to vector<4x32xf32>
    %413 = vector.extract_strided_slice %411 {offsets = [0, 0], sizes = [4, 16], strides = [1, 1]} : vector<4x32xf32> to vector<4x16xf32>
    %414 = vector.extract_strided_slice %411 {offsets = [0, 16], sizes = [4, 16], strides = [1, 1]} : vector<4x32xf32> to vector<4x16xf32>
    %cst_173 = arith.constant 5.000000e-01 : f32
    %415 = vector.broadcast %cst_173 : f32 to vector<4x16xf32>
    %416 = arith.mulf %415, %414 : vector<4x16xf32>
    %417 = math.exp %416 : vector<4x16xf32>
    %cst_174 = arith.constant 1.000000e+02 : f32
    %418 = vector.broadcast %cst_174 : f32 to vector<4x16xf32>
    %419 = arith.minimumf %417, %418 : vector<4x16xf32>
    %420 = arith.mulf %419, %393 : vector<4x16xf32>
    %421 = arith.addf %413, %420 : vector<4x16xf32>
    %cst_175 = arith.constant dense<0.000000e+00> : vector<4x32xf32>
    %422 = tpu.matmul %421, %23, %cst_175 {dimension_numbers = #tpu.dot_dimension_numbers<[1], [0], [0], [1], [0, 0, 1, 1], [], []>} : vector<4x16xf32>, vector<16x32xf32>, vector<4x32xf32> -> vector<4x32xf32>
    %423 = vector.broadcast %3 : vector<1x32xf32> to vector<4x32xf32>
    %424 = arith.addf %422, %423 : vector<4x32xf32>
    %cst_176 = arith.constant 0.000000e+00 : f32
    %425 = vector.broadcast %cst_176 : f32 to vector<4x32xf32>
    %426 = arith.maximumf %424, %425 : vector<4x32xf32>
    %c192_177 = arith.constant 192 : index
    %c0_178 = arith.constant 0 : index
    %427 = vector.load %arg2[%c192_177, %c0_178] : memref<352x128xf32, #tpu.memory_space<vmem>>, vector<32x32xf32>
    %cst_179 = arith.constant dense<0.000000e+00> : vector<4x32xf32>
    %428 = tpu.matmul %426, %427, %cst_179 {dimension_numbers = #tpu.dot_dimension_numbers<[1], [0], [0], [1], [0, 0, 1, 1], [], []>} : vector<4x32xf32>, vector<32x32xf32>, vector<4x32xf32> -> vector<4x32xf32>
    %429 = vector.extract_strided_slice %395 {offsets = [0, 64], sizes = [4, 32], strides = [1, 1]} : vector<4x96xf32> to vector<4x32xf32>
    %430 = arith.addf %428, %429 : vector<4x32xf32>
    %431 = vector.broadcast %4 : vector<1x32xf32> to vector<4x32xf32>
    %432 = arith.addf %430, %431 : vector<4x32xf32>
    %cst_180 = arith.constant 0.000000e+00 : f32
    %433 = vector.broadcast %cst_180 : f32 to vector<4x32xf32>
    %434 = arith.maximumf %432, %433 : vector<4x32xf32>
    %c224_181 = arith.constant 224 : index
    %c0_182 = arith.constant 0 : index
    %435 = vector.load %arg2[%c224_181, %c0_182] : memref<352x128xf32, #tpu.memory_space<vmem>>, vector<32x16xf32>
    %cst_183 = arith.constant dense<0.000000e+00> : vector<4x16xf32>
    %436 = tpu.matmul %434, %435, %cst_183 {dimension_numbers = #tpu.dot_dimension_numbers<[1], [0], [0], [1], [0, 0, 1, 1], [], []>} : vector<4x32xf32>, vector<32x16xf32>, vector<4x16xf32> -> vector<4x16xf32>
    %437 = vector.broadcast %5 : vector<1x16xf32> to vector<4x16xf32>
    %438 = arith.addf %436, %437 : vector<4x16xf32>
    %cst_184 = arith.constant dense<0.000000e+00> : vector<4x32xf32>
    %439 = tpu.matmul %434, %24, %cst_184 {dimension_numbers = #tpu.dot_dimension_numbers<[1], [0], [0], [1], [0, 0, 1, 1], [], []>} : vector<4x32xf32>, vector<32x32xf32>, vector<4x32xf32> -> vector<4x32xf32>
    %440 = vector.broadcast %6 : vector<1x32xf32> to vector<4x32xf32>
    %441 = arith.addf %439, %440 : vector<4x32xf32>
    %cst_185 = arith.constant 0.000000e+00 : f32
    %442 = vector.broadcast %cst_185 : f32 to vector<4x32xf32>
    %443 = arith.maximumf %441, %442 : vector<4x32xf32>
    %cst_186 = arith.constant dense<0.000000e+00> : vector<4x128xf32>
    %444 = tpu.matmul %443, %25, %cst_186 {dimension_numbers = #tpu.dot_dimension_numbers<[1], [0], [0], [1], [0, 0, 1, 1], [], []>} : vector<4x32xf32>, vector<32x128xf32>, vector<4x128xf32> -> vector<4x128xf32>
    %c320_187 = arith.constant 320 : index
    %c0_188 = arith.constant 0 : index
    %445 = vector.load %arg2[%c320_187, %c0_188] : memref<352x128xf32, #tpu.memory_space<vmem>>, vector<32x128xf32>
    %cst_189 = arith.constant dense<0.000000e+00> : vector<4x128xf32>
    %446 = tpu.matmul %426, %445, %cst_189 {dimension_numbers = #tpu.dot_dimension_numbers<[1], [0], [0], [1], [0, 0, 1, 1], [], []>} : vector<4x32xf32>, vector<32x128xf32>, vector<4x128xf32> -> vector<4x128xf32>
    %447 = arith.addf %444, %446 : vector<4x128xf32>
    %448 = arith.addf %447, %396 : vector<4x128xf32>
    %449 = vector.broadcast %7 : vector<1x128xf32> to vector<4x128xf32>
    %450 = arith.addf %448, %449 : vector<4x128xf32>
    %451 = arith.negf %450 : vector<4x128xf32>
    %452 = math.exp %451 : vector<4x128xf32>
    %cst_190 = arith.constant 1.000000e+00 : f32
    %453 = vector.broadcast %cst_190 : f32 to vector<4x128xf32>
    %454 = arith.addf %453, %452 : vector<4x128xf32>
    %455 = arith.divf %453, %454 : vector<4x128xf32>
    %456 = math.tanh %450 : vector<4x128xf32>
    %457 = vector.extract_strided_slice %455 {offsets = [0, 0], sizes = [4, 32], strides = [1, 1]} : vector<4x128xf32> to vector<4x32xf32>
    %458 = vector.extract_strided_slice %455 {offsets = [0, 32], sizes = [4, 32], strides = [1, 1]} : vector<4x128xf32> to vector<4x32xf32>
    %459 = vector.extract_strided_slice %456 {offsets = [0, 64], sizes = [4, 32], strides = [1, 1]} : vector<4x128xf32> to vector<4x32xf32>
    %460 = vector.extract_strided_slice %455 {offsets = [0, 96], sizes = [4, 32], strides = [1, 1]} : vector<4x128xf32> to vector<4x32xf32>
    %461 = arith.mulf %458, %390 : vector<4x32xf32>
    %462 = arith.mulf %457, %459 : vector<4x32xf32>
    %463 = arith.addf %461, %462 : vector<4x32xf32>
    %464 = math.tanh %463 : vector<4x32xf32>
    %465 = arith.mulf %460, %464 : vector<4x32xf32>
    %c0_191 = arith.constant 0 : index
    %c96 = arith.constant 96 : index
    %466 = vector.load %arg1[%c0_191, %c96] : memref<4x128xf32, #tpu.memory_space<vmem>>, vector<4x16xf32>
    %c24 = arith.constant 24 : index
    %c0_192 = arith.constant 0 : index
    %467 = vector.load %arg5[%c24, %c0_192] : memref<32x32xf32, #tpu.memory_space<vmem>>, vector<4x32xf32>
    %cst_193 = arith.constant dense<0.000000e+00> : vector<4x96xf32>
    %468 = tpu.matmul %465, %21, %cst_193 {dimension_numbers = #tpu.dot_dimension_numbers<[1], [0], [0], [1], [0, 0, 1, 1], [], []>} : vector<4x32xf32>, vector<32x96xf32>, vector<4x96xf32> -> vector<4x96xf32>
    %cst_194 = arith.constant dense<0.000000e+00> : vector<4x128xf32>
    %469 = tpu.matmul %465, %22, %cst_194 {dimension_numbers = #tpu.dot_dimension_numbers<[1], [0], [0], [1], [0, 0, 1, 1], [], []>} : vector<4x32xf32>, vector<32x128xf32>, vector<4x128xf32> -> vector<4x128xf32>
    %470 = vector.extract_strided_slice %468 {offsets = [0, 0], sizes = [4, 32], strides = [1, 1]} : vector<4x96xf32> to vector<4x32xf32>
    %471 = arith.addf %467, %470 : vector<4x32xf32>
    %cst_195 = arith.constant 0.000000e+00 : f32
    %472 = vector.broadcast %cst_195 : f32 to vector<4x32xf32>
    %473 = arith.maximumf %471, %472 : vector<4x32xf32>
    %474 = vector.extract_strided_slice %468 {offsets = [0, 32], sizes = [4, 32], strides = [1, 1]} : vector<4x96xf32> to vector<4x32xf32>
    %475 = vector.broadcast %1 : vector<1x32xf32> to vector<4x32xf32>
    %476 = arith.addf %474, %475 : vector<4x32xf32>
    %cst_196 = arith.constant 0.000000e+00 : f32
    %477 = vector.broadcast %cst_196 : f32 to vector<4x32xf32>
    %478 = arith.maximumf %476, %477 : vector<4x32xf32>
    %479 = tpu.concatenate %473, %478 in 1 : vector<4x32xf32>, vector<4x32xf32> -> vector<4x64xf32>
    %c112_197 = arith.constant 112 : index
    %c0_198 = arith.constant 0 : index
    %480 = vector.load %arg2[%c112_197, %c0_198] : memref<352x128xf32, #tpu.memory_space<vmem>>, vector<64x64xf32>
    %cst_199 = arith.constant dense<0.000000e+00> : vector<4x64xf32>
    %481 = tpu.matmul %479, %480, %cst_199 {dimension_numbers = #tpu.dot_dimension_numbers<[1], [0], [0], [1], [0, 0, 1, 1], [], []>} : vector<4x64xf32>, vector<64x64xf32>, vector<4x64xf32> -> vector<4x64xf32>
    %482 = vector.broadcast %2 : vector<1x64xf32> to vector<4x64xf32>
    %483 = arith.addf %481, %482 : vector<4x64xf32>
    %484 = vector.extract_strided_slice %483 {offsets = [0, 0], sizes = [4, 32], strides = [1, 1]} : vector<4x64xf32> to vector<4x32xf32>
    %485 = vector.extract_strided_slice %483 {offsets = [0, 32], sizes = [4, 32], strides = [1, 1]} : vector<4x64xf32> to vector<4x32xf32>
    %486 = vector.extract_strided_slice %484 {offsets = [0, 0], sizes = [4, 16], strides = [1, 1]} : vector<4x32xf32> to vector<4x16xf32>
    %487 = vector.extract_strided_slice %484 {offsets = [0, 16], sizes = [4, 16], strides = [1, 1]} : vector<4x32xf32> to vector<4x16xf32>
    %cst_200 = arith.constant 5.000000e-01 : f32
    %488 = vector.broadcast %cst_200 : f32 to vector<4x16xf32>
    %489 = arith.mulf %488, %487 : vector<4x16xf32>
    %490 = math.exp %489 : vector<4x16xf32>
    %cst_201 = arith.constant 1.000000e+02 : f32
    %491 = vector.broadcast %cst_201 : f32 to vector<4x16xf32>
    %492 = arith.minimumf %490, %491 : vector<4x16xf32>
    %493 = arith.mulf %492, %466 : vector<4x16xf32>
    %494 = arith.addf %486, %493 : vector<4x16xf32>
    %cst_202 = arith.constant dense<0.000000e+00> : vector<4x32xf32>
    %495 = tpu.matmul %494, %23, %cst_202 {dimension_numbers = #tpu.dot_dimension_numbers<[1], [0], [0], [1], [0, 0, 1, 1], [], []>} : vector<4x16xf32>, vector<16x32xf32>, vector<4x32xf32> -> vector<4x32xf32>
    %496 = vector.broadcast %3 : vector<1x32xf32> to vector<4x32xf32>
    %497 = arith.addf %495, %496 : vector<4x32xf32>
    %cst_203 = arith.constant 0.000000e+00 : f32
    %498 = vector.broadcast %cst_203 : f32 to vector<4x32xf32>
    %499 = arith.maximumf %497, %498 : vector<4x32xf32>
    %c192_204 = arith.constant 192 : index
    %c0_205 = arith.constant 0 : index
    %500 = vector.load %arg2[%c192_204, %c0_205] : memref<352x128xf32, #tpu.memory_space<vmem>>, vector<32x32xf32>
    %cst_206 = arith.constant dense<0.000000e+00> : vector<4x32xf32>
    %501 = tpu.matmul %499, %500, %cst_206 {dimension_numbers = #tpu.dot_dimension_numbers<[1], [0], [0], [1], [0, 0, 1, 1], [], []>} : vector<4x32xf32>, vector<32x32xf32>, vector<4x32xf32> -> vector<4x32xf32>
    %502 = vector.extract_strided_slice %468 {offsets = [0, 64], sizes = [4, 32], strides = [1, 1]} : vector<4x96xf32> to vector<4x32xf32>
    %503 = arith.addf %501, %502 : vector<4x32xf32>
    %504 = vector.broadcast %4 : vector<1x32xf32> to vector<4x32xf32>
    %505 = arith.addf %503, %504 : vector<4x32xf32>
    %cst_207 = arith.constant 0.000000e+00 : f32
    %506 = vector.broadcast %cst_207 : f32 to vector<4x32xf32>
    %507 = arith.maximumf %505, %506 : vector<4x32xf32>
    %c224_208 = arith.constant 224 : index
    %c0_209 = arith.constant 0 : index
    %508 = vector.load %arg2[%c224_208, %c0_209] : memref<352x128xf32, #tpu.memory_space<vmem>>, vector<32x16xf32>
    %cst_210 = arith.constant dense<0.000000e+00> : vector<4x16xf32>
    %509 = tpu.matmul %507, %508, %cst_210 {dimension_numbers = #tpu.dot_dimension_numbers<[1], [0], [0], [1], [0, 0, 1, 1], [], []>} : vector<4x32xf32>, vector<32x16xf32>, vector<4x16xf32> -> vector<4x16xf32>
    %510 = vector.broadcast %5 : vector<1x16xf32> to vector<4x16xf32>
    %511 = arith.addf %509, %510 : vector<4x16xf32>
    %cst_211 = arith.constant dense<0.000000e+00> : vector<4x32xf32>
    %512 = tpu.matmul %507, %24, %cst_211 {dimension_numbers = #tpu.dot_dimension_numbers<[1], [0], [0], [1], [0, 0, 1, 1], [], []>} : vector<4x32xf32>, vector<32x32xf32>, vector<4x32xf32> -> vector<4x32xf32>
    %513 = vector.broadcast %6 : vector<1x32xf32> to vector<4x32xf32>
    %514 = arith.addf %512, %513 : vector<4x32xf32>
    %cst_212 = arith.constant 0.000000e+00 : f32
    %515 = vector.broadcast %cst_212 : f32 to vector<4x32xf32>
    %516 = arith.maximumf %514, %515 : vector<4x32xf32>
    %cst_213 = arith.constant dense<0.000000e+00> : vector<4x128xf32>
    %517 = tpu.matmul %516, %25, %cst_213 {dimension_numbers = #tpu.dot_dimension_numbers<[1], [0], [0], [1], [0, 0, 1, 1], [], []>} : vector<4x32xf32>, vector<32x128xf32>, vector<4x128xf32> -> vector<4x128xf32>
    %c320_214 = arith.constant 320 : index
    %c0_215 = arith.constant 0 : index
    %518 = vector.load %arg2[%c320_214, %c0_215] : memref<352x128xf32, #tpu.memory_space<vmem>>, vector<32x128xf32>
    %cst_216 = arith.constant dense<0.000000e+00> : vector<4x128xf32>
    %519 = tpu.matmul %499, %518, %cst_216 {dimension_numbers = #tpu.dot_dimension_numbers<[1], [0], [0], [1], [0, 0, 1, 1], [], []>} : vector<4x32xf32>, vector<32x128xf32>, vector<4x128xf32> -> vector<4x128xf32>
    %520 = arith.addf %517, %519 : vector<4x128xf32>
    %521 = arith.addf %520, %469 : vector<4x128xf32>
    %522 = vector.broadcast %7 : vector<1x128xf32> to vector<4x128xf32>
    %523 = arith.addf %521, %522 : vector<4x128xf32>
    %524 = arith.negf %523 : vector<4x128xf32>
    %525 = math.exp %524 : vector<4x128xf32>
    %cst_217 = arith.constant 1.000000e+00 : f32
    %526 = vector.broadcast %cst_217 : f32 to vector<4x128xf32>
    %527 = arith.addf %526, %525 : vector<4x128xf32>
    %528 = arith.divf %526, %527 : vector<4x128xf32>
    %529 = math.tanh %523 : vector<4x128xf32>
    %530 = vector.extract_strided_slice %528 {offsets = [0, 0], sizes = [4, 32], strides = [1, 1]} : vector<4x128xf32> to vector<4x32xf32>
    %531 = vector.extract_strided_slice %528 {offsets = [0, 32], sizes = [4, 32], strides = [1, 1]} : vector<4x128xf32> to vector<4x32xf32>
    %532 = vector.extract_strided_slice %529 {offsets = [0, 64], sizes = [4, 32], strides = [1, 1]} : vector<4x128xf32> to vector<4x32xf32>
    %533 = vector.extract_strided_slice %528 {offsets = [0, 96], sizes = [4, 32], strides = [1, 1]} : vector<4x128xf32> to vector<4x32xf32>
    %534 = arith.mulf %531, %463 : vector<4x32xf32>
    %535 = arith.mulf %530, %532 : vector<4x32xf32>
    %536 = arith.addf %534, %535 : vector<4x32xf32>
    %537 = math.tanh %536 : vector<4x32xf32>
    %538 = arith.mulf %533, %537 : vector<4x32xf32>
    %c0_218 = arith.constant 0 : index
    %c112_219 = arith.constant 112 : index
    %539 = vector.load %arg1[%c0_218, %c112_219] : memref<4x128xf32, #tpu.memory_space<vmem>>, vector<4x16xf32>
    %c28 = arith.constant 28 : index
    %c0_220 = arith.constant 0 : index
    %540 = vector.load %arg5[%c28, %c0_220] : memref<32x32xf32, #tpu.memory_space<vmem>>, vector<4x32xf32>
    %cst_221 = arith.constant dense<0.000000e+00> : vector<4x96xf32>
    %541 = tpu.matmul %538, %21, %cst_221 {dimension_numbers = #tpu.dot_dimension_numbers<[1], [0], [0], [1], [0, 0, 1, 1], [], []>} : vector<4x32xf32>, vector<32x96xf32>, vector<4x96xf32> -> vector<4x96xf32>
    %542 = vector.extract_strided_slice %541 {offsets = [0, 0], sizes = [4, 32], strides = [1, 1]} : vector<4x96xf32> to vector<4x32xf32>
    %543 = arith.addf %540, %542 : vector<4x32xf32>
    %cst_222 = arith.constant 0.000000e+00 : f32
    %544 = vector.broadcast %cst_222 : f32 to vector<4x32xf32>
    %545 = arith.maximumf %543, %544 : vector<4x32xf32>
    %546 = vector.extract_strided_slice %541 {offsets = [0, 32], sizes = [4, 32], strides = [1, 1]} : vector<4x96xf32> to vector<4x32xf32>
    %547 = vector.broadcast %1 : vector<1x32xf32> to vector<4x32xf32>
    %548 = arith.addf %546, %547 : vector<4x32xf32>
    %cst_223 = arith.constant 0.000000e+00 : f32
    %549 = vector.broadcast %cst_223 : f32 to vector<4x32xf32>
    %550 = arith.maximumf %548, %549 : vector<4x32xf32>
    %551 = tpu.concatenate %545, %550 in 1 : vector<4x32xf32>, vector<4x32xf32> -> vector<4x64xf32>
    %c112_224 = arith.constant 112 : index
    %c0_225 = arith.constant 0 : index
    %552 = vector.load %arg2[%c112_224, %c0_225] : memref<352x128xf32, #tpu.memory_space<vmem>>, vector<64x64xf32>
    %cst_226 = arith.constant dense<0.000000e+00> : vector<4x64xf32>
    %553 = tpu.matmul %551, %552, %cst_226 {dimension_numbers = #tpu.dot_dimension_numbers<[1], [0], [0], [1], [0, 0, 1, 1], [], []>} : vector<4x64xf32>, vector<64x64xf32>, vector<4x64xf32> -> vector<4x64xf32>
    %554 = vector.broadcast %2 : vector<1x64xf32> to vector<4x64xf32>
    %555 = arith.addf %553, %554 : vector<4x64xf32>
    %556 = vector.extract_strided_slice %555 {offsets = [0, 0], sizes = [4, 32], strides = [1, 1]} : vector<4x64xf32> to vector<4x32xf32>
    %557 = vector.extract_strided_slice %555 {offsets = [0, 32], sizes = [4, 32], strides = [1, 1]} : vector<4x64xf32> to vector<4x32xf32>
    %558 = vector.extract_strided_slice %556 {offsets = [0, 0], sizes = [4, 16], strides = [1, 1]} : vector<4x32xf32> to vector<4x16xf32>
    %559 = vector.extract_strided_slice %556 {offsets = [0, 16], sizes = [4, 16], strides = [1, 1]} : vector<4x32xf32> to vector<4x16xf32>
    %cst_227 = arith.constant 5.000000e-01 : f32
    %560 = vector.broadcast %cst_227 : f32 to vector<4x16xf32>
    %561 = arith.mulf %560, %559 : vector<4x16xf32>
    %562 = math.exp %561 : vector<4x16xf32>
    %cst_228 = arith.constant 1.000000e+02 : f32
    %563 = vector.broadcast %cst_228 : f32 to vector<4x16xf32>
    %564 = arith.minimumf %562, %563 : vector<4x16xf32>
    %565 = arith.mulf %564, %539 : vector<4x16xf32>
    %566 = arith.addf %558, %565 : vector<4x16xf32>
    %cst_229 = arith.constant dense<0.000000e+00> : vector<4x32xf32>
    %567 = tpu.matmul %566, %23, %cst_229 {dimension_numbers = #tpu.dot_dimension_numbers<[1], [0], [0], [1], [0, 0, 1, 1], [], []>} : vector<4x16xf32>, vector<16x32xf32>, vector<4x32xf32> -> vector<4x32xf32>
    %568 = vector.broadcast %3 : vector<1x32xf32> to vector<4x32xf32>
    %569 = arith.addf %567, %568 : vector<4x32xf32>
    %cst_230 = arith.constant 0.000000e+00 : f32
    %570 = vector.broadcast %cst_230 : f32 to vector<4x32xf32>
    %571 = arith.maximumf %569, %570 : vector<4x32xf32>
    %c192_231 = arith.constant 192 : index
    %c0_232 = arith.constant 0 : index
    %572 = vector.load %arg2[%c192_231, %c0_232] : memref<352x128xf32, #tpu.memory_space<vmem>>, vector<32x32xf32>
    %cst_233 = arith.constant dense<0.000000e+00> : vector<4x32xf32>
    %573 = tpu.matmul %571, %572, %cst_233 {dimension_numbers = #tpu.dot_dimension_numbers<[1], [0], [0], [1], [0, 0, 1, 1], [], []>} : vector<4x32xf32>, vector<32x32xf32>, vector<4x32xf32> -> vector<4x32xf32>
    %574 = vector.extract_strided_slice %541 {offsets = [0, 64], sizes = [4, 32], strides = [1, 1]} : vector<4x96xf32> to vector<4x32xf32>
    %575 = arith.addf %573, %574 : vector<4x32xf32>
    %576 = vector.broadcast %4 : vector<1x32xf32> to vector<4x32xf32>
    %577 = arith.addf %575, %576 : vector<4x32xf32>
    %cst_234 = arith.constant 0.000000e+00 : f32
    %578 = vector.broadcast %cst_234 : f32 to vector<4x32xf32>
    %579 = arith.maximumf %577, %578 : vector<4x32xf32>
    %c224_235 = arith.constant 224 : index
    %c0_236 = arith.constant 0 : index
    %580 = vector.load %arg2[%c224_235, %c0_236] : memref<352x128xf32, #tpu.memory_space<vmem>>, vector<32x16xf32>
    %cst_237 = arith.constant dense<0.000000e+00> : vector<4x16xf32>
    %581 = tpu.matmul %579, %580, %cst_237 {dimension_numbers = #tpu.dot_dimension_numbers<[1], [0], [0], [1], [0, 0, 1, 1], [], []>} : vector<4x32xf32>, vector<32x16xf32>, vector<4x16xf32> -> vector<4x16xf32>
    %582 = vector.broadcast %5 : vector<1x16xf32> to vector<4x16xf32>
    %583 = arith.addf %581, %582 : vector<4x16xf32>
    %584 = tpu.concatenate %73, %146, %219, %292, %365, %438, %511, %583, %46, %119, %192, %265, %338, %411, %484, %556 in 1 : vector<4x16xf32>, vector<4x16xf32>, vector<4x16xf32>, vector<4x16xf32>, vector<4x16xf32>, vector<4x16xf32>, vector<4x16xf32>, vector<4x16xf32>, vector<4x32xf32>, vector<4x32xf32>, vector<4x32xf32>, vector<4x32xf32>, vector<4x32xf32>, vector<4x32xf32>, vector<4x32xf32>, vector<4x32xf32> -> vector<4x384xf32>
    %585 = tpu.concatenate %47, %120, %193, %266, %339, %412, %485, %557 in 1 : vector<4x32xf32>, vector<4x32xf32>, vector<4x32xf32>, vector<4x32xf32>, vector<4x32xf32>, vector<4x32xf32>, vector<4x32xf32>, vector<4x32xf32> -> vector<4x256xf32>
    %586 = tpu.concatenate %584, %585 in 1 : vector<4x384xf32>, vector<4x256xf32> -> vector<4x640xf32>
    %c0_238 = arith.constant 0 : index
    %c0_239 = arith.constant 0 : index
    %587 = vector.load %arg4[%c0_238, %c0_239] : memref<4x640xf32, #tpu.memory_space<vmem>>, vector<4x640xf32>
    tpu.vector_store %arg4[%c0_238, %c0_239], %586 {strides = array<i32>} : memref<4x640xf32, #tpu.memory_space<vmem>>, vector<4x640xf32>,
    return
  }
}

</mosaic_0001>

<llo_original>
// kernel: vrnn_forward.1
$region0: #{vrnn_forward.1}
  #allocation0 [shape = 'u32[]', space=smem, size = 0x4, offset = 0x4, fixed_abs, tag = 'smem constant byte address 0x4 - core index']
  #allocation1 [shape = 'u32[144,128]{1,0:T(1,128)}', space=vmem, size = 0x12000, scoped, tag = 'internal scratch']
  #allocation2 [shape = 'f32[32,32]{1,0:T(8,128)}', space=vmem, size = 0x4000, scoped, tag = 'scratch operand']
  %s0 = inlined_call_operand.vmem [shape: f32[32,16], index: 0, kind: input, shape index: {}]
  %s1 = inlined_call_operand.vmem [shape: f32[4,128], index: 1, kind: input, shape index: {}]
  %s2 = inlined_call_operand.hbm [shape: f32[352,128], index: 2, kind: input, shape index: {}]
  %s3 = inlined_call_operand.vmem [shape: f32[9,128], index: 3, kind: input, shape index: {}]
  %s4 = inlined_call_operand.vmem [shape: f32[4,640], index: 4, kind: output, shape index: {}]
  %s5 = sld [smem:[#allocation0]]
  $region30: #{vrnn_forward.1} parent=0
    _
  %s7 = ssub.s32 1, %s5
  %s8 = scalar_select 0, %s7, %s5
  $region1: #{vrnn_forward.1} parent=0
    #allocation3 [shape = 'u8[180224]{0}', space=vmem, size = 0x2c000, scoped, tag = 'input window, operand 2, single buffered']
    #allocation4 [shape = 's32[1]{0}', space=sflag, size = 0x4, scoped, tag = 'scoped memory for vrnn_forward.1']
    %9 = vsyncpa [#allocation4], 0
    // Predicated region
    $region2: #{vrnn_forward.1} parent=1 // pred_check
      _
    $region3: #{vrnn_forward.1} parent=1 // pred_check_branch
      %11 = sbr.rel (0) target = $region5
    $region4: #{vrnn_forward.1} parent=1 // pred_region
      _
    $region5: #{vrnn_forward.1} parent=1 // pred_fallthru
      _
    // Predicated region
    $region6: #{vrnn_forward.1} parent=1 // pred_check
      _
    $region7: #{vrnn_forward.1} parent=1 // pred_check_branch
      %13 = sbr.rel (0) target = $region9
    $region8: #{vrnn_forward.1} parent=1 // pred_region
      _
    $region9: #{vrnn_forward.1} parent=1 // pred_fallthru
      _
    // Predicated region
    $region10: #{vrnn_forward.1} parent=1 // pred_check
      _
    $region11: #{vrnn_forward.1} parent=1 // pred_check_branch
      %15 = sbr.rel (0) target = $region13
    $region12: #{vrnn_forward.1} parent=1 // pred_region
      %s17 = ssub.s32 5632, 5632
      %18 = vsyncadd [#allocation4], %s17
      %s19 = sshll.u32 [#allocation3], 4
      %s20 = int_to_ptr.vmem [resolvable:$true] %s19
      %25 = dma.hbm_to_vmem [thread:$0]  %s2, 5632, %s20, [#allocation4], 128, 128, 8
    $region13: #{vrnn_forward.1} parent=1 // pred_fallthru
      _
    // Predicated region
    $region14: #{vrnn_forward.1} parent=1 // pred_check
      _
    $region15: #{vrnn_forward.1} parent=1 // pred_check_branch
      %27 = sbr.rel (0) target = $region17
    $region16: #{vrnn_forward.1} parent=1 // pred_region
      _
    $region17: #{vrnn_forward.1} parent=1 // pred_fallthru
      _
    // Predicated region
    $region18: #{vrnn_forward.1} parent=1 // pred_check
      _
    $region19: #{vrnn_forward.1} parent=1 // pred_check_branch
      %29 = sbr.rel (0) target = $region21
    $region20: #{vrnn_forward.1} parent=1 // pred_region
      %30 = dma.done [#allocation4], 5632
    $region21: #{vrnn_forward.1} parent=1 // pred_fallthru
      _
    %v31 = vld [vmem:[%s3] sm:$0x1]
    %v32 = vld [vmem:[%s3 + $0x2] sm:$0x1]
    %v33 = vld [vmem:[%s3 + $0x3] sm:$0x1]
    %v34 = vld [vmem:[%s3 + $0x4] sm:$0x1]
    %v35 = vld [vmem:[%s3 + $0x5] sm:$0x1]
    %v36 = vld [vmem:[%s3 + $0x6] sm:$0x1]
    %v37 = vld [vmem:[%s3 + $0x7] sm:$0x1]
    %v38 = vld [vmem:[%s3 + $0x8] sm:$0x1]
    %v39 = vld [vmem:[%s0] sm:$0xff]
    %v40 = vld [vmem:[%s0 + $0x8] sm:$0xff]
    %v41 = vld [vmem:[%s0 + $0x10] sm:$0xff]
    %v42 = vld [vmem:[%s0 + $0x18] sm:$0xff]
    %v43 = vld [vmem:[#allocation3] sm:$0xff]
    %v44 = vld [vmem:[#allocation3 + $0x8] sm:$0xff]
    %v45 = vlaneseq
    %v46 = vshrl.u32 %v45, 7
    %v47 = vsub.s32 0, %v46
    %v48 = vrot.slane %v31, %v47
    %vm49 = vcmask 130048
    %v51 = vsel %vm49, %v39, 0
    %v54 = vsel %vm49, %v40, 0
    %v57 = vsel %vm49, %v41, 0
    %v60 = vsel %vm49, %v42, 0
    %62 = vmatprep.subr.mxu0 0.0
    %63 = vmatpush1.msra.mxu0 %v43
    %64 = vmatprep.subr.mxu0 0.0
    %65 = vmatpush1.msra.mxu0 %v44
    %66 = vmatprep.subr.mxu0 0.0
    %67 = vmatpush1.msra.mxu0 0.0
    %68 = vmatprep.subr.mxu0 0.0
    %69 = vmatpush1.msra.mxu0 0.0
    %70 = vmatprep.subr.mxu0 0.0
    %71 = vmatpush1.msra.mxu0 0.0
    %72 = vmatprep.subr.mxu0 0.0
    %73 = vmatpush1.msra.mxu0 0.0
    %74 = vmatprep.subr.mxu0 0.0
    %75 = vmatpush1.msra.mxu0 0.0
    %76 = vmatprep.subr.mxu0 0.0
    %77 = vmatpush1.msra.mxu0 0.0
    %78 = vmatprep.subr.mxu0 0.0
    %79 = vmatpush1.msra.mxu0 0.0
    %80 = vmatprep.subr.mxu0 0.0
    %81 = vmatpush1.msra.mxu0 0.0
    %82 = vmatprep.subr.mxu0 0.0
    %83 = vmatpush1.msra.mxu0 0.0
    %84 = vmatprep.subr.mxu0 0.0
    %85 = vmatpush1.msra.mxu0 0.0
    %86 = vmatprep.subr.mxu0 0.0
    %87 = vmatpush1.msra.mxu0 0.0
    %88 = vmatprep.subr.mxu0 0.0
    %89 = vmatpush1.msra.mxu0 0.0
    %90 = vmatprep.subr.mxu0 0.0
    %91 = vmatpush1.msra.mxu0 0.0
    %92 = vmatprep.subr.mxu0 0.0
    %93 = vmatpush1.msra.mxu0 0.0
    %94 = vmatprep.subr.mxu0 0.0
    %95 = vmatpush1.msra.mxu0 0.0
    %96 = vmatprep.subr.mxu0 0.0
    %97 = vmatpush1.msra.mxu0 0.0
    %98 = vmatprep.subr.mxu0 0.0
    %99 = vmatpush1.msra.mxu0 0.0
    %100 = vmatprep.subr.mxu0 0.0
    %101 = vmatpush1.msra.mxu0 0.0
    %102 = vmatprep.subr.mxu0 0.0
    %103 = vmatpush1.msra.mxu0 0.0
    %104 = vmatprep.subr.mxu0 0.0
    %105 = vmatpush1.msra.mxu0 0.0
    %106 = vmatprep.subr.mxu0 0.0
    %107 = vmatpush1.msra.mxu0 0.0
    %108 = vmatprep.subr.mxu0 0.0
    %109 = vmatpush1.msra.mxu0 0.0
    %110 = vmatprep.subr.mxu0 0.0
    %111 = vmatpush1.msra.mxu0 0.0
    %112 = vmatprep.subr.mxu0 0.0
    %113 = vmatpush1.msra.mxu0 0.0
    %114 = vmatprep.subr.mxu0 0.0
    %115 = vmatpush1.msra.mxu0 0.0
    %116 = vmatprep.subr.mxu0 0.0
    %117 = vmatpush1.msra.mxu0 0.0
    %118 = vmatprep.subr.mxu0 0.0
    %119 = vmatpush1.msra.mxu0 0.0
    %120 = vmatprep.subr.mxu0 0.0
    %121 = vmatpush1.msra.mxu0 0.0
    %122 = vmatprep.subr.mxu0 0.0
    %123 = vmatpush1.msra.mxu0 0.0
    %124 = vmatprep.subr.mxu0 0.0
    %125 = vmatpush1.msra.mxu0 0.0
    %126 = vmatprep.mubr.f32.mxu0 0.0
    %127 = vmatmul.mubr.f32.gmra.mrb[0].mxu0 %v51
    %v128 = vpop.f32.mrb[0].mxu0
    %v129 = vadd.f32 %v48, %v128
    %v130 = vpop.f32.mrb[0].mxu0
    %131 = vmatprep.mubr.f32.mxu0 0.0
    %132 = vmatmul.mubr.f32.gmra.mrb[0].mxu0 %v54
    %v133 = vpop.f32.mrb[0].mxu0
    %v134 = vadd.f32 %v48, %v133
    %v135 = vpop.f32.mrb[0].mxu0
    %136 = vmatprep.mubr.f32.mxu0 0.0
    %137 = vmatmul.mubr.f32.gmra.mrb[0].mxu0 %v57
    %v138 = vpop.f32.mrb[0].mxu0
    %v139 = vadd.f32 %v48, %v138
    %v140 = vpop.f32.mrb[0].mxu0
    %141 = vmatprep.mubr.f32.mxu0 0.0
    %142 = vmatmul.mubr.f32.gmra.mrb[0].mxu0 %v60
    %v143 = vpop.f32.mrb[0].mxu0
    %v144 = vadd.f32 %v48, %v143
    %v145 = vpop.f32.mrb[0].mxu0
    %146 = vdwg.mxu0
    %v147 = vmax.f32 %v129, 0.0
    %v148 = vmax.f32 %v134, 0.0
    %v149 = vmax.f32 %v139, 0.0
    %v150 = vmax.f32 %v144, 0.0
    %v151 = vld [vmem:[#allocation3 + $0x10] sm:$0xff]
    %v152 = vld [vmem:[#allocation3 + $0x18] sm:$0xff]
    %v153 = vld [vmem:[#allocation3 + $0x20] sm:$0xff]
    %v154 = vld [vmem:[#allocation3 + $0x28] sm:$0xff]
    %v155 = vld [vmem:[%s3 + $0x1] sm:$0x1]
    %v156 = vlaneseq
    %v157 = vshrl.u32 %v156, 7
    %v158 = vsub.s32 0, %v157
    %v159 = vrot.slane %v155, %v158
    %vm160 = vcmask 261120
    %v162 = vsel %vm160, %v147, 0
    %v165 = vsel %vm160, %v148, 0
    %v168 = vsel %vm160, %v149, 0
    %v171 = vsel %vm160, %v150, 0
    %173 = vmatprep.subr.mxu0 0.0
    %174 = vmatpush1.msra.mxu0 %v151
    %175 = vmatprep.subr.mxu0 0.0
    %176 = vmatpush1.msra.mxu0 %v152
    %177 = vmatprep.subr.mxu0 0.0
    %178 = vmatpush1.msra.mxu0 %v153
    %179 = vmatprep.subr.mxu0 0.0
    %180 = vmatpush1.msra.mxu0 %v154
    %181 = vmatprep.subr.mxu0 0.0
    %182 = vmatpush1.msra.mxu0 0.0
    %183 = vmatprep.subr.mxu0 0.0
    %184 = vmatpush1.msra.mxu0 0.0
    %185 = vmatprep.subr.mxu0 0.0
    %186 = vmatpush1.msra.mxu0 0.0
    %187 = vmatprep.subr.mxu0 0.0
    %188 = vmatpush1.msra.mxu0 0.0
    %189 = vmatprep.subr.mxu0 0.0
    %190 = vmatpush1.msra.mxu0 0.0
    %191 = vmatprep.subr.mxu0 0.0
    %192 = vmatpush1.msra.mxu0 0.0
    %193 = vmatprep.subr.mxu0 0.0
    %194 = vmatpush1.msra.mxu0 0.0
    %195 = vmatprep.subr.mxu0 0.0
    %196 = vmatpush1.msra.mxu0 0.0
    %197 = vmatprep.subr.mxu0 0.0
    %198 = vmatpush1.msra.mxu0 0.0
    %199 = vmatprep.subr.mxu0 0.0
    %200 = vmatpush1.msra.mxu0 0.0
    %201 = vmatprep.subr.mxu0 0.0
    %202 = vmatpush1.msra.mxu0 0.0
    %203 = vmatprep.subr.mxu0 0.0
    %204 = vmatpush1.msra.mxu0 0.0
    %205 = vmatprep.subr.mxu0 0.0
    %206 = vmatpush1.msra.mxu0 0.0
    %207 = vmatprep.subr.mxu0 0.0
    %208 = vmatpush1.msra.mxu0 0.0
    %209 = vmatprep.subr.mxu0 0.0
    %210 = vmatpush1.msra.mxu0 0.0
    %211 = vmatprep.subr.mxu0 0.0
    %212 = vmatpush1.msra.mxu0 0.0
    %213 = vmatprep.subr.mxu0 0.0
    %214 = vmatpush1.msra.mxu0 0.0
    %215 = vmatprep.subr.mxu0 0.0
    %216 = vmatpush1.msra.mxu0 0.0
    %217 = vmatprep.subr.mxu0 0.0
    %218 = vmatpush1.msra.mxu0 0.0
    %219 = vmatprep.subr.mxu0 0.0
    %220 = vmatpush1.msra.mxu0 0.0
    %221 = vmatprep.subr.mxu0 0.0
    %222 = vmatpush1.msra.mxu0 0.0
    %223 = vmatprep.subr.mxu0 0.0
    %224 = vmatpush1.msra.mxu0 0.0
    %225 = vmatprep.subr.mxu0 0.0
    %226 = vmatpush1.msra.mxu0 0.0
    %227 = vmatprep.subr.mxu0 0.0
    %228 = vmatpush1.msra.mxu0 0.0
    %229 = vmatprep.subr.mxu0 0.0
    %230 = vmatpush1.msra.mxu0 0.0
    %231 = vmatprep.subr.mxu0 0.0
    %232 = vmatpush1.msra.mxu0 0.0
    %233 = vmatprep.subr.mxu0 0.0
    %234 = vmatpush1.msra.mxu0 0.0
    %235 = vmatprep.subr.mxu0 0.0
    %236 = vmatpush1.msra.mxu0 0.0
    %237 = vmatprep.mubr.f32.mxu0 0.0
    %238 = vmatmul.mubr.f32.gmra.mrb[0].mxu0 %v162
    %v239 = vpop.f32.mrb[0].mxu0
    %v240 = vadd.f32 %v159, %v239
    %v241 = vpop.f32.mrb[0].mxu0
    %242 = vmatprep.mubr.f32.mxu0 0.0
    %243 = vmatmul.mubr.f32.gmra.mrb[0].mxu0 %v165
    %v244 = vpop.f32.mrb[0].mxu0
    %v245 = vadd.f32 %v159, %v244
    %v246 = vpop.f32.mrb[0].mxu0
    %247 = vmatprep.mubr.f32.mxu0 0.0
    %248 = vmatmul.mubr.f32.gmra.mrb[0].mxu0 %v168
    %v249 = vpop.f32.mrb[0].mxu0
    %v250 = vadd.f32 %v159, %v249
    %v251 = vpop.f32.mrb[0].mxu0
    %252 = vmatprep.mubr.f32.mxu0 0.0
    %253 = vmatmul.mubr.f32.gmra.mrb[0].mxu0 %v171
    %v254 = vpop.f32.mrb[0].mxu0
    %v255 = vadd.f32 %v159, %v254
    %v256 = vpop.f32.mrb[0].mxu0
    %257 = vdwg.mxu0
    %258 = vst.msk [vmem:[#allocation2] sm:$0xff] %vm160, %v240
    %259 = vst.msk [vmem:[#allocation2 + $0x8] sm:$0xff] %vm160, %v245
    %260 = vst.msk [vmem:[#allocation2 + $0x10] sm:$0xff] %vm160, %v250
    %261 = vst.msk [vmem:[#allocation2 + $0x18] sm:$0xff] %vm160, %v255
    %v262 = vld [vmem:[#allocation3 + $0x30] sm:$0xff]
    %v263 = vld [vmem:[#allocation3 + $0x38] sm:$0xff]
    %v264 = vld [vmem:[#allocation3 + $0x40] sm:$0xff]
    %v265 = vld [vmem:[#allocation3 + $0x48] sm:$0xff]
    %v266 = vld [vmem:[#allocation3 + $0x50] sm:$0xff]
    %v267 = vld [vmem:[#allocation3 + $0x58] sm:$0xff]
    %v268 = vld [vmem:[#allocation3 + $0x60] sm:$0xff]
    %v269 = vld [vmem:[#allocation3 + $0x68] sm:$0xff]
    %v270 = vld [vmem:[#allocation3 + $0xb0] sm:$0xff]
    %v271 = vld [vmem:[#allocation3 + $0xb8] sm:$0xff]
    %v272 = vld [vmem:[#allocation3 + $0x100] sm:$0xff]
    %v273 = vld [vmem:[#allocation3 + $0x108] sm:$0xff]
    %v274 = vld [vmem:[#allocation3 + $0x110] sm:$0xff]
    %v275 = vld [vmem:[#allocation3 + $0x118] sm:$0xff]
    %v276 = vld [vmem:[#allocation3 + $0x120] sm:$0xff]
    %v277 = vld [vmem:[#allocation3 + $0x128] sm:$0xff]
    %v278 = vld [vmem:[#allocation3 + $0x130] sm:$0xff]
    %v279 = vld [vmem:[#allocation3 + $0x138] sm:$0xff]
    %v280 = vld [vmem:[%s1] sm:$0xf]
    %v281 = vld [vmem:[#allocation2] sm:$0xf]
    %v283 = vsel %vm160, 0.0, 0
    %285 = vmatprep.subr.mxu0 0.0
    %286 = vmatpush1.msra.mxu0 %v262
    %287 = vmatprep.subr.mxu0 0.0
    %288 = vmatpush1.msra.mxu0 %v263
    %289 = vmatprep.subr.mxu0 0.0
    %290 = vmatpush1.msra.mxu0 %v264
    %291 = vmatprep.subr.mxu0 0.0
    %292 = vmatpush1.msra.mxu0 %v265
    %293 = vmatprep.subr.mxu0 0.0
    %294 = vmatpush1.msra.mxu0 0.0
    %295 = vmatprep.subr.mxu0 0.0
    %296 = vmatpush1.msra.mxu0 0.0
    %297 = vmatprep.subr.mxu0 0.0
    %298 = vmatpush1.msra.mxu0 0.0
    %299 = vmatprep.subr.mxu0 0.0
    %300 = vmatpush1.msra.mxu0 0.0
    %301 = vmatprep.subr.mxu0 0.0
    %302 = vmatpush1.msra.mxu0 0.0
    %303 = vmatprep.subr.mxu0 0.0
    %304 = vmatpush1.msra.mxu0 0.0
    %305 = vmatprep.subr.mxu0 0.0
    %306 = vmatpush1.msra.mxu0 0.0
    %307 = vmatprep.subr.mxu0 0.0
    %308 = vmatpush1.msra.mxu0 0.0
    %309 = vmatprep.subr.mxu0 0.0
    %310 = vmatpush1.msra.mxu0 0.0
    %311 = vmatprep.subr.mxu0 0.0
    %312 = vmatpush1.msra.mxu0 0.0
    %313 = vmatprep.subr.mxu0 0.0
    %314 = vmatpush1.msra.mxu0 0.0
    %315 = vmatprep.subr.mxu0 0.0
    %316 = vmatpush1.msra.mxu0 0.0
    %317 = vmatprep.subr.mxu0 0.0
    %318 = vmatpush1.msra.mxu0 0.0
    %319 = vmatprep.subr.mxu0 0.0
    %320 = vmatpush1.msra.mxu0 0.0
    %321 = vmatprep.subr.mxu0 0.0
    %322 = vmatpush1.msra.mxu0 0.0
    %323 = vmatprep.subr.mxu0 0.0
    %324 = vmatpush1.msra.mxu0 0.0
    %325 = vmatprep.subr.mxu0 0.0
    %326 = vmatpush1.msra.mxu0 0.0
    %327 = vmatprep.subr.mxu0 0.0
    %328 = vmatpush1.msra.mxu0 0.0
    %329 = vmatprep.subr.mxu0 0.0
    %330 = vmatpush1.msra.mxu0 0.0
    %331 = vmatprep.subr.mxu0 0.0
    %332 = vmatpush1.msra.mxu0 0.0
    %333 = vmatprep.subr.mxu0 0.0
    %334 = vmatpush1.msra.mxu0 0.0
    %335 = vmatprep.subr.mxu0 0.0
    %336 = vmatpush1.msra.mxu0 0.0
    %337 = vmatprep.subr.mxu0 0.0
    %338 = vmatpush1.msra.mxu0 0.0
    %339 = vmatprep.subr.mxu0 0.0
    %340 = vmatpush1.msra.mxu0 0.0
    %341 = vmatprep.subr.mxu0 0.0
    %342 = vmatpush1.msra.mxu0 0.0
    %343 = vmatprep.subr.mxu0 0.0
    %344 = vmatpush1.msra.mxu0 0.0
    %345 = vmatprep.subr.mxu0 0.0
    %346 = vmatpush1.msra.mxu0 0.0
    %347 = vmatprep.subr.mxu0 0.0
    %348 = vmatpush1.msra.mxu0 0.0
    %349 = vmatprep.mubr.f32.mxu0 0.0
    %350 = vmatmul.mubr.f32.gmra.mrb[0].mxu0 %v283
    %v351 = vpop.f32.mrb[0].mxu0
    %v352 = vadd.f32 0.0, %v351
    %v353 = vpop.f32.mrb[0].mxu0
    %354 = vdwg.mxu0
    %355 = vmatprep.subr.mxu0 0.0
    %356 = vmatpush1.msra.mxu0 %v266
    %357 = vmatprep.subr.mxu0 0.0
    %358 = vmatpush1.msra.mxu0 %v267
    %359 = vmatprep.subr.mxu0 0.0
    %360 = vmatpush1.msra.mxu0 %v268
    %361 = vmatprep.subr.mxu0 0.0
    %362 = vmatpush1.msra.mxu0 %v269
    %363 = vmatprep.subr.mxu0 0.0
    %364 = vmatpush1.msra.mxu0 0.0
    %365 = vmatprep.subr.mxu0 0.0
    %366 = vmatpush1.msra.mxu0 0.0
    %367 = vmatprep.subr.mxu0 0.0
    %368 = vmatpush1.msra.mxu0 0.0
    %369 = vmatprep.subr.mxu0 0.0
    %370 = vmatpush1.msra.mxu0 0.0
    %371 = vmatprep.subr.mxu0 0.0
    %372 = vmatpush1.msra.mxu0 0.0
    %373 = vmatprep.subr.mxu0 0.0
    %374 = vmatpush1.msra.mxu0 0.0
    %375 = vmatprep.subr.mxu0 0.0
    %376 = vmatpush1.msra.mxu0 0.0
    %377 = vmatprep.subr.mxu0 0.0
    %378 = vmatpush1.msra.mxu0 0.0
    %379 = vmatprep.subr.mxu0 0.0
    %380 = vmatpush1.msra.mxu0 0.0
    %381 = vmatprep.subr.mxu0 0.0
    %382 = vmatpush1.msra.mxu0 0.0
    %383 = vmatprep.subr.mxu0 0.0
    %384 = vmatpush1.msra.mxu0 0.0
    %385 = vmatprep.subr.mxu0 0.0
    %386 = vmatpush1.msra.mxu0 0.0
    %387 = vmatprep.subr.mxu0 0.0
    %388 = vmatpush1.msra.mxu0 0.0
    %389 = vmatprep.subr.mxu0 0.0
    %390 = vmatpush1.msra.mxu0 0.0
    %391 = vmatprep.subr.mxu0 0.0
    %392 = vmatpush1.msra.mxu0 0.0
    %393 = vmatprep.subr.mxu0 0.0
    %394 = vmatpush1.msra.mxu0 0.0
    %395 = vmatprep.subr.mxu0 0.0
    %396 = vmatpush1.msra.mxu0 0.0
    %397 = vmatprep.subr.mxu0 0.0
    %398 = vmatpush1.msra.mxu0 0.0
    %399 = vmatprep.subr.mxu0 0.0
    %400 = vmatpush1.msra.mxu0 0.0
    %401 = vmatprep.subr.mxu0 0.0
    %402 = vmatpush1.msra.mxu0 0.0
    %403 = vmatprep.subr.mxu0 0.0
    %404 = vmatpush1.msra.mxu0 0.0
    %405 = vmatprep.subr.mxu0 0.0
    %406 = vmatpush1.msra.mxu0 0.0
    %407 = vmatprep.subr.mxu0 0.0
    %408 = vmatpush1.msra.mxu0 0.0
    %409 = vmatprep.subr.mxu0 0.0
    %410 = vmatpush1.msra.mxu0 0.0
    %411 = vmatprep.subr.mxu0 0.0
    %412 = vmatpush1.msra.mxu0 0.0
    %413 = vmatprep.subr.mxu0 0.0
    %414 = vmatpush1.msra.mxu0 0.0
    %415 = vmatprep.subr.mxu0 0.0
    %416 = vmatpush1.msra.mxu0 0.0
    %417 = vmatprep.subr.mxu0 0.0
    %418 = vmatpush1.msra.mxu0 0.0
    %419 = vmatprep.mubr.f32.mxu0 0.0
    %420 = vmatmul.mubr.f32.gmra.mrb[0].mxu0 %v283
    %v421 = vpop.f32.mrb[0].mxu0
    %v422 = vadd.f32 0.0, %v421
    %v423 = vpop.f32.mrb[0].mxu0
    %424 = vdwg.mxu0
    %v425 = vadd.f32 %v281, %v352
    %v426 = vmax.f32 %v425, 0.0
    %v427 = vlaneseq
    %v428 = vshrl.u32 %v427, 7
    %v429 = vsub.s32 0, %v428
    %v430 = vrot.slane %v32, %v429
    %432 = vrot.lane.b32.xlu0 %v430, 32
    %v433 = vpop.permute.xlu0 %432
    %v435 = vadd.f32 %v352, %v433
    %v436 = vmax.f32 %v435, 0.0
    %v437 = vsel %vm160, %v426, %v436
    %v438 = vld [vmem:[#allocation3 + $0x70] sm:$0xff]
    %v439 = vld [vmem:[#allocation3 + $0x78] sm:$0xff]
    %v440 = vld [vmem:[#allocation3 + $0x80] sm:$0xff]
    %v441 = vld [vmem:[#allocation3 + $0x88] sm:$0xff]
    %v442 = vld [vmem:[#allocation3 + $0x90] sm:$0xff]
    %v443 = vld [vmem:[#allocation3 + $0x98] sm:$0xff]
    %v444 = vld [vmem:[#allocation3 + $0xa0] sm:$0xff]
    %v445 = vld [vmem:[#allocation3 + $0xa8] sm:$0xff]
    %v446 = vlaneseq
    %v447 = vshrl.u32 %v446, 7
    %v448 = vsub.s32 0, %v447
    %v449 = vrot.slane %v33, %v448
    %vm450 = vcmask 523264
    %v452 = vsel %vm450, %v437, 0
    %454 = vmatprep.subr.mxu0 0.0
    %455 = vmatpush1.msra.mxu0 %v438
    %456 = vmatprep.subr.mxu0 0.0
    %457 = vmatpush1.msra.mxu0 %v439
    %458 = vmatprep.subr.mxu0 0.0
    %459 = vmatpush1.msra.mxu0 %v440
    %460 = vmatprep.subr.mxu0 0.0
    %461 = vmatpush1.msra.mxu0 %v441
    %462 = vmatprep.subr.mxu0 0.0
    %463 = vmatpush1.msra.mxu0 %v442
    %464 = vmatprep.subr.mxu0 0.0
    %465 = vmatpush1.msra.mxu0 %v443
    %466 = vmatprep.subr.mxu0 0.0
    %467 = vmatpush1.msra.mxu0 %v444
    %468 = vmatprep.subr.mxu0 0.0
    %469 = vmatpush1.msra.mxu0 %v445
    %470 = vmatprep.subr.mxu0 0.0
    %471 = vmatpush1.msra.mxu0 0.0
    %472 = vmatprep.subr.mxu0 0.0
    %473 = vmatpush1.msra.mxu0 0.0
    %474 = vmatprep.subr.mxu0 0.0
    %475 = vmatpush1.msra.mxu0 0.0
    %476 = vmatprep.subr.mxu0 0.0
    %477 = vmatpush1.msra.mxu0 0.0
    %478 = vmatprep.subr.mxu0 0.0
    %479 = vmatpush1.msra.mxu0 0.0
    %480 = vmatprep.subr.mxu0 0.0
    %481 = vmatpush1.msra.mxu0 0.0
    %482 = vmatprep.subr.mxu0 0.0
    %483 = vmatpush1.msra.mxu0 0.0
    %484 = vmatprep.subr.mxu0 0.0
    %485 = vmatpush1.msra.mxu0 0.0
    %486 = vmatprep.subr.mxu0 0.0
    %487 = vmatpush1.msra.mxu0 0.0
    %488 = vmatprep.subr.mxu0 0.0
    %489 = vmatpush1.msra.mxu0 0.0
    %490 = vmatprep.subr.mxu0 0.0
    %491 = vmatpush1.msra.mxu0 0.0
    %492 = vmatprep.subr.mxu0 0.0
    %493 = vmatpush1.msra.mxu0 0.0
    %494 = vmatprep.subr.mxu0 0.0
    %495 = vmatpush1.msra.mxu0 0.0
    %496 = vmatprep.subr.mxu0 0.0
    %497 = vmatpush1.msra.mxu0 0.0
    %498 = vmatprep.subr.mxu0 0.0
    %499 = vmatpush1.msra.mxu0 0.0
    %500 = vmatprep.subr.mxu0 0.0
    %501 = vmatpush1.msra.mxu0 0.0
    %502 = vmatprep.subr.mxu0 0.0
    %503 = vmatpush1.msra.mxu0 0.0
    %504 = vmatprep.subr.mxu0 0.0
    %505 = vmatpush1.msra.mxu0 0.0
    %506 = vmatprep.subr.mxu0 0.0
    %507 = vmatpush1.msra.mxu0 0.0
    %508 = vmatprep.subr.mxu0 0.0
    %509 = vmatpush1.msra.mxu0 0.0
    %510 = vmatprep.subr.mxu0 0.0
    %511 = vmatpush1.msra.mxu0 0.0
    %512 = vmatprep.subr.mxu0 0.0
    %513 = vmatpush1.msra.mxu0 0.0
    %514 = vmatprep.subr.mxu0 0.0
    %515 = vmatpush1.msra.mxu0 0.0
    %516 = vmatprep.subr.mxu0 0.0
    %517 = vmatpush1.msra.mxu0 0.0
    %518 = vmatprep.mubr.f32.mxu0 0.0
    %519 = vmatmul.mubr.f32.gmra.mrb[0].mxu0 %v452
    %v520 = vpop.f32.mrb[0].mxu0
    %v521 = vadd.f32 %v449, %v520
    %v522 = vpop.f32.mrb[0].mxu0
    %523 = vdwg.mxu0
    %v524 = vmul.f32 %v521, 0.5
    %v525 = vmul.f32 %v524, 1.442695
    %v526 = vpow.pop %v525
    %v527 = vmin.f32 %v526, 100.0
    %529 = vrot.lane.b32.xlu0 %v280, 16
    %v530 = vpop.permute.xlu0 %529
    %v532 = vmul.f32 %v527, %v530
    %534 = vrot.lane.b32.xlu0 %v532, 112
    %v535 = vpop.permute.xlu0 %534
    %v537 = vadd.f32 %v521, %v535
    %v538 = vlaneseq
    %v539 = vshrl.u32 %v538, 7
    %v540 = vsub.s32 0, %v539
    %v541 = vrot.slane %v34, %v540
    %v543 = vsel %vm49, %v537, 0
    %545 = vmatprep.subr.mxu0 0.0
    %546 = vmatpush1.msra.mxu0 %v270
    %547 = vmatprep.subr.mxu0 0.0
    %548 = vmatpush1.msra.mxu0 %v271
    %549 = vmatprep.subr.mxu0 0.0
    %550 = vmatpush1.msra.mxu0 0.0
    %551 = vmatprep.subr.mxu0 0.0
    %552 = vmatpush1.msra.mxu0 0.0
    %553 = vmatprep.subr.mxu0 0.0
    %554 = vmatpush1.msra.mxu0 0.0
    %555 = vmatprep.subr.mxu0 0.0
    %556 = vmatpush1.msra.mxu0 0.0
    %557 = vmatprep.subr.mxu0 0.0
    %558 = vmatpush1.msra.mxu0 0.0
    %559 = vmatprep.subr.mxu0 0.0
    %560 = vmatpush1.msra.mxu0 0.0
    %561 = vmatprep.subr.mxu0 0.0
    %562 = vmatpush1.msra.mxu0 0.0
    %563 = vmatprep.subr.mxu0 0.0
    %564 = vmatpush1.msra.mxu0 0.0
    %565 = vmatprep.subr.mxu0 0.0
    %566 = vmatpush1.msra.mxu0 0.0
    %567 = vmatprep.subr.mxu0 0.0
    %568 = vmatpush1.msra.mxu0 0.0
    %569 = vmatprep.subr.mxu0 0.0
    %570 = vmatpush1.msra.mxu0 0.0
    %571 = vmatprep.subr.mxu0 0.0
    %572 = vmatpush1.msra.mxu0 0.0
    %573 = vmatprep.subr.mxu0 0.0
    %574 = vmatpush1.msra.mxu0 0.0
    %575 = vmatprep.subr.mxu0 0.0
    %576 = vmatpush1.msra.mxu0 0.0
    %577 = vmatprep.subr.mxu0 0.0
    %578 = vmatpush1.msra.mxu0 0.0
    %579 = vmatprep.subr.mxu0 0.0
    %580 = vmatpush1.msra.mxu0 0.0
    %581 = vmatprep.subr.mxu0 0.0
    %582 = vmatpush1.msra.mxu0 0.0
    %583 = vmatprep.subr.mxu0 0.0
    %584 = vmatpush1.msra.mxu0 0.0
    %585 = vmatprep.subr.mxu0 0.0
    %586 = vmatpush1.msra.mxu0 0.0
    %587 = vmatprep.subr.mxu0 0.0
    %588 = vmatpush1.msra.mxu0 0.0
    %589 = vmatprep.subr.mxu0 0.0
    %590 = vmatpush1.msra.mxu0 0.0
    %591 = vmatprep.subr.mxu0 0.0
    %592 = vmatpush1.msra.mxu0 0.0
    %593 = vmatprep.subr.mxu0 0.0
    %594 = vmatpush1.msra.mxu0 0.0
    %595 = vmatprep.subr.mxu0 0.0
    %596 = vmatpush1.msra.mxu0 0.0
    %597 = vmatprep.subr.mxu0 0.0
    %598 = vmatpush1.msra.mxu0 0.0
    %599 = vmatprep.subr.mxu0 0.0
    %600 = vmatpush1.msra.mxu0 0.0
    %601 = vmatprep.subr.mxu0 0.0
    %602 = vmatpush1.msra.mxu0 0.0
    %603 = vmatprep.subr.mxu0 0.0
    %604 = vmatpush1.msra.mxu0 0.0
    %605 = vmatprep.subr.mxu0 0.0
    %606 = vmatpush1.msra.mxu0 0.0
    %607 = vmatprep.subr.mxu0 0.0
    %608 = vmatpush1.msra.mxu0 0.0
    %609 = vmatprep.mubr.f32.mxu0 0.0
    %610 = vmatmul.mubr.f32.gmra.mrb[0].mxu0 %v543
    %v611 = vpop.f32.mrb[0].mxu0
    %v612 = vadd.f32 %v541, %v611
    %v613 = vpop.f32.mrb[0].mxu0
    %614 = vdwg.mxu0
    %v615 = vmax.f32 %v612, 0.0
    %v616 = vld [vmem:[#allocation3 + $0xc0] sm:$0xff]
    %v617 = vld [vmem:[#allocation3 + $0xc8] sm:$0xff]
    %v618 = vld [vmem:[#allocation3 + $0xd0] sm:$0xff]
    %v619 = vld [vmem:[#allocation3 + $0xd8] sm:$0xff]
    %621 = vrot.lane.b32.xlu0 %v352, 64
    %v622 = vpop.permute.xlu0 %621
    %v625 = vsel %vm160, %v615, 0
    %627 = vmatprep.subr.mxu0 0.0
    %628 = vmatpush1.msra.mxu0 %v616
    %629 = vmatprep.subr.mxu0 0.0
    %630 = vmatpush1.msra.mxu0 %v617
    %631 = vmatprep.subr.mxu0 0.0
    %632 = vmatpush1.msra.mxu0 %v618
    %633 = vmatprep.subr.mxu0 0.0
    %634 = vmatpush1.msra.mxu0 %v619
    %635 = vmatprep.subr.mxu0 0.0
    %636 = vmatpush1.msra.mxu0 0.0
    %637 = vmatprep.subr.mxu0 0.0
    %638 = vmatpush1.msra.mxu0 0.0
    %639 = vmatprep.subr.mxu0 0.0
    %640 = vmatpush1.msra.mxu0 0.0
    %641 = vmatprep.subr.mxu0 0.0
    %642 = vmatpush1.msra.mxu0 0.0
    %643 = vmatprep.subr.mxu0 0.0
    %644 = vmatpush1.msra.mxu0 0.0
    %645 = vmatprep.subr.mxu0 0.0
    %646 = vmatpush1.msra.mxu0 0.0
    %647 = vmatprep.subr.mxu0 0.0
    %648 = vmatpush1.msra.mxu0 0.0
    %649 = vmatprep.subr.mxu0 0.0
    %650 = vmatpush1.msra.mxu0 0.0
    %651 = vmatprep.subr.mxu0 0.0
    %652 = vmatpush1.msra.mxu0 0.0
    %653 = vmatprep.subr.mxu0 0.0
    %654 = vmatpush1.msra.mxu0 0.0
    %655 = vmatprep.subr.mxu0 0.0
    %656 = vmatpush1.msra.mxu0 0.0
    %657 = vmatprep.subr.mxu0 0.0
    %658 = vmatpush1.msra.mxu0 0.0
    %659 = vmatprep.subr.mxu0 0.0
    %660 = vmatpush1.msra.mxu0 0.0
    %661 = vmatprep.subr.mxu0 0.0
    %662 = vmatpush1.msra.mxu0 0.0
    %663 = vmatprep.subr.mxu0 0.0
    %664 = vmatpush1.msra.mxu0 0.0
    %665 = vmatprep.subr.mxu0 0.0
    %666 = vmatpush1.msra.mxu0 0.0
    %667 = vmatprep.subr.mxu0 0.0
    %668 = vmatpush1.msra.mxu0 0.0
    %669 = vmatprep.subr.mxu0 0.0
    %670 = vmatpush1.msra.mxu0 0.0
    %671 = vmatprep.subr.mxu0 0.0
    %672 = vmatpush1.msra.mxu0 0.0
    %673 = vmatprep.subr.mxu0 0.0
    %674 = vmatpush1.msra.mxu0 0.0
    %675 = vmatprep.subr.mxu0 0.0
    %676 = vmatpush1.msra.mxu0 0.0
    %677 = vmatprep.subr.mxu0 0.0
    %678 = vmatpush1.msra.mxu0 0.0
    %679 = vmatprep.subr.mxu0 0.0
    %680 = vmatpush1.msra.mxu0 0.0
    %681 = vmatprep.subr.mxu0 0.0
    %682 = vmatpush1.msra.mxu0 0.0
    %683 = vmatprep.subr.mxu0 0.0
    %684 = vmatpush1.msra.mxu0 0.0
    %685 = vmatprep.subr.mxu0 0.0
    %686 = vmatpush1.msra.mxu0 0.0
    %687 = vmatprep.subr.mxu0 0.0
    %688 = vmatpush1.msra.mxu0 0.0
    %689 = vmatprep.subr.mxu0 0.0
    %690 = vmatpush1.msra.mxu0 0.0
    %691 = vmatprep.mubr.f32.mxu0 0.0
    %692 = vmatmul.mubr.f32.gmra.mrb[0].mxu0 %v625
    %v693 = vpop.f32.mrb[0].mxu0
    %v694 = vadd.f32 %v622, %v693
    %v695 = vpop.f32.mrb[0].mxu0
    %696 = vdwg.mxu0
    %v697 = vlaneseq
    %v698 = vshrl.u32 %v697, 7
    %v699 = vsub.s32 0, %v698
    %v700 = vrot.slane %v35, %v699
    %v701 = vadd.f32 %v694, %v700
    %v702 = vmax.f32 %v701, 0.0
    %v703 = vld [vmem:[#allocation3 + $0xe0] sm:$0xff]
    %v704 = vld [vmem:[#allocation3 + $0xe8] sm:$0xff]
    %v705 = vld [vmem:[#allocation3 + $0xf0] sm:$0xff]
    %v706 = vld [vmem:[#allocation3 + $0xf8] sm:$0xff]
    %v707 = vlaneseq
    %v708 = vshrl.u32 %v707, 7
    %v709 = vsub.s32 0, %v708
    %v710 = vrot.slane %v36, %v709
    %v712 = vsel %vm160, %v702, 0
    %714 = vmatprep.subr.mxu0 0.0
    %715 = vmatpush1.msra.mxu0 %v703
    %716 = vmatprep.subr.mxu0 0.0
    %717 = vmatpush1.msra.mxu0 %v704
    %718 = vmatprep.subr.mxu0 0.0
    %719 = vmatpush1.msra.mxu0 %v705
    %720 = vmatprep.subr.mxu0 0.0
    %721 = vmatpush1.msra.mxu0 %v706
    %722 = vmatprep.subr.mxu0 0.0
    %723 = vmatpush1.msra.mxu0 0.0
    %724 = vmatprep.subr.mxu0 0.0
    %725 = vmatpush1.msra.mxu0 0.0
    %726 = vmatprep.subr.mxu0 0.0
    %727 = vmatpush1.msra.mxu0 0.0
    %728 = vmatprep.subr.mxu0 0.0
    %729 = vmatpush1.msra.mxu0 0.0
    %730 = vmatprep.subr.mxu0 0.0
    %731 = vmatpush1.msra.mxu0 0.0
    %732 = vmatprep.subr.mxu0 0.0
    %733 = vmatpush1.msra.mxu0 0.0
    %734 = vmatprep.subr.mxu0 0.0
    %735 = vmatpush1.msra.mxu0 0.0
    %736 = vmatprep.subr.mxu0 0.0
    %737 = vmatpush1.msra.mxu0 0.0
    %738 = vmatprep.subr.mxu0 0.0
    %739 = vmatpush1.msra.mxu0 0.0
    %740 = vmatprep.subr.mxu0 0.0
    %741 = vmatpush1.msra.mxu0 0.0
    %742 = vmatprep.subr.mxu0 0.0
    %743 = vmatpush1.msra.mxu0 0.0
    %744 = vmatprep.subr.mxu0 0.0
    %745 = vmatpush1.msra.mxu0 0.0
    %746 = vmatprep.subr.mxu0 0.0
    %747 = vmatpush1.msra.mxu0 0.0
    %748 = vmatprep.subr.mxu0 0.0
    %749 = vmatpush1.msra.mxu0 0.0
    %750 = vmatprep.subr.mxu0 0.0
    %751 = vmatpush1.msra.mxu0 0.0
    %752 = vmatprep.subr.mxu0 0.0
    %753 = vmatpush1.msra.mxu0 0.0
    %754 = vmatprep.subr.mxu0 0.0
    %755 = vmatpush1.msra.mxu0 0.0
    %756 = vmatprep.subr.mxu0 0.0
    %757 = vmatpush1.msra.mxu0 0.0
    %758 = vmatprep.subr.mxu0 0.0
    %759 = vmatpush1.msra.mxu0 0.0
    %760 = vmatprep.subr.mxu0 0.0
    %761 = vmatpush1.msra.mxu0 0.0
    %762 = vmatprep.subr.mxu0 0.0
    %763 = vmatpush1.msra.mxu0 0.0
    %764 = vmatprep.subr.mxu0 0.0
    %765 = vmatpush1.msra.mxu0 0.0
    %766 = vmatprep.subr.mxu0 0.0
    %767 = vmatpush1.msra.mxu0 0.0
    %768 = vmatprep.subr.mxu0 0.0
    %769 = vmatpush1.msra.mxu0 0.0
    %770 = vmatprep.subr.mxu0 0.0
    %771 = vmatpush1.msra.mxu0 0.0
    %772 = vmatprep.subr.mxu0 0.0
    %773 = vmatpush1.msra.mxu0 0.0
    %774 = vmatprep.subr.mxu0 0.0
    %775 = vmatpush1.msra.mxu0 0.0
    %776 = vmatprep.subr.mxu0 0.0
    %777 = vmatpush1.msra.mxu0 0.0
    %778 = vmatprep.mubr.f32.mxu0 0.0
    %779 = vmatmul.mubr.f32.gmra.mrb[0].mxu0 %v712
    %v780 = vpop.f32.mrb[0].mxu0
    %v781 = vadd.f32 %v710, %v780
    %v782 = vpop.f32.mrb[0].mxu0
    %783 = vdwg.mxu0
    %v784 = vlaneseq
    %v785 = vshrl.u32 %v784, 7
    %v786 = vsub.s32 0, %v785
    %v787 = vrot.slane %v37, %v786
    %788 = vmatprep.subr.mxu0 0.0
    %789 = vmatpush1.msra.mxu0 %v272
    %790 = vmatprep.subr.mxu0 0.0
    %791 = vmatpush1.msra.mxu0 %v273
    %792 = vmatprep.subr.mxu0 0.0
    %793 = vmatpush1.msra.mxu0 %v274
    %794 = vmatprep.subr.mxu0 0.0
    %795 = vmatpush1.msra.mxu0 %v275
    %796 = vmatprep.subr.mxu0 0.0
    %797 = vmatpush1.msra.mxu0 0.0
    %798 = vmatprep.subr.mxu0 0.0
    %799 = vmatpush1.msra.mxu0 0.0
    %800 = vmatprep.subr.mxu0 0.0
    %801 = vmatpush1.msra.mxu0 0.0
    %802 = vmatprep.subr.mxu0 0.0
    %803 = vmatpush1.msra.mxu0 0.0
    %804 = vmatprep.subr.mxu0 0.0
    %805 = vmatpush1.msra.mxu0 0.0
    %806 = vmatprep.subr.mxu0 0.0
    %807 = vmatpush1.msra.mxu0 0.0
    %808 = vmatprep.subr.mxu0 0.0
    %809 = vmatpush1.msra.mxu0 0.0
    %810 = vmatprep.subr.mxu0 0.0
    %811 = vmatpush1.msra.mxu0 0.0
    %812 = vmatprep.subr.mxu0 0.0
    %813 = vmatpush1.msra.mxu0 0.0
    %814 = vmatprep.subr.mxu0 0.0
    %815 = vmatpush1.msra.mxu0 0.0
    %816 = vmatprep.subr.mxu0 0.0
    %817 = vmatpush1.msra.mxu0 0.0
    %818 = vmatprep.subr.mxu0 0.0
    %819 = vmatpush1.msra.mxu0 0.0
    %820 = vmatprep.subr.mxu0 0.0
    %821 = vmatpush1.msra.mxu0 0.0
    %822 = vmatprep.subr.mxu0 0.0
    %823 = vmatpush1.msra.mxu0 0.0
    %824 = vmatprep.subr.mxu0 0.0
    %825 = vmatpush1.msra.mxu0 0.0
    %826 = vmatprep.subr.mxu0 0.0
    %827 = vmatpush1.msra.mxu0 0.0
    %828 = vmatprep.subr.mxu0 0.0
    %829 = vmatpush1.msra.mxu0 0.0
    %830 = vmatprep.subr.mxu0 0.0
    %831 = vmatpush1.msra.mxu0 0.0
    %832 = vmatprep.subr.mxu0 0.0
    %833 = vmatpush1.msra.mxu0 0.0
    %834 = vmatprep.subr.mxu0 0.0
    %835 = vmatpush1.msra.mxu0 0.0
    %836 = vmatprep.subr.mxu0 0.0
    %837 = vmatpush1.msra.mxu0 0.0
    %838 = vmatprep.subr.mxu0 0.0
    %839 = vmatpush1.msra.mxu0 0.0
    %840 = vmatprep.subr.mxu0 0.0
    %841 = vmatpush1.msra.mxu0 0.0
    %842 = vmatprep.subr.mxu0 0.0
    %843 = vmatpush1.msra.mxu0 0.0
    %844 = vmatprep.subr.mxu0 0.0
    %845 = vmatpush1.msra.mxu0 0.0
    %846 = vmatprep.subr.mxu0 0.0
    %847 = vmatpush1.msra.mxu0 0.0
    %848 = vmatprep.subr.mxu0 0.0
    %849 = vmatpush1.msra.mxu0 0.0
    %850 = vmatprep.subr.mxu0 0.0
    %851 = vmatpush1.msra.mxu0 0.0
    %852 = vmatprep.mubr.f32.mxu0 0.0
    %853 = vmatmul.mubr.f32.gmra.mrb[0].mxu0 %v712
    %v854 = vpop.f32.mrb[0].mxu0
    %v855 = vadd.f32 %v787, %v854
    %v856 = vpop.f32.mrb[0].mxu0
    %857 = vdwg.mxu0
    %v858 = vmax.f32 %v855, 0.0
    %v859 = vld [vmem:[#allocation3 + $0x140] sm:$0xff]
    %v860 = vld [vmem:[#allocation3 + $0x148] sm:$0xff]
    %v861 = vld [vmem:[#allocation3 + $0x150] sm:$0xff]
    %v862 = vld [vmem:[#allocation3 + $0x158] sm:$0xff]
    %863 = vmatprep.subr.mxu0 0.0
    %864 = vmatpush1.msra.mxu0 %v859
    %865 = vmatprep.subr.mxu0 0.0
    %866 = vmatpush1.msra.mxu0 %v860
    %867 = vmatprep.subr.mxu0 0.0
    %868 = vmatpush1.msra.mxu0 %v861
    %869 = vmatprep.subr.mxu0 0.0
    %870 = vmatpush1.msra.mxu0 %v862
    %871 = vmatprep.subr.mxu0 0.0
    %872 = vmatpush1.msra.mxu0 0.0
    %873 = vmatprep.subr.mxu0 0.0
    %874 = vmatpush1.msra.mxu0 0.0
    %875 = vmatprep.subr.mxu0 0.0
    %876 = vmatpush1.msra.mxu0 0.0
    %877 = vmatprep.subr.mxu0 0.0
    %878 = vmatpush1.msra.mxu0 0.0
    %879 = vmatprep.subr.mxu0 0.0
    %880 = vmatpush1.msra.mxu0 0.0
    %881 = vmatprep.subr.mxu0 0.0
    %882 = vmatpush1.msra.mxu0 0.0
    %883 = vmatprep.subr.mxu0 0.0
    %884 = vmatpush1.msra.mxu0 0.0
    %885 = vmatprep.subr.mxu0 0.0
    %886 = vmatpush1.msra.mxu0 0.0
    %887 = vmatprep.subr.mxu0 0.0
    %888 = vmatpush1.msra.mxu0 0.0
    %889 = vmatprep.subr.mxu0 0.0
    %890 = vmatpush1.msra.mxu0 0.0
    %891 = vmatprep.subr.mxu0 0.0
    %892 = vmatpush1.msra.mxu0 0.0
    %893 = vmatprep.subr.mxu0 0.0
    %894 = vmatpush1.msra.mxu0 0.0
    %895 = vmatprep.subr.mxu0 0.0
    %896 = vmatpush1.msra.mxu0 0.0
    %897 = vmatprep.subr.mxu0 0.0
    %898 = vmatpush1.msra.mxu0 0.0
    %899 = vmatprep.subr.mxu0 0.0
    %900 = vmatpush1.msra.mxu0 0.0
    %901 = vmatprep.subr.mxu0 0.0
    %902 = vmatpush1.msra.mxu0 0.0
    %903 = vmatprep.subr.mxu0 0.0
    %904 = vmatpush1.msra.mxu0 0.0
    %905 = vmatprep.subr.mxu0 0.0
    %906 = vmatpush1.msra.mxu0 0.0
    %907 = vmatprep.subr.mxu0 0.0
    %908 = vmatpush1.msra.mxu0 0.0
    %909 = vmatprep.subr.mxu0 0.0
    %910 = vmatpush1.msra.mxu0 0.0
    %911 = vmatprep.subr.mxu0 0.0
    %912 = vmatpush1.msra.mxu0 0.0
    %913 = vmatprep.subr.mxu0 0.0
    %914 = vmatpush1.msra.mxu0 0.0
    %915 = vmatprep.subr.mxu0 0.0
    %916 = vmatpush1.msra.mxu0 0.0
    %917 = vmatprep.subr.mxu0 0.0
    %918 = vmatpush1.msra.mxu0 0.0
    %919 = vmatprep.subr.mxu0 0.0
    %920 = vmatpush1.msra.mxu0 0.0
    %921 = vmatprep.subr.mxu0 0.0
    %922 = vmatpush1.msra.mxu0 0.0
    %923 = vmatprep.subr.mxu0 0.0
    %924 = vmatpush1.msra.mxu0 0.0
    %925 = vmatprep.subr.mxu0 0.0
    %926 = vmatpush1.msra.mxu0 0.0
    %927 = vmatprep.mubr.f32.mxu0 0.0
    %928 = vmatmul.mubr.f32.gmra.mrb[0].mxu0 %v625
    %v929 = vpop.f32.mrb[0].mxu0
    %v930 = vadd.f32 0.0, %v929
    %v931 = vpop.f32.mrb[0].mxu0
    %932 = vdwg.mxu0
    %v934 = vsel %vm160, %v858, 0
    %936 = vmatprep.subr.mxu0 0.0
    %937 = vmatpush1.msra.mxu0 %v276
    %938 = vmatprep.subr.mxu0 0.0
    %939 = vmatpush1.msra.mxu0 %v277
    %940 = vmatprep.subr.mxu0 0.0
    %941 = vmatpush1.msra.mxu0 %v278
    %942 = vmatprep.subr.mxu0 0.0
    %943 = vmatpush1.msra.mxu0 %v279
    %944 = vmatprep.subr.mxu0 0.0
    %945 = vmatpush1.msra.mxu0 0.0
    %946 = vmatprep.subr.mxu0 0.0
    %947 = vmatpush1.msra.mxu0 0.0
    %948 = vmatprep.subr.mxu0 0.0
    %949 = vmatpush1.msra.mxu0 0.0
    %950 = vmatprep.subr.mxu0 0.0
    %951 = vmatpush1.msra.mxu0 0.0
    %952 = vmatprep.subr.mxu0 0.0
    %953 = vmatpush1.msra.mxu0 0.0
    %954 = vmatprep.subr.mxu0 0.0
    %955 = vmatpush1.msra.mxu0 0.0
    %956 = vmatprep.subr.mxu0 0.0
    %957 = vmatpush1.msra.mxu0 0.0
    %958 = vmatprep.subr.mxu0 0.0
    %959 = vmatpush1.msra.mxu0 0.0
    %960 = vmatprep.subr.mxu0 0.0
    %961 = vmatpush1.msra.mxu0 0.0
    %962 = vmatprep.subr.mxu0 0.0
    %963 = vmatpush1.msra.mxu0 0.0
    %964 = vmatprep.subr.mxu0 0.0
    %965 = vmatpush1.msra.mxu0 0.0
    %966 = vmatprep.subr.mxu0 0.0
    %967 = vmatpush1.msra.mxu0 0.0
    %968 = vmatprep.subr.mxu0 0.0
    %969 = vmatpush1.msra.mxu0 0.0
    %970 = vmatprep.subr.mxu0 0.0
    %971 = vmatpush1.msra.mxu0 0.0
    %972 = vmatprep.subr.mxu0 0.0
    %973 = vmatpush1.msra.mxu0 0.0
    %974 = vmatprep.subr.mxu0 0.0
    %975 = vmatpush1.msra.mxu0 0.0
    %976 = vmatprep.subr.mxu0 0.0
    %977 = vmatpush1.msra.mxu0 0.0
    %978 = vmatprep.subr.mxu0 0.0
    %979 = vmatpush1.msra.mxu0 0.0
    %980 = vmatprep.subr.mxu0 0.0
    %981 = vmatpush1.msra.mxu0 0.0
    %982 = vmatprep.subr.mxu0 0.0
    %983 = vmatpush1.msra.mxu0 0.0
    %984 = vmatprep.subr.mxu0 0.0
    %985 = vmatpush1.msra.mxu0 0.0
    %986 = vmatprep.subr.mxu0 0.0
    %987 = vmatpush1.msra.mxu0 0.0
    %988 = vmatprep.subr.mxu0 0.0
    %989 = vmatpush1.msra.mxu0 0.0
    %990 = vmatprep.subr.mxu0 0.0
    %991 = vmatpush1.msra.mxu0 0.0
    %992 = vmatprep.subr.mxu0 0.0
    %993 = vmatpush1.msra.mxu0 0.0
    %994 = vmatprep.subr.mxu0 0.0
    %995 = vmatpush1.msra.mxu0 0.0
    %996 = vmatprep.subr.mxu0 0.0
    %997 = vmatpush1.msra.mxu0 0.0
    %998 = vmatprep.subr.mxu0 0.0
    %999 = vmatpush1.msra.mxu0 0.0
    %1000 = vmatprep.mubr.f32.mxu0 0.0
    %1001 = vmatmul.mubr.f32.gmra.mrb[0].mxu0 %v934
    %v1002 = vpop.f32.mrb[0].mxu0
    %v1003 = vadd.f32 %v930, %v1002
    %v1004 = vpop.f32.mrb[0].mxu0
    %1005 = vdwg.mxu0
    %v1006 = vadd.f32 %v1003, %v422
    %v1007 = vlaneseq
    %v1008 = vshrl.u32 %v1007, 7
    %v1009 = vsub.s32 0, %v1008
    %v1010 = vrot.slane %v38, %v1009
    %v1011 = vadd.f32 %v1006, %v1010
    %v1012 = vxor.u32 %v1011, 2147483648
    %v1013 = vmul.f32 %v1012, 1.442695
    %v1014 = vpow.pop %v1013
    %v1015 = vadd.f32 %v1014, 1.0
    %v1016 = vrcp.pop %v1015
    %v1017 = vmul.f32 1.0, %v1016
    %v1018 = vtanh.pop %v1011
    %v1019 = vmul.f32 %v1017, 0.0
    %1021 = vrot.lane.b32.xlu0 %v1018, 64
    %v1022 = vpop.permute.xlu0 %1021
    %v1024 = vmul.f32 %v1017, %v1022
    %1026 = vrot.lane.b32.xlu0 %v1024, 32
    %v1027 = vpop.permute.xlu0 %1026
    %v1029 = vadd.f32 %v1019, %v1027
    %v1030 = vtanh.pop %v1029
    %1032 = vrot.lane.b32.xlu0 %v1030, 64
    %v1033 = vpop.permute.xlu0 %1032
    %v1035 = vmul.f32 %v1017, %v1033
    %v1036 = vld [vmem:[#allocation2 + $0x4] sm:$0xf]
    %1038 = vrot.lane.b32.xlu0 %v1035, 32
    %v1039 = vpop.permute.xlu0 %1038
    %v1040 = vsel %vm160, %v1039, 0
    %1042 = vmatprep.subr.mxu0 0.0
    %1043 = vmatpush1.msra.mxu0 %v262
    %1044 = vmatprep.subr.mxu0 0.0
    %1045 = vmatpush1.msra.mxu0 %v263
    %1046 = vmatprep.subr.mxu0 0.0
    %1047 = vmatpush1.msra.mxu0 %v264
    %1048 = vmatprep.subr.mxu0 0.0
    %1049 = vmatpush1.msra.mxu0 %v265
    %1050 = vmatprep.subr.mxu0 0.0
    %1051 = vmatpush1.msra.mxu0 0.0
    %1052 = vmatprep.subr.mxu0 0.0
    %1053 = vmatpush1.msra.mxu0 0.0
    %1054 = vmatprep.subr.mxu0 0.0
    %1055 = vmatpush1.msra.mxu0 0.0
    %1056 = vmatprep.subr.mxu0 0.0
    %1057 = vmatpush1.msra.mxu0 0.0
    %1058 = vmatprep.subr.mxu0 0.0
    %1059 = vmatpush1.msra.mxu0 0.0
    %1060 = vmatprep.subr.mxu0 0.0
    %1061 = vmatpush1.msra.mxu0 0.0
    %1062 = vmatprep.subr.mxu0 0.0
    %1063 = vmatpush1.msra.mxu0 0.0
    %1064 = vmatprep.subr.mxu0 0.0
    %1065 = vmatpush1.msra.mxu0 0.0
    %1066 = vmatprep.subr.mxu0 0.0
    %1067 = vmatpush1.msra.mxu0 0.0
    %1068 = vmatprep.subr.mxu0 0.0
    %1069 = vmatpush1.msra.mxu0 0.0
    %1070 = vmatprep.subr.mxu0 0.0
    %1071 = vmatpush1.msra.mxu0 0.0
    %1072 = vmatprep.subr.mxu0 0.0
    %1073 = vmatpush1.msra.mxu0 0.0
    %1074 = vmatprep.subr.mxu0 0.0
    %1075 = vmatpush1.msra.mxu0 0.0
    %1076 = vmatprep.subr.mxu0 0.0
    %1077 = vmatpush1.msra.mxu0 0.0
    %1078 = vmatprep.subr.mxu0 0.0
    %1079 = vmatpush1.msra.mxu0 0.0
    %1080 = vmatprep.subr.mxu0 0.0
    %1081 = vmatpush1.msra.mxu0 0.0
    %1082 = vmatprep.subr.mxu0 0.0
    %1083 = vmatpush1.msra.mxu0 0.0
    %1084 = vmatprep.subr.mxu0 0.0
    %1085 = vmatpush1.msra.mxu0 0.0
    %1086 = vmatprep.subr.mxu0 0.0
    %1087 = vmatpush1.msra.mxu0 0.0
    %1088 = vmatprep.subr.mxu0 0.0
    %1089 = vmatpush1.msra.mxu0 0.0
    %1090 = vmatprep.subr.mxu0 0.0
    %1091 = vmatpush1.msra.mxu0 0.0
    %1092 = vmatprep.subr.mxu0 0.0
    %1093 = vmatpush1.msra.mxu0 0.0
    %1094 = vmatprep.subr.mxu0 0.0
    %1095 = vmatpush1.msra.mxu0 0.0
    %1096 = vmatprep.subr.mxu0 0.0
    %1097 = vmatpush1.msra.mxu0 0.0
    %1098 = vmatprep.subr.mxu0 0.0
    %1099 = vmatpush1.msra.mxu0 0.0
    %1100 = vmatprep.subr.mxu0 0.0
    %1101 = vmatpush1.msra.mxu0 0.0
    %1102 = vmatprep.subr.mxu0 0.0
    %1103 = vmatpush1.msra.mxu0 0.0
    %1104 = vmatprep.subr.mxu0 0.0
    %1105 = vmatpush1.msra.mxu0 0.0
    %1106 = vmatprep.mubr.f32.mxu0 0.0
    %1107 = vmatmul.mubr.f32.gmra.mrb[0].mxu0 %v1040
    %v1108 = vpop.f32.mrb[0].mxu0
    %v1109 = vadd.f32 0.0, %v1108
    %v1110 = vpop.f32.mrb[0].mxu0
    %1111 = vdwg.mxu0
    %1112 = vmatprep.subr.mxu0 0.0
    %1113 = vmatpush1.msra.mxu0 %v266
    %1114 = vmatprep.subr.mxu0 0.0
    %1115 = vmatpush1.msra.mxu0 %v267
    %1116 = vmatprep.subr.mxu0 0.0
    %1117 = vmatpush1.msra.mxu0 %v268
    %1118 = vmatprep.subr.mxu0 0.0
    %1119 = vmatpush1.msra.mxu0 %v269
    %1120 = vmatprep.subr.mxu0 0.0
    %1121 = vmatpush1.msra.mxu0 0.0
    %1122 = vmatprep.subr.mxu0 0.0
    %1123 = vmatpush1.msra.mxu0 0.0
    %1124 = vmatprep.subr.mxu0 0.0
    %1125 = vmatpush1.msra.mxu0 0.0
    %1126 = vmatprep.subr.mxu0 0.0
    %1127 = vmatpush1.msra.mxu0 0.0
    %1128 = vmatprep.subr.mxu0 0.0
    %1129 = vmatpush1.msra.mxu0 0.0
    %1130 = vmatprep.subr.mxu0 0.0
    %1131 = vmatpush1.msra.mxu0 0.0
    %1132 = vmatprep.subr.mxu0 0.0
    %1133 = vmatpush1.msra.mxu0 0.0
    %1134 = vmatprep.subr.mxu0 0.0
    %1135 = vmatpush1.msra.mxu0 0.0
    %1136 = vmatprep.subr.mxu0 0.0
    %1137 = vmatpush1.msra.mxu0 0.0
    %1138 = vmatprep.subr.mxu0 0.0
    %1139 = vmatpush1.msra.mxu0 0.0
    %1140 = vmatprep.subr.mxu0 0.0
    %1141 = vmatpush1.msra.mxu0 0.0
    %1142 = vmatprep.subr.mxu0 0.0
    %1143 = vmatpush1.msra.mxu0 0.0
    %1144 = vmatprep.subr.mxu0 0.0
    %1145 = vmatpush1.msra.mxu0 0.0
    %1146 = vmatprep.subr.mxu0 0.0
    %1147 = vmatpush1.msra.mxu0 0.0
    %1148 = vmatprep.subr.mxu0 0.0
    %1149 = vmatpush1.msra.mxu0 0.0
    %1150 = vmatprep.subr.mxu0 0.0
    %1151 = vmatpush1.msra.mxu0 0.0
    %1152 = vmatprep.subr.mxu0 0.0
    %1153 = vmatpush1.msra.mxu0 0.0
    %1154 = vmatprep.subr.mxu0 0.0
    %1155 = vmatpush1.msra.mxu0 0.0
    %1156 = vmatprep.subr.mxu0 0.0
    %1157 = vmatpush1.msra.mxu0 0.0
    %1158 = vmatprep.subr.mxu0 0.0
    %1159 = vmatpush1.msra.mxu0 0.0
    %1160 = vmatprep.subr.mxu0 0.0
    %1161 = vmatpush1.msra.mxu0 0.0
    %1162 = vmatprep.subr.mxu0 0.0
    %1163 = vmatpush1.msra.mxu0 0.0
    %1164 = vmatprep.subr.mxu0 0.0
    %1165 = vmatpush1.msra.mxu0 0.0
    %1166 = vmatprep.subr.mxu0 0.0
    %1167 = vmatpush1.msra.mxu0 0.0
    %1168 = vmatprep.subr.mxu0 0.0
    %1169 = vmatpush1.msra.mxu0 0.0
    %1170 = vmatprep.subr.mxu0 0.0
    %1171 = vmatpush1.msra.mxu0 0.0
    %1172 = vmatprep.subr.mxu0 0.0
    %1173 = vmatpush1.msra.mxu0 0.0
    %1174 = vmatprep.subr.mxu0 0.0
    %1175 = vmatpush1.msra.mxu0 0.0
    %1176 = vmatprep.mubr.f32.mxu0 0.0
    %1177 = vmatmul.mubr.f32.gmra.mrb[0].mxu0 %v1040
    %v1178 = vpop.f32.mrb[0].mxu0
    %v1179 = vadd.f32 0.0, %v1178
    %v1180 = vpop.f32.mrb[0].mxu0
    %1181 = vdwg.mxu0
    %v1182 = vadd.f32 %v1036, %v1109
    %v1183 = vmax.f32 %v1182, 0.0
    %v1184 = vadd.f32 %v1109, %v433
    %v1185 = vmax.f32 %v1184, 0.0
    %v1186 = vsel %vm160, %v1183, %v1185
    %v1188 = vsel %vm450, %v1186, 0
    %1190 = vmatprep.subr.mxu0 0.0
    %1191 = vmatpush1.msra.mxu0 %v438
    %1192 = vmatprep.subr.mxu0 0.0
    %1193 = vmatpush1.msra.mxu0 %v439
    %1194 = vmatprep.subr.mxu0 0.0
    %1195 = vmatpush1.msra.mxu0 %v440
    %1196 = vmatprep.subr.mxu0 0.0
    %1197 = vmatpush1.msra.mxu0 %v441
    %1198 = vmatprep.subr.mxu0 0.0
    %1199 = vmatpush1.msra.mxu0 %v442
    %1200 = vmatprep.subr.mxu0 0.0
    %1201 = vmatpush1.msra.mxu0 %v443
    %1202 = vmatprep.subr.mxu0 0.0
    %1203 = vmatpush1.msra.mxu0 %v444
    %1204 = vmatprep.subr.mxu0 0.0
    %1205 = vmatpush1.msra.mxu0 %v445
    %1206 = vmatprep.subr.mxu0 0.0
    %1207 = vmatpush1.msra.mxu0 0.0
    %1208 = vmatprep.subr.mxu0 0.0
    %1209 = vmatpush1.msra.mxu0 0.0
    %1210 = vmatprep.subr.mxu0 0.0
    %1211 = vmatpush1.msra.mxu0 0.0
    %1212 = vmatprep.subr.mxu0 0.0
    %1213 = vmatpush1.msra.mxu0 0.0
    %1214 = vmatprep.subr.mxu0 0.0
    %1215 = vmatpush1.msra.mxu0 0.0
    %1216 = vmatprep.subr.mxu0 0.0
    %1217 = vmatpush1.msra.mxu0 0.0
    %1218 = vmatprep.subr.mxu0 0.0
    %1219 = vmatpush1.msra.mxu0 0.0
    %1220 = vmatprep.subr.mxu0 0.0
    %1221 = vmatpush1.msra.mxu0 0.0
    %1222 = vmatprep.subr.mxu0 0.0
    %1223 = vmatpush1.msra.mxu0 0.0
    %1224 = vmatprep.subr.mxu0 0.0
    %1225 = vmatpush1.msra.mxu0 0.0
    %1226 = vmatprep.subr.mxu0 0.0
    %1227 = vmatpush1.msra.mxu0 0.0
    %1228 = vmatprep.subr.mxu0 0.0
    %1229 = vmatpush1.msra.mxu0 0.0
    %1230 = vmatprep.subr.mxu0 0.0
    %1231 = vmatpush1.msra.mxu0 0.0
    %1232 = vmatprep.subr.mxu0 0.0
    %1233 = vmatpush1.msra.mxu0 0.0
    %1234 = vmatprep.subr.mxu0 0.0
    %1235 = vmatpush1.msra.mxu0 0.0
    %1236 = vmatprep.subr.mxu0 0.0
    %1237 = vmatpush1.msra.mxu0 0.0
    %1238 = vmatprep.subr.mxu0 0.0
    %1239 = vmatpush1.msra.mxu0 0.0
    %1240 = vmatprep.subr.mxu0 0.0
    %1241 = vmatpush1.msra.mxu0 0.0
    %1242 = vmatprep.subr.mxu0 0.0
    %1243 = vmatpush1.msra.mxu0 0.0
    %1244 = vmatprep.subr.mxu0 0.0
    %1245 = vmatpush1.msra.mxu0 0.0
    %1246 = vmatprep.subr.mxu0 0.0
    %1247 = vmatpush1.msra.mxu0 0.0
    %1248 = vmatprep.subr.mxu0 0.0
    %1249 = vmatpush1.msra.mxu0 0.0
    %1250 = vmatprep.subr.mxu0 0.0
    %1251 = vmatpush1.msra.mxu0 0.0
    %1252 = vmatprep.subr.mxu0 0.0
    %1253 = vmatpush1.msra.mxu0 0.0
    %1254 = vmatprep.mubr.f32.mxu0 0.0
    %1255 = vmatmul.mubr.f32.gmra.mrb[0].mxu0 %v1188
    %v1256 = vpop.f32.mrb[0].mxu0
    %v1257 = vadd.f32 %v449, %v1256
    %v1258 = vpop.f32.mrb[0].mxu0
    %1259 = vdwg.mxu0
    %v1260 = vmul.f32 %v1257, 0.5
    %v1261 = vmul.f32 %v1260, 1.442695
    %v1262 = vpow.pop %v1261
    %v1263 = vmin.f32 %v1262, 100.0
    %v1264 = vmul.f32 %v1263, %v280
    %1266 = vrot.lane.b32.xlu0 %v1264, 112
    %v1267 = vpop.permute.xlu0 %1266
    %v1269 = vadd.f32 %v1257, %v1267
    %v1271 = vsel %vm49, %v1269, 0
    %1273 = vmatprep.subr.mxu0 0.0
    %1274 = vmatpush1.msra.mxu0 %v270
    %1275 = vmatprep.subr.mxu0 0.0
    %1276 = vmatpush1.msra.mxu0 %v271
    %1277 = vmatprep.subr.mxu0 0.0
    %1278 = vmatpush1.msra.mxu0 0.0
    %1279 = vmatprep.subr.mxu0 0.0
    %1280 = vmatpush1.msra.mxu0 0.0
    %1281 = vmatprep.subr.mxu0 0.0
    %1282 = vmatpush1.msra.mxu0 0.0
    %1283 = vmatprep.subr.mxu0 0.0
    %1284 = vmatpush1.msra.mxu0 0.0
    %1285 = vmatprep.subr.mxu0 0.0
    %1286 = vmatpush1.msra.mxu0 0.0
    %1287 = vmatprep.subr.mxu0 0.0
    %1288 = vmatpush1.msra.mxu0 0.0
    %1289 = vmatprep.subr.mxu0 0.0
    %1290 = vmatpush1.msra.mxu0 0.0
    %1291 = vmatprep.subr.mxu0 0.0
    %1292 = vmatpush1.msra.mxu0 0.0
    %1293 = vmatprep.subr.mxu0 0.0
    %1294 = vmatpush1.msra.mxu0 0.0
    %1295 = vmatprep.subr.mxu0 0.0
    %1296 = vmatpush1.msra.mxu0 0.0
    %1297 = vmatprep.subr.mxu0 0.0
    %1298 = vmatpush1.msra.mxu0 0.0
    %1299 = vmatprep.subr.mxu0 0.0
    %1300 = vmatpush1.msra.mxu0 0.0
    %1301 = vmatprep.subr.mxu0 0.0
    %1302 = vmatpush1.msra.mxu0 0.0
    %1303 = vmatprep.subr.mxu0 0.0
    %1304 = vmatpush1.msra.mxu0 0.0
    %1305 = vmatprep.subr.mxu0 0.0
    %1306 = vmatpush1.msra.mxu0 0.0
    %1307 = vmatprep.subr.mxu0 0.0
    %1308 = vmatpush1.msra.mxu0 0.0
    %1309 = vmatprep.subr.mxu0 0.0
    %1310 = vmatpush1.msra.mxu0 0.0
    %1311 = vmatprep.subr.mxu0 0.0
    %1312 = vmatpush1.msra.mxu0 0.0
    %1313 = vmatprep.subr.mxu0 0.0
    %1314 = vmatpush1.msra.mxu0 0.0
    %1315 = vmatprep.subr.mxu0 0.0
    %1316 = vmatpush1.msra.mxu0 0.0
    %1317 = vmatprep.subr.mxu0 0.0
    %1318 = vmatpush1.msra.mxu0 0.0
    %1319 = vmatprep.subr.mxu0 0.0
    %1320 = vmatpush1.msra.mxu0 0.0
    %1321 = vmatprep.subr.mxu0 0.0
    %1322 = vmatpush1.msra.mxu0 0.0
    %1323 = vmatprep.subr.mxu0 0.0
    %1324 = vmatpush1.msra.mxu0 0.0
    %1325 = vmatprep.subr.mxu0 0.0
    %1326 = vmatpush1.msra.mxu0 0.0
    %1327 = vmatprep.subr.mxu0 0.0
    %1328 = vmatpush1.msra.mxu0 0.0
    %1329 = vmatprep.subr.mxu0 0.0
    %1330 = vmatpush1.msra.mxu0 0.0
    %1331 = vmatprep.subr.mxu0 0.0
    %1332 = vmatpush1.msra.mxu0 0.0
    %1333 = vmatprep.subr.mxu0 0.0
    %1334 = vmatpush1.msra.mxu0 0.0
    %1335 = vmatprep.subr.mxu0 0.0
    %1336 = vmatpush1.msra.mxu0 0.0
    %1337 = vmatprep.mubr.f32.mxu0 0.0
    %1338 = vmatmul.mubr.f32.gmra.mrb[0].mxu0 %v1271
    %v1339 = vpop.f32.mrb[0].mxu0
    %v1340 = vadd.f32 %v541, %v1339
    %v1341 = vpop.f32.mrb[0].mxu0
    %1342 = vdwg.mxu0
    %v1343 = vmax.f32 %v1340, 0.0
    %1345 = vrot.lane.b32.xlu0 %v1109, 64
    %v1346 = vpop.permute.xlu0 %1345
    %v1349 = vsel %vm160, %v1343, 0
    %1351 = vmatprep.subr.mxu0 0.0
    %1352 = vmatpush1.msra.mxu0 %v616
    %1353 = vmatprep.subr.mxu0 0.0
    %1354 = vmatpush1.msra.mxu0 %v617
    %1355 = vmatprep.subr.mxu0 0.0
    %1356 = vmatpush1.msra.mxu0 %v618
    %1357 = vmatprep.subr.mxu0 0.0
    %1358 = vmatpush1.msra.mxu0 %v619
    %1359 = vmatprep.subr.mxu0 0.0
    %1360 = vmatpush1.msra.mxu0 0.0
    %1361 = vmatprep.subr.mxu0 0.0
    %1362 = vmatpush1.msra.mxu0 0.0
    %1363 = vmatprep.subr.mxu0 0.0
    %1364 = vmatpush1.msra.mxu0 0.0
    %1365 = vmatprep.subr.mxu0 0.0
    %1366 = vmatpush1.msra.mxu0 0.0
    %1367 = vmatprep.subr.mxu0 0.0
    %1368 = vmatpush1.msra.mxu0 0.0
    %1369 = vmatprep.subr.mxu0 0.0
    %1370 = vmatpush1.msra.mxu0 0.0
    %1371 = vmatprep.subr.mxu0 0.0
    %1372 = vmatpush1.msra.mxu0 0.0
    %1373 = vmatprep.subr.mxu0 0.0
    %1374 = vmatpush1.msra.mxu0 0.0
    %1375 = vmatprep.subr.mxu0 0.0
    %1376 = vmatpush1.msra.mxu0 0.0
    %1377 = vmatprep.subr.mxu0 0.0
    %1378 = vmatpush1.msra.mxu0 0.0
    %1379 = vmatprep.subr.mxu0 0.0
    %1380 = vmatpush1.msra.mxu0 0.0
    %1381 = vmatprep.subr.mxu0 0.0
    %1382 = vmatpush1.msra.mxu0 0.0
    %1383 = vmatprep.subr.mxu0 0.0
    %1384 = vmatpush1.msra.mxu0 0.0
    %1385 = vmatprep.subr.mxu0 0.0
    %1386 = vmatpush1.msra.mxu0 0.0
    %1387 = vmatprep.subr.mxu0 0.0
    %1388 = vmatpush1.msra.mxu0 0.0
    %1389 = vmatprep.subr.mxu0 0.0
    %1390 = vmatpush1.msra.mxu0 0.0
    %1391 = vmatprep.subr.mxu0 0.0
    %1392 = vmatpush1.msra.mxu0 0.0
    %1393 = vmatprep.subr.mxu0 0.0
    %1394 = vmatpush1.msra.mxu0 0.0
    %1395 = vmatprep.subr.mxu0 0.0
    %1396 = vmatpush1.msra.mxu0 0.0
    %1397 = vmatprep.subr.mxu0 0.0
    %1398 = vmatpush1.msra.mxu0 0.0
    %1399 = vmatprep.subr.mxu0 0.0
    %1400 = vmatpush1.msra.mxu0 0.0
    %1401 = vmatprep.subr.mxu0 0.0
    %1402 = vmatpush1.msra.mxu0 0.0
    %1403 = vmatprep.subr.mxu0 0.0
    %1404 = vmatpush1.msra.mxu0 0.0
    %1405 = vmatprep.subr.mxu0 0.0
    %1406 = vmatpush1.msra.mxu0 0.0
    %1407 = vmatprep.subr.mxu0 0.0
    %1408 = vmatpush1.msra.mxu0 0.0
    %1409 = vmatprep.subr.mxu0 0.0
    %1410 = vmatpush1.msra.mxu0 0.0
    %1411 = vmatprep.subr.mxu0 0.0
    %1412 = vmatpush1.msra.mxu0 0.0
    %1413 = vmatprep.subr.mxu0 0.0
    %1414 = vmatpush1.msra.mxu0 0.0
    %1415 = vmatprep.mubr.f32.mxu0 0.0
    %1416 = vmatmul.mubr.f32.gmra.mrb[0].mxu0 %v1349
    %v1417 = vpop.f32.mrb[0].mxu0
    %v1418 = vadd.f32 %v1346, %v1417
    %v1419 = vpop.f32.mrb[0].mxu0
    %1420 = vdwg.mxu0
    %v1421 = vadd.f32 %v1418, %v700
    %v1422 = vmax.f32 %v1421, 0.0
    %v1424 = vsel %vm160, %v1422, 0
    %1426 = vmatprep.subr.mxu0 0.0
    %1427 = vmatpush1.msra.mxu0 %v703
    %1428 = vmatprep.subr.mxu0 0.0
    %1429 = vmatpush1.msra.mxu0 %v704
    %1430 = vmatprep.subr.mxu0 0.0
    %1431 = vmatpush1.msra.mxu0 %v705
    %1432 = vmatprep.subr.mxu0 0.0
    %1433 = vmatpush1.msra.mxu0 %v706
    %1434 = vmatprep.subr.mxu0 0.0
    %1435 = vmatpush1.msra.mxu0 0.0
    %1436 = vmatprep.subr.mxu0 0.0
    %1437 = vmatpush1.msra.mxu0 0.0
    %1438 = vmatprep.subr.mxu0 0.0
    %1439 = vmatpush1.msra.mxu0 0.0
    %1440 = vmatprep.subr.mxu0 0.0
    %1441 = vmatpush1.msra.mxu0 0.0
    %1442 = vmatprep.subr.mxu0 0.0
    %1443 = vmatpush1.msra.mxu0 0.0
    %1444 = vmatprep.subr.mxu0 0.0
    %1445 = vmatpush1.msra.mxu0 0.0
    %1446 = vmatprep.subr.mxu0 0.0
    %1447 = vmatpush1.msra.mxu0 0.0
    %1448 = vmatprep.subr.mxu0 0.0
    %1449 = vmatpush1.msra.mxu0 0.0
    %1450 = vmatprep.subr.mxu0 0.0
    %1451 = vmatpush1.msra.mxu0 0.0
    %1452 = vmatprep.subr.mxu0 0.0
    %1453 = vmatpush1.msra.mxu0 0.0
    %1454 = vmatprep.subr.mxu0 0.0
    %1455 = vmatpush1.msra.mxu0 0.0
    %1456 = vmatprep.subr.mxu0 0.0
    %1457 = vmatpush1.msra.mxu0 0.0
    %1458 = vmatprep.subr.mxu0 0.0
    %1459 = vmatpush1.msra.mxu0 0.0
    %1460 = vmatprep.subr.mxu0 0.0
    %1461 = vmatpush1.msra.mxu0 0.0
    %1462 = vmatprep.subr.mxu0 0.0
    %1463 = vmatpush1.msra.mxu0 0.0
    %1464 = vmatprep.subr.mxu0 0.0
    %1465 = vmatpush1.msra.mxu0 0.0
    %1466 = vmatprep.subr.mxu0 0.0
    %1467 = vmatpush1.msra.mxu0 0.0
    %1468 = vmatprep.subr.mxu0 0.0
    %1469 = vmatpush1.msra.mxu0 0.0
    %1470 = vmatprep.subr.mxu0 0.0
    %1471 = vmatpush1.msra.mxu0 0.0
    %1472 = vmatprep.subr.mxu0 0.0
    %1473 = vmatpush1.msra.mxu0 0.0
    %1474 = vmatprep.subr.mxu0 0.0
    %1475 = vmatpush1.msra.mxu0 0.0
    %1476 = vmatprep.subr.mxu0 0.0
    %1477 = vmatpush1.msra.mxu0 0.0
    %1478 = vmatprep.subr.mxu0 0.0
    %1479 = vmatpush1.msra.mxu0 0.0
    %1480 = vmatprep.subr.mxu0 0.0
    %1481 = vmatpush1.msra.mxu0 0.0
    %1482 = vmatprep.subr.mxu0 0.0
    %1483 = vmatpush1.msra.mxu0 0.0
    %1484 = vmatprep.subr.mxu0 0.0
    %1485 = vmatpush1.msra.mxu0 0.0
    %1486 = vmatprep.subr.mxu0 0.0
    %1487 = vmatpush1.msra.mxu0 0.0
    %1488 = vmatprep.subr.mxu0 0.0
    %1489 = vmatpush1.msra.mxu0 0.0
    %1490 = vmatprep.mubr.f32.mxu0 0.0
    %1491 = vmatmul.mubr.f32.gmra.mrb[0].mxu0 %v1424
    %v1492 = vpop.f32.mrb[0].mxu0
    %v1493 = vadd.f32 %v710, %v1492
    %v1494 = vpop.f32.mrb[0].mxu0
    %1495 = vdwg.mxu0
    %1496 = vmatprep.subr.mxu0 0.0
    %1497 = vmatpush1.msra.mxu0 %v272
    %1498 = vmatprep.subr.mxu0 0.0
    %1499 = vmatpush1.msra.mxu0 %v273
    %1500 = vmatprep.subr.mxu0 0.0
    %1501 = vmatpush1.msra.mxu0 %v274
    %1502 = vmatprep.subr.mxu0 0.0
    %1503 = vmatpush1.msra.mxu0 %v275
    %1504 = vmatprep.subr.mxu0 0.0
    %1505 = vmatpush1.msra.mxu0 0.0
    %1506 = vmatprep.subr.mxu0 0.0
    %1507 = vmatpush1.msra.mxu0 0.0
    %1508 = vmatprep.subr.mxu0 0.0
    %1509 = vmatpush1.msra.mxu0 0.0
    %1510 = vmatprep.subr.mxu0 0.0
    %1511 = vmatpush1.msra.mxu0 0.0
    %1512 = vmatprep.subr.mxu0 0.0
    %1513 = vmatpush1.msra.mxu0 0.0
    %1514 = vmatprep.subr.mxu0 0.0
    %1515 = vmatpush1.msra.mxu0 0.0
    %1516 = vmatprep.subr.mxu0 0.0
    %1517 = vmatpush1.msra.mxu0 0.0
    %1518 = vmatprep.subr.mxu0 0.0
    %1519 = vmatpush1.msra.mxu0 0.0
    %1520 = vmatprep.subr.mxu0 0.0
    %1521 = vmatpush1.msra.mxu0 0.0
    %1522 = vmatprep.subr.mxu0 0.0
    %1523 = vmatpush1.msra.mxu0 0.0
    %1524 = vmatprep.subr.mxu0 0.0
    %1525 = vmatpush1.msra.mxu0 0.0
    %1526 = vmatprep.subr.mxu0 0.0
    %1527 = vmatpush1.msra.mxu0 0.0
    %1528 = vmatprep.subr.mxu0 0.0
    %1529 = vmatpush1.msra.mxu0 0.0
    %1530 = vmatprep.subr.mxu0 0.0
    %1531 = vmatpush1.msra.mxu0 0.0
    %1532 = vmatprep.subr.mxu0 0.0
    %1533 = vmatpush1.msra.mxu0 0.0
    %1534 = vmatprep.subr.mxu0 0.0
    %1535 = vmatpush1.msra.mxu0 0.0
    %1536 = vmatprep.subr.mxu0 0.0
    %1537 = vmatpush1.msra.mxu0 0.0
    %1538 = vmatprep.subr.mxu0 0.0
    %1539 = vmatpush1.msra.mxu0 0.0
    %1540 = vmatprep.subr.mxu0 0.0
    %1541 = vmatpush1.msra.mxu0 0.0
    %1542 = vmatprep.subr.mxu0 0.0
    %1543 = vmatpush1.msra.mxu0 0.0
    %1544 = vmatprep.subr.mxu0 0.0
    %1545 = vmatpush1.msra.mxu0 0.0
    %1546 = vmatprep.subr.mxu0 0.0
    %1547 = vmatpush1.msra.mxu0 0.0
    %1548 = vmatprep.subr.mxu0 0.0
    %1549 = vmatpush1.msra.mxu0 0.0
    %1550 = vmatprep.subr.mxu0 0.0
    %1551 = vmatpush1.msra.mxu0 0.0
    %1552 = vmatprep.subr.mxu0 0.0
    %1553 = vmatpush1.msra.mxu0 0.0
    %1554 = vmatprep.subr.mxu0 0.0
    %1555 = vmatpush1.msra.mxu0 0.0
    %1556 = vmatprep.subr.mxu0 0.0
    %1557 = vmatpush1.msra.mxu0 0.0
    %1558 = vmatprep.subr.mxu0 0.0
    %1559 = vmatpush1.msra.mxu0 0.0
    %1560 = vmatprep.mubr.f32.mxu0 0.0
    %1561 = vmatmul.mubr.f32.gmra.mrb[0].mxu0 %v1424
    %v1562 = vpop.f32.mrb[0].mxu0
    %v1563 = vadd.f32 %v787, %v1562
    %v1564 = vpop.f32.mrb[0].mxu0
    %1565 = vdwg.mxu0
    %v1566 = vmax.f32 %v1563, 0.0
    %1567 = vmatprep.subr.mxu0 0.0
    %1568 = vmatpush1.msra.mxu0 %v859
    %1569 = vmatprep.subr.mxu0 0.0
    %1570 = vmatpush1.msra.mxu0 %v860
    %1571 = vmatprep.subr.mxu0 0.0
    %1572 = vmatpush1.msra.mxu0 %v861
    %1573 = vmatprep.subr.mxu0 0.0
    %1574 = vmatpush1.msra.mxu0 %v862
    %1575 = vmatprep.subr.mxu0 0.0
    %1576 = vmatpush1.msra.mxu0 0.0
    %1577 = vmatprep.subr.mxu0 0.0
    %1578 = vmatpush1.msra.mxu0 0.0
    %1579 = vmatprep.subr.mxu0 0.0
    %1580 = vmatpush1.msra.mxu0 0.0
    %1581 = vmatprep.subr.mxu0 0.0
    %1582 = vmatpush1.msra.mxu0 0.0
    %1583 = vmatprep.subr.mxu0 0.0
    %1584 = vmatpush1.msra.mxu0 0.0
    %1585 = vmatprep.subr.mxu0 0.0
    %1586 = vmatpush1.msra.mxu0 0.0
    %1587 = vmatprep.subr.mxu0 0.0
    %1588 = vmatpush1.msra.mxu0 0.0
    %1589 = vmatprep.subr.mxu0 0.0
    %1590 = vmatpush1.msra.mxu0 0.0
    %1591 = vmatprep.subr.mxu0 0.0
    %1592 = vmatpush1.msra.mxu0 0.0
    %1593 = vmatprep.subr.mxu0 0.0
    %1594 = vmatpush1.msra.mxu0 0.0
    %1595 = vmatprep.subr.mxu0 0.0
    %1596 = vmatpush1.msra.mxu0 0.0
    %1597 = vmatprep.subr.mxu0 0.0
    %1598 = vmatpush1.msra.mxu0 0.0
    %1599 = vmatprep.subr.mxu0 0.0
    %1600 = vmatpush1.msra.mxu0 0.0
    %1601 = vmatprep.subr.mxu0 0.0
    %1602 = vmatpush1.msra.mxu0 0.0
    %1603 = vmatprep.subr.mxu0 0.0
    %1604 = vmatpush1.msra.mxu0 0.0
    %1605 = vmatprep.subr.mxu0 0.0
    %1606 = vmatpush1.msra.mxu0 0.0
    %1607 = vmatprep.subr.mxu0 0.0
    %1608 = vmatpush1.msra.mxu0 0.0
    %1609 = vmatprep.subr.mxu0 0.0
    %1610 = vmatpush1.msra.mxu0 0.0
    %1611 = vmatprep.subr.mxu0 0.0
    %1612 = vmatpush1.msra.mxu0 0.0
    %1613 = vmatprep.subr.mxu0 0.0
    %1614 = vmatpush1.msra.mxu0 0.0
    %1615 = vmatprep.subr.mxu0 0.0
    %1616 = vmatpush1.msra.mxu0 0.0
    %1617 = vmatprep.subr.mxu0 0.0
    %1618 = vmatpush1.msra.mxu0 0.0
    %1619 = vmatprep.subr.mxu0 0.0
    %1620 = vmatpush1.msra.mxu0 0.0
    %1621 = vmatprep.subr.mxu0 0.0
    %1622 = vmatpush1.msra.mxu0 0.0
    %1623 = vmatprep.subr.mxu0 0.0
    %1624 = vmatpush1.msra.mxu0 0.0
    %1625 = vmatprep.subr.mxu0 0.0
    %1626 = vmatpush1.msra.mxu0 0.0
    %1627 = vmatprep.subr.mxu0 0.0
    %1628 = vmatpush1.msra.mxu0 0.0
    %1629 = vmatprep.subr.mxu0 0.0
    %1630 = vmatpush1.msra.mxu0 0.0
    %1631 = vmatprep.mubr.f32.mxu0 0.0
    %1632 = vmatmul.mubr.f32.gmra.mrb[0].mxu0 %v1349
    %v1633 = vpop.f32.mrb[0].mxu0
    %v1634 = vadd.f32 0.0, %v1633
    %v1635 = vpop.f32.mrb[0].mxu0
    %1636 = vdwg.mxu0
    %v1638 = vsel %vm160, %v1566, 0
    %1640 = vmatprep.subr.mxu0 0.0
    %1641 = vmatpush1.msra.mxu0 %v276
    %1642 = vmatprep.subr.mxu0 0.0
    %1643 = vmatpush1.msra.mxu0 %v277
    %1644 = vmatprep.subr.mxu0 0.0
    %1645 = vmatpush1.msra.mxu0 %v278
    %1646 = vmatprep.subr.mxu0 0.0
    %1647 = vmatpush1.msra.mxu0 %v279
    %1648 = vmatprep.subr.mxu0 0.0
    %1649 = vmatpush1.msra.mxu0 0.0
    %1650 = vmatprep.subr.mxu0 0.0
    %1651 = vmatpush1.msra.mxu0 0.0
    %1652 = vmatprep.subr.mxu0 0.0
    %1653 = vmatpush1.msra.mxu0 0.0
    %1654 = vmatprep.subr.mxu0 0.0
    %1655 = vmatpush1.msra.mxu0 0.0
    %1656 = vmatprep.subr.mxu0 0.0
    %1657 = vmatpush1.msra.mxu0 0.0
    %1658 = vmatprep.subr.mxu0 0.0
    %1659 = vmatpush1.msra.mxu0 0.0
    %1660 = vmatprep.subr.mxu0 0.0
    %1661 = vmatpush1.msra.mxu0 0.0
    %1662 = vmatprep.subr.mxu0 0.0
    %1663 = vmatpush1.msra.mxu0 0.0
    %1664 = vmatprep.subr.mxu0 0.0
    %1665 = vmatpush1.msra.mxu0 0.0
    %1666 = vmatprep.subr.mxu0 0.0
    %1667 = vmatpush1.msra.mxu0 0.0
    %1668 = vmatprep.subr.mxu0 0.0
    %1669 = vmatpush1.msra.mxu0 0.0
    %1670 = vmatprep.subr.mxu0 0.0
    %1671 = vmatpush1.msra.mxu0 0.0
    %1672 = vmatprep.subr.mxu0 0.0
    %1673 = vmatpush1.msra.mxu0 0.0
    %1674 = vmatprep.subr.mxu0 0.0
    %1675 = vmatpush1.msra.mxu0 0.0
    %1676 = vmatprep.subr.mxu0 0.0
    %1677 = vmatpush1.msra.mxu0 0.0
    %1678 = vmatprep.subr.mxu0 0.0
    %1679 = vmatpush1.msra.mxu0 0.0
    %1680 = vmatprep.subr.mxu0 0.0
    %1681 = vmatpush1.msra.mxu0 0.0
    %1682 = vmatprep.subr.mxu0 0.0
    %1683 = vmatpush1.msra.mxu0 0.0
    %1684 = vmatprep.subr.mxu0 0.0
    %1685 = vmatpush1.msra.mxu0 0.0
    %1686 = vmatprep.subr.mxu0 0.0
    %1687 = vmatpush1.msra.mxu0 0.0
    %1688 = vmatprep.subr.mxu0 0.0
    %1689 = vmatpush1.msra.mxu0 0.0
    %1690 = vmatprep.subr.mxu0 0.0
    %1691 = vmatpush1.msra.mxu0 0.0
    %1692 = vmatprep.subr.mxu0 0.0
    %1693 = vmatpush1.msra.mxu0 0.0
    %1694 = vmatprep.subr.mxu0 0.0
    %1695 = vmatpush1.msra.mxu0 0.0
    %1696 = vmatprep.subr.mxu0 0.0
    %1697 = vmatpush1.msra.mxu0 0.0
    %1698 = vmatprep.subr.mxu0 0.0
    %1699 = vmatpush1.msra.mxu0 0.0
    %1700 = vmatprep.subr.mxu0 0.0
    %1701 = vmatpush1.msra.mxu0 0.0
    %1702 = vmatprep.subr.mxu0 0.0
    %1703 = vmatpush1.msra.mxu0 0.0
    %1704 = vmatprep.mubr.f32.mxu0 0.0
    %1705 = vmatmul.mubr.f32.gmra.mrb[0].mxu0 %v1638
    %v1706 = vpop.f32.mrb[0].mxu0
    %v1707 = vadd.f32 %v1634, %v1706
    %v1708 = vpop.f32.mrb[0].mxu0
    %1709 = vdwg.mxu0
    %v1710 = vadd.f32 %v1707, %v1179
    %v1711 = vadd.f32 %v1710, %v1010
    %v1712 = vxor.u32 %v1711, 2147483648
    %v1713 = vmul.f32 %v1712, 1.442695
    %v1714 = vpow.pop %v1713
    %v1715 = vadd.f32 %v1714, 1.0
    %v1716 = vrcp.pop %v1715
    %v1717 = vmul.f32 1.0, %v1716
    %v1718 = vtanh.pop %v1711
    %v1719 = vmul.f32 %v1717, %v1029
    %1721 = vrot.lane.b32.xlu0 %v1718, 64
    %v1722 = vpop.permute.xlu0 %1721
    %v1724 = vmul.f32 %v1717, %v1722
    %1726 = vrot.lane.b32.xlu0 %v1724, 32
    %v1727 = vpop.permute.xlu0 %1726
    %v1729 = vadd.f32 %v1719, %v1727
    %v1730 = vtanh.pop %v1729
    %1732 = vrot.lane.b32.xlu0 %v1730, 64
    %v1733 = vpop.permute.xlu0 %1732
    %v1735 = vmul.f32 %v1717, %v1733
    %v1736 = vld [vmem:[#allocation2 + $0x8] sm:$0xf]
    %1738 = vrot.lane.b32.xlu0 %v1735, 32
    %v1739 = vpop.permute.xlu0 %1738
    %v1740 = vsel %vm160, %v1739, 0
    %1742 = vmatprep.subr.mxu0 0.0
    %1743 = vmatpush1.msra.mxu0 %v262
    %1744 = vmatprep.subr.mxu0 0.0
    %1745 = vmatpush1.msra.mxu0 %v263
    %1746 = vmatprep.subr.mxu0 0.0
    %1747 = vmatpush1.msra.mxu0 %v264
    %1748 = vmatprep.subr.mxu0 0.0
    %1749 = vmatpush1.msra.mxu0 %v265
    %1750 = vmatprep.subr.mxu0 0.0
    %1751 = vmatpush1.msra.mxu0 0.0
    %1752 = vmatprep.subr.mxu0 0.0
    %1753 = vmatpush1.msra.mxu0 0.0
    %1754 = vmatprep.subr.mxu0 0.0
    %1755 = vmatpush1.msra.mxu0 0.0
    %1756 = vmatprep.subr.mxu0 0.0
    %1757 = vmatpush1.msra.mxu0 0.0
    %1758 = vmatprep.subr.mxu0 0.0
    %1759 = vmatpush1.msra.mxu0 0.0
    %1760 = vmatprep.subr.mxu0 0.0
    %1761 = vmatpush1.msra.mxu0 0.0
    %1762 = vmatprep.subr.mxu0 0.0
    %1763 = vmatpush1.msra.mxu0 0.0
    %1764 = vmatprep.subr.mxu0 0.0
    %1765 = vmatpush1.msra.mxu0 0.0
    %1766 = vmatprep.subr.mxu0 0.0
    %1767 = vmatpush1.msra.mxu0 0.0
    %1768 = vmatprep.subr.mxu0 0.0
    %1769 = vmatpush1.msra.mxu0 0.0
    %1770 = vmatprep.subr.mxu0 0.0
    %1771 = vmatpush1.msra.mxu0 0.0
    %1772 = vmatprep.subr.mxu0 0.0
    %1773 = vmatpush1.msra.mxu0 0.0
    %1774 = vmatprep.subr.mxu0 0.0
    %1775 = vmatpush1.msra.mxu0 0.0
    %1776 = vmatprep.subr.mxu0 0.0
    %1777 = vmatpush1.msra.mxu0 0.0
    %1778 = vmatprep.subr.mxu0 0.0
    %1779 = vmatpush1.msra.mxu0 0.0
    %1780 = vmatprep.subr.mxu0 0.0
    %1781 = vmatpush1.msra.mxu0 0.0
    %1782 = vmatprep.subr.mxu0 0.0
    %1783 = vmatpush1.msra.mxu0 0.0
    %1784 = vmatprep.subr.mxu0 0.0
    %1785 = vmatpush1.msra.mxu0 0.0
    %1786 = vmatprep.subr.mxu0 0.0
    %1787 = vmatpush1.msra.mxu0 0.0
    %1788 = vmatprep.subr.mxu0 0.0
    %1789 = vmatpush1.msra.mxu0 0.0
    %1790 = vmatprep.subr.mxu0 0.0
    %1791 = vmatpush1.msra.mxu0 0.0
    %1792 = vmatprep.subr.mxu0 0.0
    %1793 = vmatpush1.msra.mxu0 0.0
    %1794 = vmatprep.subr.mxu0 0.0
    %1795 = vmatpush1.msra.mxu0 0.0
    %1796 = vmatprep.subr.mxu0 0.0
    %1797 = vmatpush1.msra.mxu0 0.0
    %1798 = vmatprep.subr.mxu0 0.0
    %1799 = vmatpush1.msra.mxu0 0.0
    %1800 = vmatprep.subr.mxu0 0.0
    %1801 = vmatpush1.msra.mxu0 0.0
    %1802 = vmatprep.subr.mxu0 0.0
    %1803 = vmatpush1.msra.mxu0 0.0
    %1804 = vmatprep.subr.mxu0 0.0
    %1805 = vmatpush1.msra.mxu0 0.0
    %1806 = vmatprep.mubr.f32.mxu0 0.0
    %1807 = vmatmul.mubr.f32.gmra.mrb[0].mxu0 %v1740
    %v1808 = vpop.f32.mrb[0].mxu0
    %v1809 = vadd.f32 0.0, %v1808
    %v1810 = vpop.f32.mrb[0].mxu0
    %1811 = vdwg.mxu0
    %1812 = vmatprep.subr.mxu0 0.0
    %1813 = vmatpush1.msra.mxu0 %v266
    %1814 = vmatprep.subr.mxu0 0.0
    %1815 = vmatpush1.msra.mxu0 %v267
    %1816 = vmatprep.subr.mxu0 0.0
    %1817 = vmatpush1.msra.mxu0 %v268
    %1818 = vmatprep.subr.mxu0 0.0
    %1819 = vmatpush1.msra.mxu0 %v269
    %1820 = vmatprep.subr.mxu0 0.0
    %1821 = vmatpush1.msra.mxu0 0.0
    %1822 = vmatprep.subr.mxu0 0.0
    %1823 = vmatpush1.msra.mxu0 0.0
    %1824 = vmatprep.subr.mxu0 0.0
    %1825 = vmatpush1.msra.mxu0 0.0
    %1826 = vmatprep.subr.mxu0 0.0
    %1827 = vmatpush1.msra.mxu0 0.0
    %1828 = vmatprep.subr.mxu0 0.0
    %1829 = vmatpush1.msra.mxu0 0.0
    %1830 = vmatprep.subr.mxu0 0.0
    %1831 = vmatpush1.msra.mxu0 0.0
    %1832 = vmatprep.subr.mxu0 0.0
    %1833 = vmatpush1.msra.mxu0 0.0
    %1834 = vmatprep.subr.mxu0 0.0
    %1835 = vmatpush1.msra.mxu0 0.0
    %1836 = vmatprep.subr.mxu0 0.0
    %1837 = vmatpush1.msra.mxu0 0.0
    %1838 = vmatprep.subr.mxu0 0.0
    %1839 = vmatpush1.msra.mxu0 0.0
    %1840 = vmatprep.subr.mxu0 0.0
    %1841 = vmatpush1.msra.mxu0 0.0
    %1842 = vmatprep.subr.mxu0 0.0
    %1843 = vmatpush1.msra.mxu0 0.0
    %1844 = vmatprep.subr.mxu0 0.0
    %1845 = vmatpush1.msra.mxu0 0.0
    %1846 = vmatprep.subr.mxu0 0.0
    %1847 = vmatpush1.msra.mxu0 0.0
    %1848 = vmatprep.subr.mxu0 0.0
    %1849 = vmatpush1.msra.mxu0 0.0
    %1850 = vmatprep.subr.mxu0 0.0
    %1851 = vmatpush1.msra.mxu0 0.0
    %1852 = vmatprep.subr.mxu0 0.0
    %1853 = vmatpush1.msra.mxu0 0.0
    %1854 = vmatprep.subr.mxu0 0.0
    %1855 = vmatpush1.msra.mxu0 0.0
    %1856 = vmatprep.subr.mxu0 0.0
    %1857 = vmatpush1.msra.mxu0 0.0
    %1858 = vmatprep.subr.mxu0 0.0
    %1859 = vmatpush1.msra.mxu0 0.0
    %1860 = vmatprep.subr.mxu0 0.0
    %1861 = vmatpush1.msra.mxu0 0.0
    %1862 = vmatprep.subr.mxu0 0.0
    %1863 = vmatpush1.msra.mxu0 0.0
    %1864 = vmatprep.subr.mxu0 0.0
    %1865 = vmatpush1.msra.mxu0 0.0
    %1866 = vmatprep.subr.mxu0 0.0
    %1867 = vmatpush1.msra.mxu0 0.0
    %1868 = vmatprep.subr.mxu0 0.0
    %1869 = vmatpush1.msra.mxu0 0.0
    %1870 = vmatprep.subr.mxu0 0.0
    %1871 = vmatpush1.msra.mxu0 0.0
    %1872 = vmatprep.subr.mxu0 0.0
    %1873 = vmatpush1.msra.mxu0 0.0
    %1874 = vmatprep.subr.mxu0 0.0
    %1875 = vmatpush1.msra.mxu0 0.0
    %1876 = vmatprep.mubr.f32.mxu0 0.0
    %1877 = vmatmul.mubr.f32.gmra.mrb[0].mxu0 %v1740
    %v1878 = vpop.f32.mrb[0].mxu0
    %v1879 = vadd.f32 0.0, %v1878
    %v1880 = vpop.f32.mrb[0].mxu0
    %1881 = vdwg.mxu0
    %v1882 = vadd.f32 %v1736, %v1809
    %v1883 = vmax.f32 %v1882, 0.0
    %v1884 = vadd.f32 %v1809, %v433
    %v1885 = vmax.f32 %v1884, 0.0
    %v1886 = vsel %vm160, %v1883, %v1885
    %v1888 = vsel %vm450, %v1886, 0
    %1890 = vmatprep.subr.mxu0 0.0
    %1891 = vmatpush1.msra.mxu0 %v438
    %1892 = vmatprep.subr.mxu0 0.0
    %1893 = vmatpush1.msra.mxu0 %v439
    %1894 = vmatprep.subr.mxu0 0.0
    %1895 = vmatpush1.msra.mxu0 %v440
    %1896 = vmatprep.subr.mxu0 0.0
    %1897 = vmatpush1.msra.mxu0 %v441
    %1898 = vmatprep.subr.mxu0 0.0
    %1899 = vmatpush1.msra.mxu0 %v442
    %1900 = vmatprep.subr.mxu0 0.0
    %1901 = vmatpush1.msra.mxu0 %v443
    %1902 = vmatprep.subr.mxu0 0.0
    %1903 = vmatpush1.msra.mxu0 %v444
    %1904 = vmatprep.subr.mxu0 0.0
    %1905 = vmatpush1.msra.mxu0 %v445
    %1906 = vmatprep.subr.mxu0 0.0
    %1907 = vmatpush1.msra.mxu0 0.0
    %1908 = vmatprep.subr.mxu0 0.0
    %1909 = vmatpush1.msra.mxu0 0.0
    %1910 = vmatprep.subr.mxu0 0.0
    %1911 = vmatpush1.msra.mxu0 0.0
    %1912 = vmatprep.subr.mxu0 0.0
    %1913 = vmatpush1.msra.mxu0 0.0
    %1914 = vmatprep.subr.mxu0 0.0
    %1915 = vmatpush1.msra.mxu0 0.0
    %1916 = vmatprep.subr.mxu0 0.0
    %1917 = vmatpush1.msra.mxu0 0.0
    %1918 = vmatprep.subr.mxu0 0.0
    %1919 = vmatpush1.msra.mxu0 0.0
    %1920 = vmatprep.subr.mxu0 0.0
    %1921 = vmatpush1.msra.mxu0 0.0
    %1922 = vmatprep.subr.mxu0 0.0
    %1923 = vmatpush1.msra.mxu0 0.0
    %1924 = vmatprep.subr.mxu0 0.0
    %1925 = vmatpush1.msra.mxu0 0.0
    %1926 = vmatprep.subr.mxu0 0.0
    %1927 = vmatpush1.msra.mxu0 0.0
    %1928 = vmatprep.subr.mxu0 0.0
    %1929 = vmatpush1.msra.mxu0 0.0
    %1930 = vmatprep.subr.mxu0 0.0
    %1931 = vmatpush1.msra.mxu0 0.0
    %1932 = vmatprep.subr.mxu0 0.0
    %1933 = vmatpush1.msra.mxu0 0.0
    %1934 = vmatprep.subr.mxu0 0.0
    %1935 = vmatpush1.msra.mxu0 0.0
    %1936 = vmatprep.subr.mxu0 0.0
    %1937 = vmatpush1.msra.mxu0 0.0
    %1938 = vmatprep.subr.mxu0 0.0
    %1939 = vmatpush1.msra.mxu0 0.0
    %1940 = vmatprep.subr.mxu0 0.0
    %1941 = vmatpush1.msra.mxu0 0.0
    %1942 = vmatprep.subr.mxu0 0.0
    %1943 = vmatpush1.msra.mxu0 0.0
    %1944 = vmatprep.subr.mxu0 0.0
    %1945 = vmatpush1.msra.mxu0 0.0
    %1946 = vmatprep.subr.mxu0 0.0
    %1947 = vmatpush1.msra.mxu0 0.0
    %1948 = vmatprep.subr.mxu0 0.0
    %1949 = vmatpush1.msra.mxu0 0.0
    %1950 = vmatprep.subr.mxu0 0.0
    %1951 = vmatpush1.msra.mxu0 0.0
    %1952 = vmatprep.subr.mxu0 0.0
    %1953 = vmatpush1.msra.mxu0 0.0
    %1954 = vmatprep.mubr.f32.mxu0 0.0
    %1955 = vmatmul.mubr.f32.gmra.mrb[0].mxu0 %v1888
    %v1956 = vpop.f32.mrb[0].mxu0
    %v1957 = vadd.f32 %v449, %v1956
    %v1958 = vpop.f32.mrb[0].mxu0
    %1959 = vdwg.mxu0
    %v1960 = vmul.f32 %v1957, 0.5
    %v1961 = vmul.f32 %v1960, 1.442695
    %v1962 = vpow.pop %v1961
    %v1963 = vmin.f32 %v1962, 100.0
    %1964 = vrot.lane.b32.xlu0 %v280, 112
    %v1965 = vpop.permute.xlu0 %1964
    %v1967 = vmul.f32 %v1963, %v1965
    %1969 = vrot.lane.b32.xlu0 %v1967, 112
    %v1970 = vpop.permute.xlu0 %1969
    %v1972 = vadd.f32 %v1957, %v1970
    %v1974 = vsel %vm49, %v1972, 0
    %1976 = vmatprep.subr.mxu0 0.0
    %1977 = vmatpush1.msra.mxu0 %v270
    %1978 = vmatprep.subr.mxu0 0.0
    %1979 = vmatpush1.msra.mxu0 %v271
    %1980 = vmatprep.subr.mxu0 0.0
    %1981 = vmatpush1.msra.mxu0 0.0
    %1982 = vmatprep.subr.mxu0 0.0
    %1983 = vmatpush1.msra.mxu0 0.0
    %1984 = vmatprep.subr.mxu0 0.0
    %1985 = vmatpush1.msra.mxu0 0.0
    %1986 = vmatprep.subr.mxu0 0.0
    %1987 = vmatpush1.msra.mxu0 0.0
    %1988 = vmatprep.subr.mxu0 0.0
    %1989 = vmatpush1.msra.mxu0 0.0
    %1990 = vmatprep.subr.mxu0 0.0
    %1991 = vmatpush1.msra.mxu0 0.0
    %1992 = vmatprep.subr.mxu0 0.0
    %1993 = vmatpush1.msra.mxu0 0.0
    %1994 = vmatprep.subr.mxu0 0.0
    %1995 = vmatpush1.msra.mxu0 0.0
    %1996 = vmatprep.subr.mxu0 0.0
    %1997 = vmatpush1.msra.mxu0 0.0
    %1998 = vmatprep.subr.mxu0 0.0
    %1999 = vmatpush1.msra.mxu0 0.0
    %2000 = vmatprep.subr.mxu0 0.0
    %2001 = vmatpush1.msra.mxu0 0.0
    %2002 = vmatprep.subr.mxu0 0.0
    %2003 = vmatpush1.msra.mxu0 0.0
    %2004 = vmatprep.subr.mxu0 0.0
    %2005 = vmatpush1.msra.mxu0 0.0
    %2006 = vmatprep.subr.mxu0 0.0
    %2007 = vmatpush1.msra.mxu0 0.0
    %2008 = vmatprep.subr.mxu0 0.0
    %2009 = vmatpush1.msra.mxu0 0.0
    %2010 = vmatprep.subr.mxu0 0.0
    %2011 = vmatpush1.msra.mxu0 0.0
    %2012 = vmatprep.subr.mxu0 0.0
    %2013 = vmatpush1.msra.mxu0 0.0
    %2014 = vmatprep.subr.mxu0 0.0
    %2015 = vmatpush1.msra.mxu0 0.0
    %2016 = vmatprep.subr.mxu0 0.0
    %2017 = vmatpush1.msra.mxu0 0.0
    %2018 = vmatprep.subr.mxu0 0.0
    %2019 = vmatpush1.msra.mxu0 0.0
    %2020 = vmatprep.subr.mxu0 0.0
    %2021 = vmatpush1.msra.mxu0 0.0
    %2022 = vmatprep.subr.mxu0 0.0
    %2023 = vmatpush1.msra.mxu0 0.0
    %2024 = vmatprep.subr.mxu0 0.0
    %2025 = vmatpush1.msra.mxu0 0.0
    %2026 = vmatprep.subr.mxu0 0.0
    %2027 = vmatpush1.msra.mxu0 0.0
    %2028 = vmatprep.subr.mxu0 0.0
    %2029 = vmatpush1.msra.mxu0 0.0
    %2030 = vmatprep.subr.mxu0 0.0
    %2031 = vmatpush1.msra.mxu0 0.0
    %2032 = vmatprep.subr.mxu0 0.0
    %2033 = vmatpush1.msra.mxu0 0.0
    %2034 = vmatprep.subr.mxu0 0.0
    %2035 = vmatpush1.msra.mxu0 0.0
    %2036 = vmatprep.subr.mxu0 0.0
    %2037 = vmatpush1.msra.mxu0 0.0
    %2038 = vmatprep.subr.mxu0 0.0
    %2039 = vmatpush1.msra.mxu0 0.0
    %2040 = vmatprep.mubr.f32.mxu0 0.0
    %2041 = vmatmul.mubr.f32.gmra.mrb[0].mxu0 %v1974
    %v2042 = vpop.f32.mrb[0].mxu0
    %v2043 = vadd.f32 %v541, %v2042
    %v2044 = vpop.f32.mrb[0].mxu0
    %2045 = vdwg.mxu0
    %v2046 = vmax.f32 %v2043, 0.0
    %2048 = vrot.lane.b32.xlu0 %v1809, 64
    %v2049 = vpop.permute.xlu0 %2048
    %v2052 = vsel %vm160, %v2046, 0
    %2054 = vmatprep.subr.mxu0 0.0
    %2055 = vmatpush1.msra.mxu0 %v616
    %2056 = vmatprep.subr.mxu0 0.0
    %2057 = vmatpush1.msra.mxu0 %v617
    %2058 = vmatprep.subr.mxu0 0.0
    %2059 = vmatpush1.msra.mxu0 %v618
    %2060 = vmatprep.subr.mxu0 0.0
    %2061 = vmatpush1.msra.mxu0 %v619
    %2062 = vmatprep.subr.mxu0 0.0
    %2063 = vmatpush1.msra.mxu0 0.0
    %2064 = vmatprep.subr.mxu0 0.0
    %2065 = vmatpush1.msra.mxu0 0.0
    %2066 = vmatprep.subr.mxu0 0.0
    %2067 = vmatpush1.msra.mxu0 0.0
    %2068 = vmatprep.subr.mxu0 0.0
    %2069 = vmatpush1.msra.mxu0 0.0
    %2070 = vmatprep.subr.mxu0 0.0
    %2071 = vmatpush1.msra.mxu0 0.0
    %2072 = vmatprep.subr.mxu0 0.0
    %2073 = vmatpush1.msra.mxu0 0.0
    %2074 = vmatprep.subr.mxu0 0.0
    %2075 = vmatpush1.msra.mxu0 0.0
    %2076 = vmatprep.subr.mxu0 0.0
    %2077 = vmatpush1.msra.mxu0 0.0
    %2078 = vmatprep.subr.mxu0 0.0
    %2079 = vmatpush1.msra.mxu0 0.0
    %2080 = vmatprep.subr.mxu0 0.0
    %2081 = vmatpush1.msra.mxu0 0.0
    %2082 = vmatprep.subr.mxu0 0.0
    %2083 = vmatpush1.msra.mxu0 0.0
    %2084 = vmatprep.subr.mxu0 0.0
    %2085 = vmatpush1.msra.mxu0 0.0
    %2086 = vmatprep.subr.mxu0 0.0
    %2087 = vmatpush1.msra.mxu0 0.0
    %2088 = vmatprep.subr.mxu0 0.0
    %2089 = vmatpush1.msra.mxu0 0.0
    %2090 = vmatprep.subr.mxu0 0.0
    %2091 = vmatpush1.msra.mxu0 0.0
    %2092 = vmatprep.subr.mxu0 0.0
    %2093 = vmatpush1.msra.mxu0 0.0
    %2094 = vmatprep.subr.mxu0 0.0
    %2095 = vmatpush1.msra.mxu0 0.0
    %2096 = vmatprep.subr.mxu0 0.0
    %2097 = vmatpush1.msra.mxu0 0.0
    %2098 = vmatprep.subr.mxu0 0.0
    %2099 = vmatpush1.msra.mxu0 0.0
    %2100 = vmatprep.subr.mxu0 0.0
    %2101 = vmatpush1.msra.mxu0 0.0
    %2102 = vmatprep.subr.mxu0 0.0
    %2103 = vmatpush1.msra.mxu0 0.0
    %2104 = vmatprep.subr.mxu0 0.0
    %2105 = vmatpush1.msra.mxu0 0.0
    %2106 = vmatprep.subr.mxu0 0.0
    %2107 = vmatpush1.msra.mxu0 0.0
    %2108 = vmatprep.subr.mxu0 0.0
    %2109 = vmatpush1.msra.mxu0 0.0
    %2110 = vmatprep.subr.mxu0 0.0
    %2111 = vmatpush1.msra.mxu0 0.0
    %2112 = vmatprep.subr.mxu0 0.0
    %2113 = vmatpush1.msra.mxu0 0.0
    %2114 = vmatprep.subr.mxu0 0.0
    %2115 = vmatpush1.msra.mxu0 0.0
    %2116 = vmatprep.subr.mxu0 0.0
    %2117 = vmatpush1.msra.mxu0 0.0
    %2118 = vmatprep.mubr.f32.mxu0 0.0
    %2119 = vmatmul.mubr.f32.gmra.mrb[0].mxu0 %v2052
    %v2120 = vpop.f32.mrb[0].mxu0
    %v2121 = vadd.f32 %v2049, %v2120
    %v2122 = vpop.f32.mrb[0].mxu0
    %2123 = vdwg.mxu0
    %v2124 = vadd.f32 %v2121, %v700
    %v2125 = vmax.f32 %v2124, 0.0
    %v2127 = vsel %vm160, %v2125, 0
    %2129 = vmatprep.subr.mxu0 0.0
    %2130 = vmatpush1.msra.mxu0 %v703
    %2131 = vmatprep.subr.mxu0 0.0
    %2132 = vmatpush1.msra.mxu0 %v704
    %2133 = vmatprep.subr.mxu0 0.0
    %2134 = vmatpush1.msra.mxu0 %v705
    %2135 = vmatprep.subr.mxu0 0.0
    %2136 = vmatpush1.msra.mxu0 %v706
    %2137 = vmatprep.subr.mxu0 0.0
    %2138 = vmatpush1.msra.mxu0 0.0
    %2139 = vmatprep.subr.mxu0 0.0
    %2140 = vmatpush1.msra.mxu0 0.0
    %2141 = vmatprep.subr.mxu0 0.0
    %2142 = vmatpush1.msra.mxu0 0.0
    %2143 = vmatprep.subr.mxu0 0.0
    %2144 = vmatpush1.msra.mxu0 0.0
    %2145 = vmatprep.subr.mxu0 0.0
    %2146 = vmatpush1.msra.mxu0 0.0
    %2147 = vmatprep.subr.mxu0 0.0
    %2148 = vmatpush1.msra.mxu0 0.0
    %2149 = vmatprep.subr.mxu0 0.0
    %2150 = vmatpush1.msra.mxu0 0.0
    %2151 = vmatprep.subr.mxu0 0.0
    %2152 = vmatpush1.msra.mxu0 0.0
    %2153 = vmatprep.subr.mxu0 0.0
    %2154 = vmatpush1.msra.mxu0 0.0
    %2155 = vmatprep.subr.mxu0 0.0
    %2156 = vmatpush1.msra.mxu0 0.0
    %2157 = vmatprep.subr.mxu0 0.0
    %2158 = vmatpush1.msra.mxu0 0.0
    %2159 = vmatprep.subr.mxu0 0.0
    %2160 = vmatpush1.msra.mxu0 0.0
    %2161 = vmatprep.subr.mxu0 0.0
    %2162 = vmatpush1.msra.mxu0 0.0
    %2163 = vmatprep.subr.mxu0 0.0
    %2164 = vmatpush1.msra.mxu0 0.0
    %2165 = vmatprep.subr.mxu0 0.0
    %2166 = vmatpush1.msra.mxu0 0.0
    %2167 = vmatprep.subr.mxu0 0.0
    %2168 = vmatpush1.msra.mxu0 0.0
    %2169 = vmatprep.subr.mxu0 0.0
    %2170 = vmatpush1.msra.mxu0 0.0
    %2171 = vmatprep.subr.mxu0 0.0
    %2172 = vmatpush1.msra.mxu0 0.0
    %2173 = vmatprep.subr.mxu0 0.0
    %2174 = vmatpush1.msra.mxu0 0.0
    %2175 = vmatprep.subr.mxu0 0.0
    %2176 = vmatpush1.msra.mxu0 0.0
    %2177 = vmatprep.subr.mxu0 0.0
    %2178 = vmatpush1.msra.mxu0 0.0
    %2179 = vmatprep.subr.mxu0 0.0
    %2180 = vmatpush1.msra.mxu0 0.0
    %2181 = vmatprep.subr.mxu0 0.0
    %2182 = vmatpush1.msra.mxu0 0.0
    %2183 = vmatprep.subr.mxu0 0.0
    %2184 = vmatpush1.msra.mxu0 0.0
    %2185 = vmatprep.subr.mxu0 0.0
    %2186 = vmatpush1.msra.mxu0 0.0
    %2187 = vmatprep.subr.mxu0 0.0
    %2188 = vmatpush1.msra.mxu0 0.0
    %2189 = vmatprep.subr.mxu0 0.0
    %2190 = vmatpush1.msra.mxu0 0.0
    %2191 = vmatprep.subr.mxu0 0.0
    %2192 = vmatpush1.msra.mxu0 0.0
    %2193 = vmatprep.mubr.f32.mxu0 0.0
    %2194 = vmatmul.mubr.f32.gmra.mrb[0].mxu0 %v2127
    %v2195 = vpop.f32.mrb[0].mxu0
    %v2196 = vadd.f32 %v710, %v2195
    %v2197 = vpop.f32.mrb[0].mxu0
    %2198 = vdwg.mxu0
    %2199 = vmatprep.subr.mxu0 0.0
    %2200 = vmatpush1.msra.mxu0 %v272
    %2201 = vmatprep.subr.mxu0 0.0
    %2202 = vmatpush1.msra.mxu0 %v273
    %2203 = vmatprep.subr.mxu0 0.0
    %2204 = vmatpush1.msra.mxu0 %v274
    %2205 = vmatprep.subr.mxu0 0.0
    %2206 = vmatpush1.msra.mxu0 %v275
    %2207 = vmatprep.subr.mxu0 0.0
    %2208 = vmatpush1.msra.mxu0 0.0
    %2209 = vmatprep.subr.mxu0 0.0
    %2210 = vmatpush1.msra.mxu0 0.0
    %2211 = vmatprep.subr.mxu0 0.0
    %2212 = vmatpush1.msra.mxu0 0.0
    %2213 = vmatprep.subr.mxu0 0.0
    %2214 = vmatpush1.msra.mxu0 0.0
    %2215 = vmatprep.subr.mxu0 0.0
    %2216 = vmatpush1.msra.mxu0 0.0
    %2217 = vmatprep.subr.mxu0 0.0
    %2218 = vmatpush1.msra.mxu0 0.0
    %2219 = vmatprep.subr.mxu0 0.0
    %2220 = vmatpush1.msra.mxu0 0.0
    %2221 = vmatprep.subr.mxu0 0.0
    %2222 = vmatpush1.msra.mxu0 0.0
    %2223 = vmatprep.subr.mxu0 0.0
    %2224 = vmatpush1.msra.mxu0 0.0
    %2225 = vmatprep.subr.mxu0 0.0
    %2226 = vmatpush1.msra.mxu0 0.0
    %2227 = vmatprep.subr.mxu0 0.0
    %2228 = vmatpush1.msra.mxu0 0.0
    %2229 = vmatprep.subr.mxu0 0.0
    %2230 = vmatpush1.msra.mxu0 0.0
    %2231 = vmatprep.subr.mxu0 0.0
    %2232 = vmatpush1.msra.mxu0 0.0
    %2233 = vmatprep.subr.mxu0 0.0
    %2234 = vmatpush1.msra.mxu0 0.0
    %2235 = vmatprep.subr.mxu0 0.0
    %2236 = vmatpush1.msra.mxu0 0.0
    %2237 = vmatprep.subr.mxu0 0.0
    %2238 = vmatpush1.msra.mxu0 0.0
    %2239 = vmatprep.subr.mxu0 0.0
    %2240 = vmatpush1.msra.mxu0 0.0
    %2241 = vmatprep.subr.mxu0 0.0
    %2242 = vmatpush1.msra.mxu0 0.0
    %2243 = vmatprep.subr.mxu0 0.0
    %2244 = vmatpush1.msra.mxu0 0.0
    %2245 = vmatprep.subr.mxu0 0.0
    %2246 = vmatpush1.msra.mxu0 0.0
    %2247 = vmatprep.subr.mxu0 0.0
    %2248 = vmatpush1.msra.mxu0 0.0
    %2249 = vmatprep.subr.mxu0 0.0
    %2250 = vmatpush1.msra.mxu0 0.0
    %2251 = vmatprep.subr.mxu0 0.0
    %2252 = vmatpush1.msra.mxu0 0.0
    %2253 = vmatprep.subr.mxu0 0.0
    %2254 = vmatpush1.msra.mxu0 0.0
    %2255 = vmatprep.subr.mxu0 0.0
    %2256 = vmatpush1.msra.mxu0 0.0
    %2257 = vmatprep.subr.mxu0 0.0
    %2258 = vmatpush1.msra.mxu0 0.0
    %2259 = vmatprep.subr.mxu0 0.0
    %2260 = vmatpush1.msra.mxu0 0.0
    %2261 = vmatprep.subr.mxu0 0.0
    %2262 = vmatpush1.msra.mxu0 0.0
    %2263 = vmatprep.mubr.f32.mxu0 0.0
    %2264 = vmatmul.mubr.f32.gmra.mrb[0].mxu0 %v2127
    %v2265 = vpop.f32.mrb[0].mxu0
    %v2266 = vadd.f32 %v787, %v2265
    %v2267 = vpop.f32.mrb[0].mxu0
    %2268 = vdwg.mxu0
    %v2269 = vmax.f32 %v2266, 0.0
    %2270 = vmatprep.subr.mxu0 0.0
    %2271 = vmatpush1.msra.mxu0 %v859
    %2272 = vmatprep.subr.mxu0 0.0
    %2273 = vmatpush1.msra.mxu0 %v860
    %2274 = vmatprep.subr.mxu0 0.0
    %2275 = vmatpush1.msra.mxu0 %v861
    %2276 = vmatprep.subr.mxu0 0.0
    %2277 = vmatpush1.msra.mxu0 %v862
    %2278 = vmatprep.subr.mxu0 0.0
    %2279 = vmatpush1.msra.mxu0 0.0
    %2280 = vmatprep.subr.mxu0 0.0
    %2281 = vmatpush1.msra.mxu0 0.0
    %2282 = vmatprep.subr.mxu0 0.0
    %2283 = vmatpush1.msra.mxu0 0.0
    %2284 = vmatprep.subr.mxu0 0.0
    %2285 = vmatpush1.msra.mxu0 0.0
    %2286 = vmatprep.subr.mxu0 0.0
    %2287 = vmatpush1.msra.mxu0 0.0
    %2288 = vmatprep.subr.mxu0 0.0
    %2289 = vmatpush1.msra.mxu0 0.0
    %2290 = vmatprep.subr.mxu0 0.0
    %2291 = vmatpush1.msra.mxu0 0.0
    %2292 = vmatprep.subr.mxu0 0.0
    %2293 = vmatpush1.msra.mxu0 0.0
    %2294 = vmatprep.subr.mxu0 0.0
    %2295 = vmatpush1.msra.mxu0 0.0
    %2296 = vmatprep.subr.mxu0 0.0
    %2297 = vmatpush1.msra.mxu0 0.0
    %2298 = vmatprep.subr.mxu0 0.0
    %2299 = vmatpush1.msra.mxu0 0.0
    %2300 = vmatprep.subr.mxu0 0.0
    %2301 = vmatpush1.msra.mxu0 0.0
    %2302 = vmatprep.subr.mxu0 0.0
    %2303 = vmatpush1.msra.mxu0 0.0
    %2304 = vmatprep.subr.mxu0 0.0
    %2305 = vmatpush1.msra.mxu0 0.0
    %2306 = vmatprep.subr.mxu0 0.0
    %2307 = vmatpush1.msra.mxu0 0.0
    %2308 = vmatprep.subr.mxu0 0.0
    %2309 = vmatpush1.msra.mxu0 0.0
    %2310 = vmatprep.subr.mxu0 0.0
    %2311 = vmatpush1.msra.mxu0 0.0
    %2312 = vmatprep.subr.mxu0 0.0
    %2313 = vmatpush1.msra.mxu0 0.0
    %2314 = vmatprep.subr.mxu0 0.0
    %2315 = vmatpush1.msra.mxu0 0.0
    %2316 = vmatprep.subr.mxu0 0.0
    %2317 = vmatpush1.msra.mxu0 0.0
    %2318 = vmatprep.subr.mxu0 0.0
    %2319 = vmatpush1.msra.mxu0 0.0
    %2320 = vmatprep.subr.mxu0 0.0
    %2321 = vmatpush1.msra.mxu0 0.0
    %2322 = vmatprep.subr.mxu0 0.0
    %2323 = vmatpush1.msra.mxu0 0.0
    %2324 = vmatprep.subr.mxu0 0.0
    %2325 = vmatpush1.msra.mxu0 0.0
    %2326 = vmatprep.subr.mxu0 0.0
    %2327 = vmatpush1.msra.mxu0 0.0
    %2328 = vmatprep.subr.mxu0 0.0
    %2329 = vmatpush1.msra.mxu0 0.0
    %2330 = vmatprep.subr.mxu0 0.0
    %2331 = vmatpush1.msra.mxu0 0.0
    %2332 = vmatprep.subr.mxu0 0.0
    %2333 = vmatpush1.msra.mxu0 0.0
    %2334 = vmatprep.mubr.f32.mxu0 0.0
    %2335 = vmatmul.mubr.f32.gmra.mrb[0].mxu0 %v2052
    %v2336 = vpop.f32.mrb[0].mxu0
    %v2337 = vadd.f32 0.0, %v2336
    %v2338 = vpop.f32.mrb[0].mxu0
    %2339 = vdwg.mxu0
    %v2341 = vsel %vm160, %v2269, 0
    %2343 = vmatprep.subr.mxu0 0.0
    %2344 = vmatpush1.msra.mxu0 %v276
    %2345 = vmatprep.subr.mxu0 0.0
    %2346 = vmatpush1.msra.mxu0 %v277
    %2347 = vmatprep.subr.mxu0 0.0
    %2348 = vmatpush1.msra.mxu0 %v278
    %2349 = vmatprep.subr.mxu0 0.0
    %2350 = vmatpush1.msra.mxu0 %v279
    %2351 = vmatprep.subr.mxu0 0.0
    %2352 = vmatpush1.msra.mxu0 0.0
    %2353 = vmatprep.subr.mxu0 0.0
    %2354 = vmatpush1.msra.mxu0 0.0
    %2355 = vmatprep.subr.mxu0 0.0
    %2356 = vmatpush1.msra.mxu0 0.0
    %2357 = vmatprep.subr.mxu0 0.0
    %2358 = vmatpush1.msra.mxu0 0.0
    %2359 = vmatprep.subr.mxu0 0.0
    %2360 = vmatpush1.msra.mxu0 0.0
    %2361 = vmatprep.subr.mxu0 0.0
    %2362 = vmatpush1.msra.mxu0 0.0
    %2363 = vmatprep.subr.mxu0 0.0
    %2364 = vmatpush1.msra.mxu0 0.0
    %2365 = vmatprep.subr.mxu0 0.0
    %2366 = vmatpush1.msra.mxu0 0.0
    %2367 = vmatprep.subr.mxu0 0.0
    %2368 = vmatpush1.msra.mxu0 0.0
    %2369 = vmatprep.subr.mxu0 0.0
    %2370 = vmatpush1.msra.mxu0 0.0
    %2371 = vmatprep.subr.mxu0 0.0
    %2372 = vmatpush1.msra.mxu0 0.0
    %2373 = vmatprep.subr.mxu0 0.0
    %2374 = vmatpush1.msra.mxu0 0.0
    %2375 = vmatprep.subr.mxu0 0.0
    %2376 = vmatpush1.msra.mxu0 0.0
    %2377 = vmatprep.subr.mxu0 0.0
    %2378 = vmatpush1.msra.mxu0 0.0
    %2379 = vmatprep.subr.mxu0 0.0
    %2380 = vmatpush1.msra.mxu0 0.0
    %2381 = vmatprep.subr.mxu0 0.0
    %2382 = vmatpush1.msra.mxu0 0.0
    %2383 = vmatprep.subr.mxu0 0.0
    %2384 = vmatpush1.msra.mxu0 0.0
    %2385 = vmatprep.subr.mxu0 0.0
    %2386 = vmatpush1.msra.mxu0 0.0
    %2387 = vmatprep.subr.mxu0 0.0
    %2388 = vmatpush1.msra.mxu0 0.0
    %2389 = vmatprep.subr.mxu0 0.0
    %2390 = vmatpush1.msra.mxu0 0.0
    %2391 = vmatprep.subr.mxu0 0.0
    %2392 = vmatpush1.msra.mxu0 0.0
    %2393 = vmatprep.subr.mxu0 0.0
    %2394 = vmatpush1.msra.mxu0 0.0
    %2395 = vmatprep.subr.mxu0 0.0
    %2396 = vmatpush1.msra.mxu0 0.0
    %2397 = vmatprep.subr.mxu0 0.0
    %2398 = vmatpush1.msra.mxu0 0.0
    %2399 = vmatprep.subr.mxu0 0.0
    %2400 = vmatpush1.msra.mxu0 0.0
    %2401 = vmatprep.subr.mxu0 0.0
    %2402 = vmatpush1.msra.mxu0 0.0
    %2403 = vmatprep.subr.mxu0 0.0
    %2404 = vmatpush1.msra.mxu0 0.0
    %2405 = vmatprep.subr.mxu0 0.0
    %2406 = vmatpush1.msra.mxu0 0.0
    %2407 = vmatprep.mubr.f32.mxu0 0.0
    %2408 = vmatmul.mubr.f32.gmra.mrb[0].mxu0 %v2341
    %v2409 = vpop.f32.mrb[0].mxu0
    %v2410 = vadd.f32 %v2337, %v2409
    %v2411 = vpop.f32.mrb[0].mxu0
    %2412 = vdwg.mxu0
    %v2413 = vadd.f32 %v2410, %v1879
    %v2414 = vadd.f32 %v2413, %v1010
    %v2415 = vxor.u32 %v2414, 2147483648
    %v2416 = vmul.f32 %v2415, 1.442695
    %v2417 = vpow.pop %v2416
    %v2418 = vadd.f32 %v2417, 1.0
    %v2419 = vrcp.pop %v2418
    %v2420 = vmul.f32 1.0, %v2419
    %v2421 = vtanh.pop %v2414
    %v2422 = vmul.f32 %v2420, %v1729
    %2424 = vrot.lane.b32.xlu0 %v2421, 64
    %v2425 = vpop.permute.xlu0 %2424
    %v2427 = vmul.f32 %v2420, %v2425
    %2429 = vrot.lane.b32.xlu0 %v2427, 32
    %v2430 = vpop.permute.xlu0 %2429
    %v2432 = vadd.f32 %v2422, %v2430
    %v2433 = vtanh.pop %v2432
    %2435 = vrot.lane.b32.xlu0 %v2433, 64
    %v2436 = vpop.permute.xlu0 %2435
    %v2438 = vmul.f32 %v2420, %v2436
    %v2439 = vld [vmem:[#allocation2 + $0xc] sm:$0xf]
    %2441 = vrot.lane.b32.xlu0 %v2438, 32
    %v2442 = vpop.permute.xlu0 %2441
    %v2443 = vsel %vm160, %v2442, 0
    %2445 = vmatprep.subr.mxu0 0.0
    %2446 = vmatpush1.msra.mxu0 %v262
    %2447 = vmatprep.subr.mxu0 0.0
    %2448 = vmatpush1.msra.mxu0 %v263
    %2449 = vmatprep.subr.mxu0 0.0
    %2450 = vmatpush1.msra.mxu0 %v264
    %2451 = vmatprep.subr.mxu0 0.0
    %2452 = vmatpush1.msra.mxu0 %v265
    %2453 = vmatprep.subr.mxu0 0.0
    %2454 = vmatpush1.msra.mxu0 0.0
    %2455 = vmatprep.subr.mxu0 0.0
    %2456 = vmatpush1.msra.mxu0 0.0
    %2457 = vmatprep.subr.mxu0 0.0
    %2458 = vmatpush1.msra.mxu0 0.0
    %2459 = vmatprep.subr.mxu0 0.0
    %2460 = vmatpush1.msra.mxu0 0.0
    %2461 = vmatprep.subr.mxu0 0.0
    %2462 = vmatpush1.msra.mxu0 0.0
    %2463 = vmatprep.subr.mxu0 0.0
    %2464 = vmatpush1.msra.mxu0 0.0
    %2465 = vmatprep.subr.mxu0 0.0
    %2466 = vmatpush1.msra.mxu0 0.0
    %2467 = vmatprep.subr.mxu0 0.0
    %2468 = vmatpush1.msra.mxu0 0.0
    %2469 = vmatprep.subr.mxu0 0.0
    %2470 = vmatpush1.msra.mxu0 0.0
    %2471 = vmatprep.subr.mxu0 0.0
    %2472 = vmatpush1.msra.mxu0 0.0
    %2473 = vmatprep.subr.mxu0 0.0
    %2474 = vmatpush1.msra.mxu0 0.0
    %2475 = vmatprep.subr.mxu0 0.0
    %2476 = vmatpush1.msra.mxu0 0.0
    %2477 = vmatprep.subr.mxu0 0.0
    %2478 = vmatpush1.msra.mxu0 0.0
    %2479 = vmatprep.subr.mxu0 0.0
    %2480 = vmatpush1.msra.mxu0 0.0
    %2481 = vmatprep.subr.mxu0 0.0
    %2482 = vmatpush1.msra.mxu0 0.0
    %2483 = vmatprep.subr.mxu0 0.0
    %2484 = vmatpush1.msra.mxu0 0.0
    %2485 = vmatprep.subr.mxu0 0.0
    %2486 = vmatpush1.msra.mxu0 0.0
    %2487 = vmatprep.subr.mxu0 0.0
    %2488 = vmatpush1.msra.mxu0 0.0
    %2489 = vmatprep.subr.mxu0 0.0
    %2490 = vmatpush1.msra.mxu0 0.0
    %2491 = vmatprep.subr.mxu0 0.0
    %2492 = vmatpush1.msra.mxu0 0.0
    %2493 = vmatprep.subr.mxu0 0.0
    %2494 = vmatpush1.msra.mxu0 0.0
    %2495 = vmatprep.subr.mxu0 0.0
    %2496 = vmatpush1.msra.mxu0 0.0
    %2497 = vmatprep.subr.mxu0 0.0
    %2498 = vmatpush1.msra.mxu0 0.0
    %2499 = vmatprep.subr.mxu0 0.0
    %2500 = vmatpush1.msra.mxu0 0.0
    %2501 = vmatprep.subr.mxu0 0.0
    %2502 = vmatpush1.msra.mxu0 0.0
    %2503 = vmatprep.subr.mxu0 0.0
    %2504 = vmatpush1.msra.mxu0 0.0
    %2505 = vmatprep.subr.mxu0 0.0
    %2506 = vmatpush1.msra.mxu0 0.0
    %2507 = vmatprep.subr.mxu0 0.0
    %2508 = vmatpush1.msra.mxu0 0.0
    %2509 = vmatprep.mubr.f32.mxu0 0.0
    %2510 = vmatmul.mubr.f32.gmra.mrb[0].mxu0 %v2443
    %v2511 = vpop.f32.mrb[0].mxu0
    %v2512 = vadd.f32 0.0, %v2511
    %v2513 = vpop.f32.mrb[0].mxu0
    %2514 = vdwg.mxu0
    %2515 = vmatprep.subr.mxu0 0.0
    %2516 = vmatpush1.msra.mxu0 %v266
    %2517 = vmatprep.subr.mxu0 0.0
    %2518 = vmatpush1.msra.mxu0 %v267
    %2519 = vmatprep.subr.mxu0 0.0
    %2520 = vmatpush1.msra.mxu0 %v268
    %2521 = vmatprep.subr.mxu0 0.0
    %2522 = vmatpush1.msra.mxu0 %v269
    %2523 = vmatprep.subr.mxu0 0.0
    %2524 = vmatpush1.msra.mxu0 0.0
    %2525 = vmatprep.subr.mxu0 0.0
    %2526 = vmatpush1.msra.mxu0 0.0
    %2527 = vmatprep.subr.mxu0 0.0
    %2528 = vmatpush1.msra.mxu0 0.0
    %2529 = vmatprep.subr.mxu0 0.0
    %2530 = vmatpush1.msra.mxu0 0.0
    %2531 = vmatprep.subr.mxu0 0.0
    %2532 = vmatpush1.msra.mxu0 0.0
    %2533 = vmatprep.subr.mxu0 0.0
    %2534 = vmatpush1.msra.mxu0 0.0
    %2535 = vmatprep.subr.mxu0 0.0
    %2536 = vmatpush1.msra.mxu0 0.0
    %2537 = vmatprep.subr.mxu0 0.0
    %2538 = vmatpush1.msra.mxu0 0.0
    %2539 = vmatprep.subr.mxu0 0.0
    %2540 = vmatpush1.msra.mxu0 0.0
    %2541 = vmatprep.subr.mxu0 0.0
    %2542 = vmatpush1.msra.mxu0 0.0
    %2543 = vmatprep.subr.mxu0 0.0
    %2544 = vmatpush1.msra.mxu0 0.0
    %2545 = vmatprep.subr.mxu0 0.0
    %2546 = vmatpush1.msra.mxu0 0.0
    %2547 = vmatprep.subr.mxu0 0.0
    %2548 = vmatpush1.msra.mxu0 0.0
    %2549 = vmatprep.subr.mxu0 0.0
    %2550 = vmatpush1.msra.mxu0 0.0
    %2551 = vmatprep.subr.mxu0 0.0
    %2552 = vmatpush1.msra.mxu0 0.0
    %2553 = vmatprep.subr.mxu0 0.0
    %2554 = vmatpush1.msra.mxu0 0.0
    %2555 = vmatprep.subr.mxu0 0.0
    %2556 = vmatpush1.msra.mxu0 0.0
    %2557 = vmatprep.subr.mxu0 0.0
    %2558 = vmatpush1.msra.mxu0 0.0
    %2559 = vmatprep.subr.mxu0 0.0
    %2560 = vmatpush1.msra.mxu0 0.0
    %2561 = vmatprep.subr.mxu0 0.0
    %2562 = vmatpush1.msra.mxu0 0.0
    %2563 = vmatprep.subr.mxu0 0.0
    %2564 = vmatpush1.msra.mxu0 0.0
    %2565 = vmatprep.subr.mxu0 0.0
    %2566 = vmatpush1.msra.mxu0 0.0
    %2567 = vmatprep.subr.mxu0 0.0
    %2568 = vmatpush1.msra.mxu0 0.0
    %2569 = vmatprep.subr.mxu0 0.0
    %2570 = vmatpush1.msra.mxu0 0.0
    %2571 = vmatprep.subr.mxu0 0.0
    %2572 = vmatpush1.msra.mxu0 0.0
    %2573 = vmatprep.subr.mxu0 0.0
    %2574 = vmatpush1.msra.mxu0 0.0
    %2575 = vmatprep.subr.mxu0 0.0
    %2576 = vmatpush1.msra.mxu0 0.0
    %2577 = vmatprep.subr.mxu0 0.0
    %2578 = vmatpush1.msra.mxu0 0.0
    %2579 = vmatprep.mubr.f32.mxu0 0.0
    %2580 = vmatmul.mubr.f32.gmra.mrb[0].mxu0 %v2443
    %v2581 = vpop.f32.mrb[0].mxu0
    %v2582 = vadd.f32 0.0, %v2581
    %v2583 = vpop.f32.mrb[0].mxu0
    %2584 = vdwg.mxu0
    %v2585 = vadd.f32 %v2439, %v2512
    %v2586 = vmax.f32 %v2585, 0.0
    %v2587 = vadd.f32 %v2512, %v433
    %v2588 = vmax.f32 %v2587, 0.0
    %v2589 = vsel %vm160, %v2586, %v2588
    %v2591 = vsel %vm450, %v2589, 0
    %2593 = vmatprep.subr.mxu0 0.0
    %2594 = vmatpush1.msra.mxu0 %v438
    %2595 = vmatprep.subr.mxu0 0.0
    %2596 = vmatpush1.msra.mxu0 %v439
    %2597 = vmatprep.subr.mxu0 0.0
    %2598 = vmatpush1.msra.mxu0 %v440
    %2599 = vmatprep.subr.mxu0 0.0
    %2600 = vmatpush1.msra.mxu0 %v441
    %2601 = vmatprep.subr.mxu0 0.0
    %2602 = vmatpush1.msra.mxu0 %v442
    %2603 = vmatprep.subr.mxu0 0.0
    %2604 = vmatpush1.msra.mxu0 %v443
    %2605 = vmatprep.subr.mxu0 0.0
    %2606 = vmatpush1.msra.mxu0 %v444
    %2607 = vmatprep.subr.mxu0 0.0
    %2608 = vmatpush1.msra.mxu0 %v445
    %2609 = vmatprep.subr.mxu0 0.0
    %2610 = vmatpush1.msra.mxu0 0.0
    %2611 = vmatprep.subr.mxu0 0.0
    %2612 = vmatpush1.msra.mxu0 0.0
    %2613 = vmatprep.subr.mxu0 0.0
    %2614 = vmatpush1.msra.mxu0 0.0
    %2615 = vmatprep.subr.mxu0 0.0
    %2616 = vmatpush1.msra.mxu0 0.0
    %2617 = vmatprep.subr.mxu0 0.0
    %2618 = vmatpush1.msra.mxu0 0.0
    %2619 = vmatprep.subr.mxu0 0.0
    %2620 = vmatpush1.msra.mxu0 0.0
    %2621 = vmatprep.subr.mxu0 0.0
    %2622 = vmatpush1.msra.mxu0 0.0
    %2623 = vmatprep.subr.mxu0 0.0
    %2624 = vmatpush1.msra.mxu0 0.0
    %2625 = vmatprep.subr.mxu0 0.0
    %2626 = vmatpush1.msra.mxu0 0.0
    %2627 = vmatprep.subr.mxu0 0.0
    %2628 = vmatpush1.msra.mxu0 0.0
    %2629 = vmatprep.subr.mxu0 0.0
    %2630 = vmatpush1.msra.mxu0 0.0
    %2631 = vmatprep.subr.mxu0 0.0
    %2632 = vmatpush1.msra.mxu0 0.0
    %2633 = vmatprep.subr.mxu0 0.0
    %2634 = vmatpush1.msra.mxu0 0.0
    %2635 = vmatprep.subr.mxu0 0.0
    %2636 = vmatpush1.msra.mxu0 0.0
    %2637 = vmatprep.subr.mxu0 0.0
    %2638 = vmatpush1.msra.mxu0 0.0
    %2639 = vmatprep.subr.mxu0 0.0
    %2640 = vmatpush1.msra.mxu0 0.0
    %2641 = vmatprep.subr.mxu0 0.0
    %2642 = vmatpush1.msra.mxu0 0.0
    %2643 = vmatprep.subr.mxu0 0.0
    %2644 = vmatpush1.msra.mxu0 0.0
    %2645 = vmatprep.subr.mxu0 0.0
    %2646 = vmatpush1.msra.mxu0 0.0
    %2647 = vmatprep.subr.mxu0 0.0
    %2648 = vmatpush1.msra.mxu0 0.0
    %2649 = vmatprep.subr.mxu0 0.0
    %2650 = vmatpush1.msra.mxu0 0.0
    %2651 = vmatprep.subr.mxu0 0.0
    %2652 = vmatpush1.msra.mxu0 0.0
    %2653 = vmatprep.subr.mxu0 0.0
    %2654 = vmatpush1.msra.mxu0 0.0
    %2655 = vmatprep.subr.mxu0 0.0
    %2656 = vmatpush1.msra.mxu0 0.0
    %2657 = vmatprep.mubr.f32.mxu0 0.0
    %2658 = vmatmul.mubr.f32.gmra.mrb[0].mxu0 %v2591
    %v2659 = vpop.f32.mrb[0].mxu0
    %v2660 = vadd.f32 %v449, %v2659
    %v2661 = vpop.f32.mrb[0].mxu0
    %2662 = vdwg.mxu0
    %v2663 = vmul.f32 %v2660, 0.5
    %v2664 = vmul.f32 %v2663, 1.442695
    %v2665 = vpow.pop %v2664
    %v2666 = vmin.f32 %v2665, 100.0
    %2667 = vrot.lane.b32.xlu0 %v280, 96
    %v2668 = vpop.permute.xlu0 %2667
    %v2670 = vmul.f32 %v2666, %v2668
    %2672 = vrot.lane.b32.xlu0 %v2670, 112
    %v2673 = vpop.permute.xlu0 %2672
    %v2675 = vadd.f32 %v2660, %v2673
    %v2677 = vsel %vm49, %v2675, 0
    %2679 = vmatprep.subr.mxu0 0.0
    %2680 = vmatpush1.msra.mxu0 %v270
    %2681 = vmatprep.subr.mxu0 0.0
    %2682 = vmatpush1.msra.mxu0 %v271
    %2683 = vmatprep.subr.mxu0 0.0
    %2684 = vmatpush1.msra.mxu0 0.0
    %2685 = vmatprep.subr.mxu0 0.0
    %2686 = vmatpush1.msra.mxu0 0.0
    %2687 = vmatprep.subr.mxu0 0.0
    %2688 = vmatpush1.msra.mxu0 0.0
    %2689 = vmatprep.subr.mxu0 0.0
    %2690 = vmatpush1.msra.mxu0 0.0
    %2691 = vmatprep.subr.mxu0 0.0
    %2692 = vmatpush1.msra.mxu0 0.0
    %2693 = vmatprep.subr.mxu0 0.0
    %2694 = vmatpush1.msra.mxu0 0.0
    %2695 = vmatprep.subr.mxu0 0.0
    %2696 = vmatpush1.msra.mxu0 0.0
    %2697 = vmatprep.subr.mxu0 0.0
    %2698 = vmatpush1.msra.mxu0 0.0
    %2699 = vmatprep.subr.mxu0 0.0
    %2700 = vmatpush1.msra.mxu0 0.0
    %2701 = vmatprep.subr.mxu0 0.0
    %2702 = vmatpush1.msra.mxu0 0.0
    %2703 = vmatprep.subr.mxu0 0.0
    %2704 = vmatpush1.msra.mxu0 0.0
    %2705 = vmatprep.subr.mxu0 0.0
    %2706 = vmatpush1.msra.mxu0 0.0
    %2707 = vmatprep.subr.mxu0 0.0
    %2708 = vmatpush1.msra.mxu0 0.0
    %2709 = vmatprep.subr.mxu0 0.0
    %2710 = vmatpush1.msra.mxu0 0.0
    %2711 = vmatprep.subr.mxu0 0.0
    %2712 = vmatpush1.msra.mxu0 0.0
    %2713 = vmatprep.subr.mxu0 0.0
    %2714 = vmatpush1.msra.mxu0 0.0
    %2715 = vmatprep.subr.mxu0 0.0
    %2716 = vmatpush1.msra.mxu0 0.0
    %2717 = vmatprep.subr.mxu0 0.0
    %2718 = vmatpush1.msra.mxu0 0.0
    %2719 = vmatprep.subr.mxu0 0.0
    %2720 = vmatpush1.msra.mxu0 0.0
    %2721 = vmatprep.subr.mxu0 0.0
    %2722 = vmatpush1.msra.mxu0 0.0
    %2723 = vmatprep.subr.mxu0 0.0
    %2724 = vmatpush1.msra.mxu0 0.0
    %2725 = vmatprep.subr.mxu0 0.0
    %2726 = vmatpush1.msra.mxu0 0.0
    %2727 = vmatprep.subr.mxu0 0.0
    %2728 = vmatpush1.msra.mxu0 0.0
    %2729 = vmatprep.subr.mxu0 0.0
    %2730 = vmatpush1.msra.mxu0 0.0
    %2731 = vmatprep.subr.mxu0 0.0
    %2732 = vmatpush1.msra.mxu0 0.0
    %2733 = vmatprep.subr.mxu0 0.0
    %2734 = vmatpush1.msra.mxu0 0.0
    %2735 = vmatprep.subr.mxu0 0.0
    %2736 = vmatpush1.msra.mxu0 0.0
    %2737 = vmatprep.subr.mxu0 0.0
    %2738 = vmatpush1.msra.mxu0 0.0
    %2739 = vmatprep.subr.mxu0 0.0
    %2740 = vmatpush1.msra.mxu0 0.0
    %2741 = vmatprep.subr.mxu0 0.0
    %2742 = vmatpush1.msra.mxu0 0.0
    %2743 = vmatprep.mubr.f32.mxu0 0.0
    %2744 = vmatmul.mubr.f32.gmra.mrb[0].mxu0 %v2677
    %v2745 = vpop.f32.mrb[0].mxu0
    %v2746 = vadd.f32 %v541, %v2745
    %v2747 = vpop.f32.mrb[0].mxu0
    %2748 = vdwg.mxu0
    %v2749 = vmax.f32 %v2746, 0.0
    %2751 = vrot.lane.b32.xlu0 %v2512, 64
    %v2752 = vpop.permute.xlu0 %2751
    %v2755 = vsel %vm160, %v2749, 0
    %2757 = vmatprep.subr.mxu0 0.0
    %2758 = vmatpush1.msra.mxu0 %v616
    %2759 = vmatprep.subr.mxu0 0.0
    %2760 = vmatpush1.msra.mxu0 %v617
    %2761 = vmatprep.subr.mxu0 0.0
    %2762 = vmatpush1.msra.mxu0 %v618
    %2763 = vmatprep.subr.mxu0 0.0
    %2764 = vmatpush1.msra.mxu0 %v619
    %2765 = vmatprep.subr.mxu0 0.0
    %2766 = vmatpush1.msra.mxu0 0.0
    %2767 = vmatprep.subr.mxu0 0.0
    %2768 = vmatpush1.msra.mxu0 0.0
    %2769 = vmatprep.subr.mxu0 0.0
    %2770 = vmatpush1.msra.mxu0 0.0
    %2771 = vmatprep.subr.mxu0 0.0
    %2772 = vmatpush1.msra.mxu0 0.0
    %2773 = vmatprep.subr.mxu0 0.0
    %2774 = vmatpush1.msra.mxu0 0.0
    %2775 = vmatprep.subr.mxu0 0.0
    %2776 = vmatpush1.msra.mxu0 0.0
    %2777 = vmatprep.subr.mxu0 0.0
    %2778 = vmatpush1.msra.mxu0 0.0
    %2779 = vmatprep.subr.mxu0 0.0
    %2780 = vmatpush1.msra.mxu0 0.0
    %2781 = vmatprep.subr.mxu0 0.0
    %2782 = vmatpush1.msra.mxu0 0.0
    %2783 = vmatprep.subr.mxu0 0.0
    %2784 = vmatpush1.msra.mxu0 0.0
    %2785 = vmatprep.subr.mxu0 0.0
    %2786 = vmatpush1.msra.mxu0 0.0
    %2787 = vmatprep.subr.mxu0 0.0
    %2788 = vmatpush1.msra.mxu0 0.0
    %2789 = vmatprep.subr.mxu0 0.0
    %2790 = vmatpush1.msra.mxu0 0.0
    %2791 = vmatprep.subr.mxu0 0.0
    %2792 = vmatpush1.msra.mxu0 0.0
    %2793 = vmatprep.subr.mxu0 0.0
    %2794 = vmatpush1.msra.mxu0 0.0
    %2795 = vmatprep.subr.mxu0 0.0
    %2796 = vmatpush1.msra.mxu0 0.0
    %2797 = vmatprep.subr.mxu0 0.0
    %2798 = vmatpush1.msra.mxu0 0.0
    %2799 = vmatprep.subr.mxu0 0.0
    %2800 = vmatpush1.msra.mxu0 0.0
    %2801 = vmatprep.subr.mxu0 0.0
    %2802 = vmatpush1.msra.mxu0 0.0
    %2803 = vmatprep.subr.mxu0 0.0
    %2804 = vmatpush1.msra.mxu0 0.0
    %2805 = vmatprep.subr.mxu0 0.0
    %2806 = vmatpush1.msra.mxu0 0.0
    %2807 = vmatprep.subr.mxu0 0.0
    %2808 = vmatpush1.msra.mxu0 0.0
    %2809 = vmatprep.subr.mxu0 0.0
    %2810 = vmatpush1.msra.mxu0 0.0
    %2811 = vmatprep.subr.mxu0 0.0
    %2812 = vmatpush1.msra.mxu0 0.0
    %2813 = vmatprep.subr.mxu0 0.0
    %2814 = vmatpush1.msra.mxu0 0.0
    %2815 = vmatprep.subr.mxu0 0.0
    %2816 = vmatpush1.msra.mxu0 0.0
    %2817 = vmatprep.subr.mxu0 0.0
    %2818 = vmatpush1.msra.mxu0 0.0
    %2819 = vmatprep.subr.mxu0 0.0
    %2820 = vmatpush1.msra.mxu0 0.0
    %2821 = vmatprep.mubr.f32.mxu0 0.0
    %2822 = vmatmul.mubr.f32.gmra.mrb[0].mxu0 %v2755
    %v2823 = vpop.f32.mrb[0].mxu0
    %v2824 = vadd.f32 %v2752, %v2823
    %v2825 = vpop.f32.mrb[0].mxu0
    %2826 = vdwg.mxu0
    %v2827 = vadd.f32 %v2824, %v700
    %v2828 = vmax.f32 %v2827, 0.0
    %v2830 = vsel %vm160, %v2828, 0
    %2832 = vmatprep.subr.mxu0 0.0
    %2833 = vmatpush1.msra.mxu0 %v703
    %2834 = vmatprep.subr.mxu0 0.0
    %2835 = vmatpush1.msra.mxu0 %v704
    %2836 = vmatprep.subr.mxu0 0.0
    %2837 = vmatpush1.msra.mxu0 %v705
    %2838 = vmatprep.subr.mxu0 0.0
    %2839 = vmatpush1.msra.mxu0 %v706
    %2840 = vmatprep.subr.mxu0 0.0
    %2841 = vmatpush1.msra.mxu0 0.0
    %2842 = vmatprep.subr.mxu0 0.0
    %2843 = vmatpush1.msra.mxu0 0.0
    %2844 = vmatprep.subr.mxu0 0.0
    %2845 = vmatpush1.msra.mxu0 0.0
    %2846 = vmatprep.subr.mxu0 0.0
    %2847 = vmatpush1.msra.mxu0 0.0
    %2848 = vmatprep.subr.mxu0 0.0
    %2849 = vmatpush1.msra.mxu0 0.0
    %2850 = vmatprep.subr.mxu0 0.0
    %2851 = vmatpush1.msra.mxu0 0.0
    %2852 = vmatprep.subr.mxu0 0.0
    %2853 = vmatpush1.msra.mxu0 0.0
    %2854 = vmatprep.subr.mxu0 0.0
    %2855 = vmatpush1.msra.mxu0 0.0
    %2856 = vmatprep.subr.mxu0 0.0
    %2857 = vmatpush1.msra.mxu0 0.0
    %2858 = vmatprep.subr.mxu0 0.0
    %2859 = vmatpush1.msra.mxu0 0.0
    %2860 = vmatprep.subr.mxu0 0.0
    %2861 = vmatpush1.msra.mxu0 0.0
    %2862 = vmatprep.subr.mxu0 0.0
    %2863 = vmatpush1.msra.mxu0 0.0
    %2864 = vmatprep.subr.mxu0 0.0
    %2865 = vmatpush1.msra.mxu0 0.0
    %2866 = vmatprep.subr.mxu0 0.0
    %2867 = vmatpush1.msra.mxu0 0.0
    %2868 = vmatprep.subr.mxu0 0.0
    %2869 = vmatpush1.msra.mxu0 0.0
    %2870 = vmatprep.subr.mxu0 0.0
    %2871 = vmatpush1.msra.mxu0 0.0
    %2872 = vmatprep.subr.mxu0 0.0
    %2873 = vmatpush1.msra.mxu0 0.0
    %2874 = vmatprep.subr.mxu0 0.0
    %2875 = vmatpush1.msra.mxu0 0.0
    %2876 = vmatprep.subr.mxu0 0.0
    %2877 = vmatpush1.msra.mxu0 0.0
    %2878 = vmatprep.subr.mxu0 0.0
    %2879 = vmatpush1.msra.mxu0 0.0
    %2880 = vmatprep.subr.mxu0 0.0
    %2881 = vmatpush1.msra.mxu0 0.0
    %2882 = vmatprep.subr.mxu0 0.0
    %2883 = vmatpush1.msra.mxu0 0.0
    %2884 = vmatprep.subr.mxu0 0.0
    %2885 = vmatpush1.msra.mxu0 0.0
    %2886 = vmatprep.subr.mxu0 0.0
    %2887 = vmatpush1.msra.mxu0 0.0
    %2888 = vmatprep.subr.mxu0 0.0
    %2889 = vmatpush1.msra.mxu0 0.0
    %2890 = vmatprep.subr.mxu0 0.0
    %2891 = vmatpush1.msra.mxu0 0.0
    %2892 = vmatprep.subr.mxu0 0.0
    %2893 = vmatpush1.msra.mxu0 0.0
    %2894 = vmatprep.subr.mxu0 0.0
    %2895 = vmatpush1.msra.mxu0 0.0
    %2896 = vmatprep.mubr.f32.mxu0 0.0
    %2897 = vmatmul.mubr.f32.gmra.mrb[0].mxu0 %v2830
    %v2898 = vpop.f32.mrb[0].mxu0
    %v2899 = vadd.f32 %v710, %v2898
    %v2900 = vpop.f32.mrb[0].mxu0
    %2901 = vdwg.mxu0
    %2902 = vmatprep.subr.mxu0 0.0
    %2903 = vmatpush1.msra.mxu0 %v272
    %2904 = vmatprep.subr.mxu0 0.0
    %2905 = vmatpush1.msra.mxu0 %v273
    %2906 = vmatprep.subr.mxu0 0.0
    %2907 = vmatpush1.msra.mxu0 %v274
    %2908 = vmatprep.subr.mxu0 0.0
    %2909 = vmatpush1.msra.mxu0 %v275
    %2910 = vmatprep.subr.mxu0 0.0
    %2911 = vmatpush1.msra.mxu0 0.0
    %2912 = vmatprep.subr.mxu0 0.0
    %2913 = vmatpush1.msra.mxu0 0.0
    %2914 = vmatprep.subr.mxu0 0.0
    %2915 = vmatpush1.msra.mxu0 0.0
    %2916 = vmatprep.subr.mxu0 0.0
    %2917 = vmatpush1.msra.mxu0 0.0
    %2918 = vmatprep.subr.mxu0 0.0
    %2919 = vmatpush1.msra.mxu0 0.0
    %2920 = vmatprep.subr.mxu0 0.0
    %2921 = vmatpush1.msra.mxu0 0.0
    %2922 = vmatprep.subr.mxu0 0.0
    %2923 = vmatpush1.msra.mxu0 0.0
    %2924 = vmatprep.subr.mxu0 0.0
    %2925 = vmatpush1.msra.mxu0 0.0
    %2926 = vmatprep.subr.mxu0 0.0
    %2927 = vmatpush1.msra.mxu0 0.0
    %2928 = vmatprep.subr.mxu0 0.0
    %2929 = vmatpush1.msra.mxu0 0.0
    %2930 = vmatprep.subr.mxu0 0.0
    %2931 = vmatpush1.msra.mxu0 0.0
    %2932 = vmatprep.subr.mxu0 0.0
    %2933 = vmatpush1.msra.mxu0 0.0
    %2934 = vmatprep.subr.mxu0 0.0
    %2935 = vmatpush1.msra.mxu0 0.0
    %2936 = vmatprep.subr.mxu0 0.0
    %2937 = vmatpush1.msra.mxu0 0.0
    %2938 = vmatprep.subr.mxu0 0.0
    %2939 = vmatpush1.msra.mxu0 0.0
    %2940 = vmatprep.subr.mxu0 0.0
    %2941 = vmatpush1.msra.mxu0 0.0
    %2942 = vmatprep.subr.mxu0 0.0
    %2943 = vmatpush1.msra.mxu0 0.0
    %2944 = vmatprep.subr.mxu0 0.0
    %2945 = vmatpush1.msra.mxu0 0.0
    %2946 = vmatprep.subr.mxu0 0.0
    %2947 = vmatpush1.msra.mxu0 0.0
    %2948 = vmatprep.subr.mxu0 0.0
    %2949 = vmatpush1.msra.mxu0 0.0
    %2950 = vmatprep.subr.mxu0 0.0
    %2951 = vmatpush1.msra.mxu0 0.0
    %2952 = vmatprep.subr.mxu0 0.0
    %2953 = vmatpush1.msra.mxu0 0.0
    %2954 = vmatprep.subr.mxu0 0.0
    %2955 = vmatpush1.msra.mxu0 0.0
    %2956 = vmatprep.subr.mxu0 0.0
    %2957 = vmatpush1.msra.mxu0 0.0
    %2958 = vmatprep.subr.mxu0 0.0
    %2959 = vmatpush1.msra.mxu0 0.0
    %2960 = vmatprep.subr.mxu0 0.0
    %2961 = vmatpush1.msra.mxu0 0.0
    %2962 = vmatprep.subr.mxu0 0.0
    %2963 = vmatpush1.msra.mxu0 0.0
    %2964 = vmatprep.subr.mxu0 0.0
    %2965 = vmatpush1.msra.mxu0 0.0
    %2966 = vmatprep.mubr.f32.mxu0 0.0
    %2967 = vmatmul.mubr.f32.gmra.mrb[0].mxu0 %v2830
    %v2968 = vpop.f32.mrb[0].mxu0
    %v2969 = vadd.f32 %v787, %v2968
    %v2970 = vpop.f32.mrb[0].mxu0
    %2971 = vdwg.mxu0
    %v2972 = vmax.f32 %v2969, 0.0
    %2973 = vmatprep.subr.mxu0 0.0
    %2974 = vmatpush1.msra.mxu0 %v859
    %2975 = vmatprep.subr.mxu0 0.0
    %2976 = vmatpush1.msra.mxu0 %v860
    %2977 = vmatprep.subr.mxu0 0.0
    %2978 = vmatpush1.msra.mxu0 %v861
    %2979 = vmatprep.subr.mxu0 0.0
    %2980 = vmatpush1.msra.mxu0 %v862
    %2981 = vmatprep.subr.mxu0 0.0
    %2982 = vmatpush1.msra.mxu0 0.0
    %2983 = vmatprep.subr.mxu0 0.0
    %2984 = vmatpush1.msra.mxu0 0.0
    %2985 = vmatprep.subr.mxu0 0.0
    %2986 = vmatpush1.msra.mxu0 0.0
    %2987 = vmatprep.subr.mxu0 0.0
    %2988 = vmatpush1.msra.mxu0 0.0
    %2989 = vmatprep.subr.mxu0 0.0
    %2990 = vmatpush1.msra.mxu0 0.0
    %2991 = vmatprep.subr.mxu0 0.0
    %2992 = vmatpush1.msra.mxu0 0.0
    %2993 = vmatprep.subr.mxu0 0.0
    %2994 = vmatpush1.msra.mxu0 0.0
    %2995 = vmatprep.subr.mxu0 0.0
    %2996 = vmatpush1.msra.mxu0 0.0
    %2997 = vmatprep.subr.mxu0 0.0
    %2998 = vmatpush1.msra.mxu0 0.0
    %2999 = vmatprep.subr.mxu0 0.0
    %3000 = vmatpush1.msra.mxu0 0.0
    %3001 = vmatprep.subr.mxu0 0.0
    %3002 = vmatpush1.msra.mxu0 0.0
    %3003 = vmatprep.subr.mxu0 0.0
    %3004 = vmatpush1.msra.mxu0 0.0
    %3005 = vmatprep.subr.mxu0 0.0
    %3006 = vmatpush1.msra.mxu0 0.0
    %3007 = vmatprep.subr.mxu0 0.0
    %3008 = vmatpush1.msra.mxu0 0.0
    %3009 = vmatprep.subr.mxu0 0.0
    %3010 = vmatpush1.msra.mxu0 0.0
    %3011 = vmatprep.subr.mxu0 0.0
    %3012 = vmatpush1.msra.mxu0 0.0
    %3013 = vmatprep.subr.mxu0 0.0
    %3014 = vmatpush1.msra.mxu0 0.0
    %3015 = vmatprep.subr.mxu0 0.0
    %3016 = vmatpush1.msra.mxu0 0.0
    %3017 = vmatprep.subr.mxu0 0.0
    %3018 = vmatpush1.msra.mxu0 0.0
    %3019 = vmatprep.subr.mxu0 0.0
    %3020 = vmatpush1.msra.mxu0 0.0
    %3021 = vmatprep.subr.mxu0 0.0
    %3022 = vmatpush1.msra.mxu0 0.0
    %3023 = vmatprep.subr.mxu0 0.0
    %3024 = vmatpush1.msra.mxu0 0.0
    %3025 = vmatprep.subr.mxu0 0.0
    %3026 = vmatpush1.msra.mxu0 0.0
    %3027 = vmatprep.subr.mxu0 0.0
    %3028 = vmatpush1.msra.mxu0 0.0
    %3029 = vmatprep.subr.mxu0 0.0
    %3030 = vmatpush1.msra.mxu0 0.0
    %3031 = vmatprep.subr.mxu0 0.0
    %3032 = vmatpush1.msra.mxu0 0.0
    %3033 = vmatprep.subr.mxu0 0.0
    %3034 = vmatpush1.msra.mxu0 0.0
    %3035 = vmatprep.subr.mxu0 0.0
    %3036 = vmatpush1.msra.mxu0 0.0
    %3037 = vmatprep.mubr.f32.mxu0 0.0
    %3038 = vmatmul.mubr.f32.gmra.mrb[0].mxu0 %v2755
    %v3039 = vpop.f32.mrb[0].mxu0
    %v3040 = vadd.f32 0.0, %v3039
    %v3041 = vpop.f32.mrb[0].mxu0
    %3042 = vdwg.mxu0
    %v3044 = vsel %vm160, %v2972, 0
    %3046 = vmatprep.subr.mxu0 0.0
    %3047 = vmatpush1.msra.mxu0 %v276
    %3048 = vmatprep.subr.mxu0 0.0
    %3049 = vmatpush1.msra.mxu0 %v277
    %3050 = vmatprep.subr.mxu0 0.0
    %3051 = vmatpush1.msra.mxu0 %v278
    %3052 = vmatprep.subr.mxu0 0.0
    %3053 = vmatpush1.msra.mxu0 %v279
    %3054 = vmatprep.subr.mxu0 0.0
    %3055 = vmatpush1.msra.mxu0 0.0
    %3056 = vmatprep.subr.mxu0 0.0
    %3057 = vmatpush1.msra.mxu0 0.0
    %3058 = vmatprep.subr.mxu0 0.0
    %3059 = vmatpush1.msra.mxu0 0.0
    %3060 = vmatprep.subr.mxu0 0.0
    %3061 = vmatpush1.msra.mxu0 0.0
    %3062 = vmatprep.subr.mxu0 0.0
    %3063 = vmatpush1.msra.mxu0 0.0
    %3064 = vmatprep.subr.mxu0 0.0
    %3065 = vmatpush1.msra.mxu0 0.0
    %3066 = vmatprep.subr.mxu0 0.0
    %3067 = vmatpush1.msra.mxu0 0.0
    %3068 = vmatprep.subr.mxu0 0.0
    %3069 = vmatpush1.msra.mxu0 0.0
    %3070 = vmatprep.subr.mxu0 0.0
    %3071 = vmatpush1.msra.mxu0 0.0
    %3072 = vmatprep.subr.mxu0 0.0
    %3073 = vmatpush1.msra.mxu0 0.0
    %3074 = vmatprep.subr.mxu0 0.0
    %3075 = vmatpush1.msra.mxu0 0.0
    %3076 = vmatprep.subr.mxu0 0.0
    %3077 = vmatpush1.msra.mxu0 0.0
    %3078 = vmatprep.subr.mxu0 0.0
    %3079 = vmatpush1.msra.mxu0 0.0
    %3080 = vmatprep.subr.mxu0 0.0
    %3081 = vmatpush1.msra.mxu0 0.0
    %3082 = vmatprep.subr.mxu0 0.0
    %3083 = vmatpush1.msra.mxu0 0.0
    %3084 = vmatprep.subr.mxu0 0.0
    %3085 = vmatpush1.msra.mxu0 0.0
    %3086 = vmatprep.subr.mxu0 0.0
    %3087 = vmatpush1.msra.mxu0 0.0
    %3088 = vmatprep.subr.mxu0 0.0
    %3089 = vmatpush1.msra.mxu0 0.0
    %3090 = vmatprep.subr.mxu0 0.0
    %3091 = vmatpush1.msra.mxu0 0.0
    %3092 = vmatprep.subr.mxu0 0.0
    %3093 = vmatpush1.msra.mxu0 0.0
    %3094 = vmatprep.subr.mxu0 0.0
    %3095 = vmatpush1.msra.mxu0 0.0
    %3096 = vmatprep.subr.mxu0 0.0
    %3097 = vmatpush1.msra.mxu0 0.0
    %3098 = vmatprep.subr.mxu0 0.0
    %3099 = vmatpush1.msra.mxu0 0.0
    %3100 = vmatprep.subr.mxu0 0.0
    %3101 = vmatpush1.msra.mxu0 0.0
    %3102 = vmatprep.subr.mxu0 0.0
    %3103 = vmatpush1.msra.mxu0 0.0
    %3104 = vmatprep.subr.mxu0 0.0
    %3105 = vmatpush1.msra.mxu0 0.0
    %3106 = vmatprep.subr.mxu0 0.0
    %3107 = vmatpush1.msra.mxu0 0.0
    %3108 = vmatprep.subr.mxu0 0.0
    %3109 = vmatpush1.msra.mxu0 0.0
    %3110 = vmatprep.mubr.f32.mxu0 0.0
    %3111 = vmatmul.mubr.f32.gmra.mrb[0].mxu0 %v3044
    %v3112 = vpop.f32.mrb[0].mxu0
    %v3113 = vadd.f32 %v3040, %v3112
    %v3114 = vpop.f32.mrb[0].mxu0
    %3115 = vdwg.mxu0
    %v3116 = vadd.f32 %v3113, %v2582
    %v3117 = vadd.f32 %v3116, %v1010
    %v3118 = vxor.u32 %v3117, 2147483648
    %v3119 = vmul.f32 %v3118, 1.442695
    %v3120 = vpow.pop %v3119
    %v3121 = vadd.f32 %v3120, 1.0
    %v3122 = vrcp.pop %v3121
    %v3123 = vmul.f32 1.0, %v3122
    %v3124 = vtanh.pop %v3117
    %v3125 = vmul.f32 %v3123, %v2432
    %3127 = vrot.lane.b32.xlu0 %v3124, 64
    %v3128 = vpop.permute.xlu0 %3127
    %v3130 = vmul.f32 %v3123, %v3128
    %3132 = vrot.lane.b32.xlu0 %v3130, 32
    %v3133 = vpop.permute.xlu0 %3132
    %v3135 = vadd.f32 %v3125, %v3133
    %v3136 = vtanh.pop %v3135
    %3138 = vrot.lane.b32.xlu0 %v3136, 64
    %v3139 = vpop.permute.xlu0 %3138
    %v3141 = vmul.f32 %v3123, %v3139
    %v3142 = vld [vmem:[#allocation2 + $0x10] sm:$0xf]
    %3144 = vrot.lane.b32.xlu0 %v3141, 32
    %v3145 = vpop.permute.xlu0 %3144
    %v3146 = vsel %vm160, %v3145, 0
    %3148 = vmatprep.subr.mxu0 0.0
    %3149 = vmatpush1.msra.mxu0 %v262
    %3150 = vmatprep.subr.mxu0 0.0
    %3151 = vmatpush1.msra.mxu0 %v263
    %3152 = vmatprep.subr.mxu0 0.0
    %3153 = vmatpush1.msra.mxu0 %v264
    %3154 = vmatprep.subr.mxu0 0.0
    %3155 = vmatpush1.msra.mxu0 %v265
    %3156 = vmatprep.subr.mxu0 0.0
    %3157 = vmatpush1.msra.mxu0 0.0
    %3158 = vmatprep.subr.mxu0 0.0
    %3159 = vmatpush1.msra.mxu0 0.0
    %3160 = vmatprep.subr.mxu0 0.0
    %3161 = vmatpush1.msra.mxu0 0.0
    %3162 = vmatprep.subr.mxu0 0.0
    %3163 = vmatpush1.msra.mxu0 0.0
    %3164 = vmatprep.subr.mxu0 0.0
    %3165 = vmatpush1.msra.mxu0 0.0
    %3166 = vmatprep.subr.mxu0 0.0
    %3167 = vmatpush1.msra.mxu0 0.0
    %3168 = vmatprep.subr.mxu0 0.0
    %3169 = vmatpush1.msra.mxu0 0.0
    %3170 = vmatprep.subr.mxu0 0.0
    %3171 = vmatpush1.msra.mxu0 0.0
    %3172 = vmatprep.subr.mxu0 0.0
    %3173 = vmatpush1.msra.mxu0 0.0
    %3174 = vmatprep.subr.mxu0 0.0
    %3175 = vmatpush1.msra.mxu0 0.0
    %3176 = vmatprep.subr.mxu0 0.0
    %3177 = vmatpush1.msra.mxu0 0.0
    %3178 = vmatprep.subr.mxu0 0.0
    %3179 = vmatpush1.msra.mxu0 0.0
    %3180 = vmatprep.subr.mxu0 0.0
    %3181 = vmatpush1.msra.mxu0 0.0
    %3182 = vmatprep.subr.mxu0 0.0
    %3183 = vmatpush1.msra.mxu0 0.0
    %3184 = vmatprep.subr.mxu0 0.0
    %3185 = vmatpush1.msra.mxu0 0.0
    %3186 = vmatprep.subr.mxu0 0.0
    %3187 = vmatpush1.msra.mxu0 0.0
    %3188 = vmatprep.subr.mxu0 0.0
    %3189 = vmatpush1.msra.mxu0 0.0
    %3190 = vmatprep.subr.mxu0 0.0
    %3191 = vmatpush1.msra.mxu0 0.0
    %3192 = vmatprep.subr.mxu0 0.0
    %3193 = vmatpush1.msra.mxu0 0.0
    %3194 = vmatprep.subr.mxu0 0.0
    %3195 = vmatpush1.msra.mxu0 0.0
    %3196 = vmatprep.subr.mxu0 0.0
    %3197 = vmatpush1.msra.mxu0 0.0
    %3198 = vmatprep.subr.mxu0 0.0
    %3199 = vmatpush1.msra.mxu0 0.0
    %3200 = vmatprep.subr.mxu0 0.0
    %3201 = vmatpush1.msra.mxu0 0.0
    %3202 = vmatprep.subr.mxu0 0.0
    %3203 = vmatpush1.msra.mxu0 0.0
    %3204 = vmatprep.subr.mxu0 0.0
    %3205 = vmatpush1.msra.mxu0 0.0
    %3206 = vmatprep.subr.mxu0 0.0
    %3207 = vmatpush1.msra.mxu0 0.0
    %3208 = vmatprep.subr.mxu0 0.0
    %3209 = vmatpush1.msra.mxu0 0.0
    %3210 = vmatprep.subr.mxu0 0.0
    %3211 = vmatpush1.msra.mxu0 0.0
    %3212 = vmatprep.mubr.f32.mxu0 0.0
    %3213 = vmatmul.mubr.f32.gmra.mrb[0].mxu0 %v3146
    %v3214 = vpop.f32.mrb[0].mxu0
    %v3215 = vadd.f32 0.0, %v3214
    %v3216 = vpop.f32.mrb[0].mxu0
    %3217 = vdwg.mxu0
    %3218 = vmatprep.subr.mxu0 0.0
    %3219 = vmatpush1.msra.mxu0 %v266
    %3220 = vmatprep.subr.mxu0 0.0
    %3221 = vmatpush1.msra.mxu0 %v267
    %3222 = vmatprep.subr.mxu0 0.0
    %3223 = vmatpush1.msra.mxu0 %v268
    %3224 = vmatprep.subr.mxu0 0.0
    %3225 = vmatpush1.msra.mxu0 %v269
    %3226 = vmatprep.subr.mxu0 0.0
    %3227 = vmatpush1.msra.mxu0 0.0
    %3228 = vmatprep.subr.mxu0 0.0
    %3229 = vmatpush1.msra.mxu0 0.0
    %3230 = vmatprep.subr.mxu0 0.0
    %3231 = vmatpush1.msra.mxu0 0.0
    %3232 = vmatprep.subr.mxu0 0.0
    %3233 = vmatpush1.msra.mxu0 0.0
    %3234 = vmatprep.subr.mxu0 0.0
    %3235 = vmatpush1.msra.mxu0 0.0
    %3236 = vmatprep.subr.mxu0 0.0
    %3237 = vmatpush1.msra.mxu0 0.0
    %3238 = vmatprep.subr.mxu0 0.0
    %3239 = vmatpush1.msra.mxu0 0.0
    %3240 = vmatprep.subr.mxu0 0.0
    %3241 = vmatpush1.msra.mxu0 0.0
    %3242 = vmatprep.subr.mxu0 0.0
    %3243 = vmatpush1.msra.mxu0 0.0
    %3244 = vmatprep.subr.mxu0 0.0
    %3245 = vmatpush1.msra.mxu0 0.0
    %3246 = vmatprep.subr.mxu0 0.0
    %3247 = vmatpush1.msra.mxu0 0.0
    %3248 = vmatprep.subr.mxu0 0.0
    %3249 = vmatpush1.msra.mxu0 0.0
    %3250 = vmatprep.subr.mxu0 0.0
    %3251 = vmatpush1.msra.mxu0 0.0
    %3252 = vmatprep.subr.mxu0 0.0
    %3253 = vmatpush1.msra.mxu0 0.0
    %3254 = vmatprep.subr.mxu0 0.0
    %3255 = vmatpush1.msra.mxu0 0.0
    %3256 = vmatprep.subr.mxu0 0.0
    %3257 = vmatpush1.msra.mxu0 0.0
    %3258 = vmatprep.subr.mxu0 0.0
    %3259 = vmatpush1.msra.mxu0 0.0
    %3260 = vmatprep.subr.mxu0 0.0
    %3261 = vmatpush1.msra.mxu0 0.0
    %3262 = vmatprep.subr.mxu0 0.0
    %3263 = vmatpush1.msra.mxu0 0.0
    %3264 = vmatprep.subr.mxu0 0.0
    %3265 = vmatpush1.msra.mxu0 0.0
    %3266 = vmatprep.subr.mxu0 0.0
    %3267 = vmatpush1.msra.mxu0 0.0
    %3268 = vmatprep.subr.mxu0 0.0
    %3269 = vmatpush1.msra.mxu0 0.0
    %3270 = vmatprep.subr.mxu0 0.0
    %3271 = vmatpush1.msra.mxu0 0.0
    %3272 = vmatprep.subr.mxu0 0.0
    %3273 = vmatpush1.msra.mxu0 0.0
    %3274 = vmatprep.subr.mxu0 0.0
    %3275 = vmatpush1.msra.mxu0 0.0
    %3276 = vmatprep.subr.mxu0 0.0
    %3277 = vmatpush1.msra.mxu0 0.0
    %3278 = vmatprep.subr.mxu0 0.0
    %3279 = vmatpush1.msra.mxu0 0.0
    %3280 = vmatprep.subr.mxu0 0.0
    %3281 = vmatpush1.msra.mxu0 0.0
    %3282 = vmatprep.mubr.f32.mxu0 0.0
    %3283 = vmatmul.mubr.f32.gmra.mrb[0].mxu0 %v3146
    %v3284 = vpop.f32.mrb[0].mxu0
    %v3285 = vadd.f32 0.0, %v3284
    %v3286 = vpop.f32.mrb[0].mxu0
    %3287 = vdwg.mxu0
    %v3288 = vadd.f32 %v3142, %v3215
    %v3289 = vmax.f32 %v3288, 0.0
    %v3290 = vadd.f32 %v3215, %v433
    %v3291 = vmax.f32 %v3290, 0.0
    %v3292 = vsel %vm160, %v3289, %v3291
    %v3294 = vsel %vm450, %v3292, 0
    %3296 = vmatprep.subr.mxu0 0.0
    %3297 = vmatpush1.msra.mxu0 %v438
    %3298 = vmatprep.subr.mxu0 0.0
    %3299 = vmatpush1.msra.mxu0 %v439
    %3300 = vmatprep.subr.mxu0 0.0
    %3301 = vmatpush1.msra.mxu0 %v440
    %3302 = vmatprep.subr.mxu0 0.0
    %3303 = vmatpush1.msra.mxu0 %v441
    %3304 = vmatprep.subr.mxu0 0.0
    %3305 = vmatpush1.msra.mxu0 %v442
    %3306 = vmatprep.subr.mxu0 0.0
    %3307 = vmatpush1.msra.mxu0 %v443
    %3308 = vmatprep.subr.mxu0 0.0
    %3309 = vmatpush1.msra.mxu0 %v444
    %3310 = vmatprep.subr.mxu0 0.0
    %3311 = vmatpush1.msra.mxu0 %v445
    %3312 = vmatprep.subr.mxu0 0.0
    %3313 = vmatpush1.msra.mxu0 0.0
    %3314 = vmatprep.subr.mxu0 0.0
    %3315 = vmatpush1.msra.mxu0 0.0
    %3316 = vmatprep.subr.mxu0 0.0
    %3317 = vmatpush1.msra.mxu0 0.0
    %3318 = vmatprep.subr.mxu0 0.0
    %3319 = vmatpush1.msra.mxu0 0.0
    %3320 = vmatprep.subr.mxu0 0.0
    %3321 = vmatpush1.msra.mxu0 0.0
    %3322 = vmatprep.subr.mxu0 0.0
    %3323 = vmatpush1.msra.mxu0 0.0
    %3324 = vmatprep.subr.mxu0 0.0
    %3325 = vmatpush1.msra.mxu0 0.0
    %3326 = vmatprep.subr.mxu0 0.0
    %3327 = vmatpush1.msra.mxu0 0.0
    %3328 = vmatprep.subr.mxu0 0.0
    %3329 = vmatpush1.msra.mxu0 0.0
    %3330 = vmatprep.subr.mxu0 0.0
    %3331 = vmatpush1.msra.mxu0 0.0
    %3332 = vmatprep.subr.mxu0 0.0
    %3333 = vmatpush1.msra.mxu0 0.0
    %3334 = vmatprep.subr.mxu0 0.0
    %3335 = vmatpush1.msra.mxu0 0.0
    %3336 = vmatprep.subr.mxu0 0.0
    %3337 = vmatpush1.msra.mxu0 0.0
    %3338 = vmatprep.subr.mxu0 0.0
    %3339 = vmatpush1.msra.mxu0 0.0
    %3340 = vmatprep.subr.mxu0 0.0
    %3341 = vmatpush1.msra.mxu0 0.0
    %3342 = vmatprep.subr.mxu0 0.0
    %3343 = vmatpush1.msra.mxu0 0.0
    %3344 = vmatprep.subr.mxu0 0.0
    %3345 = vmatpush1.msra.mxu0 0.0
    %3346 = vmatprep.subr.mxu0 0.0
    %3347 = vmatpush1.msra.mxu0 0.0
    %3348 = vmatprep.subr.mxu0 0.0
    %3349 = vmatpush1.msra.mxu0 0.0
    %3350 = vmatprep.subr.mxu0 0.0
    %3351 = vmatpush1.msra.mxu0 0.0
    %3352 = vmatprep.subr.mxu0 0.0
    %3353 = vmatpush1.msra.mxu0 0.0
    %3354 = vmatprep.subr.mxu0 0.0
    %3355 = vmatpush1.msra.mxu0 0.0
    %3356 = vmatprep.subr.mxu0 0.0
    %3357 = vmatpush1.msra.mxu0 0.0
    %3358 = vmatprep.subr.mxu0 0.0
    %3359 = vmatpush1.msra.mxu0 0.0
    %3360 = vmatprep.mubr.f32.mxu0 0.0
    %3361 = vmatmul.mubr.f32.gmra.mrb[0].mxu0 %v3294
    %v3362 = vpop.f32.mrb[0].mxu0
    %v3363 = vadd.f32 %v449, %v3362
    %v3364 = vpop.f32.mrb[0].mxu0
    %3365 = vdwg.mxu0
    %v3366 = vmul.f32 %v3363, 0.5
    %v3367 = vmul.f32 %v3366, 1.442695
    %v3368 = vpow.pop %v3367
    %v3369 = vmin.f32 %v3368, 100.0
    %3370 = vrot.lane.b32.xlu0 %v280, 80
    %v3371 = vpop.permute.xlu0 %3370
    %v3373 = vmul.f32 %v3369, %v3371
    %3375 = vrot.lane.b32.xlu0 %v3373, 112
    %v3376 = vpop.permute.xlu0 %3375
    %v3378 = vadd.f32 %v3363, %v3376
    %v3380 = vsel %vm49, %v3378, 0
    %3382 = vmatprep.subr.mxu0 0.0
    %3383 = vmatpush1.msra.mxu0 %v270
    %3384 = vmatprep.subr.mxu0 0.0
    %3385 = vmatpush1.msra.mxu0 %v271
    %3386 = vmatprep.subr.mxu0 0.0
    %3387 = vmatpush1.msra.mxu0 0.0
    %3388 = vmatprep.subr.mxu0 0.0
    %3389 = vmatpush1.msra.mxu0 0.0
    %3390 = vmatprep.subr.mxu0 0.0
    %3391 = vmatpush1.msra.mxu0 0.0
    %3392 = vmatprep.subr.mxu0 0.0
    %3393 = vmatpush1.msra.mxu0 0.0
    %3394 = vmatprep.subr.mxu0 0.0
    %3395 = vmatpush1.msra.mxu0 0.0
    %3396 = vmatprep.subr.mxu0 0.0
    %3397 = vmatpush1.msra.mxu0 0.0
    %3398 = vmatprep.subr.mxu0 0.0
    %3399 = vmatpush1.msra.mxu0 0.0
    %3400 = vmatprep.subr.mxu0 0.0
    %3401 = vmatpush1.msra.mxu0 0.0
    %3402 = vmatprep.subr.mxu0 0.0
    %3403 = vmatpush1.msra.mxu0 0.0
    %3404 = vmatprep.subr.mxu0 0.0
    %3405 = vmatpush1.msra.mxu0 0.0
    %3406 = vmatprep.subr.mxu0 0.0
    %3407 = vmatpush1.msra.mxu0 0.0
    %3408 = vmatprep.subr.mxu0 0.0
    %3409 = vmatpush1.msra.mxu0 0.0
    %3410 = vmatprep.subr.mxu0 0.0
    %3411 = vmatpush1.msra.mxu0 0.0
    %3412 = vmatprep.subr.mxu0 0.0
    %3413 = vmatpush1.msra.mxu0 0.0
    %3414 = vmatprep.subr.mxu0 0.0
    %3415 = vmatpush1.msra.mxu0 0.0
    %3416 = vmatprep.subr.mxu0 0.0
    %3417 = vmatpush1.msra.mxu0 0.0
    %3418 = vmatprep.subr.mxu0 0.0
    %3419 = vmatpush1.msra.mxu0 0.0
    %3420 = vmatprep.subr.mxu0 0.0
    %3421 = vmatpush1.msra.mxu0 0.0
    %3422 = vmatprep.subr.mxu0 0.0
    %3423 = vmatpush1.msra.mxu0 0.0
    %3424 = vmatprep.subr.mxu0 0.0
    %3425 = vmatpush1.msra.mxu0 0.0
    %3426 = vmatprep.subr.mxu0 0.0
    %3427 = vmatpush1.msra.mxu0 0.0
    %3428 = vmatprep.subr.mxu0 0.0
    %3429 = vmatpush1.msra.mxu0 0.0
    %3430 = vmatprep.subr.mxu0 0.0
    %3431 = vmatpush1.msra.mxu0 0.0
    %3432 = vmatprep.subr.mxu0 0.0
    %3433 = vmatpush1.msra.mxu0 0.0
    %3434 = vmatprep.subr.mxu0 0.0
    %3435 = vmatpush1.msra.mxu0 0.0
    %3436 = vmatprep.subr.mxu0 0.0
    %3437 = vmatpush1.msra.mxu0 0.0
    %3438 = vmatprep.subr.mxu0 0.0
    %3439 = vmatpush1.msra.mxu0 0.0
    %3440 = vmatprep.subr.mxu0 0.0
    %3441 = vmatpush1.msra.mxu0 0.0
    %3442 = vmatprep.subr.mxu0 0.0
    %3443 = vmatpush1.msra.mxu0 0.0
    %3444 = vmatprep.subr.mxu0 0.0
    %3445 = vmatpush1.msra.mxu0 0.0
    %3446 = vmatprep.mubr.f32.mxu0 0.0
    %3447 = vmatmul.mubr.f32.gmra.mrb[0].mxu0 %v3380
    %v3448 = vpop.f32.mrb[0].mxu0
    %v3449 = vadd.f32 %v541, %v3448
    %v3450 = vpop.f32.mrb[0].mxu0
    %3451 = vdwg.mxu0
    %v3452 = vmax.f32 %v3449, 0.0
    %3454 = vrot.lane.b32.xlu0 %v3215, 64
    %v3455 = vpop.permute.xlu0 %3454
    %v3458 = vsel %vm160, %v3452, 0
    %3460 = vmatprep.subr.mxu0 0.0
    %3461 = vmatpush1.msra.mxu0 %v616
    %3462 = vmatprep.subr.mxu0 0.0
    %3463 = vmatpush1.msra.mxu0 %v617
    %3464 = vmatprep.subr.mxu0 0.0
    %3465 = vmatpush1.msra.mxu0 %v618
    %3466 = vmatprep.subr.mxu0 0.0
    %3467 = vmatpush1.msra.mxu0 %v619
    %3468 = vmatprep.subr.mxu0 0.0
    %3469 = vmatpush1.msra.mxu0 0.0
    %3470 = vmatprep.subr.mxu0 0.0
    %3471 = vmatpush1.msra.mxu0 0.0
    %3472 = vmatprep.subr.mxu0 0.0
    %3473 = vmatpush1.msra.mxu0 0.0
    %3474 = vmatprep.subr.mxu0 0.0
    %3475 = vmatpush1.msra.mxu0 0.0
    %3476 = vmatprep.subr.mxu0 0.0
    %3477 = vmatpush1.msra.mxu0 0.0
    %3478 = vmatprep.subr.mxu0 0.0
    %3479 = vmatpush1.msra.mxu0 0.0
    %3480 = vmatprep.subr.mxu0 0.0
    %3481 = vmatpush1.msra.mxu0 0.0
    %3482 = vmatprep.subr.mxu0 0.0
    %3483 = vmatpush1.msra.mxu0 0.0
    %3484 = vmatprep.subr.mxu0 0.0
    %3485 = vmatpush1.msra.mxu0 0.0
    %3486 = vmatprep.subr.mxu0 0.0
    %3487 = vmatpush1.msra.mxu0 0.0
    %3488 = vmatprep.subr.mxu0 0.0
    %3489 = vmatpush1.msra.mxu0 0.0
    %3490 = vmatprep.subr.mxu0 0.0
    %3491 = vmatpush1.msra.mxu0 0.0
    %3492 = vmatprep.subr.mxu0 0.0
    %3493 = vmatpush1.msra.mxu0 0.0
    %3494 = vmatprep.subr.mxu0 0.0
    %3495 = vmatpush1.msra.mxu0 0.0
    %3496 = vmatprep.subr.mxu0 0.0
    %3497 = vmatpush1.msra.mxu0 0.0
    %3498 = vmatprep.subr.mxu0 0.0
    %3499 = vmatpush1.msra.mxu0 0.0
    %3500 = vmatprep.subr.mxu0 0.0
    %3501 = vmatpush1.msra.mxu0 0.0
    %3502 = vmatprep.subr.mxu0 0.0
    %3503 = vmatpush1.msra.mxu0 0.0
    %3504 = vmatprep.subr.mxu0 0.0
    %3505 = vmatpush1.msra.mxu0 0.0
    %3506 = vmatprep.subr.mxu0 0.0
    %3507 = vmatpush1.msra.mxu0 0.0
    %3508 = vmatprep.subr.mxu0 0.0
    %3509 = vmatpush1.msra.mxu0 0.0
    %3510 = vmatprep.subr.mxu0 0.0
    %3511 = vmatpush1.msra.mxu0 0.0
    %3512 = vmatprep.subr.mxu0 0.0
    %3513 = vmatpush1.msra.mxu0 0.0
    %3514 = vmatprep.subr.mxu0 0.0
    %3515 = vmatpush1.msra.mxu0 0.0
    %3516 = vmatprep.subr.mxu0 0.0
    %3517 = vmatpush1.msra.mxu0 0.0
    %3518 = vmatprep.subr.mxu0 0.0
    %3519 = vmatpush1.msra.mxu0 0.0
    %3520 = vmatprep.subr.mxu0 0.0
    %3521 = vmatpush1.msra.mxu0 0.0
    %3522 = vmatprep.subr.mxu0 0.0
    %3523 = vmatpush1.msra.mxu0 0.0
    %3524 = vmatprep.mubr.f32.mxu0 0.0
    %3525 = vmatmul.mubr.f32.gmra.mrb[0].mxu0 %v3458
    %v3526 = vpop.f32.mrb[0].mxu0
    %v3527 = vadd.f32 %v3455, %v3526
    %v3528 = vpop.f32.mrb[0].mxu0
    %3529 = vdwg.mxu0
    %v3530 = vadd.f32 %v3527, %v700
    %v3531 = vmax.f32 %v3530, 0.0
    %v3533 = vsel %vm160, %v3531, 0
    %3535 = vmatprep.subr.mxu0 0.0
    %3536 = vmatpush1.msra.mxu0 %v703
    %3537 = vmatprep.subr.mxu0 0.0
    %3538 = vmatpush1.msra.mxu0 %v704
    %3539 = vmatprep.subr.mxu0 0.0
    %3540 = vmatpush1.msra.mxu0 %v705
    %3541 = vmatprep.subr.mxu0 0.0
    %3542 = vmatpush1.msra.mxu0 %v706
    %3543 = vmatprep.subr.mxu0 0.0
    %3544 = vmatpush1.msra.mxu0 0.0
    %3545 = vmatprep.subr.mxu0 0.0
    %3546 = vmatpush1.msra.mxu0 0.0
    %3547 = vmatprep.subr.mxu0 0.0
    %3548 = vmatpush1.msra.mxu0 0.0
    %3549 = vmatprep.subr.mxu0 0.0
    %3550 = vmatpush1.msra.mxu0 0.0
    %3551 = vmatprep.subr.mxu0 0.0
    %3552 = vmatpush1.msra.mxu0 0.0
    %3553 = vmatprep.subr.mxu0 0.0
    %3554 = vmatpush1.msra.mxu0 0.0
    %3555 = vmatprep.subr.mxu0 0.0
    %3556 = vmatpush1.msra.mxu0 0.0
    %3557 = vmatprep.subr.mxu0 0.0
    %3558 = vmatpush1.msra.mxu0 0.0
    %3559 = vmatprep.subr.mxu0 0.0
    %3560 = vmatpush1.msra.mxu0 0.0
    %3561 = vmatprep.subr.mxu0 0.0
    %3562 = vmatpush1.msra.mxu0 0.0
    %3563 = vmatprep.subr.mxu0 0.0
    %3564 = vmatpush1.msra.mxu0 0.0
    %3565 = vmatprep.subr.mxu0 0.0
    %3566 = vmatpush1.msra.mxu0 0.0
    %3567 = vmatprep.subr.mxu0 0.0
    %3568 = vmatpush1.msra.mxu0 0.0
    %3569 = vmatprep.subr.mxu0 0.0
    %3570 = vmatpush1.msra.mxu0 0.0
    %3571 = vmatprep.subr.mxu0 0.0
    %3572 = vmatpush1.msra.mxu0 0.0
    %3573 = vmatprep.subr.mxu0 0.0
    %3574 = vmatpush1.msra.mxu0 0.0
    %3575 = vmatprep.subr.mxu0 0.0
    %3576 = vmatpush1.msra.mxu0 0.0
    %3577 = vmatprep.subr.mxu0 0.0
    %3578 = vmatpush1.msra.mxu0 0.0
    %3579 = vmatprep.subr.mxu0 0.0
    %3580 = vmatpush1.msra.mxu0 0.0
    %3581 = vmatprep.subr.mxu0 0.0
    %3582 = vmatpush1.msra.mxu0 0.0
    %3583 = vmatprep.subr.mxu0 0.0
    %3584 = vmatpush1.msra.mxu0 0.0
    %3585 = vmatprep.subr.mxu0 0.0
    %3586 = vmatpush1.msra.mxu0 0.0
    %3587 = vmatprep.subr.mxu0 0.0
    %3588 = vmatpush1.msra.mxu0 0.0
    %3589 = vmatprep.subr.mxu0 0.0
    %3590 = vmatpush1.msra.mxu0 0.0
    %3591 = vmatprep.subr.mxu0 0.0
    %3592 = vmatpush1.msra.mxu0 0.0
    %3593 = vmatprep.subr.mxu0 0.0
    %3594 = vmatpush1.msra.mxu0 0.0
    %3595 = vmatprep.subr.mxu0 0.0
    %3596 = vmatpush1.msra.mxu0 0.0
    %3597 = vmatprep.subr.mxu0 0.0
    %3598 = vmatpush1.msra.mxu0 0.0
    %3599 = vmatprep.mubr.f32.mxu0 0.0
    %3600 = vmatmul.mubr.f32.gmra.mrb[0].mxu0 %v3533
    %v3601 = vpop.f32.mrb[0].mxu0
    %v3602 = vadd.f32 %v710, %v3601
    %v3603 = vpop.f32.mrb[0].mxu0
    %3604 = vdwg.mxu0
    %3605 = vmatprep.subr.mxu0 0.0
    %3606 = vmatpush1.msra.mxu0 %v272
    %3607 = vmatprep.subr.mxu0 0.0
    %3608 = vmatpush1.msra.mxu0 %v273
    %3609 = vmatprep.subr.mxu0 0.0
    %3610 = vmatpush1.msra.mxu0 %v274
    %3611 = vmatprep.subr.mxu0 0.0
    %3612 = vmatpush1.msra.mxu0 %v275
    %3613 = vmatprep.subr.mxu0 0.0
    %3614 = vmatpush1.msra.mxu0 0.0
    %3615 = vmatprep.subr.mxu0 0.0
    %3616 = vmatpush1.msra.mxu0 0.0
    %3617 = vmatprep.subr.mxu0 0.0
    %3618 = vmatpush1.msra.mxu0 0.0
    %3619 = vmatprep.subr.mxu0 0.0
    %3620 = vmatpush1.msra.mxu0 0.0
    %3621 = vmatprep.subr.mxu0 0.0
    %3622 = vmatpush1.msra.mxu0 0.0
    %3623 = vmatprep.subr.mxu0 0.0
    %3624 = vmatpush1.msra.mxu0 0.0
    %3625 = vmatprep.subr.mxu0 0.0
    %3626 = vmatpush1.msra.mxu0 0.0
    %3627 = vmatprep.subr.mxu0 0.0
    %3628 = vmatpush1.msra.mxu0 0.0
    %3629 = vmatprep.subr.mxu0 0.0
    %3630 = vmatpush1.msra.mxu0 0.0
    %3631 = vmatprep.subr.mxu0 0.0
    %3632 = vmatpush1.msra.mxu0 0.0
    %3633 = vmatprep.subr.mxu0 0.0
    %3634 = vmatpush1.msra.mxu0 0.0
    %3635 = vmatprep.subr.mxu0 0.0
    %3636 = vmatpush1.msra.mxu0 0.0
    %3637 = vmatprep.subr.mxu0 0.0
    %3638 = vmatpush1.msra.mxu0 0.0
    %3639 = vmatprep.subr.mxu0 0.0
    %3640 = vmatpush1.msra.mxu0 0.0
    %3641 = vmatprep.subr.mxu0 0.0
    %3642 = vmatpush1.msra.mxu0 0.0
    %3643 = vmatprep.subr.mxu0 0.0
    %3644 = vmatpush1.msra.mxu0 0.0
    %3645 = vmatprep.subr.mxu0 0.0
    %3646 = vmatpush1.msra.mxu0 0.0
    %3647 = vmatprep.subr.mxu0 0.0
    %3648 = vmatpush1.msra.mxu0 0.0
    %3649 = vmatprep.subr.mxu0 0.0
    %3650 = vmatpush1.msra.mxu0 0.0
    %3651 = vmatprep.subr.mxu0 0.0
    %3652 = vmatpush1.msra.mxu0 0.0
    %3653 = vmatprep.subr.mxu0 0.0
    %3654 = vmatpush1.msra.mxu0 0.0
    %3655 = vmatprep.subr.mxu0 0.0
    %3656 = vmatpush1.msra.mxu0 0.0
    %3657 = vmatprep.subr.mxu0 0.0
    %3658 = vmatpush1.msra.mxu0 0.0
    %3659 = vmatprep.subr.mxu0 0.0
    %3660 = vmatpush1.msra.mxu0 0.0
    %3661 = vmatprep.subr.mxu0 0.0
    %3662 = vmatpush1.msra.mxu0 0.0
    %3663 = vmatprep.subr.mxu0 0.0
    %3664 = vmatpush1.msra.mxu0 0.0
    %3665 = vmatprep.subr.mxu0 0.0
    %3666 = vmatpush1.msra.mxu0 0.0
    %3667 = vmatprep.subr.mxu0 0.0
    %3668 = vmatpush1.msra.mxu0 0.0
    %3669 = vmatprep.mubr.f32.mxu0 0.0
    %3670 = vmatmul.mubr.f32.gmra.mrb[0].mxu0 %v3533
    %v3671 = vpop.f32.mrb[0].mxu0
    %v3672 = vadd.f32 %v787, %v3671
    %v3673 = vpop.f32.mrb[0].mxu0
    %3674 = vdwg.mxu0
    %v3675 = vmax.f32 %v3672, 0.0
    %3676 = vmatprep.subr.mxu0 0.0
    %3677 = vmatpush1.msra.mxu0 %v859
    %3678 = vmatprep.subr.mxu0 0.0
    %3679 = vmatpush1.msra.mxu0 %v860
    %3680 = vmatprep.subr.mxu0 0.0
    %3681 = vmatpush1.msra.mxu0 %v861
    %3682 = vmatprep.subr.mxu0 0.0
    %3683 = vmatpush1.msra.mxu0 %v862
    %3684 = vmatprep.subr.mxu0 0.0
    %3685 = vmatpush1.msra.mxu0 0.0
    %3686 = vmatprep.subr.mxu0 0.0
    %3687 = vmatpush1.msra.mxu0 0.0
    %3688 = vmatprep.subr.mxu0 0.0
    %3689 = vmatpush1.msra.mxu0 0.0
    %3690 = vmatprep.subr.mxu0 0.0
    %3691 = vmatpush1.msra.mxu0 0.0
    %3692 = vmatprep.subr.mxu0 0.0
    %3693 = vmatpush1.msra.mxu0 0.0
    %3694 = vmatprep.subr.mxu0 0.0
    %3695 = vmatpush1.msra.mxu0 0.0
    %3696 = vmatprep.subr.mxu0 0.0
    %3697 = vmatpush1.msra.mxu0 0.0
    %3698 = vmatprep.subr.mxu0 0.0
    %3699 = vmatpush1.msra.mxu0 0.0
    %3700 = vmatprep.subr.mxu0 0.0
    %3701 = vmatpush1.msra.mxu0 0.0
    %3702 = vmatprep.subr.mxu0 0.0
    %3703 = vmatpush1.msra.mxu0 0.0
    %3704 = vmatprep.subr.mxu0 0.0
    %3705 = vmatpush1.msra.mxu0 0.0
    %3706 = vmatprep.subr.mxu0 0.0
    %3707 = vmatpush1.msra.mxu0 0.0
    %3708 = vmatprep.subr.mxu0 0.0
    %3709 = vmatpush1.msra.mxu0 0.0
    %3710 = vmatprep.subr.mxu0 0.0
    %3711 = vmatpush1.msra.mxu0 0.0
    %3712 = vmatprep.subr.mxu0 0.0
    %3713 = vmatpush1.msra.mxu0 0.0
    %3714 = vmatprep.subr.mxu0 0.0
    %3715 = vmatpush1.msra.mxu0 0.0
    %3716 = vmatprep.subr.mxu0 0.0
    %3717 = vmatpush1.msra.mxu0 0.0
    %3718 = vmatprep.subr.mxu0 0.0
    %3719 = vmatpush1.msra.mxu0 0.0
    %3720 = vmatprep.subr.mxu0 0.0
    %3721 = vmatpush1.msra.mxu0 0.0
    %3722 = vmatprep.subr.mxu0 0.0
    %3723 = vmatpush1.msra.mxu0 0.0
    %3724 = vmatprep.subr.mxu0 0.0
    %3725 = vmatpush1.msra.mxu0 0.0
    %3726 = vmatprep.subr.mxu0 0.0
    %3727 = vmatpush1.msra.mxu0 0.0
    %3728 = vmatprep.subr.mxu0 0.0
    %3729 = vmatpush1.msra.mxu0 0.0
    %3730 = vmatprep.subr.mxu0 0.0
    %3731 = vmatpush1.msra.mxu0 0.0
    %3732 = vmatprep.subr.mxu0 0.0
    %3733 = vmatpush1.msra.mxu0 0.0
    %3734 = vmatprep.subr.mxu0 0.0
    %3735 = vmatpush1.msra.mxu0 0.0
    %3736 = vmatprep.subr.mxu0 0.0
    %3737 = vmatpush1.msra.mxu0 0.0
    %3738 = vmatprep.subr.mxu0 0.0
    %3739 = vmatpush1.msra.mxu0 0.0
    %3740 = vmatprep.mubr.f32.mxu0 0.0
    %3741 = vmatmul.mubr.f32.gmra.mrb[0].mxu0 %v3458
    %v3742 = vpop.f32.mrb[0].mxu0
    %v3743 = vadd.f32 0.0, %v3742
    %v3744 = vpop.f32.mrb[0].mxu0
    %3745 = vdwg.mxu0
    %v3747 = vsel %vm160, %v3675, 0
    %3749 = vmatprep.subr.mxu0 0.0
    %3750 = vmatpush1.msra.mxu0 %v276
    %3751 = vmatprep.subr.mxu0 0.0
    %3752 = vmatpush1.msra.mxu0 %v277
    %3753 = vmatprep.subr.mxu0 0.0
    %3754 = vmatpush1.msra.mxu0 %v278
    %3755 = vmatprep.subr.mxu0 0.0
    %3756 = vmatpush1.msra.mxu0 %v279
    %3757 = vmatprep.subr.mxu0 0.0
    %3758 = vmatpush1.msra.mxu0 0.0
    %3759 = vmatprep.subr.mxu0 0.0
    %3760 = vmatpush1.msra.mxu0 0.0
    %3761 = vmatprep.subr.mxu0 0.0
    %3762 = vmatpush1.msra.mxu0 0.0
    %3763 = vmatprep.subr.mxu0 0.0
    %3764 = vmatpush1.msra.mxu0 0.0
    %3765 = vmatprep.subr.mxu0 0.0
    %3766 = vmatpush1.msra.mxu0 0.0
    %3767 = vmatprep.subr.mxu0 0.0
    %3768 = vmatpush1.msra.mxu0 0.0
    %3769 = vmatprep.subr.mxu0 0.0
    %3770 = vmatpush1.msra.mxu0 0.0
    %3771 = vmatprep.subr.mxu0 0.0
    %3772 = vmatpush1.msra.mxu0 0.0
    %3773 = vmatprep.subr.mxu0 0.0
    %3774 = vmatpush1.msra.mxu0 0.0
    %3775 = vmatprep.subr.mxu0 0.0
    %3776 = vmatpush1.msra.mxu0 0.0
    %3777 = vmatprep.subr.mxu0 0.0
    %3778 = vmatpush1.msra.mxu0 0.0
    %3779 = vmatprep.subr.mxu0 0.0
    %3780 = vmatpush1.msra.mxu0 0.0
    %3781 = vmatprep.subr.mxu0 0.0
    %3782 = vmatpush1.msra.mxu0 0.0
    %3783 = vmatprep.subr.mxu0 0.0
    %3784 = vmatpush1.msra.mxu0 0.0
    %3785 = vmatprep.subr.mxu0 0.0
    %3786 = vmatpush1.msra.mxu0 0.0
    %3787 = vmatprep.subr.mxu0 0.0
    %3788 = vmatpush1.msra.mxu0 0.0
    %3789 = vmatprep.subr.mxu0 0.0
    %3790 = vmatpush1.msra.mxu0 0.0
    %3791 = vmatprep.subr.mxu0 0.0
    %3792 = vmatpush1.msra.mxu0 0.0
    %3793 = vmatprep.subr.mxu0 0.0
    %3794 = vmatpush1.msra.mxu0 0.0
    %3795 = vmatprep.subr.mxu0 0.0
    %3796 = vmatpush1.msra.mxu0 0.0
    %3797 = vmatprep.subr.mxu0 0.0
    %3798 = vmatpush1.msra.mxu0 0.0
    %3799 = vmatprep.subr.mxu0 0.0
    %3800 = vmatpush1.msra.mxu0 0.0
    %3801 = vmatprep.subr.mxu0 0.0
    %3802 = vmatpush1.msra.mxu0 0.0
    %3803 = vmatprep.subr.mxu0 0.0
    %3804 = vmatpush1.msra.mxu0 0.0
    %3805 = vmatprep.subr.mxu0 0.0
    %3806 = vmatpush1.msra.mxu0 0.0
    %3807 = vmatprep.subr.mxu0 0.0
    %3808 = vmatpush1.msra.mxu0 0.0
    %3809 = vmatprep.subr.mxu0 0.0
    %3810 = vmatpush1.msra.mxu0 0.0
    %3811 = vmatprep.subr.mxu0 0.0
    %3812 = vmatpush1.msra.mxu0 0.0
    %3813 = vmatprep.mubr.f32.mxu0 0.0
    %3814 = vmatmul.mubr.f32.gmra.mrb[0].mxu0 %v3747
    %v3815 = vpop.f32.mrb[0].mxu0
    %v3816 = vadd.f32 %v3743, %v3815
    %v3817 = vpop.f32.mrb[0].mxu0
    %3818 = vdwg.mxu0
    %v3819 = vadd.f32 %v3816, %v3285
    %v3820 = vadd.f32 %v3819, %v1010
    %v3821 = vxor.u32 %v3820, 2147483648
    %v3822 = vmul.f32 %v3821, 1.442695
    %v3823 = vpow.pop %v3822
    %v3824 = vadd.f32 %v3823, 1.0
    %v3825 = vrcp.pop %v3824
    %v3826 = vmul.f32 1.0, %v3825
    %v3827 = vtanh.pop %v3820
    %v3828 = vmul.f32 %v3826, %v3135
    %3830 = vrot.lane.b32.xlu0 %v3827, 64
    %v3831 = vpop.permute.xlu0 %3830
    %v3833 = vmul.f32 %v3826, %v3831
    %3835 = vrot.lane.b32.xlu0 %v3833, 32
    %v3836 = vpop.permute.xlu0 %3835
    %v3838 = vadd.f32 %v3828, %v3836
    %v3839 = vtanh.pop %v3838
    %3841 = vrot.lane.b32.xlu0 %v3839, 64
    %v3842 = vpop.permute.xlu0 %3841
    %v3844 = vmul.f32 %v3826, %v3842
    %v3845 = vld [vmem:[#allocation2 + $0x14] sm:$0xf]
    %3847 = vrot.lane.b32.xlu0 %v3844, 32
    %v3848 = vpop.permute.xlu0 %3847
    %v3849 = vsel %vm160, %v3848, 0
    %3851 = vmatprep.subr.mxu0 0.0
    %3852 = vmatpush1.msra.mxu0 %v262
    %3853 = vmatprep.subr.mxu0 0.0
    %3854 = vmatpush1.msra.mxu0 %v263
    %3855 = vmatprep.subr.mxu0 0.0
    %3856 = vmatpush1.msra.mxu0 %v264
    %3857 = vmatprep.subr.mxu0 0.0
    %3858 = vmatpush1.msra.mxu0 %v265
    %3859 = vmatprep.subr.mxu0 0.0
    %3860 = vmatpush1.msra.mxu0 0.0
    %3861 = vmatprep.subr.mxu0 0.0
    %3862 = vmatpush1.msra.mxu0 0.0
    %3863 = vmatprep.subr.mxu0 0.0
    %3864 = vmatpush1.msra.mxu0 0.0
    %3865 = vmatprep.subr.mxu0 0.0
    %3866 = vmatpush1.msra.mxu0 0.0
    %3867 = vmatprep.subr.mxu0 0.0
    %3868 = vmatpush1.msra.mxu0 0.0
    %3869 = vmatprep.subr.mxu0 0.0
    %3870 = vmatpush1.msra.mxu0 0.0
    %3871 = vmatprep.subr.mxu0 0.0
    %3872 = vmatpush1.msra.mxu0 0.0
    %3873 = vmatprep.subr.mxu0 0.0
    %3874 = vmatpush1.msra.mxu0 0.0
    %3875 = vmatprep.subr.mxu0 0.0
    %3876 = vmatpush1.msra.mxu0 0.0
    %3877 = vmatprep.subr.mxu0 0.0
    %3878 = vmatpush1.msra.mxu0 0.0
    %3879 = vmatprep.subr.mxu0 0.0
    %3880 = vmatpush1.msra.mxu0 0.0
    %3881 = vmatprep.subr.mxu0 0.0
    %3882 = vmatpush1.msra.mxu0 0.0
    %3883 = vmatprep.subr.mxu0 0.0
    %3884 = vmatpush1.msra.mxu0 0.0
    %3885 = vmatprep.subr.mxu0 0.0
    %3886 = vmatpush1.msra.mxu0 0.0
    %3887 = vmatprep.subr.mxu0 0.0
    %3888 = vmatpush1.msra.mxu0 0.0
    %3889 = vmatprep.subr.mxu0 0.0
    %3890 = vmatpush1.msra.mxu0 0.0
    %3891 = vmatprep.subr.mxu0 0.0
    %3892 = vmatpush1.msra.mxu0 0.0
    %3893 = vmatprep.subr.mxu0 0.0
    %3894 = vmatpush1.msra.mxu0 0.0
    %3895 = vmatprep.subr.mxu0 0.0
    %3896 = vmatpush1.msra.mxu0 0.0
    %3897 = vmatprep.subr.mxu0 0.0
    %3898 = vmatpush1.msra.mxu0 0.0
    %3899 = vmatprep.subr.mxu0 0.0
    %3900 = vmatpush1.msra.mxu0 0.0
    %3901 = vmatprep.subr.mxu0 0.0
    %3902 = vmatpush1.msra.mxu0 0.0
    %3903 = vmatprep.subr.mxu0 0.0
    %3904 = vmatpush1.msra.mxu0 0.0
    %3905 = vmatprep.subr.mxu0 0.0
    %3906 = vmatpush1.msra.mxu0 0.0
    %3907 = vmatprep.subr.mxu0 0.0
    %3908 = vmatpush1.msra.mxu0 0.0
    %3909 = vmatprep.subr.mxu0 0.0
    %3910 = vmatpush1.msra.mxu0 0.0
    %3911 = vmatprep.subr.mxu0 0.0
    %3912 = vmatpush1.msra.mxu0 0.0
    %3913 = vmatprep.subr.mxu0 0.0
    %3914 = vmatpush1.msra.mxu0 0.0
    %3915 = vmatprep.mubr.f32.mxu0 0.0
    %3916 = vmatmul.mubr.f32.gmra.mrb[0].mxu0 %v3849
    %v3917 = vpop.f32.mrb[0].mxu0
    %v3918 = vadd.f32 0.0, %v3917
    %v3919 = vpop.f32.mrb[0].mxu0
    %3920 = vdwg.mxu0
    %3921 = vmatprep.subr.mxu0 0.0
    %3922 = vmatpush1.msra.mxu0 %v266
    %3923 = vmatprep.subr.mxu0 0.0
    %3924 = vmatpush1.msra.mxu0 %v267
    %3925 = vmatprep.subr.mxu0 0.0
    %3926 = vmatpush1.msra.mxu0 %v268
    %3927 = vmatprep.subr.mxu0 0.0
    %3928 = vmatpush1.msra.mxu0 %v269
    %3929 = vmatprep.subr.mxu0 0.0
    %3930 = vmatpush1.msra.mxu0 0.0
    %3931 = vmatprep.subr.mxu0 0.0
    %3932 = vmatpush1.msra.mxu0 0.0
    %3933 = vmatprep.subr.mxu0 0.0
    %3934 = vmatpush1.msra.mxu0 0.0
    %3935 = vmatprep.subr.mxu0 0.0
    %3936 = vmatpush1.msra.mxu0 0.0
    %3937 = vmatprep.subr.mxu0 0.0
    %3938 = vmatpush1.msra.mxu0 0.0
    %3939 = vmatprep.subr.mxu0 0.0
    %3940 = vmatpush1.msra.mxu0 0.0
    %3941 = vmatprep.subr.mxu0 0.0
    %3942 = vmatpush1.msra.mxu0 0.0
    %3943 = vmatprep.subr.mxu0 0.0
    %3944 = vmatpush1.msra.mxu0 0.0
    %3945 = vmatprep.subr.mxu0 0.0
    %3946 = vmatpush1.msra.mxu0 0.0
    %3947 = vmatprep.subr.mxu0 0.0
    %3948 = vmatpush1.msra.mxu0 0.0
    %3949 = vmatprep.subr.mxu0 0.0
    %3950 = vmatpush1.msra.mxu0 0.0
    %3951 = vmatprep.subr.mxu0 0.0
    %3952 = vmatpush1.msra.mxu0 0.0
    %3953 = vmatprep.subr.mxu0 0.0
    %3954 = vmatpush1.msra.mxu0 0.0
    %3955 = vmatprep.subr.mxu0 0.0
    %3956 = vmatpush1.msra.mxu0 0.0
    %3957 = vmatprep.subr.mxu0 0.0
    %3958 = vmatpush1.msra.mxu0 0.0
    %3959 = vmatprep.subr.mxu0 0.0
    %3960 = vmatpush1.msra.mxu0 0.0
    %3961 = vmatprep.subr.mxu0 0.0
    %3962 = vmatpush1.msra.mxu0 0.0
    %3963 = vmatprep.subr.mxu0 0.0
    %3964 = vmatpush1.msra.mxu0 0.0
    %3965 = vmatprep.subr.mxu0 0.0
    %3966 = vmatpush1.msra.mxu0 0.0
    %3967 = vmatprep.subr.mxu0 0.0
    %3968 = vmatpush1.msra.mxu0 0.0
    %3969 = vmatprep.subr.mxu0 0.0
    %3970 = vmatpush1.msra.mxu0 0.0
    %3971 = vmatprep.subr.mxu0 0.0
    %3972 = vmatpush1.msra.mxu0 0.0
    %3973 = vmatprep.subr.mxu0 0.0
    %3974 = vmatpush1.msra.mxu0 0.0
    %3975 = vmatprep.subr.mxu0 0.0
    %3976 = vmatpush1.msra.mxu0 0.0
    %3977 = vmatprep.subr.mxu0 0.0
    %3978 = vmatpush1.msra.mxu0 0.0
    %3979 = vmatprep.subr.mxu0 0.0
    %3980 = vmatpush1.msra.mxu0 0.0
    %3981 = vmatprep.subr.mxu0 0.0
    %3982 = vmatpush1.msra.mxu0 0.0
    %3983 = vmatprep.subr.mxu0 0.0
    %3984 = vmatpush1.msra.mxu0 0.0
    %3985 = vmatprep.mubr.f32.mxu0 0.0
    %3986 = vmatmul.mubr.f32.gmra.mrb[0].mxu0 %v3849
    %v3987 = vpop.f32.mrb[0].mxu0
    %v3988 = vadd.f32 0.0, %v3987
    %v3989 = vpop.f32.mrb[0].mxu0
    %3990 = vdwg.mxu0
    %v3991 = vadd.f32 %v3845, %v3918
    %v3992 = vmax.f32 %v3991, 0.0
    %v3993 = vadd.f32 %v3918, %v433
    %v3994 = vmax.f32 %v3993, 0.0
    %v3995 = vsel %vm160, %v3992, %v3994
    %v3997 = vsel %vm450, %v3995, 0
    %3999 = vmatprep.subr.mxu0 0.0
    %4000 = vmatpush1.msra.mxu0 %v438
    %4001 = vmatprep.subr.mxu0 0.0
    %4002 = vmatpush1.msra.mxu0 %v439
    %4003 = vmatprep.subr.mxu0 0.0
    %4004 = vmatpush1.msra.mxu0 %v440
    %4005 = vmatprep.subr.mxu0 0.0
    %4006 = vmatpush1.msra.mxu0 %v441
    %4007 = vmatprep.subr.mxu0 0.0
    %4008 = vmatpush1.msra.mxu0 %v442
    %4009 = vmatprep.subr.mxu0 0.0
    %4010 = vmatpush1.msra.mxu0 %v443
    %4011 = vmatprep.subr.mxu0 0.0
    %4012 = vmatpush1.msra.mxu0 %v444
    %4013 = vmatprep.subr.mxu0 0.0
    %4014 = vmatpush1.msra.mxu0 %v445
    %4015 = vmatprep.subr.mxu0 0.0
    %4016 = vmatpush1.msra.mxu0 0.0
    %4017 = vmatprep.subr.mxu0 0.0
    %4018 = vmatpush1.msra.mxu0 0.0
    %4019 = vmatprep.subr.mxu0 0.0
    %4020 = vmatpush1.msra.mxu0 0.0
    %4021 = vmatprep.subr.mxu0 0.0
    %4022 = vmatpush1.msra.mxu0 0.0
    %4023 = vmatprep.subr.mxu0 0.0
    %4024 = vmatpush1.msra.mxu0 0.0
    %4025 = vmatprep.subr.mxu0 0.0
    %4026 = vmatpush1.msra.mxu0 0.0
    %4027 = vmatprep.subr.mxu0 0.0
    %4028 = vmatpush1.msra.mxu0 0.0
    %4029 = vmatprep.subr.mxu0 0.0
    %4030 = vmatpush1.msra.mxu0 0.0
    %4031 = vmatprep.subr.mxu0 0.0
    %4032 = vmatpush1.msra.mxu0 0.0
    %4033 = vmatprep.subr.mxu0 0.0
    %4034 = vmatpush1.msra.mxu0 0.0
    %4035 = vmatprep.subr.mxu0 0.0
    %4036 = vmatpush1.msra.mxu0 0.0
    %4037 = vmatprep.subr.mxu0 0.0
    %4038 = vmatpush1.msra.mxu0 0.0
    %4039 = vmatprep.subr.mxu0 0.0
    %4040 = vmatpush1.msra.mxu0 0.0
    %4041 = vmatprep.subr.mxu0 0.0
    %4042 = vmatpush1.msra.mxu0 0.0
    %4043 = vmatprep.subr.mxu0 0.0
    %4044 = vmatpush1.msra.mxu0 0.0
    %4045 = vmatprep.subr.mxu0 0.0
    %4046 = vmatpush1.msra.mxu0 0.0
    %4047 = vmatprep.subr.mxu0 0.0
    %4048 = vmatpush1.msra.mxu0 0.0
    %4049 = vmatprep.subr.mxu0 0.0
    %4050 = vmatpush1.msra.mxu0 0.0
    %4051 = vmatprep.subr.mxu0 0.0
    %4052 = vmatpush1.msra.mxu0 0.0
    %4053 = vmatprep.subr.mxu0 0.0
    %4054 = vmatpush1.msra.mxu0 0.0
    %4055 = vmatprep.subr.mxu0 0.0
    %4056 = vmatpush1.msra.mxu0 0.0
    %4057 = vmatprep.subr.mxu0 0.0
    %4058 = vmatpush1.msra.mxu0 0.0
    %4059 = vmatprep.subr.mxu0 0.0
    %4060 = vmatpush1.msra.mxu0 0.0
    %4061 = vmatprep.subr.mxu0 0.0
    %4062 = vmatpush1.msra.mxu0 0.0
    %4063 = vmatprep.mubr.f32.mxu0 0.0
    %4064 = vmatmul.mubr.f32.gmra.mrb[0].mxu0 %v3997
    %v4065 = vpop.f32.mrb[0].mxu0
    %v4066 = vadd.f32 %v449, %v4065
    %v4067 = vpop.f32.mrb[0].mxu0
    %4068 = vdwg.mxu0
    %v4069 = vmul.f32 %v4066, 0.5
    %v4070 = vmul.f32 %v4069, 1.442695
    %v4071 = vpow.pop %v4070
    %v4072 = vmin.f32 %v4071, 100.0
    %4073 = vrot.lane.b32.xlu0 %v280, 64
    %v4074 = vpop.permute.xlu0 %4073
    %v4076 = vmul.f32 %v4072, %v4074
    %4078 = vrot.lane.b32.xlu0 %v4076, 112
    %v4079 = vpop.permute.xlu0 %4078
    %v4081 = vadd.f32 %v4066, %v4079
    %v4083 = vsel %vm49, %v4081, 0
    %4085 = vmatprep.subr.mxu0 0.0
    %4086 = vmatpush1.msra.mxu0 %v270
    %4087 = vmatprep.subr.mxu0 0.0
    %4088 = vmatpush1.msra.mxu0 %v271
    %4089 = vmatprep.subr.mxu0 0.0
    %4090 = vmatpush1.msra.mxu0 0.0
    %4091 = vmatprep.subr.mxu0 0.0
    %4092 = vmatpush1.msra.mxu0 0.0
    %4093 = vmatprep.subr.mxu0 0.0
    %4094 = vmatpush1.msra.mxu0 0.0
    %4095 = vmatprep.subr.mxu0 0.0
    %4096 = vmatpush1.msra.mxu0 0.0
    %4097 = vmatprep.subr.mxu0 0.0
    %4098 = vmatpush1.msra.mxu0 0.0
    %4099 = vmatprep.subr.mxu0 0.0
    %4100 = vmatpush1.msra.mxu0 0.0
    %4101 = vmatprep.subr.mxu0 0.0
    %4102 = vmatpush1.msra.mxu0 0.0
    %4103 = vmatprep.subr.mxu0 0.0
    %4104 = vmatpush1.msra.mxu0 0.0
    %4105 = vmatprep.subr.mxu0 0.0
    %4106 = vmatpush1.msra.mxu0 0.0
    %4107 = vmatprep.subr.mxu0 0.0
    %4108 = vmatpush1.msra.mxu0 0.0
    %4109 = vmatprep.subr.mxu0 0.0
    %4110 = vmatpush1.msra.mxu0 0.0
    %4111 = vmatprep.subr.mxu0 0.0
    %4112 = vmatpush1.msra.mxu0 0.0
    %4113 = vmatprep.subr.mxu0 0.0
    %4114 = vmatpush1.msra.mxu0 0.0
    %4115 = vmatprep.subr.mxu0 0.0
    %4116 = vmatpush1.msra.mxu0 0.0
    %4117 = vmatprep.subr.mxu0 0.0
    %4118 = vmatpush1.msra.mxu0 0.0
    %4119 = vmatprep.subr.mxu0 0.0
    %4120 = vmatpush1.msra.mxu0 0.0
    %4121 = vmatprep.subr.mxu0 0.0
    %4122 = vmatpush1.msra.mxu0 0.0
    %4123 = vmatprep.subr.mxu0 0.0
    %4124 = vmatpush1.msra.mxu0 0.0
    %4125 = vmatprep.subr.mxu0 0.0
    %4126 = vmatpush1.msra.mxu0 0.0
    %4127 = vmatprep.subr.mxu0 0.0
    %4128 = vmatpush1.msra.mxu0 0.0
    %4129 = vmatprep.subr.mxu0 0.0
    %4130 = vmatpush1.msra.mxu0 0.0
    %4131 = vmatprep.subr.mxu0 0.0
    %4132 = vmatpush1.msra.mxu0 0.0
    %4133 = vmatprep.subr.mxu0 0.0
    %4134 = vmatpush1.msra.mxu0 0.0
    %4135 = vmatprep.subr.mxu0 0.0
    %4136 = vmatpush1.msra.mxu0 0.0
    %4137 = vmatprep.subr.mxu0 0.0
    %4138 = vmatpush1.msra.mxu0 0.0
    %4139 = vmatprep.subr.mxu0 0.0
    %4140 = vmatpush1.msra.mxu0 0.0
    %4141 = vmatprep.subr.mxu0 0.0
    %4142 = vmatpush1.msra.mxu0 0.0
    %4143 = vmatprep.subr.mxu0 0.0
    %4144 = vmatpush1.msra.mxu0 0.0
    %4145 = vmatprep.subr.mxu0 0.0
    %4146 = vmatpush1.msra.mxu0 0.0
    %4147 = vmatprep.subr.mxu0 0.0
    %4148 = vmatpush1.msra.mxu0 0.0
    %4149 = vmatprep.mubr.f32.mxu0 0.0
    %4150 = vmatmul.mubr.f32.gmra.mrb[0].mxu0 %v4083
    %v4151 = vpop.f32.mrb[0].mxu0
    %v4152 = vadd.f32 %v541, %v4151
    %v4153 = vpop.f32.mrb[0].mxu0
    %4154 = vdwg.mxu0
    %v4155 = vmax.f32 %v4152, 0.0
    %4157 = vrot.lane.b32.xlu0 %v3918, 64
    %v4158 = vpop.permute.xlu0 %4157
    %v4161 = vsel %vm160, %v4155, 0
    %4163 = vmatprep.subr.mxu0 0.0
    %4164 = vmatpush1.msra.mxu0 %v616
    %4165 = vmatprep.subr.mxu0 0.0
    %4166 = vmatpush1.msra.mxu0 %v617
    %4167 = vmatprep.subr.mxu0 0.0
    %4168 = vmatpush1.msra.mxu0 %v618
    %4169 = vmatprep.subr.mxu0 0.0
    %4170 = vmatpush1.msra.mxu0 %v619
    %4171 = vmatprep.subr.mxu0 0.0
    %4172 = vmatpush1.msra.mxu0 0.0
    %4173 = vmatprep.subr.mxu0 0.0
    %4174 = vmatpush1.msra.mxu0 0.0
    %4175 = vmatprep.subr.mxu0 0.0
    %4176 = vmatpush1.msra.mxu0 0.0
    %4177 = vmatprep.subr.mxu0 0.0
    %4178 = vmatpush1.msra.mxu0 0.0
    %4179 = vmatprep.subr.mxu0 0.0
    %4180 = vmatpush1.msra.mxu0 0.0
    %4181 = vmatprep.subr.mxu0 0.0
    %4182 = vmatpush1.msra.mxu0 0.0
    %4183 = vmatprep.subr.mxu0 0.0
    %4184 = vmatpush1.msra.mxu0 0.0
    %4185 = vmatprep.subr.mxu0 0.0
    %4186 = vmatpush1.msra.mxu0 0.0
    %4187 = vmatprep.subr.mxu0 0.0
    %4188 = vmatpush1.msra.mxu0 0.0
    %4189 = vmatprep.subr.mxu0 0.0
    %4190 = vmatpush1.msra.mxu0 0.0
    %4191 = vmatprep.subr.mxu0 0.0
    %4192 = vmatpush1.msra.mxu0 0.0
    %4193 = vmatprep.subr.mxu0 0.0
    %4194 = vmatpush1.msra.mxu0 0.0
    %4195 = vmatprep.subr.mxu0 0.0
    %4196 = vmatpush1.msra.mxu0 0.0
    %4197 = vmatprep.subr.mxu0 0.0
    %4198 = vmatpush1.msra.mxu0 0.0
    %4199 = vmatprep.subr.mxu0 0.0
    %4200 = vmatpush1.msra.mxu0 0.0
    %4201 = vmatprep.subr.mxu0 0.0
    %4202 = vmatpush1.msra.mxu0 0.0
    %4203 = vmatprep.subr.mxu0 0.0
    %4204 = vmatpush1.msra.mxu0 0.0
    %4205 = vmatprep.subr.mxu0 0.0
    %4206 = vmatpush1.msra.mxu0 0.0
    %4207 = vmatprep.subr.mxu0 0.0
    %4208 = vmatpush1.msra.mxu0 0.0
    %4209 = vmatprep.subr.mxu0 0.0
    %4210 = vmatpush1.msra.mxu0 0.0
    %4211 = vmatprep.subr.mxu0 0.0
    %4212 = vmatpush1.msra.mxu0 0.0
    %4213 = vmatprep.subr.mxu0 0.0
    %4214 = vmatpush1.msra.mxu0 0.0
    %4215 = vmatprep.subr.mxu0 0.0
    %4216 = vmatpush1.msra.mxu0 0.0
    %4217 = vmatprep.subr.mxu0 0.0
    %4218 = vmatpush1.msra.mxu0 0.0
    %4219 = vmatprep.subr.mxu0 0.0
    %4220 = vmatpush1.msra.mxu0 0.0
    %4221 = vmatprep.subr.mxu0 0.0
    %4222 = vmatpush1.msra.mxu0 0.0
    %4223 = vmatprep.subr.mxu0 0.0
    %4224 = vmatpush1.msra.mxu0 0.0
    %4225 = vmatprep.subr.mxu0 0.0
    %4226 = vmatpush1.msra.mxu0 0.0
    %4227 = vmatprep.mubr.f32.mxu0 0.0
    %4228 = vmatmul.mubr.f32.gmra.mrb[0].mxu0 %v4161
    %v4229 = vpop.f32.mrb[0].mxu0
    %v4230 = vadd.f32 %v4158, %v4229
    %v4231 = vpop.f32.mrb[0].mxu0
    %4232 = vdwg.mxu0
    %v4233 = vadd.f32 %v4230, %v700
    %v4234 = vmax.f32 %v4233, 0.0
    %v4236 = vsel %vm160, %v4234, 0
    %4238 = vmatprep.subr.mxu0 0.0
    %4239 = vmatpush1.msra.mxu0 %v703
    %4240 = vmatprep.subr.mxu0 0.0
    %4241 = vmatpush1.msra.mxu0 %v704
    %4242 = vmatprep.subr.mxu0 0.0
    %4243 = vmatpush1.msra.mxu0 %v705
    %4244 = vmatprep.subr.mxu0 0.0
    %4245 = vmatpush1.msra.mxu0 %v706
    %4246 = vmatprep.subr.mxu0 0.0
    %4247 = vmatpush1.msra.mxu0 0.0
    %4248 = vmatprep.subr.mxu0 0.0
    %4249 = vmatpush1.msra.mxu0 0.0
    %4250 = vmatprep.subr.mxu0 0.0
    %4251 = vmatpush1.msra.mxu0 0.0
    %4252 = vmatprep.subr.mxu0 0.0
    %4253 = vmatpush1.msra.mxu0 0.0
    %4254 = vmatprep.subr.mxu0 0.0
    %4255 = vmatpush1.msra.mxu0 0.0
    %4256 = vmatprep.subr.mxu0 0.0
    %4257 = vmatpush1.msra.mxu0 0.0
    %4258 = vmatprep.subr.mxu0 0.0
    %4259 = vmatpush1.msra.mxu0 0.0
    %4260 = vmatprep.subr.mxu0 0.0
    %4261 = vmatpush1.msra.mxu0 0.0
    %4262 = vmatprep.subr.mxu0 0.0
    %4263 = vmatpush1.msra.mxu0 0.0
    %4264 = vmatprep.subr.mxu0 0.0
    %4265 = vmatpush1.msra.mxu0 0.0
    %4266 = vmatprep.subr.mxu0 0.0
    %4267 = vmatpush1.msra.mxu0 0.0
    %4268 = vmatprep.subr.mxu0 0.0
    %4269 = vmatpush1.msra.mxu0 0.0
    %4270 = vmatprep.subr.mxu0 0.0
    %4271 = vmatpush1.msra.mxu0 0.0
    %4272 = vmatprep.subr.mxu0 0.0
    %4273 = vmatpush1.msra.mxu0 0.0
    %4274 = vmatprep.subr.mxu0 0.0
    %4275 = vmatpush1.msra.mxu0 0.0
    %4276 = vmatprep.subr.mxu0 0.0
    %4277 = vmatpush1.msra.mxu0 0.0
    %4278 = vmatprep.subr.mxu0 0.0
    %4279 = vmatpush1.msra.mxu0 0.0
    %4280 = vmatprep.subr.mxu0 0.0
    %4281 = vmatpush1.msra.mxu0 0.0
    %4282 = vmatprep.subr.mxu0 0.0
    %4283 = vmatpush1.msra.mxu0 0.0
    %4284 = vmatprep.subr.mxu0 0.0
    %4285 = vmatpush1.msra.mxu0 0.0
    %4286 = vmatprep.subr.mxu0 0.0
    %4287 = vmatpush1.msra.mxu0 0.0
    %4288 = vmatprep.subr.mxu0 0.0
    %4289 = vmatpush1.msra.mxu0 0.0
    %4290 = vmatprep.subr.mxu0 0.0
    %4291 = vmatpush1.msra.mxu0 0.0
    %4292 = vmatprep.subr.mxu0 0.0
    %4293 = vmatpush1.msra.mxu0 0.0
    %4294 = vmatprep.subr.mxu0 0.0
    %4295 = vmatpush1.msra.mxu0 0.0
    %4296 = vmatprep.subr.mxu0 0.0
    %4297 = vmatpush1.msra.mxu0 0.0
    %4298 = vmatprep.subr.mxu0 0.0
    %4299 = vmatpush1.msra.mxu0 0.0
    %4300 = vmatprep.subr.mxu0 0.0
    %4301 = vmatpush1.msra.mxu0 0.0
    %4302 = vmatprep.mubr.f32.mxu0 0.0
    %4303 = vmatmul.mubr.f32.gmra.mrb[0].mxu0 %v4236
    %v4304 = vpop.f32.mrb[0].mxu0
    %v4305 = vadd.f32 %v710, %v4304
    %v4306 = vpop.f32.mrb[0].mxu0
    %4307 = vdwg.mxu0
    %4308 = vmatprep.subr.mxu0 0.0
    %4309 = vmatpush1.msra.mxu0 %v272
    %4310 = vmatprep.subr.mxu0 0.0
    %4311 = vmatpush1.msra.mxu0 %v273
    %4312 = vmatprep.subr.mxu0 0.0
    %4313 = vmatpush1.msra.mxu0 %v274
    %4314 = vmatprep.subr.mxu0 0.0
    %4315 = vmatpush1.msra.mxu0 %v275
    %4316 = vmatprep.subr.mxu0 0.0
    %4317 = vmatpush1.msra.mxu0 0.0
    %4318 = vmatprep.subr.mxu0 0.0
    %4319 = vmatpush1.msra.mxu0 0.0
    %4320 = vmatprep.subr.mxu0 0.0
    %4321 = vmatpush1.msra.mxu0 0.0
    %4322 = vmatprep.subr.mxu0 0.0
    %4323 = vmatpush1.msra.mxu0 0.0
    %4324 = vmatprep.subr.mxu0 0.0
    %4325 = vmatpush1.msra.mxu0 0.0
    %4326 = vmatprep.subr.mxu0 0.0
    %4327 = vmatpush1.msra.mxu0 0.0
    %4328 = vmatprep.subr.mxu0 0.0
    %4329 = vmatpush1.msra.mxu0 0.0
    %4330 = vmatprep.subr.mxu0 0.0
    %4331 = vmatpush1.msra.mxu0 0.0
    %4332 = vmatprep.subr.mxu0 0.0
    %4333 = vmatpush1.msra.mxu0 0.0
    %4334 = vmatprep.subr.mxu0 0.0
    %4335 = vmatpush1.msra.mxu0 0.0
    %4336 = vmatprep.subr.mxu0 0.0
    %4337 = vmatpush1.msra.mxu0 0.0
    %4338 = vmatprep.subr.mxu0 0.0
    %4339 = vmatpush1.msra.mxu0 0.0
    %4340 = vmatprep.subr.mxu0 0.0
    %4341 = vmatpush1.msra.mxu0 0.0
    %4342 = vmatprep.subr.mxu0 0.0
    %4343 = vmatpush1.msra.mxu0 0.0
    %4344 = vmatprep.subr.mxu0 0.0
    %4345 = vmatpush1.msra.mxu0 0.0
    %4346 = vmatprep.subr.mxu0 0.0
    %4347 = vmatpush1.msra.mxu0 0.0
    %4348 = vmatprep.subr.mxu0 0.0
    %4349 = vmatpush1.msra.mxu0 0.0
    %4350 = vmatprep.subr.mxu0 0.0
    %4351 = vmatpush1.msra.mxu0 0.0
    %4352 = vmatprep.subr.mxu0 0.0
    %4353 = vmatpush1.msra.mxu0 0.0
    %4354 = vmatprep.subr.mxu0 0.0
    %4355 = vmatpush1.msra.mxu0 0.0
    %4356 = vmatprep.subr.mxu0 0.0
    %4357 = vmatpush1.msra.mxu0 0.0
    %4358 = vmatprep.subr.mxu0 0.0
    %4359 = vmatpush1.msra.mxu0 0.0
    %4360 = vmatprep.subr.mxu0 0.0
    %4361 = vmatpush1.msra.mxu0 0.0
    %4362 = vmatprep.subr.mxu0 0.0
    %4363 = vmatpush1.msra.mxu0 0.0
    %4364 = vmatprep.subr.mxu0 0.0
    %4365 = vmatpush1.msra.mxu0 0.0
    %4366 = vmatprep.subr.mxu0 0.0
    %4367 = vmatpush1.msra.mxu0 0.0
    %4368 = vmatprep.subr.mxu0 0.0
    %4369 = vmatpush1.msra.mxu0 0.0
    %4370 = vmatprep.subr.mxu0 0.0
    %4371 = vmatpush1.msra.mxu0 0.0
    %4372 = vmatprep.mubr.f32.mxu0 0.0
    %4373 = vmatmul.mubr.f32.gmra.mrb[0].mxu0 %v4236
    %v4374 = vpop.f32.mrb[0].mxu0
    %v4375 = vadd.f32 %v787, %v4374
    %v4376 = vpop.f32.mrb[0].mxu0
    %4377 = vdwg.mxu0
    %v4378 = vmax.f32 %v4375, 0.0
    %4379 = vmatprep.subr.mxu0 0.0
    %4380 = vmatpush1.msra.mxu0 %v859
    %4381 = vmatprep.subr.mxu0 0.0
    %4382 = vmatpush1.msra.mxu0 %v860
    %4383 = vmatprep.subr.mxu0 0.0
    %4384 = vmatpush1.msra.mxu0 %v861
    %4385 = vmatprep.subr.mxu0 0.0
    %4386 = vmatpush1.msra.mxu0 %v862
    %4387 = vmatprep.subr.mxu0 0.0
    %4388 = vmatpush1.msra.mxu0 0.0
    %4389 = vmatprep.subr.mxu0 0.0
    %4390 = vmatpush1.msra.mxu0 0.0
    %4391 = vmatprep.subr.mxu0 0.0
    %4392 = vmatpush1.msra.mxu0 0.0
    %4393 = vmatprep.subr.mxu0 0.0
    %4394 = vmatpush1.msra.mxu0 0.0
    %4395 = vmatprep.subr.mxu0 0.0
    %4396 = vmatpush1.msra.mxu0 0.0
    %4397 = vmatprep.subr.mxu0 0.0
    %4398 = vmatpush1.msra.mxu0 0.0
    %4399 = vmatprep.subr.mxu0 0.0
    %4400 = vmatpush1.msra.mxu0 0.0
    %4401 = vmatprep.subr.mxu0 0.0
    %4402 = vmatpush1.msra.mxu0 0.0
    %4403 = vmatprep.subr.mxu0 0.0
    %4404 = vmatpush1.msra.mxu0 0.0
    %4405 = vmatprep.subr.mxu0 0.0
    %4406 = vmatpush1.msra.mxu0 0.0
    %4407 = vmatprep.subr.mxu0 0.0
    %4408 = vmatpush1.msra.mxu0 0.0
    %4409 = vmatprep.subr.mxu0 0.0
    %4410 = vmatpush1.msra.mxu0 0.0
    %4411 = vmatprep.subr.mxu0 0.0
    %4412 = vmatpush1.msra.mxu0 0.0
    %4413 = vmatprep.subr.mxu0 0.0
    %4414 = vmatpush1.msra.mxu0 0.0
    %4415 = vmatprep.subr.mxu0 0.0
    %4416 = vmatpush1.msra.mxu0 0.0
    %4417 = vmatprep.subr.mxu0 0.0
    %4418 = vmatpush1.msra.mxu0 0.0
    %4419 = vmatprep.subr.mxu0 0.0
    %4420 = vmatpush1.msra.mxu0 0.0
    %4421 = vmatprep.subr.mxu0 0.0
    %4422 = vmatpush1.msra.mxu0 0.0
    %4423 = vmatprep.subr.mxu0 0.0
    %4424 = vmatpush1.msra.mxu0 0.0
    %4425 = vmatprep.subr.mxu0 0.0
    %4426 = vmatpush1.msra.mxu0 0.0
    %4427 = vmatprep.subr.mxu0 0.0
    %4428 = vmatpush1.msra.mxu0 0.0
    %4429 = vmatprep.subr.mxu0 0.0
    %4430 = vmatpush1.msra.mxu0 0.0
    %4431 = vmatprep.subr.mxu0 0.0
    %4432 = vmatpush1.msra.mxu0 0.0
    %4433 = vmatprep.subr.mxu0 0.0
    %4434 = vmatpush1.msra.mxu0 0.0
    %4435 = vmatprep.subr.mxu0 0.0
    %4436 = vmatpush1.msra.mxu0 0.0
    %4437 = vmatprep.subr.mxu0 0.0
    %4438 = vmatpush1.msra.mxu0 0.0
    %4439 = vmatprep.subr.mxu0 0.0
    %4440 = vmatpush1.msra.mxu0 0.0
    %4441 = vmatprep.subr.mxu0 0.0
    %4442 = vmatpush1.msra.mxu0 0.0
    %4443 = vmatprep.mubr.f32.mxu0 0.0
    %4444 = vmatmul.mubr.f32.gmra.mrb[0].mxu0 %v4161
    %v4445 = vpop.f32.mrb[0].mxu0
    %v4446 = vadd.f32 0.0, %v4445
    %v4447 = vpop.f32.mrb[0].mxu0
    %4448 = vdwg.mxu0
    %v4450 = vsel %vm160, %v4378, 0
    %4452 = vmatprep.subr.mxu0 0.0
    %4453 = vmatpush1.msra.mxu0 %v276
    %4454 = vmatprep.subr.mxu0 0.0
    %4455 = vmatpush1.msra.mxu0 %v277
    %4456 = vmatprep.subr.mxu0 0.0
    %4457 = vmatpush1.msra.mxu0 %v278
    %4458 = vmatprep.subr.mxu0 0.0
    %4459 = vmatpush1.msra.mxu0 %v279
    %4460 = vmatprep.subr.mxu0 0.0
    %4461 = vmatpush1.msra.mxu0 0.0
    %4462 = vmatprep.subr.mxu0 0.0
    %4463 = vmatpush1.msra.mxu0 0.0
    %4464 = vmatprep.subr.mxu0 0.0
    %4465 = vmatpush1.msra.mxu0 0.0
    %4466 = vmatprep.subr.mxu0 0.0
    %4467 = vmatpush1.msra.mxu0 0.0
    %4468 = vmatprep.subr.mxu0 0.0
    %4469 = vmatpush1.msra.mxu0 0.0
    %4470 = vmatprep.subr.mxu0 0.0
    %4471 = vmatpush1.msra.mxu0 0.0
    %4472 = vmatprep.subr.mxu0 0.0
    %4473 = vmatpush1.msra.mxu0 0.0
    %4474 = vmatprep.subr.mxu0 0.0
    %4475 = vmatpush1.msra.mxu0 0.0
    %4476 = vmatprep.subr.mxu0 0.0
    %4477 = vmatpush1.msra.mxu0 0.0
    %4478 = vmatprep.subr.mxu0 0.0
    %4479 = vmatpush1.msra.mxu0 0.0
    %4480 = vmatprep.subr.mxu0 0.0
    %4481 = vmatpush1.msra.mxu0 0.0
    %4482 = vmatprep.subr.mxu0 0.0
    %4483 = vmatpush1.msra.mxu0 0.0
    %4484 = vmatprep.subr.mxu0 0.0
    %4485 = vmatpush1.msra.mxu0 0.0
    %4486 = vmatprep.subr.mxu0 0.0
    %4487 = vmatpush1.msra.mxu0 0.0
    %4488 = vmatprep.subr.mxu0 0.0
    %4489 = vmatpush1.msra.mxu0 0.0
    %4490 = vmatprep.subr.mxu0 0.0
    %4491 = vmatpush1.msra.mxu0 0.0
    %4492 = vmatprep.subr.mxu0 0.0
    %4493 = vmatpush1.msra.mxu0 0.0
    %4494 = vmatprep.subr.mxu0 0.0
    %4495 = vmatpush1.msra.mxu0 0.0
    %4496 = vmatprep.subr.mxu0 0.0
    %4497 = vmatpush1.msra.mxu0 0.0
    %4498 = vmatprep.subr.mxu0 0.0
    %4499 = vmatpush1.msra.mxu0 0.0
    %4500 = vmatprep.subr.mxu0 0.0
    %4501 = vmatpush1.msra.mxu0 0.0
    %4502 = vmatprep.subr.mxu0 0.0
    %4503 = vmatpush1.msra.mxu0 0.0
    %4504 = vmatprep.subr.mxu0 0.0
    %4505 = vmatpush1.msra.mxu0 0.0
    %4506 = vmatprep.subr.mxu0 0.0
    %4507 = vmatpush1.msra.mxu0 0.0
    %4508 = vmatprep.subr.mxu0 0.0
    %4509 = vmatpush1.msra.mxu0 0.0
    %4510 = vmatprep.subr.mxu0 0.0
    %4511 = vmatpush1.msra.mxu0 0.0
    %4512 = vmatprep.subr.mxu0 0.0
    %4513 = vmatpush1.msra.mxu0 0.0
    %4514 = vmatprep.subr.mxu0 0.0
    %4515 = vmatpush1.msra.mxu0 0.0
    %4516 = vmatprep.mubr.f32.mxu0 0.0
    %4517 = vmatmul.mubr.f32.gmra.mrb[0].mxu0 %v4450
    %v4518 = vpop.f32.mrb[0].mxu0
    %v4519 = vadd.f32 %v4446, %v4518
    %v4520 = vpop.f32.mrb[0].mxu0
    %4521 = vdwg.mxu0
    %v4522 = vadd.f32 %v4519, %v3988
    %v4523 = vadd.f32 %v4522, %v1010
    %v4524 = vxor.u32 %v4523, 2147483648
    %v4525 = vmul.f32 %v4524, 1.442695
    %v4526 = vpow.pop %v4525
    %v4527 = vadd.f32 %v4526, 1.0
    %v4528 = vrcp.pop %v4527
    %v4529 = vmul.f32 1.0, %v4528
    %v4530 = vtanh.pop %v4523
    %v4531 = vmul.f32 %v4529, %v3838
    %4533 = vrot.lane.b32.xlu0 %v4530, 64
    %v4534 = vpop.permute.xlu0 %4533
    %v4536 = vmul.f32 %v4529, %v4534
    %4538 = vrot.lane.b32.xlu0 %v4536, 32
    %v4539 = vpop.permute.xlu0 %4538
    %v4541 = vadd.f32 %v4531, %v4539
    %v4542 = vtanh.pop %v4541
    %4544 = vrot.lane.b32.xlu0 %v4542, 64
    %v4545 = vpop.permute.xlu0 %4544
    %v4547 = vmul.f32 %v4529, %v4545
    %v4548 = vld [vmem:[#allocation2 + $0x18] sm:$0xf]
    %4550 = vrot.lane.b32.xlu0 %v4547, 32
    %v4551 = vpop.permute.xlu0 %4550
    %v4552 = vsel %vm160, %v4551, 0
    %4554 = vmatprep.subr.mxu0 0.0
    %4555 = vmatpush1.msra.mxu0 %v262
    %4556 = vmatprep.subr.mxu0 0.0
    %4557 = vmatpush1.msra.mxu0 %v263
    %4558 = vmatprep.subr.mxu0 0.0
    %4559 = vmatpush1.msra.mxu0 %v264
    %4560 = vmatprep.subr.mxu0 0.0
    %4561 = vmatpush1.msra.mxu0 %v265
    %4562 = vmatprep.subr.mxu0 0.0
    %4563 = vmatpush1.msra.mxu0 0.0
    %4564 = vmatprep.subr.mxu0 0.0
    %4565 = vmatpush1.msra.mxu0 0.0
    %4566 = vmatprep.subr.mxu0 0.0
    %4567 = vmatpush1.msra.mxu0 0.0
    %4568 = vmatprep.subr.mxu0 0.0
    %4569 = vmatpush1.msra.mxu0 0.0
    %4570 = vmatprep.subr.mxu0 0.0
    %4571 = vmatpush1.msra.mxu0 0.0
    %4572 = vmatprep.subr.mxu0 0.0
    %4573 = vmatpush1.msra.mxu0 0.0
    %4574 = vmatprep.subr.mxu0 0.0
    %4575 = vmatpush1.msra.mxu0 0.0
    %4576 = vmatprep.subr.mxu0 0.0
    %4577 = vmatpush1.msra.mxu0 0.0
    %4578 = vmatprep.subr.mxu0 0.0
    %4579 = vmatpush1.msra.mxu0 0.0
    %4580 = vmatprep.subr.mxu0 0.0
    %4581 = vmatpush1.msra.mxu0 0.0
    %4582 = vmatprep.subr.mxu0 0.0
    %4583 = vmatpush1.msra.mxu0 0.0
    %4584 = vmatprep.subr.mxu0 0.0
    %4585 = vmatpush1.msra.mxu0 0.0
    %4586 = vmatprep.subr.mxu0 0.0
    %4587 = vmatpush1.msra.mxu0 0.0
    %4588 = vmatprep.subr.mxu0 0.0
    %4589 = vmatpush1.msra.mxu0 0.0
    %4590 = vmatprep.subr.mxu0 0.0
    %4591 = vmatpush1.msra.mxu0 0.0
    %4592 = vmatprep.subr.mxu0 0.0
    %4593 = vmatpush1.msra.mxu0 0.0
    %4594 = vmatprep.subr.mxu0 0.0
    %4595 = vmatpush1.msra.mxu0 0.0
    %4596 = vmatprep.subr.mxu0 0.0
    %4597 = vmatpush1.msra.mxu0 0.0
    %4598 = vmatprep.subr.mxu0 0.0
    %4599 = vmatpush1.msra.mxu0 0.0
    %4600 = vmatprep.subr.mxu0 0.0
    %4601 = vmatpush1.msra.mxu0 0.0
    %4602 = vmatprep.subr.mxu0 0.0
    %4603 = vmatpush1.msra.mxu0 0.0
    %4604 = vmatprep.subr.mxu0 0.0
    %4605 = vmatpush1.msra.mxu0 0.0
    %4606 = vmatprep.subr.mxu0 0.0
    %4607 = vmatpush1.msra.mxu0 0.0
    %4608 = vmatprep.subr.mxu0 0.0
    %4609 = vmatpush1.msra.mxu0 0.0
    %4610 = vmatprep.subr.mxu0 0.0
    %4611 = vmatpush1.msra.mxu0 0.0
    %4612 = vmatprep.subr.mxu0 0.0
    %4613 = vmatpush1.msra.mxu0 0.0
    %4614 = vmatprep.subr.mxu0 0.0
    %4615 = vmatpush1.msra.mxu0 0.0
    %4616 = vmatprep.subr.mxu0 0.0
    %4617 = vmatpush1.msra.mxu0 0.0
    %4618 = vmatprep.mubr.f32.mxu0 0.0
    %4619 = vmatmul.mubr.f32.gmra.mrb[0].mxu0 %v4552
    %v4620 = vpop.f32.mrb[0].mxu0
    %v4621 = vadd.f32 0.0, %v4620
    %v4622 = vpop.f32.mrb[0].mxu0
    %4623 = vdwg.mxu0
    %4624 = vmatprep.subr.mxu0 0.0
    %4625 = vmatpush1.msra.mxu0 %v266
    %4626 = vmatprep.subr.mxu0 0.0
    %4627 = vmatpush1.msra.mxu0 %v267
    %4628 = vmatprep.subr.mxu0 0.0
    %4629 = vmatpush1.msra.mxu0 %v268
    %4630 = vmatprep.subr.mxu0 0.0
    %4631 = vmatpush1.msra.mxu0 %v269
    %4632 = vmatprep.subr.mxu0 0.0
    %4633 = vmatpush1.msra.mxu0 0.0
    %4634 = vmatprep.subr.mxu0 0.0
    %4635 = vmatpush1.msra.mxu0 0.0
    %4636 = vmatprep.subr.mxu0 0.0
    %4637 = vmatpush1.msra.mxu0 0.0
    %4638 = vmatprep.subr.mxu0 0.0
    %4639 = vmatpush1.msra.mxu0 0.0
    %4640 = vmatprep.subr.mxu0 0.0
    %4641 = vmatpush1.msra.mxu0 0.0
    %4642 = vmatprep.subr.mxu0 0.0
    %4643 = vmatpush1.msra.mxu0 0.0
    %4644 = vmatprep.subr.mxu0 0.0
    %4645 = vmatpush1.msra.mxu0 0.0
    %4646 = vmatprep.subr.mxu0 0.0
    %4647 = vmatpush1.msra.mxu0 0.0
    %4648 = vmatprep.subr.mxu0 0.0
    %4649 = vmatpush1.msra.mxu0 0.0
    %4650 = vmatprep.subr.mxu0 0.0
    %4651 = vmatpush1.msra.mxu0 0.0
    %4652 = vmatprep.subr.mxu0 0.0
    %4653 = vmatpush1.msra.mxu0 0.0
    %4654 = vmatprep.subr.mxu0 0.0
    %4655 = vmatpush1.msra.mxu0 0.0
    %4656 = vmatprep.subr.mxu0 0.0
    %4657 = vmatpush1.msra.mxu0 0.0
    %4658 = vmatprep.subr.mxu0 0.0
    %4659 = vmatpush1.msra.mxu0 0.0
    %4660 = vmatprep.subr.mxu0 0.0
    %4661 = vmatpush1.msra.mxu0 0.0
    %4662 = vmatprep.subr.mxu0 0.0
    %4663 = vmatpush1.msra.mxu0 0.0
    %4664 = vmatprep.subr.mxu0 0.0
    %4665 = vmatpush1.msra.mxu0 0.0
    %4666 = vmatprep.subr.mxu0 0.0
    %4667 = vmatpush1.msra.mxu0 0.0
    %4668 = vmatprep.subr.mxu0 0.0
    %4669 = vmatpush1.msra.mxu0 0.0
    %4670 = vmatprep.subr.mxu0 0.0
    %4671 = vmatpush1.msra.mxu0 0.0
    %4672 = vmatprep.subr.mxu0 0.0
    %4673 = vmatpush1.msra.mxu0 0.0
    %4674 = vmatprep.subr.mxu0 0.0
    %4675 = vmatpush1.msra.mxu0 0.0
    %4676 = vmatprep.subr.mxu0 0.0
    %4677 = vmatpush1.msra.mxu0 0.0
    %4678 = vmatprep.subr.mxu0 0.0
    %4679 = vmatpush1.msra.mxu0 0.0
    %4680 = vmatprep.subr.mxu0 0.0
    %4681 = vmatpush1.msra.mxu0 0.0
    %4682 = vmatprep.subr.mxu0 0.0
    %4683 = vmatpush1.msra.mxu0 0.0
    %4684 = vmatprep.subr.mxu0 0.0
    %4685 = vmatpush1.msra.mxu0 0.0
    %4686 = vmatprep.subr.mxu0 0.0
    %4687 = vmatpush1.msra.mxu0 0.0
    %4688 = vmatprep.mubr.f32.mxu0 0.0
    %4689 = vmatmul.mubr.f32.gmra.mrb[0].mxu0 %v4552
    %v4690 = vpop.f32.mrb[0].mxu0
    %v4691 = vadd.f32 0.0, %v4690
    %v4692 = vpop.f32.mrb[0].mxu0
    %4693 = vdwg.mxu0
    %v4694 = vadd.f32 %v4548, %v4621
    %v4695 = vmax.f32 %v4694, 0.0
    %v4696 = vadd.f32 %v4621, %v433
    %v4697 = vmax.f32 %v4696, 0.0
    %v4698 = vsel %vm160, %v4695, %v4697
    %v4700 = vsel %vm450, %v4698, 0
    %4702 = vmatprep.subr.mxu0 0.0
    %4703 = vmatpush1.msra.mxu0 %v438
    %4704 = vmatprep.subr.mxu0 0.0
    %4705 = vmatpush1.msra.mxu0 %v439
    %4706 = vmatprep.subr.mxu0 0.0
    %4707 = vmatpush1.msra.mxu0 %v440
    %4708 = vmatprep.subr.mxu0 0.0
    %4709 = vmatpush1.msra.mxu0 %v441
    %4710 = vmatprep.subr.mxu0 0.0
    %4711 = vmatpush1.msra.mxu0 %v442
    %4712 = vmatprep.subr.mxu0 0.0
    %4713 = vmatpush1.msra.mxu0 %v443
    %4714 = vmatprep.subr.mxu0 0.0
    %4715 = vmatpush1.msra.mxu0 %v444
    %4716 = vmatprep.subr.mxu0 0.0
    %4717 = vmatpush1.msra.mxu0 %v445
    %4718 = vmatprep.subr.mxu0 0.0
    %4719 = vmatpush1.msra.mxu0 0.0
    %4720 = vmatprep.subr.mxu0 0.0
    %4721 = vmatpush1.msra.mxu0 0.0
    %4722 = vmatprep.subr.mxu0 0.0
    %4723 = vmatpush1.msra.mxu0 0.0
    %4724 = vmatprep.subr.mxu0 0.0
    %4725 = vmatpush1.msra.mxu0 0.0
    %4726 = vmatprep.subr.mxu0 0.0
    %4727 = vmatpush1.msra.mxu0 0.0
    %4728 = vmatprep.subr.mxu0 0.0
    %4729 = vmatpush1.msra.mxu0 0.0
    %4730 = vmatprep.subr.mxu0 0.0
    %4731 = vmatpush1.msra.mxu0 0.0
    %4732 = vmatprep.subr.mxu0 0.0
    %4733 = vmatpush1.msra.mxu0 0.0
    %4734 = vmatprep.subr.mxu0 0.0
    %4735 = vmatpush1.msra.mxu0 0.0
    %4736 = vmatprep.subr.mxu0 0.0
    %4737 = vmatpush1.msra.mxu0 0.0
    %4738 = vmatprep.subr.mxu0 0.0
    %4739 = vmatpush1.msra.mxu0 0.0
    %4740 = vmatprep.subr.mxu0 0.0
    %4741 = vmatpush1.msra.mxu0 0.0
    %4742 = vmatprep.subr.mxu0 0.0
    %4743 = vmatpush1.msra.mxu0 0.0
    %4744 = vmatprep.subr.mxu0 0.0
    %4745 = vmatpush1.msra.mxu0 0.0
    %4746 = vmatprep.subr.mxu0 0.0
    %4747 = vmatpush1.msra.mxu0 0.0
    %4748 = vmatprep.subr.mxu0 0.0
    %4749 = vmatpush1.msra.mxu0 0.0
    %4750 = vmatprep.subr.mxu0 0.0
    %4751 = vmatpush1.msra.mxu0 0.0
    %4752 = vmatprep.subr.mxu0 0.0
    %4753 = vmatpush1.msra.mxu0 0.0
    %4754 = vmatprep.subr.mxu0 0.0
    %4755 = vmatpush1.msra.mxu0 0.0
    %4756 = vmatprep.subr.mxu0 0.0
    %4757 = vmatpush1.msra.mxu0 0.0
    %4758 = vmatprep.subr.mxu0 0.0
    %4759 = vmatpush1.msra.mxu0 0.0
    %4760 = vmatprep.subr.mxu0 0.0
    %4761 = vmatpush1.msra.mxu0 0.0
    %4762 = vmatprep.subr.mxu0 0.0
    %4763 = vmatpush1.msra.mxu0 0.0
    %4764 = vmatprep.subr.mxu0 0.0
    %4765 = vmatpush1.msra.mxu0 0.0
    %4766 = vmatprep.mubr.f32.mxu0 0.0
    %4767 = vmatmul.mubr.f32.gmra.mrb[0].mxu0 %v4700
    %v4768 = vpop.f32.mrb[0].mxu0
    %v4769 = vadd.f32 %v449, %v4768
    %v4770 = vpop.f32.mrb[0].mxu0
    %4771 = vdwg.mxu0
    %v4772 = vmul.f32 %v4769, 0.5
    %v4773 = vmul.f32 %v4772, 1.442695
    %v4774 = vpow.pop %v4773
    %v4775 = vmin.f32 %v4774, 100.0
    %4776 = vrot.lane.b32.xlu0 %v280, 48
    %v4777 = vpop.permute.xlu0 %4776
    %v4779 = vmul.f32 %v4775, %v4777
    %4781 = vrot.lane.b32.xlu0 %v4779, 112
    %v4782 = vpop.permute.xlu0 %4781
    %v4784 = vadd.f32 %v4769, %v4782
    %v4786 = vsel %vm49, %v4784, 0
    %4788 = vmatprep.subr.mxu0 0.0
    %4789 = vmatpush1.msra.mxu0 %v270
    %4790 = vmatprep.subr.mxu0 0.0
    %4791 = vmatpush1.msra.mxu0 %v271
    %4792 = vmatprep.subr.mxu0 0.0
    %4793 = vmatpush1.msra.mxu0 0.0
    %4794 = vmatprep.subr.mxu0 0.0
    %4795 = vmatpush1.msra.mxu0 0.0
    %4796 = vmatprep.subr.mxu0 0.0
    %4797 = vmatpush1.msra.mxu0 0.0
    %4798 = vmatprep.subr.mxu0 0.0
    %4799 = vmatpush1.msra.mxu0 0.0
    %4800 = vmatprep.subr.mxu0 0.0
    %4801 = vmatpush1.msra.mxu0 0.0
    %4802 = vmatprep.subr.mxu0 0.0
    %4803 = vmatpush1.msra.mxu0 0.0
    %4804 = vmatprep.subr.mxu0 0.0
    %4805 = vmatpush1.msra.mxu0 0.0
    %4806 = vmatprep.subr.mxu0 0.0
    %4807 = vmatpush1.msra.mxu0 0.0
    %4808 = vmatprep.subr.mxu0 0.0
    %4809 = vmatpush1.msra.mxu0 0.0
    %4810 = vmatprep.subr.mxu0 0.0
    %4811 = vmatpush1.msra.mxu0 0.0
    %4812 = vmatprep.subr.mxu0 0.0
    %4813 = vmatpush1.msra.mxu0 0.0
    %4814 = vmatprep.subr.mxu0 0.0
    %4815 = vmatpush1.msra.mxu0 0.0
    %4816 = vmatprep.subr.mxu0 0.0
    %4817 = vmatpush1.msra.mxu0 0.0
    %4818 = vmatprep.subr.mxu0 0.0
    %4819 = vmatpush1.msra.mxu0 0.0
    %4820 = vmatprep.subr.mxu0 0.0
    %4821 = vmatpush1.msra.mxu0 0.0
    %4822 = vmatprep.subr.mxu0 0.0
    %4823 = vmatpush1.msra.mxu0 0.0
    %4824 = vmatprep.subr.mxu0 0.0
    %4825 = vmatpush1.msra.mxu0 0.0
    %4826 = vmatprep.subr.mxu0 0.0
    %4827 = vmatpush1.msra.mxu0 0.0
    %4828 = vmatprep.subr.mxu0 0.0
    %4829 = vmatpush1.msra.mxu0 0.0
    %4830 = vmatprep.subr.mxu0 0.0
    %4831 = vmatpush1.msra.mxu0 0.0
    %4832 = vmatprep.subr.mxu0 0.0
    %4833 = vmatpush1.msra.mxu0 0.0
    %4834 = vmatprep.subr.mxu0 0.0
    %4835 = vmatpush1.msra.mxu0 0.0
    %4836 = vmatprep.subr.mxu0 0.0
    %4837 = vmatpush1.msra.mxu0 0.0
    %4838 = vmatprep.subr.mxu0 0.0
    %4839 = vmatpush1.msra.mxu0 0.0
    %4840 = vmatprep.subr.mxu0 0.0
    %4841 = vmatpush1.msra.mxu0 0.0
    %4842 = vmatprep.subr.mxu0 0.0
    %4843 = vmatpush1.msra.mxu0 0.0
    %4844 = vmatprep.subr.mxu0 0.0
    %4845 = vmatpush1.msra.mxu0 0.0
    %4846 = vmatprep.subr.mxu0 0.0
    %4847 = vmatpush1.msra.mxu0 0.0
    %4848 = vmatprep.subr.mxu0 0.0
    %4849 = vmatpush1.msra.mxu0 0.0
    %4850 = vmatprep.subr.mxu0 0.0
    %4851 = vmatpush1.msra.mxu0 0.0
    %4852 = vmatprep.mubr.f32.mxu0 0.0
    %4853 = vmatmul.mubr.f32.gmra.mrb[0].mxu0 %v4786
    %v4854 = vpop.f32.mrb[0].mxu0
    %v4855 = vadd.f32 %v541, %v4854
    %v4856 = vpop.f32.mrb[0].mxu0
    %4857 = vdwg.mxu0
    %v4858 = vmax.f32 %v4855, 0.0
    %4860 = vrot.lane.b32.xlu0 %v4621, 64
    %v4861 = vpop.permute.xlu0 %4860
    %v4864 = vsel %vm160, %v4858, 0
    %4866 = vmatprep.subr.mxu0 0.0
    %4867 = vmatpush1.msra.mxu0 %v616
    %4868 = vmatprep.subr.mxu0 0.0
    %4869 = vmatpush1.msra.mxu0 %v617
    %4870 = vmatprep.subr.mxu0 0.0
    %4871 = vmatpush1.msra.mxu0 %v618
    %4872 = vmatprep.subr.mxu0 0.0
    %4873 = vmatpush1.msra.mxu0 %v619
    %4874 = vmatprep.subr.mxu0 0.0
    %4875 = vmatpush1.msra.mxu0 0.0
    %4876 = vmatprep.subr.mxu0 0.0
    %4877 = vmatpush1.msra.mxu0 0.0
    %4878 = vmatprep.subr.mxu0 0.0
    %4879 = vmatpush1.msra.mxu0 0.0
    %4880 = vmatprep.subr.mxu0 0.0
    %4881 = vmatpush1.msra.mxu0 0.0
    %4882 = vmatprep.subr.mxu0 0.0
    %4883 = vmatpush1.msra.mxu0 0.0
    %4884 = vmatprep.subr.mxu0 0.0
    %4885 = vmatpush1.msra.mxu0 0.0
    %4886 = vmatprep.subr.mxu0 0.0
    %4887 = vmatpush1.msra.mxu0 0.0
    %4888 = vmatprep.subr.mxu0 0.0
    %4889 = vmatpush1.msra.mxu0 0.0
    %4890 = vmatprep.subr.mxu0 0.0
    %4891 = vmatpush1.msra.mxu0 0.0
    %4892 = vmatprep.subr.mxu0 0.0
    %4893 = vmatpush1.msra.mxu0 0.0
    %4894 = vmatprep.subr.mxu0 0.0
    %4895 = vmatpush1.msra.mxu0 0.0
    %4896 = vmatprep.subr.mxu0 0.0
    %4897 = vmatpush1.msra.mxu0 0.0
    %4898 = vmatprep.subr.mxu0 0.0
    %4899 = vmatpush1.msra.mxu0 0.0
    %4900 = vmatprep.subr.mxu0 0.0
    %4901 = vmatpush1.msra.mxu0 0.0
    %4902 = vmatprep.subr.mxu0 0.0
    %4903 = vmatpush1.msra.mxu0 0.0
    %4904 = vmatprep.subr.mxu0 0.0
    %4905 = vmatpush1.msra.mxu0 0.0
    %4906 = vmatprep.subr.mxu0 0.0
    %4907 = vmatpush1.msra.mxu0 0.0
    %4908 = vmatprep.subr.mxu0 0.0
    %4909 = vmatpush1.msra.mxu0 0.0
    %4910 = vmatprep.subr.mxu0 0.0
    %4911 = vmatpush1.msra.mxu0 0.0
    %4912 = vmatprep.subr.mxu0 0.0
    %4913 = vmatpush1.msra.mxu0 0.0
    %4914 = vmatprep.subr.mxu0 0.0
    %4915 = vmatpush1.msra.mxu0 0.0
    %4916 = vmatprep.subr.mxu0 0.0
    %4917 = vmatpush1.msra.mxu0 0.0
    %4918 = vmatprep.subr.mxu0 0.0
    %4919 = vmatpush1.msra.mxu0 0.0
    %4920 = vmatprep.subr.mxu0 0.0
    %4921 = vmatpush1.msra.mxu0 0.0
    %4922 = vmatprep.subr.mxu0 0.0
    %4923 = vmatpush1.msra.mxu0 0.0
    %4924 = vmatprep.subr.mxu0 0.0
    %4925 = vmatpush1.msra.mxu0 0.0
    %4926 = vmatprep.subr.mxu0 0.0
    %4927 = vmatpush1.msra.mxu0 0.0
    %4928 = vmatprep.subr.mxu0 0.0
    %4929 = vmatpush1.msra.mxu0 0.0
    %4930 = vmatprep.mubr.f32.mxu0 0.0
    %4931 = vmatmul.mubr.f32.gmra.mrb[0].mxu0 %v4864
    %v4932 = vpop.f32.mrb[0].mxu0
    %v4933 = vadd.f32 %v4861, %v4932
    %v4934 = vpop.f32.mrb[0].mxu0
    %4935 = vdwg.mxu0
    %v4936 = vadd.f32 %v4933, %v700
    %v4937 = vmax.f32 %v4936, 0.0
    %v4939 = vsel %vm160, %v4937, 0
    %4941 = vmatprep.subr.mxu0 0.0
    %4942 = vmatpush1.msra.mxu0 %v703
    %4943 = vmatprep.subr.mxu0 0.0
    %4944 = vmatpush1.msra.mxu0 %v704
    %4945 = vmatprep.subr.mxu0 0.0
    %4946 = vmatpush1.msra.mxu0 %v705
    %4947 = vmatprep.subr.mxu0 0.0
    %4948 = vmatpush1.msra.mxu0 %v706
    %4949 = vmatprep.subr.mxu0 0.0
    %4950 = vmatpush1.msra.mxu0 0.0
    %4951 = vmatprep.subr.mxu0 0.0
    %4952 = vmatpush1.msra.mxu0 0.0
    %4953 = vmatprep.subr.mxu0 0.0
    %4954 = vmatpush1.msra.mxu0 0.0
    %4955 = vmatprep.subr.mxu0 0.0
    %4956 = vmatpush1.msra.mxu0 0.0
    %4957 = vmatprep.subr.mxu0 0.0
    %4958 = vmatpush1.msra.mxu0 0.0
    %4959 = vmatprep.subr.mxu0 0.0
    %4960 = vmatpush1.msra.mxu0 0.0
    %4961 = vmatprep.subr.mxu0 0.0
    %4962 = vmatpush1.msra.mxu0 0.0
    %4963 = vmatprep.subr.mxu0 0.0
    %4964 = vmatpush1.msra.mxu0 0.0
    %4965 = vmatprep.subr.mxu0 0.0
    %4966 = vmatpush1.msra.mxu0 0.0
    %4967 = vmatprep.subr.mxu0 0.0
    %4968 = vmatpush1.msra.mxu0 0.0
    %4969 = vmatprep.subr.mxu0 0.0
    %4970 = vmatpush1.msra.mxu0 0.0
    %4971 = vmatprep.subr.mxu0 0.0
    %4972 = vmatpush1.msra.mxu0 0.0
    %4973 = vmatprep.subr.mxu0 0.0
    %4974 = vmatpush1.msra.mxu0 0.0
    %4975 = vmatprep.subr.mxu0 0.0
    %4976 = vmatpush1.msra.mxu0 0.0
    %4977 = vmatprep.subr.mxu0 0.0
    %4978 = vmatpush1.msra.mxu0 0.0
    %4979 = vmatprep.subr.mxu0 0.0
    %4980 = vmatpush1.msra.mxu0 0.0
    %4981 = vmatprep.subr.mxu0 0.0
    %4982 = vmatpush1.msra.mxu0 0.0
    %4983 = vmatprep.subr.mxu0 0.0
    %4984 = vmatpush1.msra.mxu0 0.0
    %4985 = vmatprep.subr.mxu0 0.0
    %4986 = vmatpush1.msra.mxu0 0.0
    %4987 = vmatprep.subr.mxu0 0.0
    %4988 = vmatpush1.msra.mxu0 0.0
    %4989 = vmatprep.subr.mxu0 0.0
    %4990 = vmatpush1.msra.mxu0 0.0
    %4991 = vmatprep.subr.mxu0 0.0
    %4992 = vmatpush1.msra.mxu0 0.0
    %4993 = vmatprep.subr.mxu0 0.0
    %4994 = vmatpush1.msra.mxu0 0.0
    %4995 = vmatprep.subr.mxu0 0.0
    %4996 = vmatpush1.msra.mxu0 0.0
    %4997 = vmatprep.subr.mxu0 0.0
    %4998 = vmatpush1.msra.mxu0 0.0
    %4999 = vmatprep.subr.mxu0 0.0
    %5000 = vmatpush1.msra.mxu0 0.0
    %5001 = vmatprep.subr.mxu0 0.0
    %5002 = vmatpush1.msra.mxu0 0.0
    %5003 = vmatprep.subr.mxu0 0.0
    %5004 = vmatpush1.msra.mxu0 0.0
    %5005 = vmatprep.mubr.f32.mxu0 0.0
    %5006 = vmatmul.mubr.f32.gmra.mrb[0].mxu0 %v4939
    %v5007 = vpop.f32.mrb[0].mxu0
    %v5008 = vadd.f32 %v710, %v5007
    %v5009 = vpop.f32.mrb[0].mxu0
    %5010 = vdwg.mxu0
    %5011 = vmatprep.subr.mxu0 0.0
    %5012 = vmatpush1.msra.mxu0 %v272
    %5013 = vmatprep.subr.mxu0 0.0
    %5014 = vmatpush1.msra.mxu0 %v273
    %5015 = vmatprep.subr.mxu0 0.0
    %5016 = vmatpush1.msra.mxu0 %v274
    %5017 = vmatprep.subr.mxu0 0.0
    %5018 = vmatpush1.msra.mxu0 %v275
    %5019 = vmatprep.subr.mxu0 0.0
    %5020 = vmatpush1.msra.mxu0 0.0
    %5021 = vmatprep.subr.mxu0 0.0
    %5022 = vmatpush1.msra.mxu0 0.0
    %5023 = vmatprep.subr.mxu0 0.0
    %5024 = vmatpush1.msra.mxu0 0.0
    %5025 = vmatprep.subr.mxu0 0.0
    %5026 = vmatpush1.msra.mxu0 0.0
    %5027 = vmatprep.subr.mxu0 0.0
    %5028 = vmatpush1.msra.mxu0 0.0
    %5029 = vmatprep.subr.mxu0 0.0
    %5030 = vmatpush1.msra.mxu0 0.0
    %5031 = vmatprep.subr.mxu0 0.0
    %5032 = vmatpush1.msra.mxu0 0.0
    %5033 = vmatprep.subr.mxu0 0.0
    %5034 = vmatpush1.msra.mxu0 0.0
    %5035 = vmatprep.subr.mxu0 0.0
    %5036 = vmatpush1.msra.mxu0 0.0
    %5037 = vmatprep.subr.mxu0 0.0
    %5038 = vmatpush1.msra.mxu0 0.0
    %5039 = vmatprep.subr.mxu0 0.0
    %5040 = vmatpush1.msra.mxu0 0.0
    %5041 = vmatprep.subr.mxu0 0.0
    %5042 = vmatpush1.msra.mxu0 0.0
    %5043 = vmatprep.subr.mxu0 0.0
    %5044 = vmatpush1.msra.mxu0 0.0
    %5045 = vmatprep.subr.mxu0 0.0
    %5046 = vmatpush1.msra.mxu0 0.0
    %5047 = vmatprep.subr.mxu0 0.0
    %5048 = vmatpush1.msra.mxu0 0.0
    %5049 = vmatprep.subr.mxu0 0.0
    %5050 = vmatpush1.msra.mxu0 0.0
    %5051 = vmatprep.subr.mxu0 0.0
    %5052 = vmatpush1.msra.mxu0 0.0
    %5053 = vmatprep.subr.mxu0 0.0
    %5054 = vmatpush1.msra.mxu0 0.0
    %5055 = vmatprep.subr.mxu0 0.0
    %5056 = vmatpush1.msra.mxu0 0.0
    %5057 = vmatprep.subr.mxu0 0.0
    %5058 = vmatpush1.msra.mxu0 0.0
    %5059 = vmatprep.subr.mxu0 0.0
    %5060 = vmatpush1.msra.mxu0 0.0
    %5061 = vmatprep.subr.mxu0 0.0
    %5062 = vmatpush1.msra.mxu0 0.0
    %5063 = vmatprep.subr.mxu0 0.0
    %5064 = vmatpush1.msra.mxu0 0.0
    %5065 = vmatprep.subr.mxu0 0.0
    %5066 = vmatpush1.msra.mxu0 0.0
    %5067 = vmatprep.subr.mxu0 0.0
    %5068 = vmatpush1.msra.mxu0 0.0
    %5069 = vmatprep.subr.mxu0 0.0
    %5070 = vmatpush1.msra.mxu0 0.0
    %5071 = vmatprep.subr.mxu0 0.0
    %5072 = vmatpush1.msra.mxu0 0.0
    %5073 = vmatprep.subr.mxu0 0.0
    %5074 = vmatpush1.msra.mxu0 0.0
    %5075 = vmatprep.mubr.f32.mxu0 0.0
    %5076 = vmatmul.mubr.f32.gmra.mrb[0].mxu0 %v4939
    %v5077 = vpop.f32.mrb[0].mxu0
    %v5078 = vadd.f32 %v787, %v5077
    %v5079 = vpop.f32.mrb[0].mxu0
    %5080 = vdwg.mxu0
    %v5081 = vmax.f32 %v5078, 0.0
    %5082 = vmatprep.subr.mxu0 0.0
    %5083 = vmatpush1.msra.mxu0 %v859
    %5084 = vmatprep.subr.mxu0 0.0
    %5085 = vmatpush1.msra.mxu0 %v860
    %5086 = vmatprep.subr.mxu0 0.0
    %5087 = vmatpush1.msra.mxu0 %v861
    %5088 = vmatprep.subr.mxu0 0.0
    %5089 = vmatpush1.msra.mxu0 %v862
    %5090 = vmatprep.subr.mxu0 0.0
    %5091 = vmatpush1.msra.mxu0 0.0
    %5092 = vmatprep.subr.mxu0 0.0
    %5093 = vmatpush1.msra.mxu0 0.0
    %5094 = vmatprep.subr.mxu0 0.0
    %5095 = vmatpush1.msra.mxu0 0.0
    %5096 = vmatprep.subr.mxu0 0.0
    %5097 = vmatpush1.msra.mxu0 0.0
    %5098 = vmatprep.subr.mxu0 0.0
    %5099 = vmatpush1.msra.mxu0 0.0
    %5100 = vmatprep.subr.mxu0 0.0
    %5101 = vmatpush1.msra.mxu0 0.0
    %5102 = vmatprep.subr.mxu0 0.0
    %5103 = vmatpush1.msra.mxu0 0.0
    %5104 = vmatprep.subr.mxu0 0.0
    %5105 = vmatpush1.msra.mxu0 0.0
    %5106 = vmatprep.subr.mxu0 0.0
    %5107 = vmatpush1.msra.mxu0 0.0
    %5108 = vmatprep.subr.mxu0 0.0
    %5109 = vmatpush1.msra.mxu0 0.0
    %5110 = vmatprep.subr.mxu0 0.0
    %5111 = vmatpush1.msra.mxu0 0.0
    %5112 = vmatprep.subr.mxu0 0.0
    %5113 = vmatpush1.msra.mxu0 0.0
    %5114 = vmatprep.subr.mxu0 0.0
    %5115 = vmatpush1.msra.mxu0 0.0
    %5116 = vmatprep.subr.mxu0 0.0
    %5117 = vmatpush1.msra.mxu0 0.0
    %5118 = vmatprep.subr.mxu0 0.0
    %5119 = vmatpush1.msra.mxu0 0.0
    %5120 = vmatprep.subr.mxu0 0.0
    %5121 = vmatpush1.msra.mxu0 0.0
    %5122 = vmatprep.subr.mxu0 0.0
    %5123 = vmatpush1.msra.mxu0 0.0
    %5124 = vmatprep.subr.mxu0 0.0
    %5125 = vmatpush1.msra.mxu0 0.0
    %5126 = vmatprep.subr.mxu0 0.0
    %5127 = vmatpush1.msra.mxu0 0.0
    %5128 = vmatprep.subr.mxu0 0.0
    %5129 = vmatpush1.msra.mxu0 0.0
    %5130 = vmatprep.subr.mxu0 0.0
    %5131 = vmatpush1.msra.mxu0 0.0
    %5132 = vmatprep.subr.mxu0 0.0
    %5133 = vmatpush1.msra.mxu0 0.0
    %5134 = vmatprep.subr.mxu0 0.0
    %5135 = vmatpush1.msra.mxu0 0.0
    %5136 = vmatprep.subr.mxu0 0.0
    %5137 = vmatpush1.msra.mxu0 0.0
    %5138 = vmatprep.subr.mxu0 0.0
    %5139 = vmatpush1.msra.mxu0 0.0
    %5140 = vmatprep.subr.mxu0 0.0
    %5141 = vmatpush1.msra.mxu0 0.0
    %5142 = vmatprep.subr.mxu0 0.0
    %5143 = vmatpush1.msra.mxu0 0.0
    %5144 = vmatprep.subr.mxu0 0.0
    %5145 = vmatpush1.msra.mxu0 0.0
    %5146 = vmatprep.mubr.f32.mxu0 0.0
    %5147 = vmatmul.mubr.f32.gmra.mrb[0].mxu0 %v4864
    %v5148 = vpop.f32.mrb[0].mxu0
    %v5149 = vadd.f32 0.0, %v5148
    %v5150 = vpop.f32.mrb[0].mxu0
    %5151 = vdwg.mxu0
    %v5153 = vsel %vm160, %v5081, 0
    %5155 = vmatprep.subr.mxu0 0.0
    %5156 = vmatpush1.msra.mxu0 %v276
    %5157 = vmatprep.subr.mxu0 0.0
    %5158 = vmatpush1.msra.mxu0 %v277
    %5159 = vmatprep.subr.mxu0 0.0
    %5160 = vmatpush1.msra.mxu0 %v278
    %5161 = vmatprep.subr.mxu0 0.0
    %5162 = vmatpush1.msra.mxu0 %v279
    %5163 = vmatprep.subr.mxu0 0.0
    %5164 = vmatpush1.msra.mxu0 0.0
    %5165 = vmatprep.subr.mxu0 0.0
    %5166 = vmatpush1.msra.mxu0 0.0
    %5167 = vmatprep.subr.mxu0 0.0
    %5168 = vmatpush1.msra.mxu0 0.0
    %5169 = vmatprep.subr.mxu0 0.0
    %5170 = vmatpush1.msra.mxu0 0.0
    %5171 = vmatprep.subr.mxu0 0.0
    %5172 = vmatpush1.msra.mxu0 0.0
    %5173 = vmatprep.subr.mxu0 0.0
    %5174 = vmatpush1.msra.mxu0 0.0
    %5175 = vmatprep.subr.mxu0 0.0
    %5176 = vmatpush1.msra.mxu0 0.0
    %5177 = vmatprep.subr.mxu0 0.0
    %5178 = vmatpush1.msra.mxu0 0.0
    %5179 = vmatprep.subr.mxu0 0.0
    %5180 = vmatpush1.msra.mxu0 0.0
    %5181 = vmatprep.subr.mxu0 0.0
    %5182 = vmatpush1.msra.mxu0 0.0
    %5183 = vmatprep.subr.mxu0 0.0
    %5184 = vmatpush1.msra.mxu0 0.0
    %5185 = vmatprep.subr.mxu0 0.0
    %5186 = vmatpush1.msra.mxu0 0.0
    %5187 = vmatprep.subr.mxu0 0.0
    %5188 = vmatpush1.msra.mxu0 0.0
    %5189 = vmatprep.subr.mxu0 0.0
    %5190 = vmatpush1.msra.mxu0 0.0
    %5191 = vmatprep.subr.mxu0 0.0
    %5192 = vmatpush1.msra.mxu0 0.0
    %5193 = vmatprep.subr.mxu0 0.0
    %5194 = vmatpush1.msra.mxu0 0.0
    %5195 = vmatprep.subr.mxu0 0.0
    %5196 = vmatpush1.msra.mxu0 0.0
    %5197 = vmatprep.subr.mxu0 0.0
    %5198 = vmatpush1.msra.mxu0 0.0
    %5199 = vmatprep.subr.mxu0 0.0
    %5200 = vmatpush1.msra.mxu0 0.0
    %5201 = vmatprep.subr.mxu0 0.0
    %5202 = vmatpush1.msra.mxu0 0.0
    %5203 = vmatprep.subr.mxu0 0.0
    %5204 = vmatpush1.msra.mxu0 0.0
    %5205 = vmatprep.subr.mxu0 0.0
    %5206 = vmatpush1.msra.mxu0 0.0
    %5207 = vmatprep.subr.mxu0 0.0
    %5208 = vmatpush1.msra.mxu0 0.0
    %5209 = vmatprep.subr.mxu0 0.0
    %5210 = vmatpush1.msra.mxu0 0.0
    %5211 = vmatprep.subr.mxu0 0.0
    %5212 = vmatpush1.msra.mxu0 0.0
    %5213 = vmatprep.subr.mxu0 0.0
    %5214 = vmatpush1.msra.mxu0 0.0
    %5215 = vmatprep.subr.mxu0 0.0
    %5216 = vmatpush1.msra.mxu0 0.0
    %5217 = vmatprep.subr.mxu0 0.0
    %5218 = vmatpush1.msra.mxu0 0.0
    %5219 = vmatprep.mubr.f32.mxu0 0.0
    %5220 = vmatmul.mubr.f32.gmra.mrb[0].mxu0 %v5153
    %v5221 = vpop.f32.mrb[0].mxu0
    %v5222 = vadd.f32 %v5149, %v5221
    %v5223 = vpop.f32.mrb[0].mxu0
    %5224 = vdwg.mxu0
    %v5225 = vadd.f32 %v5222, %v4691
    %v5226 = vadd.f32 %v5225, %v1010
    %v5227 = vxor.u32 %v5226, 2147483648
    %v5228 = vmul.f32 %v5227, 1.442695
    %v5229 = vpow.pop %v5228
    %v5230 = vadd.f32 %v5229, 1.0
    %v5231 = vrcp.pop %v5230
    %v5232 = vmul.f32 1.0, %v5231
    %v5233 = vtanh.pop %v5226
    %v5234 = vmul.f32 %v5232, %v4541
    %5236 = vrot.lane.b32.xlu0 %v5233, 64
    %v5237 = vpop.permute.xlu0 %5236
    %v5239 = vmul.f32 %v5232, %v5237
    %5241 = vrot.lane.b32.xlu0 %v5239, 32
    %v5242 = vpop.permute.xlu0 %5241
    %v5244 = vadd.f32 %v5234, %v5242
    %v5245 = vtanh.pop %v5244
    %5247 = vrot.lane.b32.xlu0 %v5245, 64
    %v5248 = vpop.permute.xlu0 %5247
    %v5250 = vmul.f32 %v5232, %v5248
    %v5251 = vld [vmem:[#allocation2 + $0x1c] sm:$0xf]
    %5253 = vrot.lane.b32.xlu0 %v5250, 32
    %v5254 = vpop.permute.xlu0 %5253
    %v5255 = vsel %vm160, %v5254, 0
    %5257 = vmatprep.subr.mxu0 0.0
    %5258 = vmatpush1.msra.mxu0 %v262
    %5259 = vmatprep.subr.mxu0 0.0
    %5260 = vmatpush1.msra.mxu0 %v263
    %5261 = vmatprep.subr.mxu0 0.0
    %5262 = vmatpush1.msra.mxu0 %v264
    %5263 = vmatprep.subr.mxu0 0.0
    %5264 = vmatpush1.msra.mxu0 %v265
    %5265 = vmatprep.subr.mxu0 0.0
    %5266 = vmatpush1.msra.mxu0 0.0
    %5267 = vmatprep.subr.mxu0 0.0
    %5268 = vmatpush1.msra.mxu0 0.0
    %5269 = vmatprep.subr.mxu0 0.0
    %5270 = vmatpush1.msra.mxu0 0.0
    %5271 = vmatprep.subr.mxu0 0.0
    %5272 = vmatpush1.msra.mxu0 0.0
    %5273 = vmatprep.subr.mxu0 0.0
    %5274 = vmatpush1.msra.mxu0 0.0
    %5275 = vmatprep.subr.mxu0 0.0
    %5276 = vmatpush1.msra.mxu0 0.0
    %5277 = vmatprep.subr.mxu0 0.0
    %5278 = vmatpush1.msra.mxu0 0.0
    %5279 = vmatprep.subr.mxu0 0.0
    %5280 = vmatpush1.msra.mxu0 0.0
    %5281 = vmatprep.subr.mxu0 0.0
    %5282 = vmatpush1.msra.mxu0 0.0
    %5283 = vmatprep.subr.mxu0 0.0
    %5284 = vmatpush1.msra.mxu0 0.0
    %5285 = vmatprep.subr.mxu0 0.0
    %5286 = vmatpush1.msra.mxu0 0.0
    %5287 = vmatprep.subr.mxu0 0.0
    %5288 = vmatpush1.msra.mxu0 0.0
    %5289 = vmatprep.subr.mxu0 0.0
    %5290 = vmatpush1.msra.mxu0 0.0
    %5291 = vmatprep.subr.mxu0 0.0
    %5292 = vmatpush1.msra.mxu0 0.0
    %5293 = vmatprep.subr.mxu0 0.0
    %5294 = vmatpush1.msra.mxu0 0.0
    %5295 = vmatprep.subr.mxu0 0.0
    %5296 = vmatpush1.msra.mxu0 0.0
    %5297 = vmatprep.subr.mxu0 0.0
    %5298 = vmatpush1.msra.mxu0 0.0
    %5299 = vmatprep.subr.mxu0 0.0
    %5300 = vmatpush1.msra.mxu0 0.0
    %5301 = vmatprep.subr.mxu0 0.0
    %5302 = vmatpush1.msra.mxu0 0.0
    %5303 = vmatprep.subr.mxu0 0.0
    %5304 = vmatpush1.msra.mxu0 0.0
    %5305 = vmatprep.subr.mxu0 0.0
    %5306 = vmatpush1.msra.mxu0 0.0
    %5307 = vmatprep.subr.mxu0 0.0
    %5308 = vmatpush1.msra.mxu0 0.0
    %5309 = vmatprep.subr.mxu0 0.0
    %5310 = vmatpush1.msra.mxu0 0.0
    %5311 = vmatprep.subr.mxu0 0.0
    %5312 = vmatpush1.msra.mxu0 0.0
    %5313 = vmatprep.subr.mxu0 0.0
    %5314 = vmatpush1.msra.mxu0 0.0
    %5315 = vmatprep.subr.mxu0 0.0
    %5316 = vmatpush1.msra.mxu0 0.0
    %5317 = vmatprep.subr.mxu0 0.0
    %5318 = vmatpush1.msra.mxu0 0.0
    %5319 = vmatprep.subr.mxu0 0.0
    %5320 = vmatpush1.msra.mxu0 0.0
    %5321 = vmatprep.mubr.f32.mxu0 0.0
    %5322 = vmatmul.mubr.f32.gmra.mrb[0].mxu0 %v5255
    %v5323 = vpop.f32.mrb[0].mxu0
    %v5324 = vadd.f32 0.0, %v5323
    %v5325 = vpop.f32.mrb[0].mxu0
    %5326 = vdwg.mxu0
    %v5327 = vadd.f32 %v5251, %v5324
    %v5328 = vmax.f32 %v5327, 0.0
    %v5329 = vadd.f32 %v5324, %v433
    %v5330 = vmax.f32 %v5329, 0.0
    %v5331 = vsel %vm160, %v5328, %v5330
    %v5333 = vsel %vm450, %v5331, 0
    %5335 = vmatprep.subr.mxu0 0.0
    %5336 = vmatpush1.msra.mxu0 %v438
    %5337 = vmatprep.subr.mxu0 0.0
    %5338 = vmatpush1.msra.mxu0 %v439
    %5339 = vmatprep.subr.mxu0 0.0
    %5340 = vmatpush1.msra.mxu0 %v440
    %5341 = vmatprep.subr.mxu0 0.0
    %5342 = vmatpush1.msra.mxu0 %v441
    %5343 = vmatprep.subr.mxu0 0.0
    %5344 = vmatpush1.msra.mxu0 %v442
    %5345 = vmatprep.subr.mxu0 0.0
    %5346 = vmatpush1.msra.mxu0 %v443
    %5347 = vmatprep.subr.mxu0 0.0
    %5348 = vmatpush1.msra.mxu0 %v444
    %5349 = vmatprep.subr.mxu0 0.0
    %5350 = vmatpush1.msra.mxu0 %v445
    %5351 = vmatprep.subr.mxu0 0.0
    %5352 = vmatpush1.msra.mxu0 0.0
    %5353 = vmatprep.subr.mxu0 0.0
    %5354 = vmatpush1.msra.mxu0 0.0
    %5355 = vmatprep.subr.mxu0 0.0
    %5356 = vmatpush1.msra.mxu0 0.0
    %5357 = vmatprep.subr.mxu0 0.0
    %5358 = vmatpush1.msra.mxu0 0.0
    %5359 = vmatprep.subr.mxu0 0.0
    %5360 = vmatpush1.msra.mxu0 0.0
    %5361 = vmatprep.subr.mxu0 0.0
    %5362 = vmatpush1.msra.mxu0 0.0
    %5363 = vmatprep.subr.mxu0 0.0
    %5364 = vmatpush1.msra.mxu0 0.0
    %5365 = vmatprep.subr.mxu0 0.0
    %5366 = vmatpush1.msra.mxu0 0.0
    %5367 = vmatprep.subr.mxu0 0.0
    %5368 = vmatpush1.msra.mxu0 0.0
    %5369 = vmatprep.subr.mxu0 0.0
    %5370 = vmatpush1.msra.mxu0 0.0
    %5371 = vmatprep.subr.mxu0 0.0
    %5372 = vmatpush1.msra.mxu0 0.0
    %5373 = vmatprep.subr.mxu0 0.0
    %5374 = vmatpush1.msra.mxu0 0.0
    %5375 = vmatprep.subr.mxu0 0.0
    %5376 = vmatpush1.msra.mxu0 0.0
    %5377 = vmatprep.subr.mxu0 0.0
    %5378 = vmatpush1.msra.mxu0 0.0
    %5379 = vmatprep.subr.mxu0 0.0
    %5380 = vmatpush1.msra.mxu0 0.0
    %5381 = vmatprep.subr.mxu0 0.0
    %5382 = vmatpush1.msra.mxu0 0.0
    %5383 = vmatprep.subr.mxu0 0.0
    %5384 = vmatpush1.msra.mxu0 0.0
    %5385 = vmatprep.subr.mxu0 0.0
    %5386 = vmatpush1.msra.mxu0 0.0
    %5387 = vmatprep.subr.mxu0 0.0
    %5388 = vmatpush1.msra.mxu0 0.0
    %5389 = vmatprep.subr.mxu0 0.0
    %5390 = vmatpush1.msra.mxu0 0.0
    %5391 = vmatprep.subr.mxu0 0.0
    %5392 = vmatpush1.msra.mxu0 0.0
    %5393 = vmatprep.subr.mxu0 0.0
    %5394 = vmatpush1.msra.mxu0 0.0
    %5395 = vmatprep.subr.mxu0 0.0
    %5396 = vmatpush1.msra.mxu0 0.0
    %5397 = vmatprep.subr.mxu0 0.0
    %5398 = vmatpush1.msra.mxu0 0.0
    %5399 = vmatprep.mubr.f32.mxu0 0.0
    %5400 = vmatmul.mubr.f32.gmra.mrb[0].mxu0 %v5333
    %v5401 = vpop.f32.mrb[0].mxu0
    %v5402 = vadd.f32 %v449, %v5401
    %v5403 = vpop.f32.mrb[0].mxu0
    %5404 = vdwg.mxu0
    %v5405 = vmul.f32 %v5402, 0.5
    %v5406 = vmul.f32 %v5405, 1.442695
    %v5407 = vpow.pop %v5406
    %v5408 = vmin.f32 %v5407, 100.0
    %5409 = vrot.lane.b32.xlu0 %v280, 32
    %v5410 = vpop.permute.xlu0 %5409
    %v5412 = vmul.f32 %v5408, %v5410
    %5414 = vrot.lane.b32.xlu0 %v5412, 112
    %v5415 = vpop.permute.xlu0 %5414
    %v5417 = vadd.f32 %v5402, %v5415
    %v5419 = vsel %vm49, %v5417, 0
    %5421 = vmatprep.subr.mxu0 0.0
    %5422 = vmatpush1.msra.mxu0 %v270
    %5423 = vmatprep.subr.mxu0 0.0
    %5424 = vmatpush1.msra.mxu0 %v271
    %5425 = vmatprep.subr.mxu0 0.0
    %5426 = vmatpush1.msra.mxu0 0.0
    %5427 = vmatprep.subr.mxu0 0.0
    %5428 = vmatpush1.msra.mxu0 0.0
    %5429 = vmatprep.subr.mxu0 0.0
    %5430 = vmatpush1.msra.mxu0 0.0
    %5431 = vmatprep.subr.mxu0 0.0
    %5432 = vmatpush1.msra.mxu0 0.0
    %5433 = vmatprep.subr.mxu0 0.0
    %5434 = vmatpush1.msra.mxu0 0.0
    %5435 = vmatprep.subr.mxu0 0.0
    %5436 = vmatpush1.msra.mxu0 0.0
    %5437 = vmatprep.subr.mxu0 0.0
    %5438 = vmatpush1.msra.mxu0 0.0
    %5439 = vmatprep.subr.mxu0 0.0
    %5440 = vmatpush1.msra.mxu0 0.0
    %5441 = vmatprep.subr.mxu0 0.0
    %5442 = vmatpush1.msra.mxu0 0.0
    %5443 = vmatprep.subr.mxu0 0.0
    %5444 = vmatpush1.msra.mxu0 0.0
    %5445 = vmatprep.subr.mxu0 0.0
    %5446 = vmatpush1.msra.mxu0 0.0
    %5447 = vmatprep.subr.mxu0 0.0
    %5448 = vmatpush1.msra.mxu0 0.0
    %5449 = vmatprep.subr.mxu0 0.0
    %5450 = vmatpush1.msra.mxu0 0.0
    %5451 = vmatprep.subr.mxu0 0.0
    %5452 = vmatpush1.msra.mxu0 0.0
    %5453 = vmatprep.subr.mxu0 0.0
    %5454 = vmatpush1.msra.mxu0 0.0
    %5455 = vmatprep.subr.mxu0 0.0
    %5456 = vmatpush1.msra.mxu0 0.0
    %5457 = vmatprep.subr.mxu0 0.0
    %5458 = vmatpush1.msra.mxu0 0.0
    %5459 = vmatprep.subr.mxu0 0.0
    %5460 = vmatpush1.msra.mxu0 0.0
    %5461 = vmatprep.subr.mxu0 0.0
    %5462 = vmatpush1.msra.mxu0 0.0
    %5463 = vmatprep.subr.mxu0 0.0
    %5464 = vmatpush1.msra.mxu0 0.0
    %5465 = vmatprep.subr.mxu0 0.0
    %5466 = vmatpush1.msra.mxu0 0.0
    %5467 = vmatprep.subr.mxu0 0.0
    %5468 = vmatpush1.msra.mxu0 0.0
    %5469 = vmatprep.subr.mxu0 0.0
    %5470 = vmatpush1.msra.mxu0 0.0
    %5471 = vmatprep.subr.mxu0 0.0
    %5472 = vmatpush1.msra.mxu0 0.0
    %5473 = vmatprep.subr.mxu0 0.0
    %5474 = vmatpush1.msra.mxu0 0.0
    %5475 = vmatprep.subr.mxu0 0.0
    %5476 = vmatpush1.msra.mxu0 0.0
    %5477 = vmatprep.subr.mxu0 0.0
    %5478 = vmatpush1.msra.mxu0 0.0
    %5479 = vmatprep.subr.mxu0 0.0
    %5480 = vmatpush1.msra.mxu0 0.0
    %5481 = vmatprep.subr.mxu0 0.0
    %5482 = vmatpush1.msra.mxu0 0.0
    %5483 = vmatprep.subr.mxu0 0.0
    %5484 = vmatpush1.msra.mxu0 0.0
    %5485 = vmatprep.mubr.f32.mxu0 0.0
    %5486 = vmatmul.mubr.f32.gmra.mrb[0].mxu0 %v5419
    %v5487 = vpop.f32.mrb[0].mxu0
    %v5488 = vadd.f32 %v541, %v5487
    %v5489 = vpop.f32.mrb[0].mxu0
    %5490 = vdwg.mxu0
    %v5491 = vmax.f32 %v5488, 0.0
    %5493 = vrot.lane.b32.xlu0 %v5324, 64
    %v5494 = vpop.permute.xlu0 %5493
    %v5497 = vsel %vm160, %v5491, 0
    %5499 = vmatprep.subr.mxu0 0.0
    %5500 = vmatpush1.msra.mxu0 %v616
    %5501 = vmatprep.subr.mxu0 0.0
    %5502 = vmatpush1.msra.mxu0 %v617
    %5503 = vmatprep.subr.mxu0 0.0
    %5504 = vmatpush1.msra.mxu0 %v618
    %5505 = vmatprep.subr.mxu0 0.0
    %5506 = vmatpush1.msra.mxu0 %v619
    %5507 = vmatprep.subr.mxu0 0.0
    %5508 = vmatpush1.msra.mxu0 0.0
    %5509 = vmatprep.subr.mxu0 0.0
    %5510 = vmatpush1.msra.mxu0 0.0
    %5511 = vmatprep.subr.mxu0 0.0
    %5512 = vmatpush1.msra.mxu0 0.0
    %5513 = vmatprep.subr.mxu0 0.0
    %5514 = vmatpush1.msra.mxu0 0.0
    %5515 = vmatprep.subr.mxu0 0.0
    %5516 = vmatpush1.msra.mxu0 0.0
    %5517 = vmatprep.subr.mxu0 0.0
    %5518 = vmatpush1.msra.mxu0 0.0
    %5519 = vmatprep.subr.mxu0 0.0
    %5520 = vmatpush1.msra.mxu0 0.0
    %5521 = vmatprep.subr.mxu0 0.0
    %5522 = vmatpush1.msra.mxu0 0.0
    %5523 = vmatprep.subr.mxu0 0.0
    %5524 = vmatpush1.msra.mxu0 0.0
    %5525 = vmatprep.subr.mxu0 0.0
    %5526 = vmatpush1.msra.mxu0 0.0
    %5527 = vmatprep.subr.mxu0 0.0
    %5528 = vmatpush1.msra.mxu0 0.0
    %5529 = vmatprep.subr.mxu0 0.0
    %5530 = vmatpush1.msra.mxu0 0.0
    %5531 = vmatprep.subr.mxu0 0.0
    %5532 = vmatpush1.msra.mxu0 0.0
    %5533 = vmatprep.subr.mxu0 0.0
    %5534 = vmatpush1.msra.mxu0 0.0
    %5535 = vmatprep.subr.mxu0 0.0
    %5536 = vmatpush1.msra.mxu0 0.0
    %5537 = vmatprep.subr.mxu0 0.0
    %5538 = vmatpush1.msra.mxu0 0.0
    %5539 = vmatprep.subr.mxu0 0.0
    %5540 = vmatpush1.msra.mxu0 0.0
    %5541 = vmatprep.subr.mxu0 0.0
    %5542 = vmatpush1.msra.mxu0 0.0
    %5543 = vmatprep.subr.mxu0 0.0
    %5544 = vmatpush1.msra.mxu0 0.0
    %5545 = vmatprep.subr.mxu0 0.0
    %5546 = vmatpush1.msra.mxu0 0.0
    %5547 = vmatprep.subr.mxu0 0.0
    %5548 = vmatpush1.msra.mxu0 0.0
    %5549 = vmatprep.subr.mxu0 0.0
    %5550 = vmatpush1.msra.mxu0 0.0
    %5551 = vmatprep.subr.mxu0 0.0
    %5552 = vmatpush1.msra.mxu0 0.0
    %5553 = vmatprep.subr.mxu0 0.0
    %5554 = vmatpush1.msra.mxu0 0.0
    %5555 = vmatprep.subr.mxu0 0.0
    %5556 = vmatpush1.msra.mxu0 0.0
    %5557 = vmatprep.subr.mxu0 0.0
    %5558 = vmatpush1.msra.mxu0 0.0
    %5559 = vmatprep.subr.mxu0 0.0
    %5560 = vmatpush1.msra.mxu0 0.0
    %5561 = vmatprep.subr.mxu0 0.0
    %5562 = vmatpush1.msra.mxu0 0.0
    %5563 = vmatprep.mubr.f32.mxu0 0.0
    %5564 = vmatmul.mubr.f32.gmra.mrb[0].mxu0 %v5497
    %v5565 = vpop.f32.mrb[0].mxu0
    %v5566 = vadd.f32 %v5494, %v5565
    %v5567 = vpop.f32.mrb[0].mxu0
    %5568 = vdwg.mxu0
    %v5569 = vadd.f32 %v5566, %v700
    %v5570 = vmax.f32 %v5569, 0.0
    %v5572 = vsel %vm160, %v5570, 0
    %5574 = vmatprep.subr.mxu0 0.0
    %5575 = vmatpush1.msra.mxu0 %v703
    %5576 = vmatprep.subr.mxu0 0.0
    %5577 = vmatpush1.msra.mxu0 %v704
    %5578 = vmatprep.subr.mxu0 0.0
    %5579 = vmatpush1.msra.mxu0 %v705
    %5580 = vmatprep.subr.mxu0 0.0
    %5581 = vmatpush1.msra.mxu0 %v706
    %5582 = vmatprep.subr.mxu0 0.0
    %5583 = vmatpush1.msra.mxu0 0.0
    %5584 = vmatprep.subr.mxu0 0.0
    %5585 = vmatpush1.msra.mxu0 0.0
    %5586 = vmatprep.subr.mxu0 0.0
    %5587 = vmatpush1.msra.mxu0 0.0
    %5588 = vmatprep.subr.mxu0 0.0
    %5589 = vmatpush1.msra.mxu0 0.0
    %5590 = vmatprep.subr.mxu0 0.0
    %5591 = vmatpush1.msra.mxu0 0.0
    %5592 = vmatprep.subr.mxu0 0.0
    %5593 = vmatpush1.msra.mxu0 0.0
    %5594 = vmatprep.subr.mxu0 0.0
    %5595 = vmatpush1.msra.mxu0 0.0
    %5596 = vmatprep.subr.mxu0 0.0
    %5597 = vmatpush1.msra.mxu0 0.0
    %5598 = vmatprep.subr.mxu0 0.0
    %5599 = vmatpush1.msra.mxu0 0.0
    %5600 = vmatprep.subr.mxu0 0.0
    %5601 = vmatpush1.msra.mxu0 0.0
    %5602 = vmatprep.subr.mxu0 0.0
    %5603 = vmatpush1.msra.mxu0 0.0
    %5604 = vmatprep.subr.mxu0 0.0
    %5605 = vmatpush1.msra.mxu0 0.0
    %5606 = vmatprep.subr.mxu0 0.0
    %5607 = vmatpush1.msra.mxu0 0.0
    %5608 = vmatprep.subr.mxu0 0.0
    %5609 = vmatpush1.msra.mxu0 0.0
    %5610 = vmatprep.subr.mxu0 0.0
    %5611 = vmatpush1.msra.mxu0 0.0
    %5612 = vmatprep.subr.mxu0 0.0
    %5613 = vmatpush1.msra.mxu0 0.0
    %5614 = vmatprep.subr.mxu0 0.0
    %5615 = vmatpush1.msra.mxu0 0.0
    %5616 = vmatprep.subr.mxu0 0.0
    %5617 = vmatpush1.msra.mxu0 0.0
    %5618 = vmatprep.subr.mxu0 0.0
    %5619 = vmatpush1.msra.mxu0 0.0
    %5620 = vmatprep.subr.mxu0 0.0
    %5621 = vmatpush1.msra.mxu0 0.0
    %5622 = vmatprep.subr.mxu0 0.0
    %5623 = vmatpush1.msra.mxu0 0.0
    %5624 = vmatprep.subr.mxu0 0.0
    %5625 = vmatpush1.msra.mxu0 0.0
    %5626 = vmatprep.subr.mxu0 0.0
    %5627 = vmatpush1.msra.mxu0 0.0
    %5628 = vmatprep.subr.mxu0 0.0
    %5629 = vmatpush1.msra.mxu0 0.0
    %5630 = vmatprep.subr.mxu0 0.0
    %5631 = vmatpush1.msra.mxu0 0.0
    %5632 = vmatprep.subr.mxu0 0.0
    %5633 = vmatpush1.msra.mxu0 0.0
    %5634 = vmatprep.subr.mxu0 0.0
    %5635 = vmatpush1.msra.mxu0 0.0
    %5636 = vmatprep.subr.mxu0 0.0
    %5637 = vmatpush1.msra.mxu0 0.0
    %5638 = vmatprep.mubr.f32.mxu0 0.0
    %5639 = vmatmul.mubr.f32.gmra.mrb[0].mxu0 %v5572
    %v5640 = vpop.f32.mrb[0].mxu0
    %v5641 = vadd.f32 %v710, %v5640
    %v5642 = vpop.f32.mrb[0].mxu0
    %5643 = vdwg.mxu0
    %5645 = vrot.lane.b32.xlu0 %v1493, 16
    %v5646 = vpop.permute.xlu0 %5645
    %5649 = vrot.lane.b32.xlu0 %v2196, 32
    %v5650 = vpop.permute.xlu0 %5649
    %5653 = vrot.lane.b32.xlu0 %v2899, 48
    %v5654 = vpop.permute.xlu0 %5653
    %5657 = vrot.lane.b32.xlu0 %v3602, 64
    %v5658 = vpop.permute.xlu0 %5657
    %5661 = vrot.lane.b32.xlu0 %v4305, 80
    %v5662 = vpop.permute.xlu0 %5661
    %5665 = vrot.lane.b32.xlu0 %v5008, 96
    %v5666 = vpop.permute.xlu0 %5665
    %5669 = vrot.lane.b32.xlu0 %v5641, 112
    %v5670 = vpop.permute.xlu0 %5669
    %5673 = vrot.lane.b32.xlu0 %v1257, 32
    %v5674 = vpop.permute.xlu0 %5673
    %5677 = vrot.lane.b32.xlu0 %v1957, 64
    %v5678 = vpop.permute.xlu0 %5677
    %5681 = vrot.lane.b32.xlu0 %v2660, 96
    %v5682 = vpop.permute.xlu0 %5681
    %5685 = vrot.lane.b32.xlu0 %v4066, 32
    %v5686 = vpop.permute.xlu0 %5685
    %5689 = vrot.lane.b32.xlu0 %v4769, 64
    %v5690 = vpop.permute.xlu0 %5689
    %5693 = vrot.lane.b32.xlu0 %v5402, 96
    %v5694 = vpop.permute.xlu0 %5693
    %v5696 = vsel %vm49, %v781, %v5646
    %v5697 = vsel %vm160, %v5696, %v5650
    %vm5698 = vcmask 392192
    %v5699 = vsel %vm5698, %v5697, %v5654
    %v5700 = vsel %vm450, %v5699, %v5658
    %vm5701 = vcmask 654336
    %v5702 = vsel %vm5701, %v5700, %v5662
    %vm5703 = vcmask 785408
    %v5704 = vsel %vm5703, %v5702, %v5666
    %vm5705 = vcmask 916480
    %v5706 = vsel %vm5705, %v5704, %v5670
    %v5707 = vsel %vm160, %v521, %v5674
    %v5708 = vsel %vm450, %v5707, %v5678
    %v5709 = vsel %vm5703, %v5708, %v5682
    %v5710 = vsel %vm160, %v3363, %v5686
    %v5711 = vsel %vm450, %v5710, %v5690
    %v5712 = vsel %vm5703, %v5711, %v5694
    %5714 = vrot.lane.b32.xlu0 %v521, 96
    %v5715 = vpop.permute.xlu0 %5714
    %5717 = vrot.lane.b32.xlu0 %v1957, 32
    %v5718 = vpop.permute.xlu0 %5717
    %5720 = vrot.lane.b32.xlu0 %v2660, 64
    %v5721 = vpop.permute.xlu0 %5720
    %5724 = vrot.lane.b32.xlu0 %v3363, 96
    %v5725 = vpop.permute.xlu0 %5724
    %5727 = vrot.lane.b32.xlu0 %v4769, 32
    %v5728 = vpop.permute.xlu0 %5727
    %5730 = vrot.lane.b32.xlu0 %v5402, 64
    %v5731 = vpop.permute.xlu0 %5730
    %v5733 = vsel %vm160, %v5715, %v1257
    %v5734 = vsel %vm450, %v5733, %v5718
    %v5735 = vsel %vm5703, %v5734, %v5721
    %v5736 = vsel %vm160, %v5725, %v4066
    %v5737 = vsel %vm450, %v5736, %v5728
    %v5738 = vsel %vm5703, %v5737, %v5731
    %v5743 = vcombine.low %v5706, %v5709
    %v5744 = vcombine.low %v5712, %v5735
    %5747 = vst [vmem:[%s4] sm:$0xff] %v5743
    %5748 = vst [vmem:[%s4 + $0x8] sm:$0xff] %v5744
    %5749 = vst [vmem:[%s4 + $0x10] sm:$0xf] %v5738
    // Predicated region
    $region22: #{vrnn_forward.1} parent=1 // pred_check
      _
    $region23: #{vrnn_forward.1} parent=1 // pred_check_branch
      %5751 = sbr.rel (0) target = $region25
    $region24: #{vrnn_forward.1} parent=1 // pred_region
      _
    $region25: #{vrnn_forward.1} parent=1 // pred_fallthru
      _
    // Predicated region
    $region26: #{vrnn_forward.1} parent=1 // pred_check
      _
    $region27: #{vrnn_forward.1} parent=1 // pred_check_branch
      %5753 = sbr.rel (0) target = $region29
    $region28: #{vrnn_forward.1} parent=1 // pred_region
      _
    $region29: #{vrnn_forward.1} parent=1 // pred_fallthru
      _
    %5754 = vsyncpa [#allocation4], 1

</llo_original>
